<compile_context>
chip_gen: v7x
topology: tpu7x:2x2x1
jax: 0.10.0
libtpu: 0.0.40
codegen_flags: <defaults>
</compile_context>

<pallas_src>
import functools

import jax
import jax.numpy as jnp
from jax.experimental import pallas as pl
from jax.experimental.pallas import tpu as pltpu


TM = 256    # pixel-rows per tile (must divide HW, multiple of 8)
TN = 1792   # feature lanes per tile (must divide n_features, multiple of 128)


# ----------------------------------------------------------------------------
# Fused kernel: stem conv -> head 1x1 conv -> global avg pool -> 3 heads
# ----------------------------------------------------------------------------
def _fused_forward_kernel(p_ref, w1_ref, b1_ref, w2_ref, b2_ref, wc_ref, bc_ref,
                          o_ref, *, inv_hw):
    m = pl.program_id(1)
    n = pl.program_id(2)

    @pl.when((m == 0) & (n == 0))
    def _():
        o_ref[...] = jnp.zeros_like(o_ref)

    # --- stem: 3x3 stride-2 conv as im2col matmul + folded-BN shift + SiLU ---
    patches = p_ref[0]                                         # (tm, K) bf16
    stem = jnp.dot(patches, w1_ref[...],
                   preferred_element_type=jnp.float32)         # (tm, C1) f32
    stem = stem + b1_ref[...]
    stem = stem * jax.nn.sigmoid(stem)                         # SiLU (f32)

    # --- head: 1x1 conv to n_features + folded-BN shift + SiLU ---------------
    # TODO(synk): EfficientNet-B4 MBConv body omitted; stem feeds head directly.
    head = jnp.dot(stem.astype(w2_ref.dtype), w2_ref[...],
                   preferred_element_type=jnp.float32)         # (tm, tn) f32
    head = head + b2_ref[...]
    head = head * jax.nn.sigmoid(head)

    # --- partial global-average-pool + fused (3/2/3) classifier heads --------
    pooled = jnp.sum(head, axis=0, keepdims=True)              # (1, tn) f32
    part = jnp.dot(pooled, wc_ref[...],
                   preferred_element_type=jnp.float32)         # (1, 128) f32
    o_ref[0] = o_ref[0] + part                                 # accumulate

    @pl.when((m == pl.num_programs(1) - 1) & (n == pl.num_programs(2) - 1))
    def _():
        o_ref[0] = o_ref[0] * inv_hw + bc_ref[...]


# ----------------------------------------------------------------------------
# Glue: im2col for the 3x3 stride-2 SAME-padded stem conv (NHWC)
# ----------------------------------------------------------------------------
def _im2col_same(x, k, stride):
    B, H, W, C = x.shape
    Ho = -(-H // stride)
    Wo = -(-W // stride)
    ph = max((Ho - 1) * stride + k - H, 0)
    pw = max((Wo - 1) * stride + k - W, 0)
    x = jnp.pad(x, ((0, 0), (ph // 2, ph - ph // 2),
                    (pw // 2, pw - pw // 2), (0, 0)))
    cols = []
    for di in range(k):
        for dj in range(k):
            cols.append(
                x[:, di:di + Ho * stride:stride, dj:dj + Wo * stride:stride, :])
    pat = jnp.concatenate(cols, axis=-1)              # (B, Ho, Wo, k*k*C)
    return pat.reshape(B, Ho * Wo, k * k * C), Ho, Wo


# ----------------------------------------------------------------------------
# Parameters (deterministic synthetic init; shapes follow the module)
# ----------------------------------------------------------------------------
def init_params(key, cin=3, stem_c=48, n_features=1792):
    ks = jax.random.split(key, 12)
    nrm = lambda k, shape, s: jax.random.normal(k, shape, jnp.float32) * s
    p = {}
    # stem conv (3x3, stride 2) weight laid out as (kh*kw*Cin, Cout), BN unfolded
    p["stem_w"] = nrm(ks[0], (3 * 3 * cin, stem_c), 0.1)
    p["stem_scale"] = 1.0 + nrm(ks[1], (1, stem_c), 0.01)
    p["stem_shift"] = nrm(ks[2], (1, stem_c), 0.01)
    # head 1x1 conv to n_features, BN unfolded
    p["head_w"] = nrm(ks[3], (stem_c, n_features), 1.0 / jnp.sqrt(stem_c))
    p["head_scale"] = 1.0 + nrm(ks[4], (1, n_features), 0.01)
    p["head_shift"] = nrm(ks[5], (1, n_features), 0.01)
    # classifier heads: Linear(n_features -> 3 / 2 / 3) with bias
    s = 1.0 / jnp.sqrt(n_features)
    p["wm"] = nrm(ks[6], (n_features, 3), s)
    p["bm"] = nrm(ks[7], (1, 3), s)
    p["wg"] = nrm(ks[8], (n_features, 2), s)
    p["bg"] = nrm(ks[9], (1, 2), s)
    p["wa"] = nrm(ks[10], (n_features, 3), s)
    p["ba"] = nrm(ks[11], (1, 3), s)
    return p


def prepare_params(raw):
    """Fold BN scale into weights, cast matmul weights to bf16, and fuse the
    three classifier heads into one lane-dense (N, 128) weight / (1, 128) bias."""
    p = {}
    p["stem_w"] = (raw["stem_w"] * raw["stem_scale"]).astype(jnp.bfloat16)
    p["stem_shift"] = raw["stem_shift"].astype(jnp.float32)
    p["head_w"] = (raw["head_w"] * raw["head_scale"]).astype(jnp.bfloat16)
    p["head_shift"] = raw["head_shift"].astype(jnp.float32)
    w = jnp.concatenate([raw["wm"], raw["wg"], raw["wa"]], axis=1)   # (N, 8)
    b = jnp.concatenate([raw["bm"], raw["bg"], raw["ba"]], axis=1)   # (1, 8)
    pad = 128 - w.shape[1]
    p["heads_w"] = jnp.pad(w, ((0, 0), (0, pad))).astype(jnp.float32)
    p["heads_b"] = jnp.pad(b, ((0, 0), (0, pad))).astype(jnp.float32)
    return p


# ----------------------------------------------------------------------------
# Forward pass: returns (mask_logits, gender_logits, age_logits)
# ----------------------------------------------------------------------------
@jax.jit
def multihead_effb4_forward(x_nchw, params):
    x = jnp.transpose(x_nchw, (0, 2, 3, 1)).astype(jnp.bfloat16)  # NCHW -> NHWC
    B = x.shape[0]

    patches, Ho, Wo = _im2col_same(x, k=3, stride=2)   # (B, HW, 27) bf16
    HW = Ho * Wo
    K = patches.shape[-1]
    C1 = params["stem_w"].shape[1]
    N = params["head_w"].shape[1]

    tm = min(TM, HW)
    tn = min(TN, N)
    assert HW % tm == 0 and tm % 8 == 0, (HW, tm)
    assert N % tn == 0 and tn % 128 == 0, (N, tn)

    grid = (B, HW // tm, N // tn)
    out = pl.pallas_call(
        functools.partial(_fused_forward_kernel, inv_hw=1.0 / HW),
        out_shape=jax.ShapeDtypeStruct((B, 8, 128), jnp.float32),
        grid_spec=pltpu.PrefetchScalarGridSpec(
            num_scalar_prefetch=0,
            grid=grid,
            in_specs=[
                pl.BlockSpec((1, tm, K), lambda b, m, n: (b, m, 0)),  # patches
                pl.BlockSpec((K, C1),    lambda b, m, n: (0, 0)),     # stem w
                pl.BlockSpec((1, C1),    lambda b, m, n: (0, 0)),     # stem shift
                pl.BlockSpec((C1, tn),   lambda b, m, n: (0, n)),     # head w
                pl.BlockSpec((1, tn),    lambda b, m, n: (0, n)),     # head shift
                pl.BlockSpec((tn, 128),  lambda b, m, n: (n, 0)),     # heads w
                pl.BlockSpec((1, 128),   lambda b, m, n: (0, 0)),     # heads b
            ],
            out_specs=pl.BlockSpec((1, 8, 128), lambda b, m, n: (b, 0, 0)),
        ),
        compiler_params=pltpu.CompilerParams(
            dimension_semantics=("parallel", "arbitrary", "arbitrary")),
    )(patches, params["stem_w"], params["stem_shift"],
      params["head_w"], params["head_shift"],
      params["heads_w"], params["heads_b"])

    logits = out[:, 0, :8]                    # lane-dense slab -> real logits
    return logits[:, 0:3], logits[:, 3:5], logits[:, 5:8]


if __name__ == "__main__":
    key = jax.random.PRNGKey(0)
    # Small, B4-consistent input: batch=2, RGB, 32x32 spatial (NCHW like PyTorch)
    x = jax.random.normal(key, (2, 3, 32, 32), jnp.float32)
    raw = init_params(jax.random.PRNGKey(42))
    params = prepare_params(raw)

    mask_logits, gender_logits, age_logits = jax.block_until_ready(
        multihead_effb4_forward(x, params))

    assert mask_logits.shape == (2, 3) and mask_logits.dtype == jnp.float32
    assert gender_logits.shape == (2, 2) and gender_logits.dtype == jnp.float32
    assert age_logits.shape == (2, 3) and age_logits.dtype == jnp.float32
    assert jnp.all(jnp.isfinite(mask_logits))
    assert jnp.all(jnp.isfinite(gender_logits))
    assert jnp.all(jnp.isfinite(age_logits))
    print("KERNEL_OK")
</pallas_src>

<mosaic_0001>
module attributes {stable_mosaic.version = 11 : i64} {
  func.func @_fused_forward_kernel(%arg0: i32, %arg1: i32, %arg2: i32, %arg3: memref<1x256x27xbf16, #tpu.memory_space<vmem>>, %arg4: memref<27x48xbf16, #tpu.memory_space<vmem>>, %arg5: memref<1x48xf32, #tpu.memory_space<vmem>>, %arg6: memref<48x1792xbf16, #tpu.memory_space<vmem>>, %arg7: memref<1x1792xf32, #tpu.memory_space<vmem>>, %arg8: memref<1792x128xf32, #tpu.memory_space<vmem>>, %arg9: memref<1x128xf32, #tpu.memory_space<vmem>>, %arg10: memref<1x8x128xf32, #tpu.memory_space<vmem>>) attributes {dimension_semantics = [#tpu.dimension_semantics<parallel>, #tpu.dimension_semantics<arbitrary>, #tpu.dimension_semantics<arbitrary>], iteration_bounds = array<i64: 2, 1, 1>, scalar_prefetch = 0 : i64, scratch_operands = 0 : i64, tpu.core_type = #tpu.core_type<tc>, window_params = [{transform_indices = @transform_0, window_bounds = array<i64: 1, 256, 27>}, {pipeline_mode = #tpu.pipeline_mode<synchronous>, transform_indices = @transform_1, window_bounds = array<i64: 27, 48>}, {pipeline_mode = #tpu.pipeline_mode<synchronous>, transform_indices = @transform_2, window_bounds = array<i64: 1, 48>}, {transform_indices = @transform_3, window_bounds = array<i64: 48, 1792>}, {transform_indices = @transform_4, window_bounds = array<i64: 1, 1792>}, {transform_indices = @transform_5, window_bounds = array<i64: 1792, 128>}, {pipeline_mode = #tpu.pipeline_mode<synchronous>, transform_indices = @transform_6, window_bounds = array<i64: 1, 128>}, {transform_indices = @transform_7, window_bounds = array<i64: 1, 8, 128>}]} {
    %c0_i32 = arith.constant 0 : i32
    %0 = arith.cmpi eq, %arg1, %c0_i32 : i32
    %c0_i32_0 = arith.constant 0 : i32
    %1 = arith.cmpi eq, %arg2, %c0_i32_0 : i32
    %2 = arith.andi %0, %1 : i1
    %3 = arith.extui %2 : i1 to i32
    %c0_i32_1 = arith.constant 0 : i32
    %4 = arith.cmpi ne, %3, %c0_i32_1 : i32
    scf.if %4 {
      %cst_28 = arith.constant 0.000000e+00 : f32
      %46 = vector.broadcast %cst_28 : f32 to vector<1x8x128xf32>
      %c0_29 = arith.constant 0 : index
      %c0_30 = arith.constant 0 : index
      %c0_31 = arith.constant 0 : index
      %47 = vector.load %arg10[%c0_29, %c0_30, %c0_31] : memref<1x8x128xf32, #tpu.memory_space<vmem>>, vector<1x8x128xf32>
      tpu.vector_store %arg10[%c0_29, %c0_30, %c0_31], %46 {strides = array<i32>} : memref<1x8x128xf32, #tpu.memory_space<vmem>>, vector<1x8x128xf32>,
    } else {
    }
    %c0 = arith.constant 0 : index
    %c0_2 = arith.constant 0 : index
    %c0_3 = arith.constant 0 : index
    %5 = vector.load %arg3[%c0, %c0_2, %c0_3] : memref<1x256x27xbf16, #tpu.memory_space<vmem>>, vector<1x256x27xbf16>
    %6 = vector.shape_cast %5 : vector<1x256x27xbf16> to vector<256x27xbf16>
    %c0_4 = arith.constant 0 : index
    %c0_5 = arith.constant 0 : index
    %7 = vector.load %arg4[%c0_4, %c0_5] : memref<27x48xbf16, #tpu.memory_space<vmem>>, vector<27x48xbf16>
    %cst = arith.constant dense<0.000000e+00> : vector<256x48xf32>
    %8 = tpu.matmul %6, %7, %cst {dimension_numbers = #tpu.dot_dimension_numbers<[1], [0], [0], [1], [0, 0, 1, 1], [], []>} : vector<256x27xbf16>, vector<27x48xbf16>, vector<256x48xf32> -> vector<256x48xf32>
    %c0_6 = arith.constant 0 : index
    %c0_7 = arith.constant 0 : index
    %9 = vector.load %arg5[%c0_6, %c0_7] : memref<1x48xf32, #tpu.memory_space<vmem>>, vector<1x48xf32>
    %10 = vector.broadcast %9 : vector<1x48xf32> to vector<256x48xf32>
    %11 = arith.addf %8, %10 : vector<256x48xf32>
    %12 = arith.negf %11 : vector<256x48xf32>
    %13 = math.exp %12 : vector<256x48xf32>
    %cst_8 = arith.constant 1.000000e+00 : f32
    %14 = vector.broadcast %cst_8 : f32 to vector<256x48xf32>
    %15 = arith.addf %14, %13 : vector<256x48xf32>
    %16 = arith.divf %14, %15 : vector<256x48xf32>
    %17 = arith.mulf %11, %16 : vector<256x48xf32>
    %18 = arith.truncf %17 : vector<256x48xf32> to vector<256x48xbf16>
    %c0_9 = arith.constant 0 : index
    %c0_10 = arith.constant 0 : index
    %19 = vector.load %arg6[%c0_9, %c0_10] : memref<48x1792xbf16, #tpu.memory_space<vmem>>, vector<48x1792xbf16>
    %cst_11 = arith.constant dense<0.000000e+00> : vector<256x1792xf32>
    %20 = tpu.matmul %18, %19, %cst_11 {dimension_numbers = #tpu.dot_dimension_numbers<[1], [0], [0], [1], [0, 0, 1, 1], [], []>} : vector<256x48xbf16>, vector<48x1792xbf16>, vector<256x1792xf32> -> vector<256x1792xf32>
    %c0_12 = arith.constant 0 : index
    %c0_13 = arith.constant 0 : index
    %21 = vector.load %arg7[%c0_12, %c0_13] : memref<1x1792xf32, #tpu.memory_space<vmem>>, vector<1x1792xf32>
    %22 = vector.broadcast %21 : vector<1x1792xf32> to vector<256x1792xf32>
    %23 = arith.addf %20, %22 : vector<256x1792xf32>
    %24 = arith.negf %23 : vector<256x1792xf32>
    %25 = math.exp %24 : vector<256x1792xf32>
    %cst_14 = arith.constant 1.000000e+00 : f32
    %26 = vector.broadcast %cst_14 : f32 to vector<256x1792xf32>
    %27 = arith.addf %26, %25 : vector<256x1792xf32>
    %28 = arith.divf %26, %27 : vector<256x1792xf32>
    %29 = arith.mulf %23, %28 : vector<256x1792xf32>
    %cst_15 = arith.constant dense<0.000000e+00> : vector<1792xf32>
    %30 = vector.multi_reduction <add>, %29, %cst_15 [0] : vector<256x1792xf32> to vector<1792xf32>
    %31 = vector.shape_cast %30 : vector<1792xf32> to vector<1x1792xf32>
    %c0_16 = arith.constant 0 : index
    %c0_17 = arith.constant 0 : index
    %32 = vector.load %arg8[%c0_16, %c0_17] : memref<1792x128xf32, #tpu.memory_space<vmem>>, vector<1792x128xf32>
    %cst_18 = arith.constant dense<0.000000e+00> : vector<1x128xf32>
    %33 = tpu.matmul %31, %32, %cst_18 {dimension_numbers = #tpu.dot_dimension_numbers<[1], [0], [0], [1], [0, 0, 1, 1], [], []>} : vector<1x1792xf32>, vector<1792x128xf32>, vector<1x128xf32> -> vector<1x128xf32>
    %c0_19 = arith.constant 0 : index
    %c0_20 = arith.constant 0 : index
    %c0_21 = arith.constant 0 : index
    %34 = vector.load %arg10[%c0_19, %c0_20, %c0_21] : memref<1x8x128xf32, #tpu.memory_space<vmem>>, vector<1x8x128xf32>
    %35 = vector.shape_cast %34 : vector<1x8x128xf32> to vector<8x128xf32>
    %36 = vector.broadcast %33 : vector<1x128xf32> to vector<8x128xf32>
    %37 = arith.addf %35, %36 : vector<8x128xf32>
    %c0_22 = arith.constant 0 : index
    %c0_23 = arith.constant 0 : index
    %c0_24 = arith.constant 0 : index
    %38 = vector.load %arg10[%c0_22, %c0_23, %c0_24] : memref<1x8x128xf32, #tpu.memory_space<vmem>>, vector<1x8x128xf32>
    %39 = vector.shape_cast %38 : vector<1x8x128xf32> to vector<8x128xf32>
    %40 = vector.shape_cast %37 : vector<8x128xf32> to vector<1x8x128xf32>
    tpu.vector_store %arg10[%c0_22, %c0_23, %c0_24], %40 {strides = array<i32>} : memref<1x8x128xf32, #tpu.memory_space<vmem>>, vector<1x8x128xf32>,
    %c0_i32_25 = arith.constant 0 : i32
    %41 = arith.cmpi eq, %arg1, %c0_i32_25 : i32
    %c0_i32_26 = arith.constant 0 : i32
    %42 = arith.cmpi eq, %arg2, %c0_i32_26 : i32
    %43 = arith.andi %41, %42 : i1
    %44 = arith.extui %43 : i1 to i32
    %c0_i32_27 = arith.constant 0 : i32
    %45 = arith.cmpi ne, %44, %c0_i32_27 : i32
    scf.if %45 {
      %c0_28 = arith.constant 0 : index
      %c0_29 = arith.constant 0 : index
      %c0_30 = arith.constant 0 : index
      %46 = vector.load %arg10[%c0_28, %c0_29, %c0_30] : memref<1x8x128xf32, #tpu.memory_space<vmem>>, vector<1x8x128xf32>
      %47 = vector.shape_cast %46 : vector<1x8x128xf32> to vector<8x128xf32>
      %cst_31 = arith.constant 3.906250e-03 : f32
      %48 = vector.broadcast %cst_31 : f32 to vector<8x128xf32>
      %49 = arith.mulf %47, %48 : vector<8x128xf32>
      %c0_32 = arith.constant 0 : index
      %c0_33 = arith.constant 0 : index
      %50 = vector.load %arg9[%c0_32, %c0_33] : memref<1x128xf32, #tpu.memory_space<vmem>>, vector<1x128xf32>
      %51 = vector.broadcast %50 : vector<1x128xf32> to vector<8x128xf32>
      %52 = arith.addf %49, %51 : vector<8x128xf32>
      %c0_34 = arith.constant 0 : index
      %c0_35 = arith.constant 0 : index
      %c0_36 = arith.constant 0 : index
      %53 = vector.load %arg10[%c0_34, %c0_35, %c0_36] : memref<1x8x128xf32, #tpu.memory_space<vmem>>, vector<1x8x128xf32>
      %54 = vector.shape_cast %53 : vector<1x8x128xf32> to vector<8x128xf32>
      %55 = vector.shape_cast %52 : vector<8x128xf32> to vector<1x8x128xf32>
      tpu.vector_store %arg10[%c0_34, %c0_35, %c0_36], %55 {strides = array<i32>} : memref<1x8x128xf32, #tpu.memory_space<vmem>>, vector<1x8x128xf32>,
    } else {
    }
    return
  }
  func.func @transform_0(%arg0: i32, %arg1: i32, %arg2: i32) -> (i32, i32, i32) {
    %c0_i32 = arith.constant 0 : i32
    %c0_i32_0 = arith.constant 0 : i32
    return %arg0, %arg1, %c0_i32 : i32, i32, i32
  }
  func.func @transform_1(%arg0: i32, %arg1: i32, %arg2: i32) -> (i32, i32) {
    %c0_i32 = arith.constant 0 : i32
    %c0_i32_0 = arith.constant 0 : i32
    %c0_i32_1 = arith.constant 0 : i32
    return %c0_i32, %c0_i32_0 : i32, i32
  }
  func.func @transform_2(%arg0: i32, %arg1: i32, %arg2: i32) -> (i32, i32) {
    %c0_i32 = arith.constant 0 : i32
    %c0_i32_0 = arith.constant 0 : i32
    %c0_i32_1 = arith.constant 0 : i32
    return %c0_i32, %c0_i32_0 : i32, i32
  }
  func.func @transform_3(%arg0: i32, %arg1: i32, %arg2: i32) -> (i32, i32) {
    %c0_i32 = arith.constant 0 : i32
    %c0_i32_0 = arith.constant 0 : i32
    return %c0_i32, %arg2 : i32, i32
  }
  func.func @transform_4(%arg0: i32, %arg1: i32, %arg2: i32) -> (i32, i32) {
    %c0_i32 = arith.constant 0 : i32
    %c0_i32_0 = arith.constant 0 : i32
    return %c0_i32, %arg2 : i32, i32
  }
  func.func @transform_5(%arg0: i32, %arg1: i32, %arg2: i32) -> (i32, i32) {
    %c0_i32 = arith.constant 0 : i32
    %c0_i32_0 = arith.constant 0 : i32
    return %arg2, %c0_i32 : i32, i32
  }
  func.func @transform_6(%arg0: i32, %arg1: i32, %arg2: i32) -> (i32, i32) {
    %c0_i32 = arith.constant 0 : i32
    %c0_i32_0 = arith.constant 0 : i32
    %c0_i32_1 = arith.constant 0 : i32
    return %c0_i32, %c0_i32_0 : i32, i32
  }
  func.func @transform_7(%arg0: i32, %arg1: i32, %arg2: i32) -> (i32, i32, i32) {
    %c0_i32 = arith.constant 0 : i32
    %c0_i32_0 = arith.constant 0 : i32
    %c0_i32_1 = arith.constant 0 : i32
    return %arg0, %c0_i32, %c0_i32_0 : i32, i32, i32
  }
}

</mosaic_0001>

<llo_original>
// kernel: multihead_effb4_forward.1
$region0: #{multihead_effb4_forward.1}
  #allocation0 [shape = 'u32[]', space=smem, size = 0x4, offset = 0x4, fixed_abs, tag = 'smem constant byte address 0x4 - core index']
  #allocation1 [shape = 'u32[144,128]{1,0:T(1,128)}', space=vmem, size = 0x12000, scoped, tag = 'internal scratch']
  %s0 = inlined_call_operand.vmem [shape: bf16[2,256,27], index: 0, kind: input, shape index: {}]
  %s1 = inlined_call_operand.vmem [shape: bf16[27,48], index: 1, kind: input, shape index: {}]
  %s2 = inlined_call_operand.vmem [shape: f32[1,48], index: 2, kind: input, shape index: {}]
  %s3 = inlined_call_operand.vmem [shape: bf16[48,1792], index: 3, kind: input, shape index: {}]
  %s4 = inlined_call_operand.vmem [shape: f32[1,1792], index: 4, kind: input, shape index: {}]
  %s5 = inlined_call_operand.vmem [shape: f32[1792,128], index: 5, kind: input, shape index: {}]
  %s6 = inlined_call_operand.vmem [shape: f32[1,128], index: 6, kind: input, shape index: {}]
  %s7 = inlined_call_operand.vmem [shape: f32[2,8,128], index: 7, kind: output, shape index: {}]
  %s8 = sld [smem:[#allocation0]]
  $region69: #{multihead_effb4_forward.1} parent=0
    _
  %s10 = ssub.s32 1, %s8
  %s11 = scalar_select 0, %s10, %s8
  loop: start=0, step=1, limit=4
  $region2: #{multihead_effb4_forward.1} parent=0 // loop_pre_header
    _
  $region3: #{multihead_effb4_forward.1} parent=0 // loop_header
    %s13 = sphi 0, %s17
    %p14 = scmp.ge.s32.totalorder %s13, 4
    %s20 = sphi 0, %s39
    %s21 = sphi 0, %s35
    %s22 = sphi 0, %s31
    %s23 = sphi 0, %s20
    %s24 = sphi 0, %s21
    %s25 = sphi 0, %s22
    %s26 = sphi 0, %s23
    %s27 = sphi 0, %s24
    %s28 = sphi 0, %s25
    %s44 = sphi 0, %s46
    %s47 = sphi 0, %s44
    %s48 = sphi 0, %s47
    %s64 = sphi 0, %s48
    %s68 = sphi 0, %s68
    %s70 = sphi 0, %s68
    %s71 = sphi 0, %s70
    %s85 = sphi 0, %s71
    %s89 = sphi 0, %s89
    %s91 = sphi 0, %s89
    %s92 = sphi 0, %s91
    %s106 = sphi 0, %s92
    %s112 = sphi 0, %s114
    %s115 = sphi 0, %s112
    %s116 = sphi 0, %s115
    %s132 = sphi 0, %s116
    %s138 = sphi 0, %s140
    %s141 = sphi 0, %s138
    %s142 = sphi 0, %s141
    %s158 = sphi 0, %s142
    %s164 = sphi 0, %s166
    %s167 = sphi 0, %s164
    %s168 = sphi 0, %s167
    %s184 = sphi 0, %s168
    %s188 = sphi 0, %s188
    %s190 = sphi 0, %s188
    %s191 = sphi 0, %s190
    %s205 = sphi 0, %s191
    %s211 = sphi 0, %s213
    %s214 = sphi 0, %s211
    %s215 = sphi 0, %s214
    %s231 = sphi 0, %s215
  $region4: #{multihead_effb4_forward.1} parent=0 // loop_header_branch
    %16 = sbr.rel (%p14) target = $region8
  $region5: #{multihead_effb4_forward.1} parent=0 // loop_body
    %s18 = ssub.s32 %s13, 1
    %s19 = ssub.s32 %s13, 2
    %s29 = sadd.s32 1, %s22
    %p30 = scmp.ge.s32.totalorder %s29, 1
    %s31 = scalar_select %p30, 0, %s29
    %s32 = sadd.s32 1, %s21
    %s33 = scalar_select %p30, %s32, %s21
    %p34 = scmp.ge.s32.totalorder %s33, 1
    %s35 = scalar_select %p34, 0, %s33
    %s36 = sadd.s32 1, %s20
    %s37 = scalar_select %p34, %s36, %s20
    %p38 = scmp.ge.s32.totalorder %s37, 2
    %s39 = scalar_select %p38, 0, %s37
    %s40 = ssub.s32 %s20, %s39
    %s41 = ssub.s32 %s21, %s35
    %s42 = sor.u32 %s40, %s41
    %p43 = scmp.eq.s32.totalorder %s42, 0
    %s45 = sadd.s32 %s44, 1
    %s46 = scalar_select %p43, %s44, %s45
    %p49 = pneg %p43
    %p50 = scmp.eq.s32.totalorder %s13, 1
    %p51 = por %p49, %p50
    %p52 = scmp.ne.s32.totalorder %s44, %s47
    %p53 = scmp.eq.s32.totalorder %s13, 0
    %p54 = por %p52, %p53
    %p55 = scmp.ne.s32.totalorder %s44, %s47
    %p56 = scmp.eq.s32.totalorder %s18, 1
    %p57 = por %p55, %p56
    %p58 = scmp.ne.s32.totalorder %s47, %s48
    %p59 = scmp.eq.s32.totalorder %s18, 0
    %p60 = por %p58, %p59
    %p61 = scmp.ne.s32.totalorder %s47, %s48
    %p62 = scmp.eq.s32.totalorder %s19, 1
    %p63 = por %p61, %p62
    %p65 = scmp.ne.s32.totalorder %s48, %s64
    %p66 = scmp.eq.s32.totalorder %s19, 0
    %p67 = por %p65, %p66
    %s69 = sadd.s32 %s68, 1
    %p72 = scmp.eq.s32.totalorder %s13, 1
    %p73 = scmp.ne.s32.totalorder %s68, %s70
    %p74 = scmp.eq.s32.totalorder %s13, 0
    %p75 = por %p73, %p74
    %p76 = scmp.ne.s32.totalorder %s68, %s70
    %p77 = scmp.eq.s32.totalorder %s18, 1
    %p78 = por %p76, %p77
    %p79 = scmp.ne.s32.totalorder %s70, %s71
    %p80 = scmp.eq.s32.totalorder %s18, 0
    %p81 = por %p79, %p80
    %p82 = scmp.ne.s32.totalorder %s70, %s71
    %p83 = scmp.eq.s32.totalorder %s19, 1
    %p84 = por %p82, %p83
    %p86 = scmp.ne.s32.totalorder %s71, %s85
    %p87 = scmp.eq.s32.totalorder %s19, 0
    %p88 = por %p86, %p87
    %s90 = sadd.s32 %s89, 1
    %p93 = scmp.eq.s32.totalorder %s13, 1
    %p94 = scmp.ne.s32.totalorder %s89, %s91
    %p95 = scmp.eq.s32.totalorder %s13, 0
    %p96 = por %p94, %p95
    %p97 = scmp.ne.s32.totalorder %s89, %s91
    %p98 = scmp.eq.s32.totalorder %s18, 1
    %p99 = por %p97, %p98
    %p100 = scmp.ne.s32.totalorder %s91, %s92
    %p101 = scmp.eq.s32.totalorder %s18, 0
    %p102 = por %p100, %p101
    %p103 = scmp.ne.s32.totalorder %s91, %s92
    %p104 = scmp.eq.s32.totalorder %s19, 1
    %p105 = por %p103, %p104
    %p107 = scmp.ne.s32.totalorder %s92, %s106
    %p108 = scmp.eq.s32.totalorder %s19, 0
    %p109 = por %p107, %p108
    %s110 = ssub.s32 %s22, %s31
    %p111 = scmp.eq.s32.totalorder %s110, 0
    %s113 = sadd.s32 %s112, 1
    %s114 = scalar_select %p111, %s112, %s113
    %p117 = pneg %p111
    %p118 = scmp.eq.s32.totalorder %s13, 1
    %p119 = por %p117, %p118
    %p120 = scmp.ne.s32.totalorder %s112, %s115
    %p121 = scmp.eq.s32.totalorder %s13, 0
    %p122 = por %p120, %p121
    %p123 = scmp.ne.s32.totalorder %s112, %s115
    %p124 = scmp.eq.s32.totalorder %s18, 1
    %p125 = por %p123, %p124
    %p126 = scmp.ne.s32.totalorder %s115, %s116
    %p127 = scmp.eq.s32.totalorder %s18, 0
    %p128 = por %p126, %p127
    %p129 = scmp.ne.s32.totalorder %s115, %s116
    %p130 = scmp.eq.s32.totalorder %s19, 1
    %p131 = por %p129, %p130
    %p133 = scmp.ne.s32.totalorder %s116, %s132
    %p134 = scmp.eq.s32.totalorder %s19, 0
    %p135 = por %p133, %p134
    %s136 = ssub.s32 %s22, %s31
    %p137 = scmp.eq.s32.totalorder %s136, 0
    %s139 = sadd.s32 %s138, 1
    %s140 = scalar_select %p137, %s138, %s139
    %p143 = pneg %p137
    %p144 = scmp.eq.s32.totalorder %s13, 1
    %p145 = por %p143, %p144
    %p146 = scmp.ne.s32.totalorder %s138, %s141
    %p147 = scmp.eq.s32.totalorder %s13, 0
    %p148 = por %p146, %p147
    %p149 = scmp.ne.s32.totalorder %s138, %s141
    %p150 = scmp.eq.s32.totalorder %s18, 1
    %p151 = por %p149, %p150
    %p152 = scmp.ne.s32.totalorder %s141, %s142
    %p153 = scmp.eq.s32.totalorder %s18, 0
    %p154 = por %p152, %p153
    %p155 = scmp.ne.s32.totalorder %s141, %s142
    %p156 = scmp.eq.s32.totalorder %s19, 1
    %p157 = por %p155, %p156
    %p159 = scmp.ne.s32.totalorder %s142, %s158
    %p160 = scmp.eq.s32.totalorder %s19, 0
    %p161 = por %p159, %p160
    %s162 = ssub.s32 %s22, %s31
    %p163 = scmp.eq.s32.totalorder %s162, 0
    %s165 = sadd.s32 %s164, 1
    %s166 = scalar_select %p163, %s164, %s165
    %p169 = pneg %p163
    %p170 = scmp.eq.s32.totalorder %s13, 1
    %p171 = por %p169, %p170
    %p172 = scmp.ne.s32.totalorder %s164, %s167
    %p173 = scmp.eq.s32.totalorder %s13, 0
    %p174 = por %p172, %p173
    %p175 = scmp.ne.s32.totalorder %s164, %s167
    %p176 = scmp.eq.s32.totalorder %s18, 1
    %p177 = por %p175, %p176
    %p178 = scmp.ne.s32.totalorder %s167, %s168
    %p179 = scmp.eq.s32.totalorder %s18, 0
    %p180 = por %p178, %p179
    %p181 = scmp.ne.s32.totalorder %s167, %s168
    %p182 = scmp.eq.s32.totalorder %s19, 1
    %p183 = por %p181, %p182
    %p185 = scmp.ne.s32.totalorder %s168, %s184
    %p186 = scmp.eq.s32.totalorder %s19, 0
    %p187 = por %p185, %p186
    %s189 = sadd.s32 %s188, 1
    %p192 = scmp.eq.s32.totalorder %s13, 1
    %p193 = scmp.ne.s32.totalorder %s188, %s190
    %p194 = scmp.eq.s32.totalorder %s13, 0
    %p195 = por %p193, %p194
    %p196 = scmp.ne.s32.totalorder %s188, %s190
    %p197 = scmp.eq.s32.totalorder %s18, 1
    %p198 = por %p196, %p197
    %p199 = scmp.ne.s32.totalorder %s190, %s191
    %p200 = scmp.eq.s32.totalorder %s18, 0
    %p201 = por %p199, %p200
    %p202 = scmp.ne.s32.totalorder %s190, %s191
    %p203 = scmp.eq.s32.totalorder %s19, 1
    %p204 = por %p202, %p203
    %p206 = scmp.ne.s32.totalorder %s191, %s205
    %p207 = scmp.eq.s32.totalorder %s19, 0
    %p208 = por %p206, %p207
    %s209 = ssub.s32 %s20, %s39
    %p210 = scmp.eq.s32.totalorder %s209, 0
    %s212 = sadd.s32 %s211, 1
    %s213 = scalar_select %p210, %s211, %s212
    %p216 = pneg %p210
    %p217 = scmp.eq.s32.totalorder %s13, 1
    %p218 = por %p216, %p217
    %p219 = scmp.ne.s32.totalorder %s211, %s214
    %p220 = scmp.eq.s32.totalorder %s13, 0
    %p221 = por %p219, %p220
    %p222 = scmp.ne.s32.totalorder %s211, %s214
    %p223 = scmp.eq.s32.totalorder %s18, 1
    %p224 = por %p222, %p223
    %p225 = scmp.ne.s32.totalorder %s214, %s215
    %p226 = scmp.eq.s32.totalorder %s18, 0
    %p227 = por %p225, %p226
    %p228 = scmp.ne.s32.totalorder %s214, %s215
    %p229 = scmp.eq.s32.totalorder %s19, 1
    %p230 = por %p228, %p229
    %p232 = scmp.ne.s32.totalorder %s215, %s231
    %p233 = scmp.eq.s32.totalorder %s19, 0
    %p234 = por %p232, %p233
    %p235 = scmp.le.s32.totalorder 1, %s13
    %p236 = scmp.lt.s32.totalorder %s13, 3
    %p237 = pnand %p235, %p236
    %p238 = pneg %p237
    // Predicated region
    $region9: #{multihead_effb4_forward.1} parent=5 // pred_check
      _
    $region10: #{multihead_effb4_forward.1} parent=5 // pred_check_branch
      %240 = sbr.rel (%p237) target = $region12
    $region11: #{multihead_effb4_forward.1} parent=5 // pred_region
      %s241 = ssub.s32 %s13, 1
      // Predicated region
      $region13: #{multihead_effb4_forward.1} parent=11 // pred_check
        %p242 = pneg %p81
      $region14: #{multihead_effb4_forward.1} parent=11 // pred_check_branch
        %244 = sbr.rel (%p242) target = $region16
      $region15: #{multihead_effb4_forward.1} parent=11 // pred_region
        _
      $region16: #{multihead_effb4_forward.1} parent=11 // pred_fallthru
        _
      // Predicated region
      $region17: #{multihead_effb4_forward.1} parent=11 // pred_check
        %p245 = pneg %p102
      $region18: #{multihead_effb4_forward.1} parent=11 // pred_check_branch
        %247 = sbr.rel (%p245) target = $region20
      $region19: #{multihead_effb4_forward.1} parent=11 // pred_region
        _
      $region20: #{multihead_effb4_forward.1} parent=11 // pred_fallthru
        _
      // Predicated region
      $region21: #{multihead_effb4_forward.1} parent=11 // pred_check
        %p248 = pneg %p128
      $region22: #{multihead_effb4_forward.1} parent=11 // pred_check_branch
        %250 = sbr.rel (%p248) target = $region24
      $region23: #{multihead_effb4_forward.1} parent=11 // pred_region
        %s251 = smul.u32 14, %s25
        %p252 = scmp.lt.s32.totalorder %s251, 13
        %s253 = scalar_select %p252, %s251, 13
        %s254 = smul.addr %s253, 4
        %s255 = scalar_lea.vmem %s3, %s254
        %s256 = smul.u32 14, %s25
      $region24: #{multihead_effb4_forward.1} parent=11 // pred_fallthru
        _
      // Predicated region
      $region25: #{multihead_effb4_forward.1} parent=11 // pred_check
        %p257 = pneg %p154
      $region26: #{multihead_effb4_forward.1} parent=11 // pred_check_branch
        %259 = sbr.rel (%p257) target = $region28
      $region27: #{multihead_effb4_forward.1} parent=11 // pred_region
        %s260 = smul.u32 14, %s25
        %p261 = scmp.lt.s32.totalorder %s260, 13
        %s262 = scalar_select %p261, %s260, 13
        %s263 = scalar_lea.vmem %s4, %s262
        %s264 = smul.u32 14, %s25
      $region28: #{multihead_effb4_forward.1} parent=11 // pred_fallthru
        _
      // Predicated region
      $region29: #{multihead_effb4_forward.1} parent=11 // pred_check
        %p265 = pneg %p180
      $region30: #{multihead_effb4_forward.1} parent=11 // pred_check_branch
        %267 = sbr.rel (%p265) target = $region32
      $region31: #{multihead_effb4_forward.1} parent=11 // pred_region
        %s268 = smul.u32 224, %s25
        %p269 = scmp.lt.s32.totalorder %s268, 223
        %s270 = scalar_select %p269, %s268, 223
        %s271 = smul.addr %s270, 8
        %s272 = scalar_lea.vmem %s5, %s271
        %s273 = smul.u32 224, %s25
      $region32: #{multihead_effb4_forward.1} parent=11 // pred_fallthru
        _
      // Predicated region
      $region33: #{multihead_effb4_forward.1} parent=11 // pred_check
        %p274 = pneg %p201
      $region34: #{multihead_effb4_forward.1} parent=11 // pred_check_branch
        %276 = sbr.rel (%p274) target = $region36
      $region35: #{multihead_effb4_forward.1} parent=11 // pred_region
        _
      $region36: #{multihead_effb4_forward.1} parent=11 // pred_fallthru
        _
    $region12: #{multihead_effb4_forward.1} parent=5 // pred_fallthru
      _
    %p277 = scmp.lt.s32.totalorder %s13, 2
    // Predicated region
    $region37: #{multihead_effb4_forward.1} parent=5 // pred_check
      %p278 = pneg %p277
    $region38: #{multihead_effb4_forward.1} parent=5 // pred_check_branch
      %280 = sbr.rel (%p278) target = $region40
    $region39: #{multihead_effb4_forward.1} parent=5 // pred_region
      // Predicated region
      $region41: #{multihead_effb4_forward.1} parent=39 // pred_check
        %p281 = pneg %p54
      $region42: #{multihead_effb4_forward.1} parent=39 // pred_check_branch
        %283 = sbr.rel (%p281) target = $region44
      $region43: #{multihead_effb4_forward.1} parent=39 // pred_region
        %s284 = smul.u32 32, %s21
        %p285 = scmp.lt.s32.totalorder %s20, 1
        %s286 = scalar_select %p285, %s20, 1
        %p287 = scmp.lt.s32.totalorder %s284, 31
        %s288 = scalar_select %p287, %s284, 31
        %s289 = smul.addr %s286, 32
        %s290 = sadd.s32 %s288, %s289
        %s291 = smul.addr %s290, 4
        %s292 = scalar_lea.vmem %s0, %s291
        %s293 = smul.u32 32, %s21
      $region44: #{multihead_effb4_forward.1} parent=39 // pred_fallthru
        _
    $region40: #{multihead_effb4_forward.1} parent=5 // pred_fallthru
      _
    %p294 = scmp.le.s32.totalorder 1, %s13
    %p295 = scmp.lt.s32.totalorder %s13, 3
    %p296 = pnand %p294, %p295
    %p297 = pneg %p296
    // Predicated region
    $region45: #{multihead_effb4_forward.1} parent=5 // pred_check
      _
    $region46: #{multihead_effb4_forward.1} parent=5 // pred_check_branch
      %299 = sbr.rel (%p296) target = $region48
    $region47: #{multihead_effb4_forward.1} parent=5 // pred_region
      %s300 = ssub.s32 %s13, 1
      %s301 = smul.u32 32, %s24
      %p302 = scmp.lt.s32.totalorder %s23, 1
      %s303 = scalar_select %p302, %s23, 1
      %p304 = scmp.lt.s32.totalorder %s301, 31
      %s305 = scalar_select %p304, %s301, 31
      %s306 = smul.addr %s303, 32
      %s307 = sadd.s32 %s305, %s306
      %s308 = smul.addr %s307, 4
      %s309 = scalar_lea.vmem %s0, %s308
      %p310 = pneg %p60
      %p311 = pneg %p57
      %p312 = pneg %p81
      %p313 = pneg %p78
      %p314 = pneg %p102
      %p315 = pneg %p99
      %s316 = smul.u32 14, %s25
      %p317 = scmp.lt.s32.totalorder %s316, 13
      %s318 = scalar_select %p317, %s316, 13
      %s319 = smul.addr %s318, 4
      %s320 = scalar_lea.vmem %s3, %s319
      %p321 = pneg %p128
      %p322 = pneg %p125
      %s323 = smul.u32 14, %s25
      %p324 = scmp.lt.s32.totalorder %s323, 13
      %s325 = scalar_select %p324, %s323, 13
      %s326 = scalar_lea.vmem %s4, %s325
      %p327 = pneg %p154
      %p328 = pneg %p151
      %s329 = smul.u32 224, %s25
      %p330 = scmp.lt.s32.totalorder %s329, 223
      %s331 = scalar_select %p330, %s329, 223
      %s332 = smul.addr %s331, 8
      %s333 = scalar_lea.vmem %s5, %s332
      %p334 = pneg %p180
      %p335 = pneg %p177
      %p336 = pneg %p201
      %p337 = pneg %p198
      %p338 = pneg %p227
      %p339 = pneg %p224
      %p340 = scmp.lt.s32.totalorder %s23, 1
      %s341 = scalar_select %p340, %s23, 1
      %s342 = smul.addr %s341, 8
      %s343 = scalar_lea.vmem %s7, %s342
      %s344 = smul.u32 32, %s24
      %p345 = scmp.lt.s32.totalorder %s23, 1
      %s346 = scalar_select %p345, %s23, 1
      %p347 = scmp.lt.s32.totalorder %s344, 31
      %s348 = scalar_select %p347, %s344, 31
      %s349 = smul.addr %s346, 32
      %s350 = sadd.s32 %s348, %s349
      %s351 = smul.addr %s350, 4
      %s352 = scalar_lea.vmem %s0, %s351
      %s353 = smul.u32 32, %s24
      %s354 = smul.u32 14, %s25
      %p355 = scmp.lt.s32.totalorder %s354, 13
      %s356 = scalar_select %p355, %s354, 13
      %s357 = smul.addr %s356, 4
      %s358 = scalar_lea.vmem %s3, %s357
      %s359 = smul.u32 14, %s25
      %s360 = smul.u32 14, %s25
      %p361 = scmp.lt.s32.totalorder %s360, 13
      %s362 = scalar_select %p361, %s360, 13
      %s363 = scalar_lea.vmem %s4, %s362
      %s364 = smul.u32 14, %s25
      %s365 = smul.u32 224, %s25
      %p366 = scmp.lt.s32.totalorder %s365, 223
      %s367 = scalar_select %p366, %s365, 223
      %s368 = smul.addr %s367, 8
      %s369 = scalar_lea.vmem %s5, %s368
      %s370 = smul.u32 224, %s25
      %p371 = scmp.lt.s32.totalorder %s23, 1
      %s372 = scalar_select %p371, %s23, 1
      %s373 = smul.addr %s372, 8
      %s374 = scalar_lea.vmem %s7, %s373
      %p376 = scmp.eq.s32.totalorder %s24, 0
      %p377 = scmp.eq.s32.totalorder %s25, 0
      %p378 = pnand %p376, %p377
      %p379 = pneg %p378
      // Predicated region
      $region49: #{multihead_effb4_forward.1} parent=47 // pred_check
        _
      $region50: #{multihead_effb4_forward.1} parent=47 // pred_check_branch
        %381 = sbr.rel (%p378) target = $region52
      $region51: #{multihead_effb4_forward.1} parent=47 // pred_region
        %382 = vst [vmem:[%s374] sm:$0xff] 0.0
      $region52: #{multihead_effb4_forward.1} parent=47 // pred_fallthru
        _
      %v383 = vld [vmem:[%s352] sm:$0xf]
      %v384 = vld [vmem:[%s352 + $0x4] sm:$0xf]
      %v385 = vld [vmem:[%s352 + $0x8] sm:$0xf]
      %v386 = vld [vmem:[%s352 + $0xc] sm:$0xf]
      %v387 = vld [vmem:[%s352 + $0x10] sm:$0xf]
      %v388 = vld [vmem:[%s352 + $0x14] sm:$0xf]
      %v389 = vld [vmem:[%s352 + $0x18] sm:$0xf]
      %v390 = vld [vmem:[%s352 + $0x1c] sm:$0xf]
      %v391 = vld [vmem:[%s352 + $0x20] sm:$0xf]
      %v392 = vld [vmem:[%s352 + $0x24] sm:$0xf]
      %v393 = vld [vmem:[%s352 + $0x28] sm:$0xf]
      %v394 = vld [vmem:[%s352 + $0x2c] sm:$0xf]
      %v395 = vld [vmem:[%s352 + $0x30] sm:$0xf]
      %v396 = vld [vmem:[%s352 + $0x34] sm:$0xf]
      %v397 = vld [vmem:[%s352 + $0x38] sm:$0xf]
      %v398 = vld [vmem:[%s352 + $0x3c] sm:$0xf]
      %v399 = vld [vmem:[%s352 + $0x40] sm:$0xf]
      %v400 = vld [vmem:[%s352 + $0x44] sm:$0xf]
      %v401 = vld [vmem:[%s352 + $0x48] sm:$0xf]
      %v402 = vld [vmem:[%s352 + $0x4c] sm:$0xf]
      %v403 = vld [vmem:[%s352 + $0x50] sm:$0xf]
      %v404 = vld [vmem:[%s352 + $0x54] sm:$0xf]
      %v405 = vld [vmem:[%s352 + $0x58] sm:$0xf]
      %v406 = vld [vmem:[%s352 + $0x5c] sm:$0xf]
      %v407 = vld [vmem:[%s352 + $0x60] sm:$0xf]
      %v408 = vld [vmem:[%s352 + $0x64] sm:$0xf]
      %v409 = vld [vmem:[%s352 + $0x68] sm:$0xf]
      %v410 = vld [vmem:[%s352 + $0x6c] sm:$0xf]
      %v411 = vld [vmem:[%s352 + $0x70] sm:$0xf]
      %v412 = vld [vmem:[%s352 + $0x74] sm:$0xf]
      %v413 = vld [vmem:[%s352 + $0x78] sm:$0xf]
      %v414 = vld [vmem:[%s352 + $0x7c] sm:$0xf]
      %v415 = vld [vmem:[%s1] sm:$0xf]
      %v416 = vld [vmem:[%s1 + $0x4] sm:$0xf]
      %v417 = vld [vmem:[%s1 + $0x8] sm:$0xf]
      %v418 = vld [vmem:[%s1 + $0xc] sm:$0x3]
      %v419 = vld [vmem:[%s2] sm:$0x1]
      %v421 = vlaneseq
      %v422 = vshrl.u32 %v421, 7
      %v423 = vsub.s32 0, %v422
      %v424 = vrot.slane %v419, %v423
      %v458 = vunpack.c.l.b16 %v383
      %v459 = vunpack.c.l.b16 %v384
      %v460 = vunpack.c.l.b16 %v385
      %v461 = vunpack.c.l.b16 %v386
      %v462 = vunpack.c.l.b16 %v387
      %v463 = vunpack.c.l.b16 %v388
      %v464 = vunpack.c.l.b16 %v389
      %v465 = vunpack.c.l.b16 %v390
      %v466 = vunpack.c.l.b16 %v391
      %v467 = vunpack.c.l.b16 %v392
      %v468 = vunpack.c.l.b16 %v393
      %v469 = vunpack.c.l.b16 %v394
      %v470 = vunpack.c.l.b16 %v395
      %v471 = vunpack.c.l.b16 %v396
      %v472 = vunpack.c.l.b16 %v397
      %v473 = vunpack.c.l.b16 %v398
      %v474 = vunpack.c.l.b16 %v399
      %v475 = vunpack.c.l.b16 %v400
      %v476 = vunpack.c.l.b16 %v401
      %v477 = vunpack.c.l.b16 %v402
      %v478 = vunpack.c.l.b16 %v403
      %v479 = vunpack.c.l.b16 %v404
      %v480 = vunpack.c.l.b16 %v405
      %v481 = vunpack.c.l.b16 %v406
      %v482 = vunpack.c.l.b16 %v407
      %v483 = vunpack.c.l.b16 %v408
      %v484 = vunpack.c.l.b16 %v409
      %v485 = vunpack.c.l.b16 %v410
      %v486 = vunpack.c.l.b16 %v411
      %v487 = vunpack.c.l.b16 %v412
      %v488 = vunpack.c.l.b16 %v413
      %v489 = vunpack.c.l.b16 %v414
      %v490 = vpack.c.b16 %v459, %v458
      %v491 = vpack.c.b16 %v461, %v460
      %v492 = vpack.c.b16 %v463, %v462
      %v493 = vpack.c.b16 %v465, %v464
      %v494 = vpack.c.b16 %v467, %v466
      %v495 = vpack.c.b16 %v469, %v468
      %v496 = vpack.c.b16 %v471, %v470
      %v497 = vpack.c.b16 %v473, %v472
      %v498 = vpack.c.b16 %v475, %v474
      %v499 = vpack.c.b16 %v477, %v476
      %v500 = vpack.c.b16 %v479, %v478
      %v501 = vpack.c.b16 %v481, %v480
      %v502 = vpack.c.b16 %v483, %v482
      %v503 = vpack.c.b16 %v485, %v484
      %v504 = vpack.c.b16 %v487, %v486
      %v505 = vpack.c.b16 %v489, %v488
      %v510 = vunpack.c.l.b16 %v415
      %v511 = vunpack.c.l.b16 %v416
      %v512 = vunpack.c.l.b16 %v417
      %v513 = vunpack.c.l.b16 %v418
      %v514 = vpack.c.b16 %v511, %v510
      %v515 = vpack.c.b16 %v513, %v512
      %vm517 = vcmask 220160
      %v519 = vsel %vm517, %v490, 0
      %v522 = vsel %vm517, %v491, 0
      %v525 = vsel %vm517, %v492, 0
      %v528 = vsel %vm517, %v493, 0
      %v531 = vsel %vm517, %v494, 0
      %v534 = vsel %vm517, %v495, 0
      %v537 = vsel %vm517, %v496, 0
      %v540 = vsel %vm517, %v497, 0
      %v543 = vsel %vm517, %v498, 0
      %v546 = vsel %vm517, %v499, 0
      %v549 = vsel %vm517, %v500, 0
      %v552 = vsel %vm517, %v501, 0
      %v555 = vsel %vm517, %v502, 0
      %v558 = vsel %vm517, %v503, 0
      %v561 = vsel %vm517, %v504, 0
      %v564 = vsel %vm517, %v505, 0
      %vm566 = vcmask 1044480
      %vm567 = vcmask 1045504
      %v568 = vsel %vm566, 4294967295, 65535
      %v569 = vsel %vm567, %v568, 0
      %v571 = vand.u32 %v515, %v569
      %573 = vmatprep.subr.bf16.mxu0 0
      %574 = vmatpush1.bf16.msra.mxu0 %v514
      %575 = vmatprep.subr.bf16.mxu0 0
      %576 = vmatpush1.bf16.msra.mxu0 %v571
      %577 = vmatprep.subr.bf16.mxu0 0
      %578 = vmatpush1.bf16.msra.mxu0 0
      %579 = vmatprep.subr.bf16.mxu0 0
      %580 = vmatpush1.bf16.msra.mxu0 0
      %581 = vmatprep.subr.bf16.mxu0 0
      %582 = vmatpush1.bf16.msra.mxu0 0
      %583 = vmatprep.subr.bf16.mxu0 0
      %584 = vmatpush1.bf16.msra.mxu0 0
      %585 = vmatprep.subr.bf16.mxu0 0
      %586 = vmatpush1.bf16.msra.mxu0 0
      %587 = vmatprep.subr.bf16.mxu0 0
      %588 = vmatpush1.bf16.msra.mxu0 0
      %589 = vmatprep.subr.bf16.mxu0 0
      %590 = vmatpush1.bf16.msra.mxu0 0
      %591 = vmatprep.subr.bf16.mxu0 0
      %592 = vmatpush1.bf16.msra.mxu0 0
      %593 = vmatprep.subr.bf16.mxu0 0
      %594 = vmatpush1.bf16.msra.mxu0 0
      %595 = vmatprep.subr.bf16.mxu0 0
      %596 = vmatpush1.bf16.msra.mxu0 0
      %597 = vmatprep.subr.bf16.mxu0 0
      %598 = vmatpush1.bf16.msra.mxu0 0
      %599 = vmatprep.subr.bf16.mxu0 0
      %600 = vmatpush1.bf16.msra.mxu0 0
      %601 = vmatprep.subr.bf16.mxu0 0
      %602 = vmatpush1.bf16.msra.mxu0 0
      %603 = vmatprep.subr.bf16.mxu0 0
      %604 = vmatpush1.bf16.msra.mxu0 0
      %605 = vmatprep.mubr.bf16.mxu0 0
      %606 = vmatmul.mubr.bf16.gmra.mrb[0].mxu0 %v519
      %v607 = vpop.f32.mrb[0].mxu0
      %v608 = vadd.f32 %v424, %v607
      %v609 = vpop.f32.mrb[0].mxu0
      %v610 = vpop.f32.mrb[0].mxu0
      %v611 = vadd.f32 %v424, %v610
      %v612 = vpop.f32.mrb[0].mxu0
      %613 = vmatprep.mubr.bf16.mxu0 0
      %614 = vmatmul.mubr.bf16.gmra.mrb[0].mxu0 %v522
      %v615 = vpop.f32.mrb[0].mxu0
      %v616 = vadd.f32 %v424, %v615
      %v617 = vpop.f32.mrb[0].mxu0
      %v618 = vpop.f32.mrb[0].mxu0
      %v619 = vadd.f32 %v424, %v618
      %v620 = vpop.f32.mrb[0].mxu0
      %621 = vmatprep.mubr.bf16.mxu0 0
      %622 = vmatmul.mubr.bf16.gmra.mrb[0].mxu0 %v525
      %v623 = vpop.f32.mrb[0].mxu0
      %v624 = vadd.f32 %v424, %v623
      %v625 = vpop.f32.mrb[0].mxu0
      %v626 = vpop.f32.mrb[0].mxu0
      %v627 = vadd.f32 %v424, %v626
      %v628 = vpop.f32.mrb[0].mxu0
      %629 = vmatprep.mubr.bf16.mxu0 0
      %630 = vmatmul.mubr.bf16.gmra.mrb[0].mxu0 %v528
      %v631 = vpop.f32.mrb[0].mxu0
      %v632 = vadd.f32 %v424, %v631
      %v633 = vpop.f32.mrb[0].mxu0
      %v634 = vpop.f32.mrb[0].mxu0
      %v635 = vadd.f32 %v424, %v634
      %v636 = vpop.f32.mrb[0].mxu0
      %637 = vmatprep.mubr.bf16.mxu0 0
      %638 = vmatmul.mubr.bf16.gmra.mrb[0].mxu0 %v531
      %v639 = vpop.f32.mrb[0].mxu0
      %v640 = vadd.f32 %v424, %v639
      %v641 = vpop.f32.mrb[0].mxu0
      %v642 = vpop.f32.mrb[0].mxu0
      %v643 = vadd.f32 %v424, %v642
      %v644 = vpop.f32.mrb[0].mxu0
      %645 = vmatprep.mubr.bf16.mxu0 0
      %646 = vmatmul.mubr.bf16.gmra.mrb[0].mxu0 %v534
      %v647 = vpop.f32.mrb[0].mxu0
      %v648 = vadd.f32 %v424, %v647
      %v649 = vpop.f32.mrb[0].mxu0
      %v650 = vpop.f32.mrb[0].mxu0
      %v651 = vadd.f32 %v424, %v650
      %v652 = vpop.f32.mrb[0].mxu0
      %653 = vmatprep.mubr.bf16.mxu0 0
      %654 = vmatmul.mubr.bf16.gmra.mrb[0].mxu0 %v537
      %v655 = vpop.f32.mrb[0].mxu0
      %v656 = vadd.f32 %v424, %v655
      %v657 = vpop.f32.mrb[0].mxu0
      %v658 = vpop.f32.mrb[0].mxu0
      %v659 = vadd.f32 %v424, %v658
      %v660 = vpop.f32.mrb[0].mxu0
      %661 = vmatprep.mubr.bf16.mxu0 0
      %662 = vmatmul.mubr.bf16.gmra.mrb[0].mxu0 %v540
      %v663 = vpop.f32.mrb[0].mxu0
      %v664 = vadd.f32 %v424, %v663
      %v665 = vpop.f32.mrb[0].mxu0
      %v666 = vpop.f32.mrb[0].mxu0
      %v667 = vadd.f32 %v424, %v666
      %v668 = vpop.f32.mrb[0].mxu0
      %669 = vmatprep.mubr.bf16.mxu0 0
      %670 = vmatmul.mubr.bf16.gmra.mrb[0].mxu0 %v543
      %v671 = vpop.f32.mrb[0].mxu0
      %v672 = vadd.f32 %v424, %v671
      %v673 = vpop.f32.mrb[0].mxu0
      %v674 = vpop.f32.mrb[0].mxu0
      %v675 = vadd.f32 %v424, %v674
      %v676 = vpop.f32.mrb[0].mxu0
      %677 = vmatprep.mubr.bf16.mxu0 0
      %678 = vmatmul.mubr.bf16.gmra.mrb[0].mxu0 %v546
      %v679 = vpop.f32.mrb[0].mxu0
      %v680 = vadd.f32 %v424, %v679
      %v681 = vpop.f32.mrb[0].mxu0
      %v682 = vpop.f32.mrb[0].mxu0
      %v683 = vadd.f32 %v424, %v682
      %v684 = vpop.f32.mrb[0].mxu0
      %685 = vmatprep.mubr.bf16.mxu0 0
      %686 = vmatmul.mubr.bf16.gmra.mrb[0].mxu0 %v549
      %v687 = vpop.f32.mrb[0].mxu0
      %v688 = vadd.f32 %v424, %v687
      %v689 = vpop.f32.mrb[0].mxu0
      %v690 = vpop.f32.mrb[0].mxu0
      %v691 = vadd.f32 %v424, %v690
      %v692 = vpop.f32.mrb[0].mxu0
      %693 = vmatprep.mubr.bf16.mxu0 0
      %694 = vmatmul.mubr.bf16.gmra.mrb[0].mxu0 %v552
      %v695 = vpop.f32.mrb[0].mxu0
      %v696 = vadd.f32 %v424, %v695
      %v697 = vpop.f32.mrb[0].mxu0
      %v698 = vpop.f32.mrb[0].mxu0
      %v699 = vadd.f32 %v424, %v698
      %v700 = vpop.f32.mrb[0].mxu0
      %701 = vmatprep.mubr.bf16.mxu0 0
      %702 = vmatmul.mubr.bf16.gmra.mrb[0].mxu0 %v555
      %v703 = vpop.f32.mrb[0].mxu0
      %v704 = vadd.f32 %v424, %v703
      %v705 = vpop.f32.mrb[0].mxu0
      %v706 = vpop.f32.mrb[0].mxu0
      %v707 = vadd.f32 %v424, %v706
      %v708 = vpop.f32.mrb[0].mxu0
      %709 = vmatprep.mubr.bf16.mxu0 0
      %710 = vmatmul.mubr.bf16.gmra.mrb[0].mxu0 %v558
      %v711 = vpop.f32.mrb[0].mxu0
      %v712 = vadd.f32 %v424, %v711
      %v713 = vpop.f32.mrb[0].mxu0
      %v714 = vpop.f32.mrb[0].mxu0
      %v715 = vadd.f32 %v424, %v714
      %v716 = vpop.f32.mrb[0].mxu0
      %717 = vmatprep.mubr.bf16.mxu0 0
      %718 = vmatmul.mubr.bf16.gmra.mrb[0].mxu0 %v561
      %v719 = vpop.f32.mrb[0].mxu0
      %v720 = vadd.f32 %v424, %v719
      %v721 = vpop.f32.mrb[0].mxu0
      %v722 = vpop.f32.mrb[0].mxu0
      %v723 = vadd.f32 %v424, %v722
      %v724 = vpop.f32.mrb[0].mxu0
      %725 = vmatprep.mubr.bf16.mxu0 0
      %726 = vmatmul.mubr.bf16.gmra.mrb[0].mxu0 %v564
      %v727 = vpop.f32.mrb[0].mxu0
      %v728 = vadd.f32 %v424, %v727
      %v729 = vpop.f32.mrb[0].mxu0
      %v730 = vpop.f32.mrb[0].mxu0
      %v731 = vadd.f32 %v424, %v730
      %v732 = vpop.f32.mrb[0].mxu0
      %733 = vdwg.mxu0
      %v734 = vxor.u32 %v608, 2147483648
      %v735 = vxor.u32 %v611, 2147483648
      %v736 = vxor.u32 %v616, 2147483648
      %v737 = vxor.u32 %v619, 2147483648
      %v738 = vxor.u32 %v624, 2147483648
      %v739 = vxor.u32 %v627, 2147483648
      %v740 = vxor.u32 %v632, 2147483648
      %v741 = vxor.u32 %v635, 2147483648
      %v742 = vxor.u32 %v640, 2147483648
      %v743 = vxor.u32 %v643, 2147483648
      %v744 = vxor.u32 %v648, 2147483648
      %v745 = vxor.u32 %v651, 2147483648
      %v746 = vxor.u32 %v656, 2147483648
      %v747 = vxor.u32 %v659, 2147483648
      %v748 = vxor.u32 %v664, 2147483648
      %v749 = vxor.u32 %v667, 2147483648
      %v750 = vxor.u32 %v672, 2147483648
      %v751 = vxor.u32 %v675, 2147483648
      %v752 = vxor.u32 %v680, 2147483648
      %v753 = vxor.u32 %v683, 2147483648
      %v754 = vxor.u32 %v688, 2147483648
      %v755 = vxor.u32 %v691, 2147483648
      %v756 = vxor.u32 %v696, 2147483648
      %v757 = vxor.u32 %v699, 2147483648
      %v758 = vxor.u32 %v704, 2147483648
      %v759 = vxor.u32 %v707, 2147483648
      %v760 = vxor.u32 %v712, 2147483648
      %v761 = vxor.u32 %v715, 2147483648
      %v762 = vxor.u32 %v720, 2147483648
      %v763 = vxor.u32 %v723, 2147483648
      %v764 = vxor.u32 %v728, 2147483648
      %v765 = vxor.u32 %v731, 2147483648
      %v766 = vmul.f32 %v734, 1.442695
      %v767 = vpow.pop %v766
      %v768 = vmul.f32 %v735, 1.442695
      %v769 = vpow.pop %v768
      %v770 = vmul.f32 %v736, 1.442695
      %v771 = vpow.pop %v770
      %v772 = vmul.f32 %v737, 1.442695
      %v773 = vpow.pop %v772
      %v774 = vmul.f32 %v738, 1.442695
      %v775 = vpow.pop %v774
      %v776 = vmul.f32 %v739, 1.442695
      %v777 = vpow.pop %v776
      %v778 = vmul.f32 %v740, 1.442695
      %v779 = vpow.pop %v778
      %v780 = vmul.f32 %v741, 1.442695
      %v781 = vpow.pop %v780
      %v782 = vmul.f32 %v742, 1.442695
      %v783 = vpow.pop %v782
      %v784 = vmul.f32 %v743, 1.442695
      %v785 = vpow.pop %v784
      %v786 = vmul.f32 %v744, 1.442695
      %v787 = vpow.pop %v786
      %v788 = vmul.f32 %v745, 1.442695
      %v789 = vpow.pop %v788
      %v790 = vmul.f32 %v746, 1.442695
      %v791 = vpow.pop %v790
      %v792 = vmul.f32 %v747, 1.442695
      %v793 = vpow.pop %v792
      %v794 = vmul.f32 %v748, 1.442695
      %v795 = vpow.pop %v794
      %v796 = vmul.f32 %v749, 1.442695
      %v797 = vpow.pop %v796
      %v798 = vmul.f32 %v750, 1.442695
      %v799 = vpow.pop %v798
      %v800 = vmul.f32 %v751, 1.442695
      %v801 = vpow.pop %v800
      %v802 = vmul.f32 %v752, 1.442695
      %v803 = vpow.pop %v802
      %v804 = vmul.f32 %v753, 1.442695
      %v805 = vpow.pop %v804
      %v806 = vmul.f32 %v754, 1.442695
      %v807 = vpow.pop %v806
      %v808 = vmul.f32 %v755, 1.442695
      %v809 = vpow.pop %v808
      %v810 = vmul.f32 %v756, 1.442695
      %v811 = vpow.pop %v810
      %v812 = vmul.f32 %v757, 1.442695
      %v813 = vpow.pop %v812
      %v814 = vmul.f32 %v758, 1.442695
      %v815 = vpow.pop %v814
      %v816 = vmul.f32 %v759, 1.442695
      %v817 = vpow.pop %v816
      %v818 = vmul.f32 %v760, 1.442695
      %v819 = vpow.pop %v818
      %v820 = vmul.f32 %v761, 1.442695
      %v821 = vpow.pop %v820
      %v822 = vmul.f32 %v762, 1.442695
      %v823 = vpow.pop %v822
      %v824 = vmul.f32 %v763, 1.442695
      %v825 = vpow.pop %v824
      %v826 = vmul.f32 %v764, 1.442695
      %v827 = vpow.pop %v826
      %v828 = vmul.f32 %v765, 1.442695
      %v829 = vpow.pop %v828
      %v830 = vadd.f32 %v767, 1.0
      %v831 = vadd.f32 %v769, 1.0
      %v832 = vadd.f32 %v771, 1.0
      %v833 = vadd.f32 %v773, 1.0
      %v834 = vadd.f32 %v775, 1.0
      %v835 = vadd.f32 %v777, 1.0
      %v836 = vadd.f32 %v779, 1.0
      %v837 = vadd.f32 %v781, 1.0
      %v838 = vadd.f32 %v783, 1.0
      %v839 = vadd.f32 %v785, 1.0
      %v840 = vadd.f32 %v787, 1.0
      %v841 = vadd.f32 %v789, 1.0
      %v842 = vadd.f32 %v791, 1.0
      %v843 = vadd.f32 %v793, 1.0
      %v844 = vadd.f32 %v795, 1.0
      %v845 = vadd.f32 %v797, 1.0
      %v846 = vadd.f32 %v799, 1.0
      %v847 = vadd.f32 %v801, 1.0
      %v848 = vadd.f32 %v803, 1.0
      %v849 = vadd.f32 %v805, 1.0
      %v850 = vadd.f32 %v807, 1.0
      %v851 = vadd.f32 %v809, 1.0
      %v852 = vadd.f32 %v811, 1.0
      %v853 = vadd.f32 %v813, 1.0
      %v854 = vadd.f32 %v815, 1.0
      %v855 = vadd.f32 %v817, 1.0
      %v856 = vadd.f32 %v819, 1.0
      %v857 = vadd.f32 %v821, 1.0
      %v858 = vadd.f32 %v823, 1.0
      %v859 = vadd.f32 %v825, 1.0
      %v860 = vadd.f32 %v827, 1.0
      %v861 = vadd.f32 %v829, 1.0
      %v862 = vrcp.pop %v830
      %v863 = vmul.f32 1.0, %v862
      %v864 = vrcp.pop %v831
      %v865 = vmul.f32 1.0, %v864
      %v866 = vrcp.pop %v832
      %v867 = vmul.f32 1.0, %v866
      %v868 = vrcp.pop %v833
      %v869 = vmul.f32 1.0, %v868
      %v870 = vrcp.pop %v834
      %v871 = vmul.f32 1.0, %v870
      %v872 = vrcp.pop %v835
      %v873 = vmul.f32 1.0, %v872
      %v874 = vrcp.pop %v836
      %v875 = vmul.f32 1.0, %v874
      %v876 = vrcp.pop %v837
      %v877 = vmul.f32 1.0, %v876
      %v878 = vrcp.pop %v838
      %v879 = vmul.f32 1.0, %v878
      %v880 = vrcp.pop %v839
      %v881 = vmul.f32 1.0, %v880
      %v882 = vrcp.pop %v840
      %v883 = vmul.f32 1.0, %v882
      %v884 = vrcp.pop %v841
      %v885 = vmul.f32 1.0, %v884
      %v886 = vrcp.pop %v842
      %v887 = vmul.f32 1.0, %v886
      %v888 = vrcp.pop %v843
      %v889 = vmul.f32 1.0, %v888
      %v890 = vrcp.pop %v844
      %v891 = vmul.f32 1.0, %v890
      %v892 = vrcp.pop %v845
      %v893 = vmul.f32 1.0, %v892
      %v894 = vrcp.pop %v846
      %v895 = vmul.f32 1.0, %v894
      %v896 = vrcp.pop %v847
      %v897 = vmul.f32 1.0, %v896
      %v898 = vrcp.pop %v848
      %v899 = vmul.f32 1.0, %v898
      %v900 = vrcp.pop %v849
      %v901 = vmul.f32 1.0, %v900
      %v902 = vrcp.pop %v850
      %v903 = vmul.f32 1.0, %v902
      %v904 = vrcp.pop %v851
      %v905 = vmul.f32 1.0, %v904
      %v906 = vrcp.pop %v852
      %v907 = vmul.f32 1.0, %v906
      %v908 = vrcp.pop %v853
      %v909 = vmul.f32 1.0, %v908
      %v910 = vrcp.pop %v854
      %v911 = vmul.f32 1.0, %v910
      %v912 = vrcp.pop %v855
      %v913 = vmul.f32 1.0, %v912
      %v914 = vrcp.pop %v856
      %v915 = vmul.f32 1.0, %v914
      %v916 = vrcp.pop %v857
      %v917 = vmul.f32 1.0, %v916
      %v918 = vrcp.pop %v858
      %v919 = vmul.f32 1.0, %v918
      %v920 = vrcp.pop %v859
      %v921 = vmul.f32 1.0, %v920
      %v922 = vrcp.pop %v860
      %v923 = vmul.f32 1.0, %v922
      %v924 = vrcp.pop %v861
      %v925 = vmul.f32 1.0, %v924
      %v926 = vmul.f32 %v608, %v863
      %v927 = vmul.f32 %v611, %v865
      %v928 = vmul.f32 %v616, %v867
      %v929 = vmul.f32 %v619, %v869
      %v930 = vmul.f32 %v624, %v871
      %v931 = vmul.f32 %v627, %v873
      %v932 = vmul.f32 %v632, %v875
      %v933 = vmul.f32 %v635, %v877
      %v934 = vmul.f32 %v640, %v879
      %v935 = vmul.f32 %v643, %v881
      %v936 = vmul.f32 %v648, %v883
      %v937 = vmul.f32 %v651, %v885
      %v938 = vmul.f32 %v656, %v887
      %v939 = vmul.f32 %v659, %v889
      %v940 = vmul.f32 %v664, %v891
      %v941 = vmul.f32 %v667, %v893
      %v942 = vmul.f32 %v672, %v895
      %v943 = vmul.f32 %v675, %v897
      %v944 = vmul.f32 %v680, %v899
      %v945 = vmul.f32 %v683, %v901
      %v946 = vmul.f32 %v688, %v903
      %v947 = vmul.f32 %v691, %v905
      %v948 = vmul.f32 %v696, %v907
      %v949 = vmul.f32 %v699, %v909
      %v950 = vmul.f32 %v704, %v911
      %v951 = vmul.f32 %v707, %v913
      %v952 = vmul.f32 %v712, %v915
      %v953 = vmul.f32 %v715, %v917
      %v954 = vmul.f32 %v720, %v919
      %v955 = vmul.f32 %v723, %v921
      %v956 = vmul.f32 %v728, %v923
      %v957 = vmul.f32 %v731, %v925
      %v958 = vpack.c.bf16 %v927, %v926
      %v959 = vpack.c.bf16 %v929, %v928
      %v960 = vpack.c.bf16 %v931, %v930
      %v961 = vpack.c.bf16 %v933, %v932
      %v962 = vpack.c.bf16 %v935, %v934
      %v963 = vpack.c.bf16 %v937, %v936
      %v964 = vpack.c.bf16 %v939, %v938
      %v965 = vpack.c.bf16 %v941, %v940
      %v966 = vpack.c.bf16 %v943, %v942
      %v967 = vpack.c.bf16 %v945, %v944
      %v968 = vpack.c.bf16 %v947, %v946
      %v969 = vpack.c.bf16 %v949, %v948
      %v970 = vpack.c.bf16 %v951, %v950
      %v971 = vpack.c.bf16 %v953, %v952
      %v972 = vpack.c.bf16 %v955, %v954
      %v973 = vpack.c.bf16 %v957, %v956
      %v974 = vld [vmem:[%s358] sm:$0xff]
      %v975 = vld [vmem:[%s358 + $0x8] sm:$0xff]
      %v976 = vld [vmem:[%s358 + $0x10] sm:$0xff]
      %v977 = vld [vmem:[%s358 + $0x18] sm:$0xff]
      %v978 = vld [vmem:[%s358 + $0x20] sm:$0xff]
      %v979 = vld [vmem:[%s358 + $0x28] sm:$0xff]
      %v980 = vld [vmem:[%s358 + $0x30] sm:$0xff]
      %v981 = vld [vmem:[%s358 + $0x38] sm:$0xff]
      %v982 = vld [vmem:[%s358 + $0x40] sm:$0xff]
      %v983 = vld [vmem:[%s358 + $0x48] sm:$0xff]
      %v984 = vld [vmem:[%s358 + $0x50] sm:$0xff]
      %v985 = vld [vmem:[%s358 + $0x58] sm:$0xff]
      %v986 = vld [vmem:[%s358 + $0x60] sm:$0xff]
      %v987 = vld [vmem:[%s358 + $0x68] sm:$0xff]
      %v988 = vld [vmem:[%s358 + $0x70] sm:$0xff]
      %v989 = vld [vmem:[%s358 + $0x78] sm:$0xff]
      %v990 = vld [vmem:[%s358 + $0x80] sm:$0xff]
      %v991 = vld [vmem:[%s358 + $0x88] sm:$0xff]
      %v992 = vld [vmem:[%s358 + $0x90] sm:$0xff]
      %v993 = vld [vmem:[%s358 + $0x98] sm:$0xff]
      %v994 = vld [vmem:[%s358 + $0xa0] sm:$0xff]
      %v995 = vld [vmem:[%s358 + $0xa8] sm:$0xff]
      %v996 = vld [vmem:[%s358 + $0xb0] sm:$0xff]
      %v997 = vld [vmem:[%s358 + $0xb8] sm:$0xff]
      %v998 = vld [vmem:[%s358 + $0xc0] sm:$0xff]
      %v999 = vld [vmem:[%s358 + $0xc8] sm:$0xff]
      %v1000 = vld [vmem:[%s358 + $0xd0] sm:$0xff]
      %v1001 = vld [vmem:[%s358 + $0xd8] sm:$0xff]
      %v1002 = vld [vmem:[%s358 + $0xe0] sm:$0xff]
      %v1003 = vld [vmem:[%s358 + $0xe8] sm:$0xff]
      %v1004 = vld [vmem:[%s358 + $0xf0] sm:$0xff]
      %v1005 = vld [vmem:[%s358 + $0xf8] sm:$0xff]
      %v1006 = vld [vmem:[%s358 + $0x100] sm:$0xff]
      %v1007 = vld [vmem:[%s358 + $0x108] sm:$0xff]
      %v1008 = vld [vmem:[%s358 + $0x110] sm:$0xff]
      %v1009 = vld [vmem:[%s358 + $0x118] sm:$0xff]
      %v1010 = vld [vmem:[%s358 + $0x120] sm:$0xff]
      %v1011 = vld [vmem:[%s358 + $0x128] sm:$0xff]
      %v1012 = vld [vmem:[%s358 + $0x130] sm:$0xff]
      %v1013 = vld [vmem:[%s358 + $0x138] sm:$0xff]
      %v1014 = vld [vmem:[%s358 + $0x140] sm:$0xff]
      %v1015 = vld [vmem:[%s358 + $0x148] sm:$0xff]
      %v1016 = vld [vmem:[%s363] sm:$0xff]
      %v1017 = vld [vmem:[%s363 + $0x8] sm:$0x3f]
      %v1020 = vlaneseq
      %v1021 = vshrl.u32 %v1020, 7
      %v1022 = vsub.s32 0, %v1021
      %v1023 = vrot.slane %v1016, %v1022
      %v1024 = vlaneseq
      %v1025 = vshrl.u32 %v1024, 7
      %v1026 = vsub.s32 1, %v1025
      %v1027 = vrot.slane %v1016, %v1026
      %v1028 = vlaneseq
      %v1029 = vshrl.u32 %v1028, 7
      %v1030 = vsub.s32 2, %v1029
      %v1031 = vrot.slane %v1016, %v1030
      %v1032 = vlaneseq
      %v1033 = vshrl.u32 %v1032, 7
      %v1034 = vsub.s32 3, %v1033
      %v1035 = vrot.slane %v1016, %v1034
      %v1036 = vlaneseq
      %v1037 = vshrl.u32 %v1036, 7
      %v1038 = vsub.s32 4, %v1037
      %v1039 = vrot.slane %v1016, %v1038
      %v1040 = vlaneseq
      %v1041 = vshrl.u32 %v1040, 7
      %v1042 = vsub.s32 5, %v1041
      %v1043 = vrot.slane %v1016, %v1042
      %v1044 = vlaneseq
      %v1045 = vshrl.u32 %v1044, 7
      %v1046 = vsub.s32 6, %v1045
      %v1047 = vrot.slane %v1016, %v1046
      %v1048 = vlaneseq
      %v1049 = vshrl.u32 %v1048, 7
      %v1050 = vsub.s32 7, %v1049
      %v1051 = vrot.slane %v1016, %v1050
      %v1052 = vlaneseq
      %v1053 = vshrl.u32 %v1052, 7
      %v1054 = vsub.s32 0, %v1053
      %v1055 = vrot.slane %v1017, %v1054
      %v1056 = vlaneseq
      %v1057 = vshrl.u32 %v1056, 7
      %v1058 = vsub.s32 1, %v1057
      %v1059 = vrot.slane %v1017, %v1058
      %v1060 = vlaneseq
      %v1061 = vshrl.u32 %v1060, 7
      %v1062 = vsub.s32 2, %v1061
      %v1063 = vrot.slane %v1017, %v1062
      %v1064 = vlaneseq
      %v1065 = vshrl.u32 %v1064, 7
      %v1066 = vsub.s32 3, %v1065
      %v1067 = vrot.slane %v1017, %v1066
      %v1068 = vlaneseq
      %v1069 = vshrl.u32 %v1068, 7
      %v1070 = vsub.s32 4, %v1069
      %v1071 = vrot.slane %v1017, %v1070
      %v1072 = vlaneseq
      %v1073 = vshrl.u32 %v1072, 7
      %v1074 = vsub.s32 5, %v1073
      %v1075 = vrot.slane %v1017, %v1074
      %v1132 = vunpack.c.l.b16 %v974
      %v1133 = vunpack.c.h.b16 %v974
      %v1134 = vunpack.c.l.b16 %v975
      %v1135 = vunpack.c.h.b16 %v975
      %v1136 = vunpack.c.l.b16 %v976
      %v1137 = vunpack.c.h.b16 %v976
      %v1138 = vunpack.c.l.b16 %v977
      %v1139 = vunpack.c.h.b16 %v977
      %v1140 = vunpack.c.l.b16 %v978
      %v1141 = vunpack.c.h.b16 %v978
      %v1142 = vunpack.c.l.b16 %v979
      %v1143 = vunpack.c.h.b16 %v979
      %v1144 = vunpack.c.l.b16 %v980
      %v1145 = vunpack.c.h.b16 %v980
      %v1146 = vunpack.c.l.b16 %v981
      %v1147 = vunpack.c.h.b16 %v981
      %v1148 = vunpack.c.l.b16 %v982
      %v1149 = vunpack.c.h.b16 %v982
      %v1150 = vunpack.c.l.b16 %v983
      %v1151 = vunpack.c.h.b16 %v983
      %v1152 = vunpack.c.l.b16 %v984
      %v1153 = vunpack.c.h.b16 %v984
      %v1154 = vunpack.c.l.b16 %v985
      %v1155 = vunpack.c.h.b16 %v985
      %v1156 = vunpack.c.l.b16 %v986
      %v1157 = vunpack.c.h.b16 %v986
      %v1158 = vunpack.c.l.b16 %v987
      %v1159 = vunpack.c.h.b16 %v987
      %v1160 = vunpack.c.l.b16 %v988
      %v1161 = vunpack.c.h.b16 %v988
      %v1162 = vunpack.c.l.b16 %v989
      %v1163 = vunpack.c.h.b16 %v989
      %v1164 = vunpack.c.l.b16 %v990
      %v1165 = vunpack.c.h.b16 %v990
      %v1166 = vunpack.c.l.b16 %v991
      %v1167 = vunpack.c.h.b16 %v991
      %v1168 = vunpack.c.l.b16 %v992
      %v1169 = vunpack.c.h.b16 %v992
      %v1170 = vunpack.c.l.b16 %v993
      %v1171 = vunpack.c.h.b16 %v993
      %v1172 = vunpack.c.l.b16 %v994
      %v1173 = vunpack.c.h.b16 %v994
      %v1174 = vunpack.c.l.b16 %v995
      %v1175 = vunpack.c.h.b16 %v995
      %v1176 = vunpack.c.l.b16 %v996
      %v1177 = vunpack.c.h.b16 %v996
      %v1178 = vunpack.c.l.b16 %v997
      %v1179 = vunpack.c.h.b16 %v997
      %v1180 = vunpack.c.l.b16 %v998
      %v1181 = vunpack.c.h.b16 %v998
      %v1182 = vunpack.c.l.b16 %v999
      %v1183 = vunpack.c.h.b16 %v999
      %v1184 = vunpack.c.l.b16 %v1000
      %v1185 = vunpack.c.h.b16 %v1000
      %v1186 = vunpack.c.l.b16 %v1001
      %v1187 = vunpack.c.h.b16 %v1001
      %v1188 = vunpack.c.l.b16 %v1002
      %v1189 = vunpack.c.h.b16 %v1002
      %v1190 = vunpack.c.l.b16 %v1003
      %v1191 = vunpack.c.h.b16 %v1003
      %v1192 = vunpack.c.l.b16 %v1004
      %v1193 = vunpack.c.h.b16 %v1004
      %v1194 = vunpack.c.l.b16 %v1005
      %v1195 = vunpack.c.h.b16 %v1005
      %v1196 = vunpack.c.l.b16 %v1006
      %v1197 = vunpack.c.h.b16 %v1006
      %v1198 = vunpack.c.l.b16 %v1007
      %v1199 = vunpack.c.h.b16 %v1007
      %v1200 = vunpack.c.l.b16 %v1008
      %v1201 = vunpack.c.h.b16 %v1008
      %v1202 = vunpack.c.l.b16 %v1009
      %v1203 = vunpack.c.h.b16 %v1009
      %v1204 = vunpack.c.l.b16 %v1010
      %v1205 = vunpack.c.h.b16 %v1010
      %v1206 = vunpack.c.l.b16 %v1011
      %v1207 = vunpack.c.h.b16 %v1011
      %v1208 = vunpack.c.l.b16 %v1012
      %v1209 = vunpack.c.h.b16 %v1012
      %v1210 = vunpack.c.l.b16 %v1013
      %v1211 = vunpack.c.h.b16 %v1013
      %v1212 = vunpack.c.l.b16 %v1014
      %v1213 = vunpack.c.h.b16 %v1014
      %v1214 = vunpack.c.l.b16 %v1015
      %v1215 = vunpack.c.h.b16 %v1015
      %v1216 = vpack.c.b16 %v1146, %v1132
      %v1217 = vpack.c.b16 %v1147, %v1133
      %v1218 = vpack.c.b16 %v1148, %v1134
      %v1219 = vpack.c.b16 %v1149, %v1135
      %v1220 = vpack.c.b16 %v1150, %v1136
      %v1221 = vpack.c.b16 %v1151, %v1137
      %v1222 = vpack.c.b16 %v1152, %v1138
      %v1223 = vpack.c.b16 %v1153, %v1139
      %v1224 = vpack.c.b16 %v1154, %v1140
      %v1225 = vpack.c.b16 %v1155, %v1141
      %v1226 = vpack.c.b16 %v1156, %v1142
      %v1227 = vpack.c.b16 %v1157, %v1143
      %v1228 = vpack.c.b16 %v1158, %v1144
      %v1229 = vpack.c.b16 %v1159, %v1145
      %v1230 = vpack.c.b16 %v1174, %v1160
      %v1231 = vpack.c.b16 %v1175, %v1161
      %v1232 = vpack.c.b16 %v1176, %v1162
      %v1233 = vpack.c.b16 %v1177, %v1163
      %v1234 = vpack.c.b16 %v1178, %v1164
      %v1235 = vpack.c.b16 %v1179, %v1165
      %v1236 = vpack.c.b16 %v1180, %v1166
      %v1237 = vpack.c.b16 %v1181, %v1167
      %v1238 = vpack.c.b16 %v1182, %v1168
      %v1239 = vpack.c.b16 %v1183, %v1169
      %v1240 = vpack.c.b16 %v1184, %v1170
      %v1241 = vpack.c.b16 %v1185, %v1171
      %v1242 = vpack.c.b16 %v1186, %v1172
      %v1243 = vpack.c.b16 %v1187, %v1173
      %v1244 = vpack.c.b16 %v1202, %v1188
      %v1245 = vpack.c.b16 %v1203, %v1189
      %v1246 = vpack.c.b16 %v1204, %v1190
      %v1247 = vpack.c.b16 %v1205, %v1191
      %v1248 = vpack.c.b16 %v1206, %v1192
      %v1249 = vpack.c.b16 %v1207, %v1193
      %v1250 = vpack.c.b16 %v1208, %v1194
      %v1251 = vpack.c.b16 %v1209, %v1195
      %v1252 = vpack.c.b16 %v1210, %v1196
      %v1253 = vpack.c.b16 %v1211, %v1197
      %v1254 = vpack.c.b16 %v1212, %v1198
      %v1255 = vpack.c.b16 %v1213, %v1199
      %v1256 = vpack.c.b16 %v1214, %v1200
      %v1257 = vpack.c.b16 %v1215, %v1201
      %vm1300 = vcmask 392192
      %v1302 = vsel %vm1300, %v958, 0
      %v1305 = vsel %vm1300, %v959, 0
      %v1308 = vsel %vm1300, %v960, 0
      %v1311 = vsel %vm1300, %v961, 0
      %v1314 = vsel %vm1300, %v962, 0
      %v1317 = vsel %vm1300, %v963, 0
      %v1320 = vsel %vm1300, %v964, 0
      %v1323 = vsel %vm1300, %v965, 0
      %v1326 = vsel %vm1300, %v966, 0
      %v1329 = vsel %vm1300, %v967, 0
      %v1332 = vsel %vm1300, %v968, 0
      %v1335 = vsel %vm1300, %v969, 0
      %v1338 = vsel %vm1300, %v970, 0
      %v1341 = vsel %vm1300, %v971, 0
      %v1344 = vsel %vm1300, %v972, 0
      %v1347 = vsel %vm1300, %v973, 0
      %1349 = vmatprep.subr.bf16.mxu0 %v1217
      %1350 = vmatpush1.bf16.msra.mxu0 %v1216
      %1351 = vmatprep.subr.bf16.mxu0 %v1231
      %1352 = vmatpush1.bf16.msra.mxu0 %v1230
      %1353 = vmatprep.subr.bf16.mxu0 %v1245
      %1354 = vmatpush1.bf16.msra.mxu0 %v1244
      %1355 = vmatprep.subr.bf16.mxu0 0
      %1356 = vmatpush1.bf16.msra.mxu0 0
      %1357 = vmatprep.subr.bf16.mxu0 0
      %1358 = vmatpush1.bf16.msra.mxu0 0
      %1359 = vmatprep.subr.bf16.mxu0 0
      %1360 = vmatpush1.bf16.msra.mxu0 0
      %1361 = vmatprep.subr.bf16.mxu0 0
      %1362 = vmatpush1.bf16.msra.mxu0 0
      %1363 = vmatprep.subr.bf16.mxu0 0
      %1364 = vmatpush1.bf16.msra.mxu0 0
      %1365 = vmatprep.subr.bf16.mxu0 0
      %1366 = vmatpush1.bf16.msra.mxu0 0
      %1367 = vmatprep.subr.bf16.mxu0 0
      %1368 = vmatpush1.bf16.msra.mxu0 0
      %1369 = vmatprep.subr.bf16.mxu0 0
      %1370 = vmatpush1.bf16.msra.mxu0 0
      %1371 = vmatprep.subr.bf16.mxu0 0
      %1372 = vmatpush1.bf16.msra.mxu0 0
      %1373 = vmatprep.subr.bf16.mxu0 0
      %1374 = vmatpush1.bf16.msra.mxu0 0
      %1375 = vmatprep.subr.bf16.mxu0 0
      %1376 = vmatpush1.bf16.msra.mxu0 0
      %1377 = vmatprep.subr.bf16.mxu0 0
      %1378 = vmatpush1.bf16.msra.mxu0 0
      %1379 = vmatprep.subr.bf16.mxu0 0
      %1380 = vmatpush1.bf16.msra.mxu0 0
      %1381 = vmatprep.mubr.bf16.mxu0 0
      %1382 = vmatmul.mubr.bf16.gmra.mrb[0].mxu0 %v1302
      %v1383 = vpop.f32.mrb[0].mxu0
      %v1384 = vadd.f32 %v1023, %v1383
      %v1385 = vpop.f32.mrb[0].mxu0
      %v1386 = vadd.f32 %v1027, %v1385
      %v1387 = vpop.f32.mrb[0].mxu0
      %v1388 = vadd.f32 %v1023, %v1387
      %v1389 = vpop.f32.mrb[0].mxu0
      %v1390 = vadd.f32 %v1027, %v1389
      %1391 = vmatprep.mubr.bf16.mxu0 0
      %1392 = vmatmul.mubr.bf16.gmra.mrb[0].mxu0 %v1305
      %v1393 = vpop.f32.mrb[0].mxu0
      %v1394 = vadd.f32 %v1023, %v1393
      %v1395 = vpop.f32.mrb[0].mxu0
      %v1396 = vadd.f32 %v1027, %v1395
      %v1397 = vpop.f32.mrb[0].mxu0
      %v1398 = vadd.f32 %v1023, %v1397
      %v1399 = vpop.f32.mrb[0].mxu0
      %v1400 = vadd.f32 %v1027, %v1399
      %1401 = vmatprep.mubr.bf16.mxu0 0
      %1402 = vmatmul.mubr.bf16.gmra.mrb[0].mxu0 %v1308
      %v1403 = vpop.f32.mrb[0].mxu0
      %v1404 = vadd.f32 %v1023, %v1403
      %v1405 = vpop.f32.mrb[0].mxu0
      %v1406 = vadd.f32 %v1027, %v1405
      %v1407 = vpop.f32.mrb[0].mxu0
      %v1408 = vadd.f32 %v1023, %v1407
      %v1409 = vpop.f32.mrb[0].mxu0
      %v1410 = vadd.f32 %v1027, %v1409
      %1411 = vmatprep.mubr.bf16.mxu0 0
      %1412 = vmatmul.mubr.bf16.gmra.mrb[0].mxu0 %v1311
      %v1413 = vpop.f32.mrb[0].mxu0
      %v1414 = vadd.f32 %v1023, %v1413
      %v1415 = vpop.f32.mrb[0].mxu0
      %v1416 = vadd.f32 %v1027, %v1415
      %v1417 = vpop.f32.mrb[0].mxu0
      %v1418 = vadd.f32 %v1023, %v1417
      %v1419 = vpop.f32.mrb[0].mxu0
      %v1420 = vadd.f32 %v1027, %v1419
      %1421 = vmatprep.mubr.bf16.mxu0 0
      %1422 = vmatmul.mubr.bf16.gmra.mrb[0].mxu0 %v1314
      %v1423 = vpop.f32.mrb[0].mxu0
      %v1424 = vadd.f32 %v1023, %v1423
      %v1425 = vpop.f32.mrb[0].mxu0
      %v1426 = vadd.f32 %v1027, %v1425
      %v1427 = vpop.f32.mrb[0].mxu0
      %v1428 = vadd.f32 %v1023, %v1427
      %v1429 = vpop.f32.mrb[0].mxu0
      %v1430 = vadd.f32 %v1027, %v1429
      %1431 = vmatprep.mubr.bf16.mxu0 0
      %1432 = vmatmul.mubr.bf16.gmra.mrb[0].mxu0 %v1317
      %v1433 = vpop.f32.mrb[0].mxu0
      %v1434 = vadd.f32 %v1023, %v1433
      %v1435 = vpop.f32.mrb[0].mxu0
      %v1436 = vadd.f32 %v1027, %v1435
      %v1437 = vpop.f32.mrb[0].mxu0
      %v1438 = vadd.f32 %v1023, %v1437
      %v1439 = vpop.f32.mrb[0].mxu0
      %v1440 = vadd.f32 %v1027, %v1439
      %1441 = vmatprep.mubr.bf16.mxu0 0
      %1442 = vmatmul.mubr.bf16.gmra.mrb[0].mxu0 %v1320
      %v1443 = vpop.f32.mrb[0].mxu0
      %v1444 = vadd.f32 %v1023, %v1443
      %v1445 = vpop.f32.mrb[0].mxu0
      %v1446 = vadd.f32 %v1027, %v1445
      %v1447 = vpop.f32.mrb[0].mxu0
      %v1448 = vadd.f32 %v1023, %v1447
      %v1449 = vpop.f32.mrb[0].mxu0
      %v1450 = vadd.f32 %v1027, %v1449
      %1451 = vmatprep.mubr.bf16.mxu0 0
      %1452 = vmatmul.mubr.bf16.gmra.mrb[0].mxu0 %v1323
      %v1453 = vpop.f32.mrb[0].mxu0
      %v1454 = vadd.f32 %v1023, %v1453
      %v1455 = vpop.f32.mrb[0].mxu0
      %v1456 = vadd.f32 %v1027, %v1455
      %v1457 = vpop.f32.mrb[0].mxu0
      %v1458 = vadd.f32 %v1023, %v1457
      %v1459 = vpop.f32.mrb[0].mxu0
      %v1460 = vadd.f32 %v1027, %v1459
      %1461 = vmatprep.mubr.bf16.mxu0 0
      %1462 = vmatmul.mubr.bf16.gmra.mrb[0].mxu0 %v1326
      %v1463 = vpop.f32.mrb[0].mxu0
      %v1464 = vadd.f32 %v1023, %v1463
      %v1465 = vpop.f32.mrb[0].mxu0
      %v1466 = vadd.f32 %v1027, %v1465
      %v1467 = vpop.f32.mrb[0].mxu0
      %v1468 = vadd.f32 %v1023, %v1467
      %v1469 = vpop.f32.mrb[0].mxu0
      %v1470 = vadd.f32 %v1027, %v1469
      %1471 = vmatprep.mubr.bf16.mxu0 0
      %1472 = vmatmul.mubr.bf16.gmra.mrb[0].mxu0 %v1329
      %v1473 = vpop.f32.mrb[0].mxu0
      %v1474 = vadd.f32 %v1023, %v1473
      %v1475 = vpop.f32.mrb[0].mxu0
      %v1476 = vadd.f32 %v1027, %v1475
      %v1477 = vpop.f32.mrb[0].mxu0
      %v1478 = vadd.f32 %v1023, %v1477
      %v1479 = vpop.f32.mrb[0].mxu0
      %v1480 = vadd.f32 %v1027, %v1479
      %1481 = vmatprep.mubr.bf16.mxu0 0
      %1482 = vmatmul.mubr.bf16.gmra.mrb[0].mxu0 %v1332
      %v1483 = vpop.f32.mrb[0].mxu0
      %v1484 = vadd.f32 %v1023, %v1483
      %v1485 = vpop.f32.mrb[0].mxu0
      %v1486 = vadd.f32 %v1027, %v1485
      %v1487 = vpop.f32.mrb[0].mxu0
      %v1488 = vadd.f32 %v1023, %v1487
      %v1489 = vpop.f32.mrb[0].mxu0
      %v1490 = vadd.f32 %v1027, %v1489
      %1491 = vmatprep.mubr.bf16.mxu0 0
      %1492 = vmatmul.mubr.bf16.gmra.mrb[0].mxu0 %v1335
      %v1493 = vpop.f32.mrb[0].mxu0
      %v1494 = vadd.f32 %v1023, %v1493
      %v1495 = vpop.f32.mrb[0].mxu0
      %v1496 = vadd.f32 %v1027, %v1495
      %v1497 = vpop.f32.mrb[0].mxu0
      %v1498 = vadd.f32 %v1023, %v1497
      %v1499 = vpop.f32.mrb[0].mxu0
      %v1500 = vadd.f32 %v1027, %v1499
      %1501 = vmatprep.mubr.bf16.mxu0 0
      %1502 = vmatmul.mubr.bf16.gmra.mrb[0].mxu0 %v1338
      %v1503 = vpop.f32.mrb[0].mxu0
      %v1504 = vadd.f32 %v1023, %v1503
      %v1505 = vpop.f32.mrb[0].mxu0
      %v1506 = vadd.f32 %v1027, %v1505
      %v1507 = vpop.f32.mrb[0].mxu0
      %v1508 = vadd.f32 %v1023, %v1507
      %v1509 = vpop.f32.mrb[0].mxu0
      %v1510 = vadd.f32 %v1027, %v1509
      %1511 = vmatprep.mubr.bf16.mxu0 0
      %1512 = vmatmul.mubr.bf16.gmra.mrb[0].mxu0 %v1341
      %v1513 = vpop.f32.mrb[0].mxu0
      %v1514 = vadd.f32 %v1023, %v1513
      %v1515 = vpop.f32.mrb[0].mxu0
      %v1516 = vadd.f32 %v1027, %v1515
      %v1517 = vpop.f32.mrb[0].mxu0
      %v1518 = vadd.f32 %v1023, %v1517
      %v1519 = vpop.f32.mrb[0].mxu0
      %v1520 = vadd.f32 %v1027, %v1519
      %1521 = vmatprep.mubr.bf16.mxu0 0
      %1522 = vmatmul.mubr.bf16.gmra.mrb[0].mxu0 %v1344
      %v1523 = vpop.f32.mrb[0].mxu0
      %v1524 = vadd.f32 %v1023, %v1523
      %v1525 = vpop.f32.mrb[0].mxu0
      %v1526 = vadd.f32 %v1027, %v1525
      %v1527 = vpop.f32.mrb[0].mxu0
      %v1528 = vadd.f32 %v1023, %v1527
      %v1529 = vpop.f32.mrb[0].mxu0
      %v1530 = vadd.f32 %v1027, %v1529
      %1531 = vmatprep.mubr.bf16.mxu0 0
      %1532 = vmatmul.mubr.bf16.gmra.mrb[0].mxu0 %v1347
      %v1533 = vpop.f32.mrb[0].mxu0
      %v1534 = vadd.f32 %v1023, %v1533
      %v1535 = vpop.f32.mrb[0].mxu0
      %v1536 = vadd.f32 %v1027, %v1535
      %v1537 = vpop.f32.mrb[0].mxu0
      %v1538 = vadd.f32 %v1023, %v1537
      %v1539 = vpop.f32.mrb[0].mxu0
      %v1540 = vadd.f32 %v1027, %v1539
      %1541 = vdwg.mxu0
      %1542 = vmatprep.subr.bf16.mxu0 %v1219
      %1543 = vmatpush1.bf16.msra.mxu0 %v1218
      %1544 = vmatprep.subr.bf16.mxu0 %v1233
      %1545 = vmatpush1.bf16.msra.mxu0 %v1232
      %1546 = vmatprep.subr.bf16.mxu0 %v1247
      %1547 = vmatpush1.bf16.msra.mxu0 %v1246
      %1548 = vmatprep.subr.bf16.mxu0 0
      %1549 = vmatpush1.bf16.msra.mxu0 0
      %1550 = vmatprep.subr.bf16.mxu0 0
      %1551 = vmatpush1.bf16.msra.mxu0 0
      %1552 = vmatprep.subr.bf16.mxu0 0
      %1553 = vmatpush1.bf16.msra.mxu0 0
      %1554 = vmatprep.subr.bf16.mxu0 0
      %1555 = vmatpush1.bf16.msra.mxu0 0
      %1556 = vmatprep.subr.bf16.mxu0 0
      %1557 = vmatpush1.bf16.msra.mxu0 0
      %1558 = vmatprep.subr.bf16.mxu0 0
      %1559 = vmatpush1.bf16.msra.mxu0 0
      %1560 = vmatprep.subr.bf16.mxu0 0
      %1561 = vmatpush1.bf16.msra.mxu0 0
      %1562 = vmatprep.subr.bf16.mxu0 0
      %1563 = vmatpush1.bf16.msra.mxu0 0
      %1564 = vmatprep.subr.bf16.mxu0 0
      %1565 = vmatpush1.bf16.msra.mxu0 0
      %1566 = vmatprep.subr.bf16.mxu0 0
      %1567 = vmatpush1.bf16.msra.mxu0 0
      %1568 = vmatprep.subr.bf16.mxu0 0
      %1569 = vmatpush1.bf16.msra.mxu0 0
      %1570 = vmatprep.subr.bf16.mxu0 0
      %1571 = vmatpush1.bf16.msra.mxu0 0
      %1572 = vmatprep.subr.bf16.mxu0 0
      %1573 = vmatpush1.bf16.msra.mxu0 0
      %1574 = vmatprep.mubr.bf16.mxu0 0
      %1575 = vmatmul.mubr.bf16.gmra.mrb[0].mxu0 %v1302
      %v1576 = vpop.f32.mrb[0].mxu0
      %v1577 = vadd.f32 %v1031, %v1576
      %v1578 = vpop.f32.mrb[0].mxu0
      %v1579 = vadd.f32 %v1035, %v1578
      %v1580 = vpop.f32.mrb[0].mxu0
      %v1581 = vadd.f32 %v1031, %v1580
      %v1582 = vpop.f32.mrb[0].mxu0
      %v1583 = vadd.f32 %v1035, %v1582
      %1584 = vmatprep.mubr.bf16.mxu0 0
      %1585 = vmatmul.mubr.bf16.gmra.mrb[0].mxu0 %v1305
      %v1586 = vpop.f32.mrb[0].mxu0
      %v1587 = vadd.f32 %v1031, %v1586
      %v1588 = vpop.f32.mrb[0].mxu0
      %v1589 = vadd.f32 %v1035, %v1588
      %v1590 = vpop.f32.mrb[0].mxu0
      %v1591 = vadd.f32 %v1031, %v1590
      %v1592 = vpop.f32.mrb[0].mxu0
      %v1593 = vadd.f32 %v1035, %v1592
      %1594 = vmatprep.mubr.bf16.mxu0 0
      %1595 = vmatmul.mubr.bf16.gmra.mrb[0].mxu0 %v1308
      %v1596 = vpop.f32.mrb[0].mxu0
      %v1597 = vadd.f32 %v1031, %v1596
      %v1598 = vpop.f32.mrb[0].mxu0
      %v1599 = vadd.f32 %v1035, %v1598
      %v1600 = vpop.f32.mrb[0].mxu0
      %v1601 = vadd.f32 %v1031, %v1600
      %v1602 = vpop.f32.mrb[0].mxu0
      %v1603 = vadd.f32 %v1035, %v1602
      %1604 = vmatprep.mubr.bf16.mxu0 0
      %1605 = vmatmul.mubr.bf16.gmra.mrb[0].mxu0 %v1311
      %v1606 = vpop.f32.mrb[0].mxu0
      %v1607 = vadd.f32 %v1031, %v1606
      %v1608 = vpop.f32.mrb[0].mxu0
      %v1609 = vadd.f32 %v1035, %v1608
      %v1610 = vpop.f32.mrb[0].mxu0
      %v1611 = vadd.f32 %v1031, %v1610
      %v1612 = vpop.f32.mrb[0].mxu0
      %v1613 = vadd.f32 %v1035, %v1612
      %1614 = vmatprep.mubr.bf16.mxu0 0
      %1615 = vmatmul.mubr.bf16.gmra.mrb[0].mxu0 %v1314
      %v1616 = vpop.f32.mrb[0].mxu0
      %v1617 = vadd.f32 %v1031, %v1616
      %v1618 = vpop.f32.mrb[0].mxu0
      %v1619 = vadd.f32 %v1035, %v1618
      %v1620 = vpop.f32.mrb[0].mxu0
      %v1621 = vadd.f32 %v1031, %v1620
      %v1622 = vpop.f32.mrb[0].mxu0
      %v1623 = vadd.f32 %v1035, %v1622
      %1624 = vmatprep.mubr.bf16.mxu0 0
      %1625 = vmatmul.mubr.bf16.gmra.mrb[0].mxu0 %v1317
      %v1626 = vpop.f32.mrb[0].mxu0
      %v1627 = vadd.f32 %v1031, %v1626
      %v1628 = vpop.f32.mrb[0].mxu0
      %v1629 = vadd.f32 %v1035, %v1628
      %v1630 = vpop.f32.mrb[0].mxu0
      %v1631 = vadd.f32 %v1031, %v1630
      %v1632 = vpop.f32.mrb[0].mxu0
      %v1633 = vadd.f32 %v1035, %v1632
      %1634 = vmatprep.mubr.bf16.mxu0 0
      %1635 = vmatmul.mubr.bf16.gmra.mrb[0].mxu0 %v1320
      %v1636 = vpop.f32.mrb[0].mxu0
      %v1637 = vadd.f32 %v1031, %v1636
      %v1638 = vpop.f32.mrb[0].mxu0
      %v1639 = vadd.f32 %v1035, %v1638
      %v1640 = vpop.f32.mrb[0].mxu0
      %v1641 = vadd.f32 %v1031, %v1640
      %v1642 = vpop.f32.mrb[0].mxu0
      %v1643 = vadd.f32 %v1035, %v1642
      %1644 = vmatprep.mubr.bf16.mxu0 0
      %1645 = vmatmul.mubr.bf16.gmra.mrb[0].mxu0 %v1323
      %v1646 = vpop.f32.mrb[0].mxu0
      %v1647 = vadd.f32 %v1031, %v1646
      %v1648 = vpop.f32.mrb[0].mxu0
      %v1649 = vadd.f32 %v1035, %v1648
      %v1650 = vpop.f32.mrb[0].mxu0
      %v1651 = vadd.f32 %v1031, %v1650
      %v1652 = vpop.f32.mrb[0].mxu0
      %v1653 = vadd.f32 %v1035, %v1652
      %1654 = vmatprep.mubr.bf16.mxu0 0
      %1655 = vmatmul.mubr.bf16.gmra.mrb[0].mxu0 %v1326
      %v1656 = vpop.f32.mrb[0].mxu0
      %v1657 = vadd.f32 %v1031, %v1656
      %v1658 = vpop.f32.mrb[0].mxu0
      %v1659 = vadd.f32 %v1035, %v1658
      %v1660 = vpop.f32.mrb[0].mxu0
      %v1661 = vadd.f32 %v1031, %v1660
      %v1662 = vpop.f32.mrb[0].mxu0
      %v1663 = vadd.f32 %v1035, %v1662
      %1664 = vmatprep.mubr.bf16.mxu0 0
      %1665 = vmatmul.mubr.bf16.gmra.mrb[0].mxu0 %v1329
      %v1666 = vpop.f32.mrb[0].mxu0
      %v1667 = vadd.f32 %v1031, %v1666
      %v1668 = vpop.f32.mrb[0].mxu0
      %v1669 = vadd.f32 %v1035, %v1668
      %v1670 = vpop.f32.mrb[0].mxu0
      %v1671 = vadd.f32 %v1031, %v1670
      %v1672 = vpop.f32.mrb[0].mxu0
      %v1673 = vadd.f32 %v1035, %v1672
      %1674 = vmatprep.mubr.bf16.mxu0 0
      %1675 = vmatmul.mubr.bf16.gmra.mrb[0].mxu0 %v1332
      %v1676 = vpop.f32.mrb[0].mxu0
      %v1677 = vadd.f32 %v1031, %v1676
      %v1678 = vpop.f32.mrb[0].mxu0
      %v1679 = vadd.f32 %v1035, %v1678
      %v1680 = vpop.f32.mrb[0].mxu0
      %v1681 = vadd.f32 %v1031, %v1680
      %v1682 = vpop.f32.mrb[0].mxu0
      %v1683 = vadd.f32 %v1035, %v1682
      %1684 = vmatprep.mubr.bf16.mxu0 0
      %1685 = vmatmul.mubr.bf16.gmra.mrb[0].mxu0 %v1335
      %v1686 = vpop.f32.mrb[0].mxu0
      %v1687 = vadd.f32 %v1031, %v1686
      %v1688 = vpop.f32.mrb[0].mxu0
      %v1689 = vadd.f32 %v1035, %v1688
      %v1690 = vpop.f32.mrb[0].mxu0
      %v1691 = vadd.f32 %v1031, %v1690
      %v1692 = vpop.f32.mrb[0].mxu0
      %v1693 = vadd.f32 %v1035, %v1692
      %1694 = vmatprep.mubr.bf16.mxu0 0
      %1695 = vmatmul.mubr.bf16.gmra.mrb[0].mxu0 %v1338
      %v1696 = vpop.f32.mrb[0].mxu0
      %v1697 = vadd.f32 %v1031, %v1696
      %v1698 = vpop.f32.mrb[0].mxu0
      %v1699 = vadd.f32 %v1035, %v1698
      %v1700 = vpop.f32.mrb[0].mxu0
      %v1701 = vadd.f32 %v1031, %v1700
      %v1702 = vpop.f32.mrb[0].mxu0
      %v1703 = vadd.f32 %v1035, %v1702
      %1704 = vmatprep.mubr.bf16.mxu0 0
      %1705 = vmatmul.mubr.bf16.gmra.mrb[0].mxu0 %v1341
      %v1706 = vpop.f32.mrb[0].mxu0
      %v1707 = vadd.f32 %v1031, %v1706
      %v1708 = vpop.f32.mrb[0].mxu0
      %v1709 = vadd.f32 %v1035, %v1708
      %v1710 = vpop.f32.mrb[0].mxu0
      %v1711 = vadd.f32 %v1031, %v1710
      %v1712 = vpop.f32.mrb[0].mxu0
      %v1713 = vadd.f32 %v1035, %v1712
      %1714 = vmatprep.mubr.bf16.mxu0 0
      %1715 = vmatmul.mubr.bf16.gmra.mrb[0].mxu0 %v1344
      %v1716 = vpop.f32.mrb[0].mxu0
      %v1717 = vadd.f32 %v1031, %v1716
      %v1718 = vpop.f32.mrb[0].mxu0
      %v1719 = vadd.f32 %v1035, %v1718
      %v1720 = vpop.f32.mrb[0].mxu0
      %v1721 = vadd.f32 %v1031, %v1720
      %v1722 = vpop.f32.mrb[0].mxu0
      %v1723 = vadd.f32 %v1035, %v1722
      %1724 = vmatprep.mubr.bf16.mxu0 0
      %1725 = vmatmul.mubr.bf16.gmra.mrb[0].mxu0 %v1347
      %v1726 = vpop.f32.mrb[0].mxu0
      %v1727 = vadd.f32 %v1031, %v1726
      %v1728 = vpop.f32.mrb[0].mxu0
      %v1729 = vadd.f32 %v1035, %v1728
      %v1730 = vpop.f32.mrb[0].mxu0
      %v1731 = vadd.f32 %v1031, %v1730
      %v1732 = vpop.f32.mrb[0].mxu0
      %v1733 = vadd.f32 %v1035, %v1732
      %1734 = vdwg.mxu0
      %1735 = vmatprep.subr.bf16.mxu0 %v1221
      %1736 = vmatpush1.bf16.msra.mxu0 %v1220
      %1737 = vmatprep.subr.bf16.mxu0 %v1235
      %1738 = vmatpush1.bf16.msra.mxu0 %v1234
      %1739 = vmatprep.subr.bf16.mxu0 %v1249
      %1740 = vmatpush1.bf16.msra.mxu0 %v1248
      %1741 = vmatprep.subr.bf16.mxu0 0
      %1742 = vmatpush1.bf16.msra.mxu0 0
      %1743 = vmatprep.subr.bf16.mxu0 0
      %1744 = vmatpush1.bf16.msra.mxu0 0
      %1745 = vmatprep.subr.bf16.mxu0 0
      %1746 = vmatpush1.bf16.msra.mxu0 0
      %1747 = vmatprep.subr.bf16.mxu0 0
      %1748 = vmatpush1.bf16.msra.mxu0 0
      %1749 = vmatprep.subr.bf16.mxu0 0
      %1750 = vmatpush1.bf16.msra.mxu0 0
      %1751 = vmatprep.subr.bf16.mxu0 0
      %1752 = vmatpush1.bf16.msra.mxu0 0
      %1753 = vmatprep.subr.bf16.mxu0 0
      %1754 = vmatpush1.bf16.msra.mxu0 0
      %1755 = vmatprep.subr.bf16.mxu0 0
      %1756 = vmatpush1.bf16.msra.mxu0 0
      %1757 = vmatprep.subr.bf16.mxu0 0
      %1758 = vmatpush1.bf16.msra.mxu0 0
      %1759 = vmatprep.subr.bf16.mxu0 0
      %1760 = vmatpush1.bf16.msra.mxu0 0
      %1761 = vmatprep.subr.bf16.mxu0 0
      %1762 = vmatpush1.bf16.msra.mxu0 0
      %1763 = vmatprep.subr.bf16.mxu0 0
      %1764 = vmatpush1.bf16.msra.mxu0 0
      %1765 = vmatprep.subr.bf16.mxu0 0
      %1766 = vmatpush1.bf16.msra.mxu0 0
      %1767 = vmatprep.mubr.bf16.mxu0 0
      %1768 = vmatmul.mubr.bf16.gmra.mrb[0].mxu0 %v1302
      %v1769 = vpop.f32.mrb[0].mxu0
      %v1770 = vadd.f32 %v1039, %v1769
      %v1771 = vpop.f32.mrb[0].mxu0
      %v1772 = vadd.f32 %v1043, %v1771
      %v1773 = vpop.f32.mrb[0].mxu0
      %v1774 = vadd.f32 %v1039, %v1773
      %v1775 = vpop.f32.mrb[0].mxu0
      %v1776 = vadd.f32 %v1043, %v1775
      %1777 = vmatprep.mubr.bf16.mxu0 0
      %1778 = vmatmul.mubr.bf16.gmra.mrb[0].mxu0 %v1305
      %v1779 = vpop.f32.mrb[0].mxu0
      %v1780 = vadd.f32 %v1039, %v1779
      %v1781 = vpop.f32.mrb[0].mxu0
      %v1782 = vadd.f32 %v1043, %v1781
      %v1783 = vpop.f32.mrb[0].mxu0
      %v1784 = vadd.f32 %v1039, %v1783
      %v1785 = vpop.f32.mrb[0].mxu0
      %v1786 = vadd.f32 %v1043, %v1785
      %1787 = vmatprep.mubr.bf16.mxu0 0
      %1788 = vmatmul.mubr.bf16.gmra.mrb[0].mxu0 %v1308
      %v1789 = vpop.f32.mrb[0].mxu0
      %v1790 = vadd.f32 %v1039, %v1789
      %v1791 = vpop.f32.mrb[0].mxu0
      %v1792 = vadd.f32 %v1043, %v1791
      %v1793 = vpop.f32.mrb[0].mxu0
      %v1794 = vadd.f32 %v1039, %v1793
      %v1795 = vpop.f32.mrb[0].mxu0
      %v1796 = vadd.f32 %v1043, %v1795
      %1797 = vmatprep.mubr.bf16.mxu0 0
      %1798 = vmatmul.mubr.bf16.gmra.mrb[0].mxu0 %v1311
      %v1799 = vpop.f32.mrb[0].mxu0
      %v1800 = vadd.f32 %v1039, %v1799
      %v1801 = vpop.f32.mrb[0].mxu0
      %v1802 = vadd.f32 %v1043, %v1801
      %v1803 = vpop.f32.mrb[0].mxu0
      %v1804 = vadd.f32 %v1039, %v1803
      %v1805 = vpop.f32.mrb[0].mxu0
      %v1806 = vadd.f32 %v1043, %v1805
      %1807 = vmatprep.mubr.bf16.mxu0 0
      %1808 = vmatmul.mubr.bf16.gmra.mrb[0].mxu0 %v1314
      %v1809 = vpop.f32.mrb[0].mxu0
      %v1810 = vadd.f32 %v1039, %v1809
      %v1811 = vpop.f32.mrb[0].mxu0
      %v1812 = vadd.f32 %v1043, %v1811
      %v1813 = vpop.f32.mrb[0].mxu0
      %v1814 = vadd.f32 %v1039, %v1813
      %v1815 = vpop.f32.mrb[0].mxu0
      %v1816 = vadd.f32 %v1043, %v1815
      %1817 = vmatprep.mubr.bf16.mxu0 0
      %1818 = vmatmul.mubr.bf16.gmra.mrb[0].mxu0 %v1317
      %v1819 = vpop.f32.mrb[0].mxu0
      %v1820 = vadd.f32 %v1039, %v1819
      %v1821 = vpop.f32.mrb[0].mxu0
      %v1822 = vadd.f32 %v1043, %v1821
      %v1823 = vpop.f32.mrb[0].mxu0
      %v1824 = vadd.f32 %v1039, %v1823
      %v1825 = vpop.f32.mrb[0].mxu0
      %v1826 = vadd.f32 %v1043, %v1825
      %1827 = vmatprep.mubr.bf16.mxu0 0
      %1828 = vmatmul.mubr.bf16.gmra.mrb[0].mxu0 %v1320
      %v1829 = vpop.f32.mrb[0].mxu0
      %v1830 = vadd.f32 %v1039, %v1829
      %v1831 = vpop.f32.mrb[0].mxu0
      %v1832 = vadd.f32 %v1043, %v1831
      %v1833 = vpop.f32.mrb[0].mxu0
      %v1834 = vadd.f32 %v1039, %v1833
      %v1835 = vpop.f32.mrb[0].mxu0
      %v1836 = vadd.f32 %v1043, %v1835
      %1837 = vmatprep.mubr.bf16.mxu0 0
      %1838 = vmatmul.mubr.bf16.gmra.mrb[0].mxu0 %v1323
      %v1839 = vpop.f32.mrb[0].mxu0
      %v1840 = vadd.f32 %v1039, %v1839
      %v1841 = vpop.f32.mrb[0].mxu0
      %v1842 = vadd.f32 %v1043, %v1841
      %v1843 = vpop.f32.mrb[0].mxu0
      %v1844 = vadd.f32 %v1039, %v1843
      %v1845 = vpop.f32.mrb[0].mxu0
      %v1846 = vadd.f32 %v1043, %v1845
      %1847 = vmatprep.mubr.bf16.mxu0 0
      %1848 = vmatmul.mubr.bf16.gmra.mrb[0].mxu0 %v1326
      %v1849 = vpop.f32.mrb[0].mxu0
      %v1850 = vadd.f32 %v1039, %v1849
      %v1851 = vpop.f32.mrb[0].mxu0
      %v1852 = vadd.f32 %v1043, %v1851
      %v1853 = vpop.f32.mrb[0].mxu0
      %v1854 = vadd.f32 %v1039, %v1853
      %v1855 = vpop.f32.mrb[0].mxu0
      %v1856 = vadd.f32 %v1043, %v1855
      %1857 = vmatprep.mubr.bf16.mxu0 0
      %1858 = vmatmul.mubr.bf16.gmra.mrb[0].mxu0 %v1329
      %v1859 = vpop.f32.mrb[0].mxu0
      %v1860 = vadd.f32 %v1039, %v1859
      %v1861 = vpop.f32.mrb[0].mxu0
      %v1862 = vadd.f32 %v1043, %v1861
      %v1863 = vpop.f32.mrb[0].mxu0
      %v1864 = vadd.f32 %v1039, %v1863
      %v1865 = vpop.f32.mrb[0].mxu0
      %v1866 = vadd.f32 %v1043, %v1865
      %1867 = vmatprep.mubr.bf16.mxu0 0
      %1868 = vmatmul.mubr.bf16.gmra.mrb[0].mxu0 %v1332
      %v1869 = vpop.f32.mrb[0].mxu0
      %v1870 = vadd.f32 %v1039, %v1869
      %v1871 = vpop.f32.mrb[0].mxu0
      %v1872 = vadd.f32 %v1043, %v1871
      %v1873 = vpop.f32.mrb[0].mxu0
      %v1874 = vadd.f32 %v1039, %v1873
      %v1875 = vpop.f32.mrb[0].mxu0
      %v1876 = vadd.f32 %v1043, %v1875
      %1877 = vmatprep.mubr.bf16.mxu0 0
      %1878 = vmatmul.mubr.bf16.gmra.mrb[0].mxu0 %v1335
      %v1879 = vpop.f32.mrb[0].mxu0
      %v1880 = vadd.f32 %v1039, %v1879
      %v1881 = vpop.f32.mrb[0].mxu0
      %v1882 = vadd.f32 %v1043, %v1881
      %v1883 = vpop.f32.mrb[0].mxu0
      %v1884 = vadd.f32 %v1039, %v1883
      %v1885 = vpop.f32.mrb[0].mxu0
      %v1886 = vadd.f32 %v1043, %v1885
      %1887 = vmatprep.mubr.bf16.mxu0 0
      %1888 = vmatmul.mubr.bf16.gmra.mrb[0].mxu0 %v1338
      %v1889 = vpop.f32.mrb[0].mxu0
      %v1890 = vadd.f32 %v1039, %v1889
      %v1891 = vpop.f32.mrb[0].mxu0
      %v1892 = vadd.f32 %v1043, %v1891
      %v1893 = vpop.f32.mrb[0].mxu0
      %v1894 = vadd.f32 %v1039, %v1893
      %v1895 = vpop.f32.mrb[0].mxu0
      %v1896 = vadd.f32 %v1043, %v1895
      %1897 = vmatprep.mubr.bf16.mxu0 0
      %1898 = vmatmul.mubr.bf16.gmra.mrb[0].mxu0 %v1341
      %v1899 = vpop.f32.mrb[0].mxu0
      %v1900 = vadd.f32 %v1039, %v1899
      %v1901 = vpop.f32.mrb[0].mxu0
      %v1902 = vadd.f32 %v1043, %v1901
      %v1903 = vpop.f32.mrb[0].mxu0
      %v1904 = vadd.f32 %v1039, %v1903
      %v1905 = vpop.f32.mrb[0].mxu0
      %v1906 = vadd.f32 %v1043, %v1905
      %1907 = vmatprep.mubr.bf16.mxu0 0
      %1908 = vmatmul.mubr.bf16.gmra.mrb[0].mxu0 %v1344
      %v1909 = vpop.f32.mrb[0].mxu0
      %v1910 = vadd.f32 %v1039, %v1909
      %v1911 = vpop.f32.mrb[0].mxu0
      %v1912 = vadd.f32 %v1043, %v1911
      %v1913 = vpop.f32.mrb[0].mxu0
      %v1914 = vadd.f32 %v1039, %v1913
      %v1915 = vpop.f32.mrb[0].mxu0
      %v1916 = vadd.f32 %v1043, %v1915
      %1917 = vmatprep.mubr.bf16.mxu0 0
      %1918 = vmatmul.mubr.bf16.gmra.mrb[0].mxu0 %v1347
      %v1919 = vpop.f32.mrb[0].mxu0
      %v1920 = vadd.f32 %v1039, %v1919
      %v1921 = vpop.f32.mrb[0].mxu0
      %v1922 = vadd.f32 %v1043, %v1921
      %v1923 = vpop.f32.mrb[0].mxu0
      %v1924 = vadd.f32 %v1039, %v1923
      %v1925 = vpop.f32.mrb[0].mxu0
      %v1926 = vadd.f32 %v1043, %v1925
      %1927 = vdwg.mxu0
      %1928 = vmatprep.subr.bf16.mxu0 %v1223
      %1929 = vmatpush1.bf16.msra.mxu0 %v1222
      %1930 = vmatprep.subr.bf16.mxu0 %v1237
      %1931 = vmatpush1.bf16.msra.mxu0 %v1236
      %1932 = vmatprep.subr.bf16.mxu0 %v1251
      %1933 = vmatpush1.bf16.msra.mxu0 %v1250
      %1934 = vmatprep.subr.bf16.mxu0 0
      %1935 = vmatpush1.bf16.msra.mxu0 0
      %1936 = vmatprep.subr.bf16.mxu0 0
      %1937 = vmatpush1.bf16.msra.mxu0 0
      %1938 = vmatprep.subr.bf16.mxu0 0
      %1939 = vmatpush1.bf16.msra.mxu0 0
      %1940 = vmatprep.subr.bf16.mxu0 0
      %1941 = vmatpush1.bf16.msra.mxu0 0
      %1942 = vmatprep.subr.bf16.mxu0 0
      %1943 = vmatpush1.bf16.msra.mxu0 0
      %1944 = vmatprep.subr.bf16.mxu0 0
      %1945 = vmatpush1.bf16.msra.mxu0 0
      %1946 = vmatprep.subr.bf16.mxu0 0
      %1947 = vmatpush1.bf16.msra.mxu0 0
      %1948 = vmatprep.subr.bf16.mxu0 0
      %1949 = vmatpush1.bf16.msra.mxu0 0
      %1950 = vmatprep.subr.bf16.mxu0 0
      %1951 = vmatpush1.bf16.msra.mxu0 0
      %1952 = vmatprep.subr.bf16.mxu0 0
      %1953 = vmatpush1.bf16.msra.mxu0 0
      %1954 = vmatprep.subr.bf16.mxu0 0
      %1955 = vmatpush1.bf16.msra.mxu0 0
      %1956 = vmatprep.subr.bf16.mxu0 0
      %1957 = vmatpush1.bf16.msra.mxu0 0
      %1958 = vmatprep.subr.bf16.mxu0 0
      %1959 = vmatpush1.bf16.msra.mxu0 0
      %1960 = vmatprep.mubr.bf16.mxu0 0
      %1961 = vmatmul.mubr.bf16.gmra.mrb[0].mxu0 %v1302
      %v1962 = vpop.f32.mrb[0].mxu0
      %v1963 = vadd.f32 %v1047, %v1962
      %v1964 = vpop.f32.mrb[0].mxu0
      %v1965 = vadd.f32 %v1051, %v1964
      %v1966 = vpop.f32.mrb[0].mxu0
      %v1967 = vadd.f32 %v1047, %v1966
      %v1968 = vpop.f32.mrb[0].mxu0
      %v1969 = vadd.f32 %v1051, %v1968
      %1970 = vmatprep.mubr.bf16.mxu0 0
      %1971 = vmatmul.mubr.bf16.gmra.mrb[0].mxu0 %v1305
      %v1972 = vpop.f32.mrb[0].mxu0
      %v1973 = vadd.f32 %v1047, %v1972
      %v1974 = vpop.f32.mrb[0].mxu0
      %v1975 = vadd.f32 %v1051, %v1974
      %v1976 = vpop.f32.mrb[0].mxu0
      %v1977 = vadd.f32 %v1047, %v1976
      %v1978 = vpop.f32.mrb[0].mxu0
      %v1979 = vadd.f32 %v1051, %v1978
      %1980 = vmatprep.mubr.bf16.mxu0 0
      %1981 = vmatmul.mubr.bf16.gmra.mrb[0].mxu0 %v1308
      %v1982 = vpop.f32.mrb[0].mxu0
      %v1983 = vadd.f32 %v1047, %v1982
      %v1984 = vpop.f32.mrb[0].mxu0
      %v1985 = vadd.f32 %v1051, %v1984
      %v1986 = vpop.f32.mrb[0].mxu0
      %v1987 = vadd.f32 %v1047, %v1986
      %v1988 = vpop.f32.mrb[0].mxu0
      %v1989 = vadd.f32 %v1051, %v1988
      %1990 = vmatprep.mubr.bf16.mxu0 0
      %1991 = vmatmul.mubr.bf16.gmra.mrb[0].mxu0 %v1311
      %v1992 = vpop.f32.mrb[0].mxu0
      %v1993 = vadd.f32 %v1047, %v1992
      %v1994 = vpop.f32.mrb[0].mxu0
      %v1995 = vadd.f32 %v1051, %v1994
      %v1996 = vpop.f32.mrb[0].mxu0
      %v1997 = vadd.f32 %v1047, %v1996
      %v1998 = vpop.f32.mrb[0].mxu0
      %v1999 = vadd.f32 %v1051, %v1998
      %2000 = vmatprep.mubr.bf16.mxu0 0
      %2001 = vmatmul.mubr.bf16.gmra.mrb[0].mxu0 %v1314
      %v2002 = vpop.f32.mrb[0].mxu0
      %v2003 = vadd.f32 %v1047, %v2002
      %v2004 = vpop.f32.mrb[0].mxu0
      %v2005 = vadd.f32 %v1051, %v2004
      %v2006 = vpop.f32.mrb[0].mxu0
      %v2007 = vadd.f32 %v1047, %v2006
      %v2008 = vpop.f32.mrb[0].mxu0
      %v2009 = vadd.f32 %v1051, %v2008
      %2010 = vmatprep.mubr.bf16.mxu0 0
      %2011 = vmatmul.mubr.bf16.gmra.mrb[0].mxu0 %v1317
      %v2012 = vpop.f32.mrb[0].mxu0
      %v2013 = vadd.f32 %v1047, %v2012
      %v2014 = vpop.f32.mrb[0].mxu0
      %v2015 = vadd.f32 %v1051, %v2014
      %v2016 = vpop.f32.mrb[0].mxu0
      %v2017 = vadd.f32 %v1047, %v2016
      %v2018 = vpop.f32.mrb[0].mxu0
      %v2019 = vadd.f32 %v1051, %v2018
      %2020 = vmatprep.mubr.bf16.mxu0 0
      %2021 = vmatmul.mubr.bf16.gmra.mrb[0].mxu0 %v1320
      %v2022 = vpop.f32.mrb[0].mxu0
      %v2023 = vadd.f32 %v1047, %v2022
      %v2024 = vpop.f32.mrb[0].mxu0
      %v2025 = vadd.f32 %v1051, %v2024
      %v2026 = vpop.f32.mrb[0].mxu0
      %v2027 = vadd.f32 %v1047, %v2026
      %v2028 = vpop.f32.mrb[0].mxu0
      %v2029 = vadd.f32 %v1051, %v2028
      %2030 = vmatprep.mubr.bf16.mxu0 0
      %2031 = vmatmul.mubr.bf16.gmra.mrb[0].mxu0 %v1323
      %v2032 = vpop.f32.mrb[0].mxu0
      %v2033 = vadd.f32 %v1047, %v2032
      %v2034 = vpop.f32.mrb[0].mxu0
      %v2035 = vadd.f32 %v1051, %v2034
      %v2036 = vpop.f32.mrb[0].mxu0
      %v2037 = vadd.f32 %v1047, %v2036
      %v2038 = vpop.f32.mrb[0].mxu0
      %v2039 = vadd.f32 %v1051, %v2038
      %2040 = vmatprep.mubr.bf16.mxu0 0
      %2041 = vmatmul.mubr.bf16.gmra.mrb[0].mxu0 %v1326
      %v2042 = vpop.f32.mrb[0].mxu0
      %v2043 = vadd.f32 %v1047, %v2042
      %v2044 = vpop.f32.mrb[0].mxu0
      %v2045 = vadd.f32 %v1051, %v2044
      %v2046 = vpop.f32.mrb[0].mxu0
      %v2047 = vadd.f32 %v1047, %v2046
      %v2048 = vpop.f32.mrb[0].mxu0
      %v2049 = vadd.f32 %v1051, %v2048
      %2050 = vmatprep.mubr.bf16.mxu0 0
      %2051 = vmatmul.mubr.bf16.gmra.mrb[0].mxu0 %v1329
      %v2052 = vpop.f32.mrb[0].mxu0
      %v2053 = vadd.f32 %v1047, %v2052
      %v2054 = vpop.f32.mrb[0].mxu0
      %v2055 = vadd.f32 %v1051, %v2054
      %v2056 = vpop.f32.mrb[0].mxu0
      %v2057 = vadd.f32 %v1047, %v2056
      %v2058 = vpop.f32.mrb[0].mxu0
      %v2059 = vadd.f32 %v1051, %v2058
      %2060 = vmatprep.mubr.bf16.mxu0 0
      %2061 = vmatmul.mubr.bf16.gmra.mrb[0].mxu0 %v1332
      %v2062 = vpop.f32.mrb[0].mxu0
      %v2063 = vadd.f32 %v1047, %v2062
      %v2064 = vpop.f32.mrb[0].mxu0
      %v2065 = vadd.f32 %v1051, %v2064
      %v2066 = vpop.f32.mrb[0].mxu0
      %v2067 = vadd.f32 %v1047, %v2066
      %v2068 = vpop.f32.mrb[0].mxu0
      %v2069 = vadd.f32 %v1051, %v2068
      %2070 = vmatprep.mubr.bf16.mxu0 0
      %2071 = vmatmul.mubr.bf16.gmra.mrb[0].mxu0 %v1335
      %v2072 = vpop.f32.mrb[0].mxu0
      %v2073 = vadd.f32 %v1047, %v2072
      %v2074 = vpop.f32.mrb[0].mxu0
      %v2075 = vadd.f32 %v1051, %v2074
      %v2076 = vpop.f32.mrb[0].mxu0
      %v2077 = vadd.f32 %v1047, %v2076
      %v2078 = vpop.f32.mrb[0].mxu0
      %v2079 = vadd.f32 %v1051, %v2078
      %2080 = vmatprep.mubr.bf16.mxu0 0
      %2081 = vmatmul.mubr.bf16.gmra.mrb[0].mxu0 %v1338
      %v2082 = vpop.f32.mrb[0].mxu0
      %v2083 = vadd.f32 %v1047, %v2082
      %v2084 = vpop.f32.mrb[0].mxu0
      %v2085 = vadd.f32 %v1051, %v2084
      %v2086 = vpop.f32.mrb[0].mxu0
      %v2087 = vadd.f32 %v1047, %v2086
      %v2088 = vpop.f32.mrb[0].mxu0
      %v2089 = vadd.f32 %v1051, %v2088
      %2090 = vmatprep.mubr.bf16.mxu0 0
      %2091 = vmatmul.mubr.bf16.gmra.mrb[0].mxu0 %v1341
      %v2092 = vpop.f32.mrb[0].mxu0
      %v2093 = vadd.f32 %v1047, %v2092
      %v2094 = vpop.f32.mrb[0].mxu0
      %v2095 = vadd.f32 %v1051, %v2094
      %v2096 = vpop.f32.mrb[0].mxu0
      %v2097 = vadd.f32 %v1047, %v2096
      %v2098 = vpop.f32.mrb[0].mxu0
      %v2099 = vadd.f32 %v1051, %v2098
      %2100 = vmatprep.mubr.bf16.mxu0 0
      %2101 = vmatmul.mubr.bf16.gmra.mrb[0].mxu0 %v1344
      %v2102 = vpop.f32.mrb[0].mxu0
      %v2103 = vadd.f32 %v1047, %v2102
      %v2104 = vpop.f32.mrb[0].mxu0
      %v2105 = vadd.f32 %v1051, %v2104
      %v2106 = vpop.f32.mrb[0].mxu0
      %v2107 = vadd.f32 %v1047, %v2106
      %v2108 = vpop.f32.mrb[0].mxu0
      %v2109 = vadd.f32 %v1051, %v2108
      %2110 = vmatprep.mubr.bf16.mxu0 0
      %2111 = vmatmul.mubr.bf16.gmra.mrb[0].mxu0 %v1347
      %v2112 = vpop.f32.mrb[0].mxu0
      %v2113 = vadd.f32 %v1047, %v2112
      %v2114 = vpop.f32.mrb[0].mxu0
      %v2115 = vadd.f32 %v1051, %v2114
      %v2116 = vpop.f32.mrb[0].mxu0
      %v2117 = vadd.f32 %v1047, %v2116
      %v2118 = vpop.f32.mrb[0].mxu0
      %v2119 = vadd.f32 %v1051, %v2118
      %2120 = vdwg.mxu0
      %2121 = vmatprep.subr.bf16.mxu0 %v1225
      %2122 = vmatpush1.bf16.msra.mxu0 %v1224
      %2123 = vmatprep.subr.bf16.mxu0 %v1239
      %2124 = vmatpush1.bf16.msra.mxu0 %v1238
      %2125 = vmatprep.subr.bf16.mxu0 %v1253
      %2126 = vmatpush1.bf16.msra.mxu0 %v1252
      %2127 = vmatprep.subr.bf16.mxu0 0
      %2128 = vmatpush1.bf16.msra.mxu0 0
      %2129 = vmatprep.subr.bf16.mxu0 0
      %2130 = vmatpush1.bf16.msra.mxu0 0
      %2131 = vmatprep.subr.bf16.mxu0 0
      %2132 = vmatpush1.bf16.msra.mxu0 0
      %2133 = vmatprep.subr.bf16.mxu0 0
      %2134 = vmatpush1.bf16.msra.mxu0 0
      %2135 = vmatprep.subr.bf16.mxu0 0
      %2136 = vmatpush1.bf16.msra.mxu0 0
      %2137 = vmatprep.subr.bf16.mxu0 0
      %2138 = vmatpush1.bf16.msra.mxu0 0
      %2139 = vmatprep.subr.bf16.mxu0 0
      %2140 = vmatpush1.bf16.msra.mxu0 0
      %2141 = vmatprep.subr.bf16.mxu0 0
      %2142 = vmatpush1.bf16.msra.mxu0 0
      %2143 = vmatprep.subr.bf16.mxu0 0
      %2144 = vmatpush1.bf16.msra.mxu0 0
      %2145 = vmatprep.subr.bf16.mxu0 0
      %2146 = vmatpush1.bf16.msra.mxu0 0
      %2147 = vmatprep.subr.bf16.mxu0 0
      %2148 = vmatpush1.bf16.msra.mxu0 0
      %2149 = vmatprep.subr.bf16.mxu0 0
      %2150 = vmatpush1.bf16.msra.mxu0 0
      %2151 = vmatprep.subr.bf16.mxu0 0
      %2152 = vmatpush1.bf16.msra.mxu0 0
      %2153 = vmatprep.mubr.bf16.mxu0 0
      %2154 = vmatmul.mubr.bf16.gmra.mrb[0].mxu0 %v1302
      %v2155 = vpop.f32.mrb[0].mxu0
      %v2156 = vadd.f32 %v1055, %v2155
      %v2157 = vpop.f32.mrb[0].mxu0
      %v2158 = vadd.f32 %v1059, %v2157
      %v2159 = vpop.f32.mrb[0].mxu0
      %v2160 = vadd.f32 %v1055, %v2159
      %v2161 = vpop.f32.mrb[0].mxu0
      %v2162 = vadd.f32 %v1059, %v2161
      %2163 = vmatprep.mubr.bf16.mxu0 0
      %2164 = vmatmul.mubr.bf16.gmra.mrb[0].mxu0 %v1305
      %v2165 = vpop.f32.mrb[0].mxu0
      %v2166 = vadd.f32 %v1055, %v2165
      %v2167 = vpop.f32.mrb[0].mxu0
      %v2168 = vadd.f32 %v1059, %v2167
      %v2169 = vpop.f32.mrb[0].mxu0
      %v2170 = vadd.f32 %v1055, %v2169
      %v2171 = vpop.f32.mrb[0].mxu0
      %v2172 = vadd.f32 %v1059, %v2171
      %2173 = vmatprep.mubr.bf16.mxu0 0
      %2174 = vmatmul.mubr.bf16.gmra.mrb[0].mxu0 %v1308
      %v2175 = vpop.f32.mrb[0].mxu0
      %v2176 = vadd.f32 %v1055, %v2175
      %v2177 = vpop.f32.mrb[0].mxu0
      %v2178 = vadd.f32 %v1059, %v2177
      %v2179 = vpop.f32.mrb[0].mxu0
      %v2180 = vadd.f32 %v1055, %v2179
      %v2181 = vpop.f32.mrb[0].mxu0
      %v2182 = vadd.f32 %v1059, %v2181
      %2183 = vmatprep.mubr.bf16.mxu0 0
      %2184 = vmatmul.mubr.bf16.gmra.mrb[0].mxu0 %v1311
      %v2185 = vpop.f32.mrb[0].mxu0
      %v2186 = vadd.f32 %v1055, %v2185
      %v2187 = vpop.f32.mrb[0].mxu0
      %v2188 = vadd.f32 %v1059, %v2187
      %v2189 = vpop.f32.mrb[0].mxu0
      %v2190 = vadd.f32 %v1055, %v2189
      %v2191 = vpop.f32.mrb[0].mxu0
      %v2192 = vadd.f32 %v1059, %v2191
      %2193 = vmatprep.mubr.bf16.mxu0 0
      %2194 = vmatmul.mubr.bf16.gmra.mrb[0].mxu0 %v1314
      %v2195 = vpop.f32.mrb[0].mxu0
      %v2196 = vadd.f32 %v1055, %v2195
      %v2197 = vpop.f32.mrb[0].mxu0
      %v2198 = vadd.f32 %v1059, %v2197
      %v2199 = vpop.f32.mrb[0].mxu0
      %v2200 = vadd.f32 %v1055, %v2199
      %v2201 = vpop.f32.mrb[0].mxu0
      %v2202 = vadd.f32 %v1059, %v2201
      %2203 = vmatprep.mubr.bf16.mxu0 0
      %2204 = vmatmul.mubr.bf16.gmra.mrb[0].mxu0 %v1317
      %v2205 = vpop.f32.mrb[0].mxu0
      %v2206 = vadd.f32 %v1055, %v2205
      %v2207 = vpop.f32.mrb[0].mxu0
      %v2208 = vadd.f32 %v1059, %v2207
      %v2209 = vpop.f32.mrb[0].mxu0
      %v2210 = vadd.f32 %v1055, %v2209
      %v2211 = vpop.f32.mrb[0].mxu0
      %v2212 = vadd.f32 %v1059, %v2211
      %2213 = vmatprep.mubr.bf16.mxu0 0
      %2214 = vmatmul.mubr.bf16.gmra.mrb[0].mxu0 %v1320
      %v2215 = vpop.f32.mrb[0].mxu0
      %v2216 = vadd.f32 %v1055, %v2215
      %v2217 = vpop.f32.mrb[0].mxu0
      %v2218 = vadd.f32 %v1059, %v2217
      %v2219 = vpop.f32.mrb[0].mxu0
      %v2220 = vadd.f32 %v1055, %v2219
      %v2221 = vpop.f32.mrb[0].mxu0
      %v2222 = vadd.f32 %v1059, %v2221
      %2223 = vmatprep.mubr.bf16.mxu0 0
      %2224 = vmatmul.mubr.bf16.gmra.mrb[0].mxu0 %v1323
      %v2225 = vpop.f32.mrb[0].mxu0
      %v2226 = vadd.f32 %v1055, %v2225
      %v2227 = vpop.f32.mrb[0].mxu0
      %v2228 = vadd.f32 %v1059, %v2227
      %v2229 = vpop.f32.mrb[0].mxu0
      %v2230 = vadd.f32 %v1055, %v2229
      %v2231 = vpop.f32.mrb[0].mxu0
      %v2232 = vadd.f32 %v1059, %v2231
      %2233 = vmatprep.mubr.bf16.mxu0 0
      %2234 = vmatmul.mubr.bf16.gmra.mrb[0].mxu0 %v1326
      %v2235 = vpop.f32.mrb[0].mxu0
      %v2236 = vadd.f32 %v1055, %v2235
      %v2237 = vpop.f32.mrb[0].mxu0
      %v2238 = vadd.f32 %v1059, %v2237
      %v2239 = vpop.f32.mrb[0].mxu0
      %v2240 = vadd.f32 %v1055, %v2239
      %v2241 = vpop.f32.mrb[0].mxu0
      %v2242 = vadd.f32 %v1059, %v2241
      %2243 = vmatprep.mubr.bf16.mxu0 0
      %2244 = vmatmul.mubr.bf16.gmra.mrb[0].mxu0 %v1329
      %v2245 = vpop.f32.mrb[0].mxu0
      %v2246 = vadd.f32 %v1055, %v2245
      %v2247 = vpop.f32.mrb[0].mxu0
      %v2248 = vadd.f32 %v1059, %v2247
      %v2249 = vpop.f32.mrb[0].mxu0
      %v2250 = vadd.f32 %v1055, %v2249
      %v2251 = vpop.f32.mrb[0].mxu0
      %v2252 = vadd.f32 %v1059, %v2251
      %2253 = vmatprep.mubr.bf16.mxu0 0
      %2254 = vmatmul.mubr.bf16.gmra.mrb[0].mxu0 %v1332
      %v2255 = vpop.f32.mrb[0].mxu0
      %v2256 = vadd.f32 %v1055, %v2255
      %v2257 = vpop.f32.mrb[0].mxu0
      %v2258 = vadd.f32 %v1059, %v2257
      %v2259 = vpop.f32.mrb[0].mxu0
      %v2260 = vadd.f32 %v1055, %v2259
      %v2261 = vpop.f32.mrb[0].mxu0
      %v2262 = vadd.f32 %v1059, %v2261
      %2263 = vmatprep.mubr.bf16.mxu0 0
      %2264 = vmatmul.mubr.bf16.gmra.mrb[0].mxu0 %v1335
      %v2265 = vpop.f32.mrb[0].mxu0
      %v2266 = vadd.f32 %v1055, %v2265
      %v2267 = vpop.f32.mrb[0].mxu0
      %v2268 = vadd.f32 %v1059, %v2267
      %v2269 = vpop.f32.mrb[0].mxu0
      %v2270 = vadd.f32 %v1055, %v2269
      %v2271 = vpop.f32.mrb[0].mxu0
      %v2272 = vadd.f32 %v1059, %v2271
      %2273 = vmatprep.mubr.bf16.mxu0 0
      %2274 = vmatmul.mubr.bf16.gmra.mrb[0].mxu0 %v1338
      %v2275 = vpop.f32.mrb[0].mxu0
      %v2276 = vadd.f32 %v1055, %v2275
      %v2277 = vpop.f32.mrb[0].mxu0
      %v2278 = vadd.f32 %v1059, %v2277
      %v2279 = vpop.f32.mrb[0].mxu0
      %v2280 = vadd.f32 %v1055, %v2279
      %v2281 = vpop.f32.mrb[0].mxu0
      %v2282 = vadd.f32 %v1059, %v2281
      %2283 = vmatprep.mubr.bf16.mxu0 0
      %2284 = vmatmul.mubr.bf16.gmra.mrb[0].mxu0 %v1341
      %v2285 = vpop.f32.mrb[0].mxu0
      %v2286 = vadd.f32 %v1055, %v2285
      %v2287 = vpop.f32.mrb[0].mxu0
      %v2288 = vadd.f32 %v1059, %v2287
      %v2289 = vpop.f32.mrb[0].mxu0
      %v2290 = vadd.f32 %v1055, %v2289
      %v2291 = vpop.f32.mrb[0].mxu0
      %v2292 = vadd.f32 %v1059, %v2291
      %2293 = vmatprep.mubr.bf16.mxu0 0
      %2294 = vmatmul.mubr.bf16.gmra.mrb[0].mxu0 %v1344
      %v2295 = vpop.f32.mrb[0].mxu0
      %v2296 = vadd.f32 %v1055, %v2295
      %v2297 = vpop.f32.mrb[0].mxu0
      %v2298 = vadd.f32 %v1059, %v2297
      %v2299 = vpop.f32.mrb[0].mxu0
      %v2300 = vadd.f32 %v1055, %v2299
      %v2301 = vpop.f32.mrb[0].mxu0
      %v2302 = vadd.f32 %v1059, %v2301
      %2303 = vmatprep.mubr.bf16.mxu0 0
      %2304 = vmatmul.mubr.bf16.gmra.mrb[0].mxu0 %v1347
      %v2305 = vpop.f32.mrb[0].mxu0
      %v2306 = vadd.f32 %v1055, %v2305
      %v2307 = vpop.f32.mrb[0].mxu0
      %v2308 = vadd.f32 %v1059, %v2307
      %v2309 = vpop.f32.mrb[0].mxu0
      %v2310 = vadd.f32 %v1055, %v2309
      %v2311 = vpop.f32.mrb[0].mxu0
      %v2312 = vadd.f32 %v1059, %v2311
      %2313 = vdwg.mxu0
      %2314 = vmatprep.subr.bf16.mxu0 %v1227
      %2315 = vmatpush1.bf16.msra.mxu0 %v1226
      %2316 = vmatprep.subr.bf16.mxu0 %v1241
      %2317 = vmatpush1.bf16.msra.mxu0 %v1240
      %2318 = vmatprep.subr.bf16.mxu0 %v1255
      %2319 = vmatpush1.bf16.msra.mxu0 %v1254
      %2320 = vmatprep.subr.bf16.mxu0 0
      %2321 = vmatpush1.bf16.msra.mxu0 0
      %2322 = vmatprep.subr.bf16.mxu0 0
      %2323 = vmatpush1.bf16.msra.mxu0 0
      %2324 = vmatprep.subr.bf16.mxu0 0
      %2325 = vmatpush1.bf16.msra.mxu0 0
      %2326 = vmatprep.subr.bf16.mxu0 0
      %2327 = vmatpush1.bf16.msra.mxu0 0
      %2328 = vmatprep.subr.bf16.mxu0 0
      %2329 = vmatpush1.bf16.msra.mxu0 0
      %2330 = vmatprep.subr.bf16.mxu0 0
      %2331 = vmatpush1.bf16.msra.mxu0 0
      %2332 = vmatprep.subr.bf16.mxu0 0
      %2333 = vmatpush1.bf16.msra.mxu0 0
      %2334 = vmatprep.subr.bf16.mxu0 0
      %2335 = vmatpush1.bf16.msra.mxu0 0
      %2336 = vmatprep.subr.bf16.mxu0 0
      %2337 = vmatpush1.bf16.msra.mxu0 0
      %2338 = vmatprep.subr.bf16.mxu0 0
      %2339 = vmatpush1.bf16.msra.mxu0 0
      %2340 = vmatprep.subr.bf16.mxu0 0
      %2341 = vmatpush1.bf16.msra.mxu0 0
      %2342 = vmatprep.subr.bf16.mxu0 0
      %2343 = vmatpush1.bf16.msra.mxu0 0
      %2344 = vmatprep.subr.bf16.mxu0 0
      %2345 = vmatpush1.bf16.msra.mxu0 0
      %2346 = vmatprep.mubr.bf16.mxu0 0
      %2347 = vmatmul.mubr.bf16.gmra.mrb[0].mxu0 %v1302
      %v2348 = vpop.f32.mrb[0].mxu0
      %v2349 = vadd.f32 %v1063, %v2348
      %v2350 = vpop.f32.mrb[0].mxu0
      %v2351 = vadd.f32 %v1067, %v2350
      %v2352 = vpop.f32.mrb[0].mxu0
      %v2353 = vadd.f32 %v1063, %v2352
      %v2354 = vpop.f32.mrb[0].mxu0
      %v2355 = vadd.f32 %v1067, %v2354
      %2356 = vmatprep.mubr.bf16.mxu0 0
      %2357 = vmatmul.mubr.bf16.gmra.mrb[0].mxu0 %v1305
      %v2358 = vpop.f32.mrb[0].mxu0
      %v2359 = vadd.f32 %v1063, %v2358
      %v2360 = vpop.f32.mrb[0].mxu0
      %v2361 = vadd.f32 %v1067, %v2360
      %v2362 = vpop.f32.mrb[0].mxu0
      %v2363 = vadd.f32 %v1063, %v2362
      %v2364 = vpop.f32.mrb[0].mxu0
      %v2365 = vadd.f32 %v1067, %v2364
      %2366 = vmatprep.mubr.bf16.mxu0 0
      %2367 = vmatmul.mubr.bf16.gmra.mrb[0].mxu0 %v1308
      %v2368 = vpop.f32.mrb[0].mxu0
      %v2369 = vadd.f32 %v1063, %v2368
      %v2370 = vpop.f32.mrb[0].mxu0
      %v2371 = vadd.f32 %v1067, %v2370
      %v2372 = vpop.f32.mrb[0].mxu0
      %v2373 = vadd.f32 %v1063, %v2372
      %v2374 = vpop.f32.mrb[0].mxu0
      %v2375 = vadd.f32 %v1067, %v2374
      %2376 = vmatprep.mubr.bf16.mxu0 0
      %2377 = vmatmul.mubr.bf16.gmra.mrb[0].mxu0 %v1311
      %v2378 = vpop.f32.mrb[0].mxu0
      %v2379 = vadd.f32 %v1063, %v2378
      %v2380 = vpop.f32.mrb[0].mxu0
      %v2381 = vadd.f32 %v1067, %v2380
      %v2382 = vpop.f32.mrb[0].mxu0
      %v2383 = vadd.f32 %v1063, %v2382
      %v2384 = vpop.f32.mrb[0].mxu0
      %v2385 = vadd.f32 %v1067, %v2384
      %2386 = vmatprep.mubr.bf16.mxu0 0
      %2387 = vmatmul.mubr.bf16.gmra.mrb[0].mxu0 %v1314
      %v2388 = vpop.f32.mrb[0].mxu0
      %v2389 = vadd.f32 %v1063, %v2388
      %v2390 = vpop.f32.mrb[0].mxu0
      %v2391 = vadd.f32 %v1067, %v2390
      %v2392 = vpop.f32.mrb[0].mxu0
      %v2393 = vadd.f32 %v1063, %v2392
      %v2394 = vpop.f32.mrb[0].mxu0
      %v2395 = vadd.f32 %v1067, %v2394
      %2396 = vmatprep.mubr.bf16.mxu0 0
      %2397 = vmatmul.mubr.bf16.gmra.mrb[0].mxu0 %v1317
      %v2398 = vpop.f32.mrb[0].mxu0
      %v2399 = vadd.f32 %v1063, %v2398
      %v2400 = vpop.f32.mrb[0].mxu0
      %v2401 = vadd.f32 %v1067, %v2400
      %v2402 = vpop.f32.mrb[0].mxu0
      %v2403 = vadd.f32 %v1063, %v2402
      %v2404 = vpop.f32.mrb[0].mxu0
      %v2405 = vadd.f32 %v1067, %v2404
      %2406 = vmatprep.mubr.bf16.mxu0 0
      %2407 = vmatmul.mubr.bf16.gmra.mrb[0].mxu0 %v1320
      %v2408 = vpop.f32.mrb[0].mxu0
      %v2409 = vadd.f32 %v1063, %v2408
      %v2410 = vpop.f32.mrb[0].mxu0
      %v2411 = vadd.f32 %v1067, %v2410
      %v2412 = vpop.f32.mrb[0].mxu0
      %v2413 = vadd.f32 %v1063, %v2412
      %v2414 = vpop.f32.mrb[0].mxu0
      %v2415 = vadd.f32 %v1067, %v2414
      %2416 = vmatprep.mubr.bf16.mxu0 0
      %2417 = vmatmul.mubr.bf16.gmra.mrb[0].mxu0 %v1323
      %v2418 = vpop.f32.mrb[0].mxu0
      %v2419 = vadd.f32 %v1063, %v2418
      %v2420 = vpop.f32.mrb[0].mxu0
      %v2421 = vadd.f32 %v1067, %v2420
      %v2422 = vpop.f32.mrb[0].mxu0
      %v2423 = vadd.f32 %v1063, %v2422
      %v2424 = vpop.f32.mrb[0].mxu0
      %v2425 = vadd.f32 %v1067, %v2424
      %2426 = vmatprep.mubr.bf16.mxu0 0
      %2427 = vmatmul.mubr.bf16.gmra.mrb[0].mxu0 %v1326
      %v2428 = vpop.f32.mrb[0].mxu0
      %v2429 = vadd.f32 %v1063, %v2428
      %v2430 = vpop.f32.mrb[0].mxu0
      %v2431 = vadd.f32 %v1067, %v2430
      %v2432 = vpop.f32.mrb[0].mxu0
      %v2433 = vadd.f32 %v1063, %v2432
      %v2434 = vpop.f32.mrb[0].mxu0
      %v2435 = vadd.f32 %v1067, %v2434
      %2436 = vmatprep.mubr.bf16.mxu0 0
      %2437 = vmatmul.mubr.bf16.gmra.mrb[0].mxu0 %v1329
      %v2438 = vpop.f32.mrb[0].mxu0
      %v2439 = vadd.f32 %v1063, %v2438
      %v2440 = vpop.f32.mrb[0].mxu0
      %v2441 = vadd.f32 %v1067, %v2440
      %v2442 = vpop.f32.mrb[0].mxu0
      %v2443 = vadd.f32 %v1063, %v2442
      %v2444 = vpop.f32.mrb[0].mxu0
      %v2445 = vadd.f32 %v1067, %v2444
      %2446 = vmatprep.mubr.bf16.mxu0 0
      %2447 = vmatmul.mubr.bf16.gmra.mrb[0].mxu0 %v1332
      %v2448 = vpop.f32.mrb[0].mxu0
      %v2449 = vadd.f32 %v1063, %v2448
      %v2450 = vpop.f32.mrb[0].mxu0
      %v2451 = vadd.f32 %v1067, %v2450
      %v2452 = vpop.f32.mrb[0].mxu0
      %v2453 = vadd.f32 %v1063, %v2452
      %v2454 = vpop.f32.mrb[0].mxu0
      %v2455 = vadd.f32 %v1067, %v2454
      %2456 = vmatprep.mubr.bf16.mxu0 0
      %2457 = vmatmul.mubr.bf16.gmra.mrb[0].mxu0 %v1335
      %v2458 = vpop.f32.mrb[0].mxu0
      %v2459 = vadd.f32 %v1063, %v2458
      %v2460 = vpop.f32.mrb[0].mxu0
      %v2461 = vadd.f32 %v1067, %v2460
      %v2462 = vpop.f32.mrb[0].mxu0
      %v2463 = vadd.f32 %v1063, %v2462
      %v2464 = vpop.f32.mrb[0].mxu0
      %v2465 = vadd.f32 %v1067, %v2464
      %2466 = vmatprep.mubr.bf16.mxu0 0
      %2467 = vmatmul.mubr.bf16.gmra.mrb[0].mxu0 %v1338
      %v2468 = vpop.f32.mrb[0].mxu0
      %v2469 = vadd.f32 %v1063, %v2468
      %v2470 = vpop.f32.mrb[0].mxu0
      %v2471 = vadd.f32 %v1067, %v2470
      %v2472 = vpop.f32.mrb[0].mxu0
      %v2473 = vadd.f32 %v1063, %v2472
      %v2474 = vpop.f32.mrb[0].mxu0
      %v2475 = vadd.f32 %v1067, %v2474
      %2476 = vmatprep.mubr.bf16.mxu0 0
      %2477 = vmatmul.mubr.bf16.gmra.mrb[0].mxu0 %v1341
      %v2478 = vpop.f32.mrb[0].mxu0
      %v2479 = vadd.f32 %v1063, %v2478
      %v2480 = vpop.f32.mrb[0].mxu0
      %v2481 = vadd.f32 %v1067, %v2480
      %v2482 = vpop.f32.mrb[0].mxu0
      %v2483 = vadd.f32 %v1063, %v2482
      %v2484 = vpop.f32.mrb[0].mxu0
      %v2485 = vadd.f32 %v1067, %v2484
      %2486 = vmatprep.mubr.bf16.mxu0 0
      %2487 = vmatmul.mubr.bf16.gmra.mrb[0].mxu0 %v1344
      %v2488 = vpop.f32.mrb[0].mxu0
      %v2489 = vadd.f32 %v1063, %v2488
      %v2490 = vpop.f32.mrb[0].mxu0
      %v2491 = vadd.f32 %v1067, %v2490
      %v2492 = vpop.f32.mrb[0].mxu0
      %v2493 = vadd.f32 %v1063, %v2492
      %v2494 = vpop.f32.mrb[0].mxu0
      %v2495 = vadd.f32 %v1067, %v2494
      %2496 = vmatprep.mubr.bf16.mxu0 0
      %2497 = vmatmul.mubr.bf16.gmra.mrb[0].mxu0 %v1347
      %v2498 = vpop.f32.mrb[0].mxu0
      %v2499 = vadd.f32 %v1063, %v2498
      %v2500 = vpop.f32.mrb[0].mxu0
      %v2501 = vadd.f32 %v1067, %v2500
      %v2502 = vpop.f32.mrb[0].mxu0
      %v2503 = vadd.f32 %v1063, %v2502
      %v2504 = vpop.f32.mrb[0].mxu0
      %v2505 = vadd.f32 %v1067, %v2504
      %2506 = vdwg.mxu0
      %2507 = vmatprep.subr.bf16.mxu0 %v1229
      %2508 = vmatpush1.bf16.msra.mxu0 %v1228
      %2509 = vmatprep.subr.bf16.mxu0 %v1243
      %2510 = vmatpush1.bf16.msra.mxu0 %v1242
      %2511 = vmatprep.subr.bf16.mxu0 %v1257
      %2512 = vmatpush1.bf16.msra.mxu0 %v1256
      %2513 = vmatprep.subr.bf16.mxu0 0
      %2514 = vmatpush1.bf16.msra.mxu0 0
      %2515 = vmatprep.subr.bf16.mxu0 0
      %2516 = vmatpush1.bf16.msra.mxu0 0
      %2517 = vmatprep.subr.bf16.mxu0 0
      %2518 = vmatpush1.bf16.msra.mxu0 0
      %2519 = vmatprep.subr.bf16.mxu0 0
      %2520 = vmatpush1.bf16.msra.mxu0 0
      %2521 = vmatprep.subr.bf16.mxu0 0
      %2522 = vmatpush1.bf16.msra.mxu0 0
      %2523 = vmatprep.subr.bf16.mxu0 0
      %2524 = vmatpush1.bf16.msra.mxu0 0
      %2525 = vmatprep.subr.bf16.mxu0 0
      %2526 = vmatpush1.bf16.msra.mxu0 0
      %2527 = vmatprep.subr.bf16.mxu0 0
      %2528 = vmatpush1.bf16.msra.mxu0 0
      %2529 = vmatprep.subr.bf16.mxu0 0
      %2530 = vmatpush1.bf16.msra.mxu0 0
      %2531 = vmatprep.subr.bf16.mxu0 0
      %2532 = vmatpush1.bf16.msra.mxu0 0
      %2533 = vmatprep.subr.bf16.mxu0 0
      %2534 = vmatpush1.bf16.msra.mxu0 0
      %2535 = vmatprep.subr.bf16.mxu0 0
      %2536 = vmatpush1.bf16.msra.mxu0 0
      %2537 = vmatprep.subr.bf16.mxu0 0
      %2538 = vmatpush1.bf16.msra.mxu0 0
      %2539 = vmatprep.mubr.bf16.mxu0 0
      %2540 = vmatmul.mubr.bf16.gmra.mrb[0].mxu0 %v1302
      %v2541 = vpop.f32.mrb[0].mxu0
      %v2542 = vadd.f32 %v1071, %v2541
      %v2543 = vpop.f32.mrb[0].mxu0
      %v2544 = vadd.f32 %v1075, %v2543
      %v2545 = vpop.f32.mrb[0].mxu0
      %v2546 = vadd.f32 %v1071, %v2545
      %v2547 = vpop.f32.mrb[0].mxu0
      %v2548 = vadd.f32 %v1075, %v2547
      %2549 = vmatprep.mubr.bf16.mxu0 0
      %2550 = vmatmul.mubr.bf16.gmra.mrb[0].mxu0 %v1305
      %v2551 = vpop.f32.mrb[0].mxu0
      %v2552 = vadd.f32 %v1071, %v2551
      %v2553 = vpop.f32.mrb[0].mxu0
      %v2554 = vadd.f32 %v1075, %v2553
      %v2555 = vpop.f32.mrb[0].mxu0
      %v2556 = vadd.f32 %v1071, %v2555
      %v2557 = vpop.f32.mrb[0].mxu0
      %v2558 = vadd.f32 %v1075, %v2557
      %2559 = vmatprep.mubr.bf16.mxu0 0
      %2560 = vmatmul.mubr.bf16.gmra.mrb[0].mxu0 %v1308
      %v2561 = vpop.f32.mrb[0].mxu0
      %v2562 = vadd.f32 %v1071, %v2561
      %v2563 = vpop.f32.mrb[0].mxu0
      %v2564 = vadd.f32 %v1075, %v2563
      %v2565 = vpop.f32.mrb[0].mxu0
      %v2566 = vadd.f32 %v1071, %v2565
      %v2567 = vpop.f32.mrb[0].mxu0
      %v2568 = vadd.f32 %v1075, %v2567
      %2569 = vmatprep.mubr.bf16.mxu0 0
      %2570 = vmatmul.mubr.bf16.gmra.mrb[0].mxu0 %v1311
      %v2571 = vpop.f32.mrb[0].mxu0
      %v2572 = vadd.f32 %v1071, %v2571
      %v2573 = vpop.f32.mrb[0].mxu0
      %v2574 = vadd.f32 %v1075, %v2573
      %v2575 = vpop.f32.mrb[0].mxu0
      %v2576 = vadd.f32 %v1071, %v2575
      %v2577 = vpop.f32.mrb[0].mxu0
      %v2578 = vadd.f32 %v1075, %v2577
      %2579 = vmatprep.mubr.bf16.mxu0 0
      %2580 = vmatmul.mubr.bf16.gmra.mrb[0].mxu0 %v1314
      %v2581 = vpop.f32.mrb[0].mxu0
      %v2582 = vadd.f32 %v1071, %v2581
      %v2583 = vpop.f32.mrb[0].mxu0
      %v2584 = vadd.f32 %v1075, %v2583
      %v2585 = vpop.f32.mrb[0].mxu0
      %v2586 = vadd.f32 %v1071, %v2585
      %v2587 = vpop.f32.mrb[0].mxu0
      %v2588 = vadd.f32 %v1075, %v2587
      %2589 = vmatprep.mubr.bf16.mxu0 0
      %2590 = vmatmul.mubr.bf16.gmra.mrb[0].mxu0 %v1317
      %v2591 = vpop.f32.mrb[0].mxu0
      %v2592 = vadd.f32 %v1071, %v2591
      %v2593 = vpop.f32.mrb[0].mxu0
      %v2594 = vadd.f32 %v1075, %v2593
      %v2595 = vpop.f32.mrb[0].mxu0
      %v2596 = vadd.f32 %v1071, %v2595
      %v2597 = vpop.f32.mrb[0].mxu0
      %v2598 = vadd.f32 %v1075, %v2597
      %2599 = vmatprep.mubr.bf16.mxu0 0
      %2600 = vmatmul.mubr.bf16.gmra.mrb[0].mxu0 %v1320
      %v2601 = vpop.f32.mrb[0].mxu0
      %v2602 = vadd.f32 %v1071, %v2601
      %v2603 = vpop.f32.mrb[0].mxu0
      %v2604 = vadd.f32 %v1075, %v2603
      %v2605 = vpop.f32.mrb[0].mxu0
      %v2606 = vadd.f32 %v1071, %v2605
      %v2607 = vpop.f32.mrb[0].mxu0
      %v2608 = vadd.f32 %v1075, %v2607
      %2609 = vmatprep.mubr.bf16.mxu0 0
      %2610 = vmatmul.mubr.bf16.gmra.mrb[0].mxu0 %v1323
      %v2611 = vpop.f32.mrb[0].mxu0
      %v2612 = vadd.f32 %v1071, %v2611
      %v2613 = vpop.f32.mrb[0].mxu0
      %v2614 = vadd.f32 %v1075, %v2613
      %v2615 = vpop.f32.mrb[0].mxu0
      %v2616 = vadd.f32 %v1071, %v2615
      %v2617 = vpop.f32.mrb[0].mxu0
      %v2618 = vadd.f32 %v1075, %v2617
      %2619 = vmatprep.mubr.bf16.mxu0 0
      %2620 = vmatmul.mubr.bf16.gmra.mrb[0].mxu0 %v1326
      %v2621 = vpop.f32.mrb[0].mxu0
      %v2622 = vadd.f32 %v1071, %v2621
      %v2623 = vpop.f32.mrb[0].mxu0
      %v2624 = vadd.f32 %v1075, %v2623
      %v2625 = vpop.f32.mrb[0].mxu0
      %v2626 = vadd.f32 %v1071, %v2625
      %v2627 = vpop.f32.mrb[0].mxu0
      %v2628 = vadd.f32 %v1075, %v2627
      %2629 = vmatprep.mubr.bf16.mxu0 0
      %2630 = vmatmul.mubr.bf16.gmra.mrb[0].mxu0 %v1329
      %v2631 = vpop.f32.mrb[0].mxu0
      %v2632 = vadd.f32 %v1071, %v2631
      %v2633 = vpop.f32.mrb[0].mxu0
      %v2634 = vadd.f32 %v1075, %v2633
      %v2635 = vpop.f32.mrb[0].mxu0
      %v2636 = vadd.f32 %v1071, %v2635
      %v2637 = vpop.f32.mrb[0].mxu0
      %v2638 = vadd.f32 %v1075, %v2637
      %2639 = vmatprep.mubr.bf16.mxu0 0
      %2640 = vmatmul.mubr.bf16.gmra.mrb[0].mxu0 %v1332
      %v2641 = vpop.f32.mrb[0].mxu0
      %v2642 = vadd.f32 %v1071, %v2641
      %v2643 = vpop.f32.mrb[0].mxu0
      %v2644 = vadd.f32 %v1075, %v2643
      %v2645 = vpop.f32.mrb[0].mxu0
      %v2646 = vadd.f32 %v1071, %v2645
      %v2647 = vpop.f32.mrb[0].mxu0
      %v2648 = vadd.f32 %v1075, %v2647
      %2649 = vmatprep.mubr.bf16.mxu0 0
      %2650 = vmatmul.mubr.bf16.gmra.mrb[0].mxu0 %v1335
      %v2651 = vpop.f32.mrb[0].mxu0
      %v2652 = vadd.f32 %v1071, %v2651
      %v2653 = vpop.f32.mrb[0].mxu0
      %v2654 = vadd.f32 %v1075, %v2653
      %v2655 = vpop.f32.mrb[0].mxu0
      %v2656 = vadd.f32 %v1071, %v2655
      %v2657 = vpop.f32.mrb[0].mxu0
      %v2658 = vadd.f32 %v1075, %v2657
      %2659 = vmatprep.mubr.bf16.mxu0 0
      %2660 = vmatmul.mubr.bf16.gmra.mrb[0].mxu0 %v1338
      %v2661 = vpop.f32.mrb[0].mxu0
      %v2662 = vadd.f32 %v1071, %v2661
      %v2663 = vpop.f32.mrb[0].mxu0
      %v2664 = vadd.f32 %v1075, %v2663
      %v2665 = vpop.f32.mrb[0].mxu0
      %v2666 = vadd.f32 %v1071, %v2665
      %v2667 = vpop.f32.mrb[0].mxu0
      %v2668 = vadd.f32 %v1075, %v2667
      %2669 = vmatprep.mubr.bf16.mxu0 0
      %2670 = vmatmul.mubr.bf16.gmra.mrb[0].mxu0 %v1341
      %v2671 = vpop.f32.mrb[0].mxu0
      %v2672 = vadd.f32 %v1071, %v2671
      %v2673 = vpop.f32.mrb[0].mxu0
      %v2674 = vadd.f32 %v1075, %v2673
      %v2675 = vpop.f32.mrb[0].mxu0
      %v2676 = vadd.f32 %v1071, %v2675
      %v2677 = vpop.f32.mrb[0].mxu0
      %v2678 = vadd.f32 %v1075, %v2677
      %2679 = vmatprep.mubr.bf16.mxu0 0
      %2680 = vmatmul.mubr.bf16.gmra.mrb[0].mxu0 %v1344
      %v2681 = vpop.f32.mrb[0].mxu0
      %v2682 = vadd.f32 %v1071, %v2681
      %v2683 = vpop.f32.mrb[0].mxu0
      %v2684 = vadd.f32 %v1075, %v2683
      %v2685 = vpop.f32.mrb[0].mxu0
      %v2686 = vadd.f32 %v1071, %v2685
      %v2687 = vpop.f32.mrb[0].mxu0
      %v2688 = vadd.f32 %v1075, %v2687
      %2689 = vmatprep.mubr.bf16.mxu0 0
      %2690 = vmatmul.mubr.bf16.gmra.mrb[0].mxu0 %v1347
      %v2691 = vpop.f32.mrb[0].mxu0
      %v2692 = vadd.f32 %v1071, %v2691
      %v2693 = vpop.f32.mrb[0].mxu0
      %v2694 = vadd.f32 %v1075, %v2693
      %v2695 = vpop.f32.mrb[0].mxu0
      %v2696 = vadd.f32 %v1071, %v2695
      %v2697 = vpop.f32.mrb[0].mxu0
      %v2698 = vadd.f32 %v1075, %v2697
      %2699 = vdwg.mxu0
      %v2700 = vxor.u32 %v1384, 2147483648
      %v2701 = vxor.u32 %v1386, 2147483648
      %v2702 = vxor.u32 %v1577, 2147483648
      %v2703 = vxor.u32 %v1579, 2147483648
      %v2704 = vxor.u32 %v1770, 2147483648
      %v2705 = vxor.u32 %v1772, 2147483648
      %v2706 = vxor.u32 %v1963, 2147483648
      %v2707 = vxor.u32 %v1965, 2147483648
      %v2708 = vxor.u32 %v2156, 2147483648
      %v2709 = vxor.u32 %v2158, 2147483648
      %v2710 = vxor.u32 %v2349, 2147483648
      %v2711 = vxor.u32 %v2351, 2147483648
      %v2712 = vxor.u32 %v2542, 2147483648
      %v2713 = vxor.u32 %v2544, 2147483648
      %v2714 = vxor.u32 %v1388, 2147483648
      %v2715 = vxor.u32 %v1390, 2147483648
      %v2716 = vxor.u32 %v1581, 2147483648
      %v2717 = vxor.u32 %v1583, 2147483648
      %v2718 = vxor.u32 %v1774, 2147483648
      %v2719 = vxor.u32 %v1776, 2147483648
      %v2720 = vxor.u32 %v1967, 2147483648
      %v2721 = vxor.u32 %v1969, 2147483648
      %v2722 = vxor.u32 %v2160, 2147483648
      %v2723 = vxor.u32 %v2162, 2147483648
      %v2724 = vxor.u32 %v2353, 2147483648
      %v2725 = vxor.u32 %v2355, 2147483648
      %v2726 = vxor.u32 %v2546, 2147483648
      %v2727 = vxor.u32 %v2548, 2147483648
      %v2728 = vxor.u32 %v1394, 2147483648
      %v2729 = vxor.u32 %v1396, 2147483648
      %v2730 = vxor.u32 %v1587, 2147483648
      %v2731 = vxor.u32 %v1589, 2147483648
      %v2732 = vxor.u32 %v1780, 2147483648
      %v2733 = vxor.u32 %v1782, 2147483648
      %v2734 = vxor.u32 %v1973, 2147483648
      %v2735 = vxor.u32 %v1975, 2147483648
      %v2736 = vxor.u32 %v2166, 2147483648
      %v2737 = vxor.u32 %v2168, 2147483648
      %v2738 = vxor.u32 %v2359, 2147483648
      %v2739 = vxor.u32 %v2361, 2147483648
      %v2740 = vxor.u32 %v2552, 2147483648
      %v2741 = vxor.u32 %v2554, 2147483648
      %v2742 = vxor.u32 %v1398, 2147483648
      %v2743 = vxor.u32 %v1400, 2147483648
      %v2744 = vxor.u32 %v1591, 2147483648
      %v2745 = vxor.u32 %v1593, 2147483648
      %v2746 = vxor.u32 %v1784, 2147483648
      %v2747 = vxor.u32 %v1786, 2147483648
      %v2748 = vxor.u32 %v1977, 2147483648
      %v2749 = vxor.u32 %v1979, 2147483648
      %v2750 = vxor.u32 %v2170, 2147483648
      %v2751 = vxor.u32 %v2172, 2147483648
      %v2752 = vxor.u32 %v2363, 2147483648
      %v2753 = vxor.u32 %v2365, 2147483648
      %v2754 = vxor.u32 %v2556, 2147483648
      %v2755 = vxor.u32 %v2558, 2147483648
      %v2756 = vxor.u32 %v1404, 2147483648
      %v2757 = vxor.u32 %v1406, 2147483648
      %v2758 = vxor.u32 %v1597, 2147483648
      %v2759 = vxor.u32 %v1599, 2147483648
      %v2760 = vxor.u32 %v1790, 2147483648
      %v2761 = vxor.u32 %v1792, 2147483648
      %v2762 = vxor.u32 %v1983, 2147483648
      %v2763 = vxor.u32 %v1985, 2147483648
      %v2764 = vxor.u32 %v2176, 2147483648
      %v2765 = vxor.u32 %v2178, 2147483648
      %v2766 = vxor.u32 %v2369, 2147483648
      %v2767 = vxor.u32 %v2371, 2147483648
      %v2768 = vxor.u32 %v2562, 2147483648
      %v2769 = vxor.u32 %v2564, 2147483648
      %v2770 = vxor.u32 %v1408, 2147483648
      %v2771 = vxor.u32 %v1410, 2147483648
      %v2772 = vxor.u32 %v1601, 2147483648
      %v2773 = vxor.u32 %v1603, 2147483648
      %v2774 = vxor.u32 %v1794, 2147483648
      %v2775 = vxor.u32 %v1796, 2147483648
      %v2776 = vxor.u32 %v1987, 2147483648
      %v2777 = vxor.u32 %v1989, 2147483648
      %v2778 = vxor.u32 %v2180, 2147483648
      %v2779 = vxor.u32 %v2182, 2147483648
      %v2780 = vxor.u32 %v2373, 2147483648
      %v2781 = vxor.u32 %v2375, 2147483648
      %v2782 = vxor.u32 %v2566, 2147483648
      %v2783 = vxor.u32 %v2568, 2147483648
      %v2784 = vxor.u32 %v1414, 2147483648
      %v2785 = vxor.u32 %v1416, 2147483648
      %v2786 = vxor.u32 %v1607, 2147483648
      %v2787 = vxor.u32 %v1609, 2147483648
      %v2788 = vxor.u32 %v1800, 2147483648
      %v2789 = vxor.u32 %v1802, 2147483648
      %v2790 = vxor.u32 %v1993, 2147483648
      %v2791 = vxor.u32 %v1995, 2147483648
      %v2792 = vxor.u32 %v2186, 2147483648
      %v2793 = vxor.u32 %v2188, 2147483648
      %v2794 = vxor.u32 %v2379, 2147483648
      %v2795 = vxor.u32 %v2381, 2147483648
      %v2796 = vxor.u32 %v2572, 2147483648
      %v2797 = vxor.u32 %v2574, 2147483648
      %v2798 = vxor.u32 %v1418, 2147483648
      %v2799 = vxor.u32 %v1420, 2147483648
      %v2800 = vxor.u32 %v1611, 2147483648
      %v2801 = vxor.u32 %v1613, 2147483648
      %v2802 = vxor.u32 %v1804, 2147483648
      %v2803 = vxor.u32 %v1806, 2147483648
      %v2804 = vxor.u32 %v1997, 2147483648
      %v2805 = vxor.u32 %v1999, 2147483648
      %v2806 = vxor.u32 %v2190, 2147483648
      %v2807 = vxor.u32 %v2192, 2147483648
      %v2808 = vxor.u32 %v2383, 2147483648
      %v2809 = vxor.u32 %v2385, 2147483648
      %v2810 = vxor.u32 %v2576, 2147483648
      %v2811 = vxor.u32 %v2578, 2147483648
      %v2812 = vxor.u32 %v1424, 2147483648
      %v2813 = vxor.u32 %v1426, 2147483648
      %v2814 = vxor.u32 %v1617, 2147483648
      %v2815 = vxor.u32 %v1619, 2147483648
      %v2816 = vxor.u32 %v1810, 2147483648
      %v2817 = vxor.u32 %v1812, 2147483648
      %v2818 = vxor.u32 %v2003, 2147483648
      %v2819 = vxor.u32 %v2005, 2147483648
      %v2820 = vxor.u32 %v2196, 2147483648
      %v2821 = vxor.u32 %v2198, 2147483648
      %v2822 = vxor.u32 %v2389, 2147483648
      %v2823 = vxor.u32 %v2391, 2147483648
      %v2824 = vxor.u32 %v2582, 2147483648
      %v2825 = vxor.u32 %v2584, 2147483648
      %v2826 = vxor.u32 %v1428, 2147483648
      %v2827 = vxor.u32 %v1430, 2147483648
      %v2828 = vxor.u32 %v1621, 2147483648
      %v2829 = vxor.u32 %v1623, 2147483648
      %v2830 = vxor.u32 %v1814, 2147483648
      %v2831 = vxor.u32 %v1816, 2147483648
      %v2832 = vxor.u32 %v2007, 2147483648
      %v2833 = vxor.u32 %v2009, 2147483648
      %v2834 = vxor.u32 %v2200, 2147483648
      %v2835 = vxor.u32 %v2202, 2147483648
      %v2836 = vxor.u32 %v2393, 2147483648
      %v2837 = vxor.u32 %v2395, 2147483648
      %v2838 = vxor.u32 %v2586, 2147483648
      %v2839 = vxor.u32 %v2588, 2147483648
      %v2840 = vxor.u32 %v1434, 2147483648
      %v2841 = vxor.u32 %v1436, 2147483648
      %v2842 = vxor.u32 %v1627, 2147483648
      %v2843 = vxor.u32 %v1629, 2147483648
      %v2844 = vxor.u32 %v1820, 2147483648
      %v2845 = vxor.u32 %v1822, 2147483648
      %v2846 = vxor.u32 %v2013, 2147483648
      %v2847 = vxor.u32 %v2015, 2147483648
      %v2848 = vxor.u32 %v2206, 2147483648
      %v2849 = vxor.u32 %v2208, 2147483648
      %v2850 = vxor.u32 %v2399, 2147483648
      %v2851 = vxor.u32 %v2401, 2147483648
      %v2852 = vxor.u32 %v2592, 2147483648
      %v2853 = vxor.u32 %v2594, 2147483648
      %v2854 = vxor.u32 %v1438, 2147483648
      %v2855 = vxor.u32 %v1440, 2147483648
      %v2856 = vxor.u32 %v1631, 2147483648
      %v2857 = vxor.u32 %v1633, 2147483648
      %v2858 = vxor.u32 %v1824, 2147483648
      %v2859 = vxor.u32 %v1826, 2147483648
      %v2860 = vxor.u32 %v2017, 2147483648
      %v2861 = vxor.u32 %v2019, 2147483648
      %v2862 = vxor.u32 %v2210, 2147483648
      %v2863 = vxor.u32 %v2212, 2147483648
      %v2864 = vxor.u32 %v2403, 2147483648
      %v2865 = vxor.u32 %v2405, 2147483648
      %v2866 = vxor.u32 %v2596, 2147483648
      %v2867 = vxor.u32 %v2598, 2147483648
      %v2868 = vxor.u32 %v1444, 2147483648
      %v2869 = vxor.u32 %v1446, 2147483648
      %v2870 = vxor.u32 %v1637, 2147483648
      %v2871 = vxor.u32 %v1639, 2147483648
      %v2872 = vxor.u32 %v1830, 2147483648
      %v2873 = vxor.u32 %v1832, 2147483648
      %v2874 = vxor.u32 %v2023, 2147483648
      %v2875 = vxor.u32 %v2025, 2147483648
      %v2876 = vxor.u32 %v2216, 2147483648
      %v2877 = vxor.u32 %v2218, 2147483648
      %v2878 = vxor.u32 %v2409, 2147483648
      %v2879 = vxor.u32 %v2411, 2147483648
      %v2880 = vxor.u32 %v2602, 2147483648
      %v2881 = vxor.u32 %v2604, 2147483648
      %v2882 = vxor.u32 %v1448, 2147483648
      %v2883 = vxor.u32 %v1450, 2147483648
      %v2884 = vxor.u32 %v1641, 2147483648
      %v2885 = vxor.u32 %v1643, 2147483648
      %v2886 = vxor.u32 %v1834, 2147483648
      %v2887 = vxor.u32 %v1836, 2147483648
      %v2888 = vxor.u32 %v2027, 2147483648
      %v2889 = vxor.u32 %v2029, 2147483648
      %v2890 = vxor.u32 %v2220, 2147483648
      %v2891 = vxor.u32 %v2222, 2147483648
      %v2892 = vxor.u32 %v2413, 2147483648
      %v2893 = vxor.u32 %v2415, 2147483648
      %v2894 = vxor.u32 %v2606, 2147483648
      %v2895 = vxor.u32 %v2608, 2147483648
      %v2896 = vxor.u32 %v1454, 2147483648
      %v2897 = vxor.u32 %v1456, 2147483648
      %v2898 = vxor.u32 %v1647, 2147483648
      %v2899 = vxor.u32 %v1649, 2147483648
      %v2900 = vxor.u32 %v1840, 2147483648
      %v2901 = vxor.u32 %v1842, 2147483648
      %v2902 = vxor.u32 %v2033, 2147483648
      %v2903 = vxor.u32 %v2035, 2147483648
      %v2904 = vxor.u32 %v2226, 2147483648
      %v2905 = vxor.u32 %v2228, 2147483648
      %v2906 = vxor.u32 %v2419, 2147483648
      %v2907 = vxor.u32 %v2421, 2147483648
      %v2908 = vxor.u32 %v2612, 2147483648
      %v2909 = vxor.u32 %v2614, 2147483648
      %v2910 = vxor.u32 %v1458, 2147483648
      %v2911 = vxor.u32 %v1460, 2147483648
      %v2912 = vxor.u32 %v1651, 2147483648
      %v2913 = vxor.u32 %v1653, 2147483648
      %v2914 = vxor.u32 %v1844, 2147483648
      %v2915 = vxor.u32 %v1846, 2147483648
      %v2916 = vxor.u32 %v2037, 2147483648
      %v2917 = vxor.u32 %v2039, 2147483648
      %v2918 = vxor.u32 %v2230, 2147483648
      %v2919 = vxor.u32 %v2232, 2147483648
      %v2920 = vxor.u32 %v2423, 2147483648
      %v2921 = vxor.u32 %v2425, 2147483648
      %v2922 = vxor.u32 %v2616, 2147483648
      %v2923 = vxor.u32 %v2618, 2147483648
      %v2924 = vxor.u32 %v1464, 2147483648
      %v2925 = vxor.u32 %v1466, 2147483648
      %v2926 = vxor.u32 %v1657, 2147483648
      %v2927 = vxor.u32 %v1659, 2147483648
      %v2928 = vxor.u32 %v1850, 2147483648
      %v2929 = vxor.u32 %v1852, 2147483648
      %v2930 = vxor.u32 %v2043, 2147483648
      %v2931 = vxor.u32 %v2045, 2147483648
      %v2932 = vxor.u32 %v2236, 2147483648
      %v2933 = vxor.u32 %v2238, 2147483648
      %v2934 = vxor.u32 %v2429, 2147483648
      %v2935 = vxor.u32 %v2431, 2147483648
      %v2936 = vxor.u32 %v2622, 2147483648
      %v2937 = vxor.u32 %v2624, 2147483648
      %v2938 = vxor.u32 %v1468, 2147483648
      %v2939 = vxor.u32 %v1470, 2147483648
      %v2940 = vxor.u32 %v1661, 2147483648
      %v2941 = vxor.u32 %v1663, 2147483648
      %v2942 = vxor.u32 %v1854, 2147483648
      %v2943 = vxor.u32 %v1856, 2147483648
      %v2944 = vxor.u32 %v2047, 2147483648
      %v2945 = vxor.u32 %v2049, 2147483648
      %v2946 = vxor.u32 %v2240, 2147483648
      %v2947 = vxor.u32 %v2242, 2147483648
      %v2948 = vxor.u32 %v2433, 2147483648
      %v2949 = vxor.u32 %v2435, 2147483648
      %v2950 = vxor.u32 %v2626, 2147483648
      %v2951 = vxor.u32 %v2628, 2147483648
      %v2952 = vxor.u32 %v1474, 2147483648
      %v2953 = vxor.u32 %v1476, 2147483648
      %v2954 = vxor.u32 %v1667, 2147483648
      %v2955 = vxor.u32 %v1669, 2147483648
      %v2956 = vxor.u32 %v1860, 2147483648
      %v2957 = vxor.u32 %v1862, 2147483648
      %v2958 = vxor.u32 %v2053, 2147483648
      %v2959 = vxor.u32 %v2055, 2147483648
      %v2960 = vxor.u32 %v2246, 2147483648
      %v2961 = vxor.u32 %v2248, 2147483648
      %v2962 = vxor.u32 %v2439, 2147483648
      %v2963 = vxor.u32 %v2441, 2147483648
      %v2964 = vxor.u32 %v2632, 2147483648
      %v2965 = vxor.u32 %v2634, 2147483648
      %v2966 = vxor.u32 %v1478, 2147483648
      %v2967 = vxor.u32 %v1480, 2147483648
      %v2968 = vxor.u32 %v1671, 2147483648
      %v2969 = vxor.u32 %v1673, 2147483648
      %v2970 = vxor.u32 %v1864, 2147483648
      %v2971 = vxor.u32 %v1866, 2147483648
      %v2972 = vxor.u32 %v2057, 2147483648
      %v2973 = vxor.u32 %v2059, 2147483648
      %v2974 = vxor.u32 %v2250, 2147483648
      %v2975 = vxor.u32 %v2252, 2147483648
      %v2976 = vxor.u32 %v2443, 2147483648
      %v2977 = vxor.u32 %v2445, 2147483648
      %v2978 = vxor.u32 %v2636, 2147483648
      %v2979 = vxor.u32 %v2638, 2147483648
      %v2980 = vxor.u32 %v1484, 2147483648
      %v2981 = vxor.u32 %v1486, 2147483648
      %v2982 = vxor.u32 %v1677, 2147483648
      %v2983 = vxor.u32 %v1679, 2147483648
      %v2984 = vxor.u32 %v1870, 2147483648
      %v2985 = vxor.u32 %v1872, 2147483648
      %v2986 = vxor.u32 %v2063, 2147483648
      %v2987 = vxor.u32 %v2065, 2147483648
      %v2988 = vxor.u32 %v2256, 2147483648
      %v2989 = vxor.u32 %v2258, 2147483648
      %v2990 = vxor.u32 %v2449, 2147483648
      %v2991 = vxor.u32 %v2451, 2147483648
      %v2992 = vxor.u32 %v2642, 2147483648
      %v2993 = vxor.u32 %v2644, 2147483648
      %v2994 = vxor.u32 %v1488, 2147483648
      %v2995 = vxor.u32 %v1490, 2147483648
      %v2996 = vxor.u32 %v1681, 2147483648
      %v2997 = vxor.u32 %v1683, 2147483648
      %v2998 = vxor.u32 %v1874, 2147483648
      %v2999 = vxor.u32 %v1876, 2147483648
      %v3000 = vxor.u32 %v2067, 2147483648
      %v3001 = vxor.u32 %v2069, 2147483648
      %v3002 = vxor.u32 %v2260, 2147483648
      %v3003 = vxor.u32 %v2262, 2147483648
      %v3004 = vxor.u32 %v2453, 2147483648
      %v3005 = vxor.u32 %v2455, 2147483648
      %v3006 = vxor.u32 %v2646, 2147483648
      %v3007 = vxor.u32 %v2648, 2147483648
      %v3008 = vxor.u32 %v1494, 2147483648
      %v3009 = vxor.u32 %v1496, 2147483648
      %v3010 = vxor.u32 %v1687, 2147483648
      %v3011 = vxor.u32 %v1689, 2147483648
      %v3012 = vxor.u32 %v1880, 2147483648
      %v3013 = vxor.u32 %v1882, 2147483648
      %v3014 = vxor.u32 %v2073, 2147483648
      %v3015 = vxor.u32 %v2075, 2147483648
      %v3016 = vxor.u32 %v2266, 2147483648
      %v3017 = vxor.u32 %v2268, 2147483648
      %v3018 = vxor.u32 %v2459, 2147483648
      %v3019 = vxor.u32 %v2461, 2147483648
      %v3020 = vxor.u32 %v2652, 2147483648
      %v3021 = vxor.u32 %v2654, 2147483648
      %v3022 = vxor.u32 %v1498, 2147483648
      %v3023 = vxor.u32 %v1500, 2147483648
      %v3024 = vxor.u32 %v1691, 2147483648
      %v3025 = vxor.u32 %v1693, 2147483648
      %v3026 = vxor.u32 %v1884, 2147483648
      %v3027 = vxor.u32 %v1886, 2147483648
      %v3028 = vxor.u32 %v2077, 2147483648
      %v3029 = vxor.u32 %v2079, 2147483648
      %v3030 = vxor.u32 %v2270, 2147483648
      %v3031 = vxor.u32 %v2272, 2147483648
      %v3032 = vxor.u32 %v2463, 2147483648
      %v3033 = vxor.u32 %v2465, 2147483648
      %v3034 = vxor.u32 %v2656, 2147483648
      %v3035 = vxor.u32 %v2658, 2147483648
      %v3036 = vxor.u32 %v1504, 2147483648
      %v3037 = vxor.u32 %v1506, 2147483648
      %v3038 = vxor.u32 %v1697, 2147483648
      %v3039 = vxor.u32 %v1699, 2147483648
      %v3040 = vxor.u32 %v1890, 2147483648
      %v3041 = vxor.u32 %v1892, 2147483648
      %v3042 = vxor.u32 %v2083, 2147483648
      %v3043 = vxor.u32 %v2085, 2147483648
      %v3044 = vxor.u32 %v2276, 2147483648
      %v3045 = vxor.u32 %v2278, 2147483648
      %v3046 = vxor.u32 %v2469, 2147483648
      %v3047 = vxor.u32 %v2471, 2147483648
      %v3048 = vxor.u32 %v2662, 2147483648
      %v3049 = vxor.u32 %v2664, 2147483648
      %v3050 = vxor.u32 %v1508, 2147483648
      %v3051 = vxor.u32 %v1510, 2147483648
      %v3052 = vxor.u32 %v1701, 2147483648
      %v3053 = vxor.u32 %v1703, 2147483648
      %v3054 = vxor.u32 %v1894, 2147483648
      %v3055 = vxor.u32 %v1896, 2147483648
      %v3056 = vxor.u32 %v2087, 2147483648
      %v3057 = vxor.u32 %v2089, 2147483648
      %v3058 = vxor.u32 %v2280, 2147483648
      %v3059 = vxor.u32 %v2282, 2147483648
      %v3060 = vxor.u32 %v2473, 2147483648
      %v3061 = vxor.u32 %v2475, 2147483648
      %v3062 = vxor.u32 %v2666, 2147483648
      %v3063 = vxor.u32 %v2668, 2147483648
      %v3064 = vxor.u32 %v1514, 2147483648
      %v3065 = vxor.u32 %v1516, 2147483648
      %v3066 = vxor.u32 %v1707, 2147483648
      %v3067 = vxor.u32 %v1709, 2147483648
      %v3068 = vxor.u32 %v1900, 2147483648
      %v3069 = vxor.u32 %v1902, 2147483648
      %v3070 = vxor.u32 %v2093, 2147483648
      %v3071 = vxor.u32 %v2095, 2147483648
      %v3072 = vxor.u32 %v2286, 2147483648
      %v3073 = vxor.u32 %v2288, 2147483648
      %v3074 = vxor.u32 %v2479, 2147483648
      %v3075 = vxor.u32 %v2481, 2147483648
      %v3076 = vxor.u32 %v2672, 2147483648
      %v3077 = vxor.u32 %v2674, 2147483648
      %v3078 = vxor.u32 %v1518, 2147483648
      %v3079 = vxor.u32 %v1520, 2147483648
      %v3080 = vxor.u32 %v1711, 2147483648
      %v3081 = vxor.u32 %v1713, 2147483648
      %v3082 = vxor.u32 %v1904, 2147483648
      %v3083 = vxor.u32 %v1906, 2147483648
      %v3084 = vxor.u32 %v2097, 2147483648
      %v3085 = vxor.u32 %v2099, 2147483648
      %v3086 = vxor.u32 %v2290, 2147483648
      %v3087 = vxor.u32 %v2292, 2147483648
      %v3088 = vxor.u32 %v2483, 2147483648
      %v3089 = vxor.u32 %v2485, 2147483648
      %v3090 = vxor.u32 %v2676, 2147483648
      %v3091 = vxor.u32 %v2678, 2147483648
      %v3092 = vxor.u32 %v1524, 2147483648
      %v3093 = vxor.u32 %v1526, 2147483648
      %v3094 = vxor.u32 %v1717, 2147483648
      %v3095 = vxor.u32 %v1719, 2147483648
      %v3096 = vxor.u32 %v1910, 2147483648
      %v3097 = vxor.u32 %v1912, 2147483648
      %v3098 = vxor.u32 %v2103, 2147483648
      %v3099 = vxor.u32 %v2105, 2147483648
      %v3100 = vxor.u32 %v2296, 2147483648
      %v3101 = vxor.u32 %v2298, 2147483648
      %v3102 = vxor.u32 %v2489, 2147483648
      %v3103 = vxor.u32 %v2491, 2147483648
      %v3104 = vxor.u32 %v2682, 2147483648
      %v3105 = vxor.u32 %v2684, 2147483648
      %v3106 = vxor.u32 %v1528, 2147483648
      %v3107 = vxor.u32 %v1530, 2147483648
      %v3108 = vxor.u32 %v1721, 2147483648
      %v3109 = vxor.u32 %v1723, 2147483648
      %v3110 = vxor.u32 %v1914, 2147483648
      %v3111 = vxor.u32 %v1916, 2147483648
      %v3112 = vxor.u32 %v2107, 2147483648
      %v3113 = vxor.u32 %v2109, 2147483648
      %v3114 = vxor.u32 %v2300, 2147483648
      %v3115 = vxor.u32 %v2302, 2147483648
      %v3116 = vxor.u32 %v2493, 2147483648
      %v3117 = vxor.u32 %v2495, 2147483648
      %v3118 = vxor.u32 %v2686, 2147483648
      %v3119 = vxor.u32 %v2688, 2147483648
      %v3120 = vxor.u32 %v1534, 2147483648
      %v3121 = vxor.u32 %v1536, 2147483648
      %v3122 = vxor.u32 %v1727, 2147483648
      %v3123 = vxor.u32 %v1729, 2147483648
      %v3124 = vxor.u32 %v1920, 2147483648
      %v3125 = vxor.u32 %v1922, 2147483648
      %v3126 = vxor.u32 %v2113, 2147483648
      %v3127 = vxor.u32 %v2115, 2147483648
      %v3128 = vxor.u32 %v2306, 2147483648
      %v3129 = vxor.u32 %v2308, 2147483648
      %v3130 = vxor.u32 %v2499, 2147483648
      %v3131 = vxor.u32 %v2501, 2147483648
      %v3132 = vxor.u32 %v2692, 2147483648
      %v3133 = vxor.u32 %v2694, 2147483648
      %v3134 = vxor.u32 %v1538, 2147483648
      %v3135 = vxor.u32 %v1540, 2147483648
      %v3136 = vxor.u32 %v1731, 2147483648
      %v3137 = vxor.u32 %v1733, 2147483648
      %v3138 = vxor.u32 %v1924, 2147483648
      %v3139 = vxor.u32 %v1926, 2147483648
      %v3140 = vxor.u32 %v2117, 2147483648
      %v3141 = vxor.u32 %v2119, 2147483648
      %v3142 = vxor.u32 %v2310, 2147483648
      %v3143 = vxor.u32 %v2312, 2147483648
      %v3144 = vxor.u32 %v2503, 2147483648
      %v3145 = vxor.u32 %v2505, 2147483648
      %v3146 = vxor.u32 %v2696, 2147483648
      %v3147 = vxor.u32 %v2698, 2147483648
      %v3148 = vmul.f32 %v2700, 1.442695
      %v3149 = vpow.pop %v3148
      %v3150 = vmul.f32 %v2701, 1.442695
      %v3151 = vpow.pop %v3150
      %v3152 = vmul.f32 %v2702, 1.442695
      %v3153 = vpow.pop %v3152
      %v3154 = vmul.f32 %v2703, 1.442695
      %v3155 = vpow.pop %v3154
      %v3156 = vmul.f32 %v2704, 1.442695
      %v3157 = vpow.pop %v3156
      %v3158 = vmul.f32 %v2705, 1.442695
      %v3159 = vpow.pop %v3158
      %v3160 = vmul.f32 %v2706, 1.442695
      %v3161 = vpow.pop %v3160
      %v3162 = vmul.f32 %v2707, 1.442695
      %v3163 = vpow.pop %v3162
      %v3164 = vmul.f32 %v2708, 1.442695
      %v3165 = vpow.pop %v3164
      %v3166 = vmul.f32 %v2709, 1.442695
      %v3167 = vpow.pop %v3166
      %v3168 = vmul.f32 %v2710, 1.442695
      %v3169 = vpow.pop %v3168
      %v3170 = vmul.f32 %v2711, 1.442695
      %v3171 = vpow.pop %v3170
      %v3172 = vmul.f32 %v2712, 1.442695
      %v3173 = vpow.pop %v3172
      %v3174 = vmul.f32 %v2713, 1.442695
      %v3175 = vpow.pop %v3174
      %v3176 = vmul.f32 %v2714, 1.442695
      %v3177 = vpow.pop %v3176
      %v3178 = vmul.f32 %v2715, 1.442695
      %v3179 = vpow.pop %v3178
      %v3180 = vmul.f32 %v2716, 1.442695
      %v3181 = vpow.pop %v3180
      %v3182 = vmul.f32 %v2717, 1.442695
      %v3183 = vpow.pop %v3182
      %v3184 = vmul.f32 %v2718, 1.442695
      %v3185 = vpow.pop %v3184
      %v3186 = vmul.f32 %v2719, 1.442695
      %v3187 = vpow.pop %v3186
      %v3188 = vmul.f32 %v2720, 1.442695
      %v3189 = vpow.pop %v3188
      %v3190 = vmul.f32 %v2721, 1.442695
      %v3191 = vpow.pop %v3190
      %v3192 = vmul.f32 %v2722, 1.442695
      %v3193 = vpow.pop %v3192
      %v3194 = vmul.f32 %v2723, 1.442695
      %v3195 = vpow.pop %v3194
      %v3196 = vmul.f32 %v2724, 1.442695
      %v3197 = vpow.pop %v3196
      %v3198 = vmul.f32 %v2725, 1.442695
      %v3199 = vpow.pop %v3198
      %v3200 = vmul.f32 %v2726, 1.442695
      %v3201 = vpow.pop %v3200
      %v3202 = vmul.f32 %v2727, 1.442695
      %v3203 = vpow.pop %v3202
      %v3204 = vmul.f32 %v2728, 1.442695
      %v3205 = vpow.pop %v3204
      %v3206 = vmul.f32 %v2729, 1.442695
      %v3207 = vpow.pop %v3206
      %v3208 = vmul.f32 %v2730, 1.442695
      %v3209 = vpow.pop %v3208
      %v3210 = vmul.f32 %v2731, 1.442695
      %v3211 = vpow.pop %v3210
      %v3212 = vmul.f32 %v2732, 1.442695
      %v3213 = vpow.pop %v3212
      %v3214 = vmul.f32 %v2733, 1.442695
      %v3215 = vpow.pop %v3214
      %v3216 = vmul.f32 %v2734, 1.442695
      %v3217 = vpow.pop %v3216
      %v3218 = vmul.f32 %v2735, 1.442695
      %v3219 = vpow.pop %v3218
      %v3220 = vmul.f32 %v2736, 1.442695
      %v3221 = vpow.pop %v3220
      %v3222 = vmul.f32 %v2737, 1.442695
      %v3223 = vpow.pop %v3222
      %v3224 = vmul.f32 %v2738, 1.442695
      %v3225 = vpow.pop %v3224
      %v3226 = vmul.f32 %v2739, 1.442695
      %v3227 = vpow.pop %v3226
      %v3228 = vmul.f32 %v2740, 1.442695
      %v3229 = vpow.pop %v3228
      %v3230 = vmul.f32 %v2741, 1.442695
      %v3231 = vpow.pop %v3230
      %v3232 = vmul.f32 %v2742, 1.442695
      %v3233 = vpow.pop %v3232
      %v3234 = vmul.f32 %v2743, 1.442695
      %v3235 = vpow.pop %v3234
      %v3236 = vmul.f32 %v2744, 1.442695
      %v3237 = vpow.pop %v3236
      %v3238 = vmul.f32 %v2745, 1.442695
      %v3239 = vpow.pop %v3238
      %v3240 = vmul.f32 %v2746, 1.442695
      %v3241 = vpow.pop %v3240
      %v3242 = vmul.f32 %v2747, 1.442695
      %v3243 = vpow.pop %v3242
      %v3244 = vmul.f32 %v2748, 1.442695
      %v3245 = vpow.pop %v3244
      %v3246 = vmul.f32 %v2749, 1.442695
      %v3247 = vpow.pop %v3246
      %v3248 = vmul.f32 %v2750, 1.442695
      %v3249 = vpow.pop %v3248
      %v3250 = vmul.f32 %v2751, 1.442695
      %v3251 = vpow.pop %v3250
      %v3252 = vmul.f32 %v2752, 1.442695
      %v3253 = vpow.pop %v3252
      %v3254 = vmul.f32 %v2753, 1.442695
      %v3255 = vpow.pop %v3254
      %v3256 = vmul.f32 %v2754, 1.442695
      %v3257 = vpow.pop %v3256
      %v3258 = vmul.f32 %v2755, 1.442695
      %v3259 = vpow.pop %v3258
      %v3260 = vmul.f32 %v2756, 1.442695
      %v3261 = vpow.pop %v3260
      %v3262 = vmul.f32 %v2757, 1.442695
      %v3263 = vpow.pop %v3262
      %v3264 = vmul.f32 %v2758, 1.442695
      %v3265 = vpow.pop %v3264
      %v3266 = vmul.f32 %v2759, 1.442695
      %v3267 = vpow.pop %v3266
      %v3268 = vmul.f32 %v2760, 1.442695
      %v3269 = vpow.pop %v3268
      %v3270 = vmul.f32 %v2761, 1.442695
      %v3271 = vpow.pop %v3270
      %v3272 = vmul.f32 %v2762, 1.442695
      %v3273 = vpow.pop %v3272
      %v3274 = vmul.f32 %v2763, 1.442695
      %v3275 = vpow.pop %v3274
      %v3276 = vmul.f32 %v2764, 1.442695
      %v3277 = vpow.pop %v3276
      %v3278 = vmul.f32 %v2765, 1.442695
      %v3279 = vpow.pop %v3278
      %v3280 = vmul.f32 %v2766, 1.442695
      %v3281 = vpow.pop %v3280
      %v3282 = vmul.f32 %v2767, 1.442695
      %v3283 = vpow.pop %v3282
      %v3284 = vmul.f32 %v2768, 1.442695
      %v3285 = vpow.pop %v3284
      %v3286 = vmul.f32 %v2769, 1.442695
      %v3287 = vpow.pop %v3286
      %v3288 = vmul.f32 %v2770, 1.442695
      %v3289 = vpow.pop %v3288
      %v3290 = vmul.f32 %v2771, 1.442695
      %v3291 = vpow.pop %v3290
      %v3292 = vmul.f32 %v2772, 1.442695
      %v3293 = vpow.pop %v3292
      %v3294 = vmul.f32 %v2773, 1.442695
      %v3295 = vpow.pop %v3294
      %v3296 = vmul.f32 %v2774, 1.442695
      %v3297 = vpow.pop %v3296
      %v3298 = vmul.f32 %v2775, 1.442695
      %v3299 = vpow.pop %v3298
      %v3300 = vmul.f32 %v2776, 1.442695
      %v3301 = vpow.pop %v3300
      %v3302 = vmul.f32 %v2777, 1.442695
      %v3303 = vpow.pop %v3302
      %v3304 = vmul.f32 %v2778, 1.442695
      %v3305 = vpow.pop %v3304
      %v3306 = vmul.f32 %v2779, 1.442695
      %v3307 = vpow.pop %v3306
      %v3308 = vmul.f32 %v2780, 1.442695
      %v3309 = vpow.pop %v3308
      %v3310 = vmul.f32 %v2781, 1.442695
      %v3311 = vpow.pop %v3310
      %v3312 = vmul.f32 %v2782, 1.442695
      %v3313 = vpow.pop %v3312
      %v3314 = vmul.f32 %v2783, 1.442695
      %v3315 = vpow.pop %v3314
      %v3316 = vmul.f32 %v2784, 1.442695
      %v3317 = vpow.pop %v3316
      %v3318 = vmul.f32 %v2785, 1.442695
      %v3319 = vpow.pop %v3318
      %v3320 = vmul.f32 %v2786, 1.442695
      %v3321 = vpow.pop %v3320
      %v3322 = vmul.f32 %v2787, 1.442695
      %v3323 = vpow.pop %v3322
      %v3324 = vmul.f32 %v2788, 1.442695
      %v3325 = vpow.pop %v3324
      %v3326 = vmul.f32 %v2789, 1.442695
      %v3327 = vpow.pop %v3326
      %v3328 = vmul.f32 %v2790, 1.442695
      %v3329 = vpow.pop %v3328
      %v3330 = vmul.f32 %v2791, 1.442695
      %v3331 = vpow.pop %v3330
      %v3332 = vmul.f32 %v2792, 1.442695
      %v3333 = vpow.pop %v3332
      %v3334 = vmul.f32 %v2793, 1.442695
      %v3335 = vpow.pop %v3334
      %v3336 = vmul.f32 %v2794, 1.442695
      %v3337 = vpow.pop %v3336
      %v3338 = vmul.f32 %v2795, 1.442695
      %v3339 = vpow.pop %v3338
      %v3340 = vmul.f32 %v2796, 1.442695
      %v3341 = vpow.pop %v3340
      %v3342 = vmul.f32 %v2797, 1.442695
      %v3343 = vpow.pop %v3342
      %v3344 = vmul.f32 %v2798, 1.442695
      %v3345 = vpow.pop %v3344
      %v3346 = vmul.f32 %v2799, 1.442695
      %v3347 = vpow.pop %v3346
      %v3348 = vmul.f32 %v2800, 1.442695
      %v3349 = vpow.pop %v3348
      %v3350 = vmul.f32 %v2801, 1.442695
      %v3351 = vpow.pop %v3350
      %v3352 = vmul.f32 %v2802, 1.442695
      %v3353 = vpow.pop %v3352
      %v3354 = vmul.f32 %v2803, 1.442695
      %v3355 = vpow.pop %v3354
      %v3356 = vmul.f32 %v2804, 1.442695
      %v3357 = vpow.pop %v3356
      %v3358 = vmul.f32 %v2805, 1.442695
      %v3359 = vpow.pop %v3358
      %v3360 = vmul.f32 %v2806, 1.442695
      %v3361 = vpow.pop %v3360
      %v3362 = vmul.f32 %v2807, 1.442695
      %v3363 = vpow.pop %v3362
      %v3364 = vmul.f32 %v2808, 1.442695
      %v3365 = vpow.pop %v3364
      %v3366 = vmul.f32 %v2809, 1.442695
      %v3367 = vpow.pop %v3366
      %v3368 = vmul.f32 %v2810, 1.442695
      %v3369 = vpow.pop %v3368
      %v3370 = vmul.f32 %v2811, 1.442695
      %v3371 = vpow.pop %v3370
      %v3372 = vmul.f32 %v2812, 1.442695
      %v3373 = vpow.pop %v3372
      %v3374 = vmul.f32 %v2813, 1.442695
      %v3375 = vpow.pop %v3374
      %v3376 = vmul.f32 %v2814, 1.442695
      %v3377 = vpow.pop %v3376
      %v3378 = vmul.f32 %v2815, 1.442695
      %v3379 = vpow.pop %v3378
      %v3380 = vmul.f32 %v2816, 1.442695
      %v3381 = vpow.pop %v3380
      %v3382 = vmul.f32 %v2817, 1.442695
      %v3383 = vpow.pop %v3382
      %v3384 = vmul.f32 %v2818, 1.442695
      %v3385 = vpow.pop %v3384
      %v3386 = vmul.f32 %v2819, 1.442695
      %v3387 = vpow.pop %v3386
      %v3388 = vmul.f32 %v2820, 1.442695
      %v3389 = vpow.pop %v3388
      %v3390 = vmul.f32 %v2821, 1.442695
      %v3391 = vpow.pop %v3390
      %v3392 = vmul.f32 %v2822, 1.442695
      %v3393 = vpow.pop %v3392
      %v3394 = vmul.f32 %v2823, 1.442695
      %v3395 = vpow.pop %v3394
      %v3396 = vmul.f32 %v2824, 1.442695
      %v3397 = vpow.pop %v3396
      %v3398 = vmul.f32 %v2825, 1.442695
      %v3399 = vpow.pop %v3398
      %v3400 = vmul.f32 %v2826, 1.442695
      %v3401 = vpow.pop %v3400
      %v3402 = vmul.f32 %v2827, 1.442695
      %v3403 = vpow.pop %v3402
      %v3404 = vmul.f32 %v2828, 1.442695
      %v3405 = vpow.pop %v3404
      %v3406 = vmul.f32 %v2829, 1.442695
      %v3407 = vpow.pop %v3406
      %v3408 = vmul.f32 %v2830, 1.442695
      %v3409 = vpow.pop %v3408
      %v3410 = vmul.f32 %v2831, 1.442695
      %v3411 = vpow.pop %v3410
      %v3412 = vmul.f32 %v2832, 1.442695
      %v3413 = vpow.pop %v3412
      %v3414 = vmul.f32 %v2833, 1.442695
      %v3415 = vpow.pop %v3414
      %v3416 = vmul.f32 %v2834, 1.442695
      %v3417 = vpow.pop %v3416
      %v3418 = vmul.f32 %v2835, 1.442695
      %v3419 = vpow.pop %v3418
      %v3420 = vmul.f32 %v2836, 1.442695
      %v3421 = vpow.pop %v3420
      %v3422 = vmul.f32 %v2837, 1.442695
      %v3423 = vpow.pop %v3422
      %v3424 = vmul.f32 %v2838, 1.442695
      %v3425 = vpow.pop %v3424
      %v3426 = vmul.f32 %v2839, 1.442695
      %v3427 = vpow.pop %v3426
      %v3428 = vmul.f32 %v2840, 1.442695
      %v3429 = vpow.pop %v3428
      %v3430 = vmul.f32 %v2841, 1.442695
      %v3431 = vpow.pop %v3430
      %v3432 = vmul.f32 %v2842, 1.442695
      %v3433 = vpow.pop %v3432
      %v3434 = vmul.f32 %v2843, 1.442695
      %v3435 = vpow.pop %v3434
      %v3436 = vmul.f32 %v2844, 1.442695
      %v3437 = vpow.pop %v3436
      %v3438 = vmul.f32 %v2845, 1.442695
      %v3439 = vpow.pop %v3438
      %v3440 = vmul.f32 %v2846, 1.442695
      %v3441 = vpow.pop %v3440
      %v3442 = vmul.f32 %v2847, 1.442695
      %v3443 = vpow.pop %v3442
      %v3444 = vmul.f32 %v2848, 1.442695
      %v3445 = vpow.pop %v3444
      %v3446 = vmul.f32 %v2849, 1.442695
      %v3447 = vpow.pop %v3446
      %v3448 = vmul.f32 %v2850, 1.442695
      %v3449 = vpow.pop %v3448
      %v3450 = vmul.f32 %v2851, 1.442695
      %v3451 = vpow.pop %v3450
      %v3452 = vmul.f32 %v2852, 1.442695
      %v3453 = vpow.pop %v3452
      %v3454 = vmul.f32 %v2853, 1.442695
      %v3455 = vpow.pop %v3454
      %v3456 = vmul.f32 %v2854, 1.442695
      %v3457 = vpow.pop %v3456
      %v3458 = vmul.f32 %v2855, 1.442695
      %v3459 = vpow.pop %v3458
      %v3460 = vmul.f32 %v2856, 1.442695
      %v3461 = vpow.pop %v3460
      %v3462 = vmul.f32 %v2857, 1.442695
      %v3463 = vpow.pop %v3462
      %v3464 = vmul.f32 %v2858, 1.442695
      %v3465 = vpow.pop %v3464
      %v3466 = vmul.f32 %v2859, 1.442695
      %v3467 = vpow.pop %v3466
      %v3468 = vmul.f32 %v2860, 1.442695
      %v3469 = vpow.pop %v3468
      %v3470 = vmul.f32 %v2861, 1.442695
      %v3471 = vpow.pop %v3470
      %v3472 = vmul.f32 %v2862, 1.442695
      %v3473 = vpow.pop %v3472
      %v3474 = vmul.f32 %v2863, 1.442695
      %v3475 = vpow.pop %v3474
      %v3476 = vmul.f32 %v2864, 1.442695
      %v3477 = vpow.pop %v3476
      %v3478 = vmul.f32 %v2865, 1.442695
      %v3479 = vpow.pop %v3478
      %v3480 = vmul.f32 %v2866, 1.442695
      %v3481 = vpow.pop %v3480
      %v3482 = vmul.f32 %v2867, 1.442695
      %v3483 = vpow.pop %v3482
      %v3484 = vmul.f32 %v2868, 1.442695
      %v3485 = vpow.pop %v3484
      %v3486 = vmul.f32 %v2869, 1.442695
      %v3487 = vpow.pop %v3486
      %v3488 = vmul.f32 %v2870, 1.442695
      %v3489 = vpow.pop %v3488
      %v3490 = vmul.f32 %v2871, 1.442695
      %v3491 = vpow.pop %v3490
      %v3492 = vmul.f32 %v2872, 1.442695
      %v3493 = vpow.pop %v3492
      %v3494 = vmul.f32 %v2873, 1.442695
      %v3495 = vpow.pop %v3494
      %v3496 = vmul.f32 %v2874, 1.442695
      %v3497 = vpow.pop %v3496
      %v3498 = vmul.f32 %v2875, 1.442695
      %v3499 = vpow.pop %v3498
      %v3500 = vmul.f32 %v2876, 1.442695
      %v3501 = vpow.pop %v3500
      %v3502 = vmul.f32 %v2877, 1.442695
      %v3503 = vpow.pop %v3502
      %v3504 = vmul.f32 %v2878, 1.442695
      %v3505 = vpow.pop %v3504
      %v3506 = vmul.f32 %v2879, 1.442695
      %v3507 = vpow.pop %v3506
      %v3508 = vmul.f32 %v2880, 1.442695
      %v3509 = vpow.pop %v3508
      %v3510 = vmul.f32 %v2881, 1.442695
      %v3511 = vpow.pop %v3510
      %v3512 = vmul.f32 %v2882, 1.442695
      %v3513 = vpow.pop %v3512
      %v3514 = vmul.f32 %v2883, 1.442695
      %v3515 = vpow.pop %v3514
      %v3516 = vmul.f32 %v2884, 1.442695
      %v3517 = vpow.pop %v3516
      %v3518 = vmul.f32 %v2885, 1.442695
      %v3519 = vpow.pop %v3518
      %v3520 = vmul.f32 %v2886, 1.442695
      %v3521 = vpow.pop %v3520
      %v3522 = vmul.f32 %v2887, 1.442695
      %v3523 = vpow.pop %v3522
      %v3524 = vmul.f32 %v2888, 1.442695
      %v3525 = vpow.pop %v3524
      %v3526 = vmul.f32 %v2889, 1.442695
      %v3527 = vpow.pop %v3526
      %v3528 = vmul.f32 %v2890, 1.442695
      %v3529 = vpow.pop %v3528
      %v3530 = vmul.f32 %v2891, 1.442695
      %v3531 = vpow.pop %v3530
      %v3532 = vmul.f32 %v2892, 1.442695
      %v3533 = vpow.pop %v3532
      %v3534 = vmul.f32 %v2893, 1.442695
      %v3535 = vpow.pop %v3534
      %v3536 = vmul.f32 %v2894, 1.442695
      %v3537 = vpow.pop %v3536
      %v3538 = vmul.f32 %v2895, 1.442695
      %v3539 = vpow.pop %v3538
      %v3540 = vmul.f32 %v2896, 1.442695
      %v3541 = vpow.pop %v3540
      %v3542 = vmul.f32 %v2897, 1.442695
      %v3543 = vpow.pop %v3542
      %v3544 = vmul.f32 %v2898, 1.442695
      %v3545 = vpow.pop %v3544
      %v3546 = vmul.f32 %v2899, 1.442695
      %v3547 = vpow.pop %v3546
      %v3548 = vmul.f32 %v2900, 1.442695
      %v3549 = vpow.pop %v3548
      %v3550 = vmul.f32 %v2901, 1.442695
      %v3551 = vpow.pop %v3550
      %v3552 = vmul.f32 %v2902, 1.442695
      %v3553 = vpow.pop %v3552
      %v3554 = vmul.f32 %v2903, 1.442695
      %v3555 = vpow.pop %v3554
      %v3556 = vmul.f32 %v2904, 1.442695
      %v3557 = vpow.pop %v3556
      %v3558 = vmul.f32 %v2905, 1.442695
      %v3559 = vpow.pop %v3558
      %v3560 = vmul.f32 %v2906, 1.442695
      %v3561 = vpow.pop %v3560
      %v3562 = vmul.f32 %v2907, 1.442695
      %v3563 = vpow.pop %v3562
      %v3564 = vmul.f32 %v2908, 1.442695
      %v3565 = vpow.pop %v3564
      %v3566 = vmul.f32 %v2909, 1.442695
      %v3567 = vpow.pop %v3566
      %v3568 = vmul.f32 %v2910, 1.442695
      %v3569 = vpow.pop %v3568
      %v3570 = vmul.f32 %v2911, 1.442695
      %v3571 = vpow.pop %v3570
      %v3572 = vmul.f32 %v2912, 1.442695
      %v3573 = vpow.pop %v3572
      %v3574 = vmul.f32 %v2913, 1.442695
      %v3575 = vpow.pop %v3574
      %v3576 = vmul.f32 %v2914, 1.442695
      %v3577 = vpow.pop %v3576
      %v3578 = vmul.f32 %v2915, 1.442695
      %v3579 = vpow.pop %v3578
      %v3580 = vmul.f32 %v2916, 1.442695
      %v3581 = vpow.pop %v3580
      %v3582 = vmul.f32 %v2917, 1.442695
      %v3583 = vpow.pop %v3582
      %v3584 = vmul.f32 %v2918, 1.442695
      %v3585 = vpow.pop %v3584
      %v3586 = vmul.f32 %v2919, 1.442695
      %v3587 = vpow.pop %v3586
      %v3588 = vmul.f32 %v2920, 1.442695
      %v3589 = vpow.pop %v3588
      %v3590 = vmul.f32 %v2921, 1.442695
      %v3591 = vpow.pop %v3590
      %v3592 = vmul.f32 %v2922, 1.442695
      %v3593 = vpow.pop %v3592
      %v3594 = vmul.f32 %v2923, 1.442695
      %v3595 = vpow.pop %v3594
      %v3596 = vmul.f32 %v2924, 1.442695
      %v3597 = vpow.pop %v3596
      %v3598 = vmul.f32 %v2925, 1.442695
      %v3599 = vpow.pop %v3598
      %v3600 = vmul.f32 %v2926, 1.442695
      %v3601 = vpow.pop %v3600
      %v3602 = vmul.f32 %v2927, 1.442695
      %v3603 = vpow.pop %v3602
      %v3604 = vmul.f32 %v2928, 1.442695
      %v3605 = vpow.pop %v3604
      %v3606 = vmul.f32 %v2929, 1.442695
      %v3607 = vpow.pop %v3606
      %v3608 = vmul.f32 %v2930, 1.442695
      %v3609 = vpow.pop %v3608
      %v3610 = vmul.f32 %v2931, 1.442695
      %v3611 = vpow.pop %v3610
      %v3612 = vmul.f32 %v2932, 1.442695
      %v3613 = vpow.pop %v3612
      %v3614 = vmul.f32 %v2933, 1.442695
      %v3615 = vpow.pop %v3614
      %v3616 = vmul.f32 %v2934, 1.442695
      %v3617 = vpow.pop %v3616
      %v3618 = vmul.f32 %v2935, 1.442695
      %v3619 = vpow.pop %v3618
      %v3620 = vmul.f32 %v2936, 1.442695
      %v3621 = vpow.pop %v3620
      %v3622 = vmul.f32 %v2937, 1.442695
      %v3623 = vpow.pop %v3622
      %v3624 = vmul.f32 %v2938, 1.442695
      %v3625 = vpow.pop %v3624
      %v3626 = vmul.f32 %v2939, 1.442695
      %v3627 = vpow.pop %v3626
      %v3628 = vmul.f32 %v2940, 1.442695
      %v3629 = vpow.pop %v3628
      %v3630 = vmul.f32 %v2941, 1.442695
      %v3631 = vpow.pop %v3630
      %v3632 = vmul.f32 %v2942, 1.442695
      %v3633 = vpow.pop %v3632
      %v3634 = vmul.f32 %v2943, 1.442695
      %v3635 = vpow.pop %v3634
      %v3636 = vmul.f32 %v2944, 1.442695
      %v3637 = vpow.pop %v3636
      %v3638 = vmul.f32 %v2945, 1.442695
      %v3639 = vpow.pop %v3638
      %v3640 = vmul.f32 %v2946, 1.442695
      %v3641 = vpow.pop %v3640
      %v3642 = vmul.f32 %v2947, 1.442695
      %v3643 = vpow.pop %v3642
      %v3644 = vmul.f32 %v2948, 1.442695
      %v3645 = vpow.pop %v3644
      %v3646 = vmul.f32 %v2949, 1.442695
      %v3647 = vpow.pop %v3646
      %v3648 = vmul.f32 %v2950, 1.442695
      %v3649 = vpow.pop %v3648
      %v3650 = vmul.f32 %v2951, 1.442695
      %v3651 = vpow.pop %v3650
      %v3652 = vmul.f32 %v2952, 1.442695
      %v3653 = vpow.pop %v3652
      %v3654 = vmul.f32 %v2953, 1.442695
      %v3655 = vpow.pop %v3654
      %v3656 = vmul.f32 %v2954, 1.442695
      %v3657 = vpow.pop %v3656
      %v3658 = vmul.f32 %v2955, 1.442695
      %v3659 = vpow.pop %v3658
      %v3660 = vmul.f32 %v2956, 1.442695
      %v3661 = vpow.pop %v3660
      %v3662 = vmul.f32 %v2957, 1.442695
      %v3663 = vpow.pop %v3662
      %v3664 = vmul.f32 %v2958, 1.442695
      %v3665 = vpow.pop %v3664
      %v3666 = vmul.f32 %v2959, 1.442695
      %v3667 = vpow.pop %v3666
      %v3668 = vmul.f32 %v2960, 1.442695
      %v3669 = vpow.pop %v3668
      %v3670 = vmul.f32 %v2961, 1.442695
      %v3671 = vpow.pop %v3670
      %v3672 = vmul.f32 %v2962, 1.442695
      %v3673 = vpow.pop %v3672
      %v3674 = vmul.f32 %v2963, 1.442695
      %v3675 = vpow.pop %v3674
      %v3676 = vmul.f32 %v2964, 1.442695
      %v3677 = vpow.pop %v3676
      %v3678 = vmul.f32 %v2965, 1.442695
      %v3679 = vpow.pop %v3678
      %v3680 = vmul.f32 %v2966, 1.442695
      %v3681 = vpow.pop %v3680
      %v3682 = vmul.f32 %v2967, 1.442695
      %v3683 = vpow.pop %v3682
      %v3684 = vmul.f32 %v2968, 1.442695
      %v3685 = vpow.pop %v3684
      %v3686 = vmul.f32 %v2969, 1.442695
      %v3687 = vpow.pop %v3686
      %v3688 = vmul.f32 %v2970, 1.442695
      %v3689 = vpow.pop %v3688
      %v3690 = vmul.f32 %v2971, 1.442695
      %v3691 = vpow.pop %v3690
      %v3692 = vmul.f32 %v2972, 1.442695
      %v3693 = vpow.pop %v3692
      %v3694 = vmul.f32 %v2973, 1.442695
      %v3695 = vpow.pop %v3694
      %v3696 = vmul.f32 %v2974, 1.442695
      %v3697 = vpow.pop %v3696
      %v3698 = vmul.f32 %v2975, 1.442695
      %v3699 = vpow.pop %v3698
      %v3700 = vmul.f32 %v2976, 1.442695
      %v3701 = vpow.pop %v3700
      %v3702 = vmul.f32 %v2977, 1.442695
      %v3703 = vpow.pop %v3702
      %v3704 = vmul.f32 %v2978, 1.442695
      %v3705 = vpow.pop %v3704
      %v3706 = vmul.f32 %v2979, 1.442695
      %v3707 = vpow.pop %v3706
      %v3708 = vmul.f32 %v2980, 1.442695
      %v3709 = vpow.pop %v3708
      %v3710 = vmul.f32 %v2981, 1.442695
      %v3711 = vpow.pop %v3710
      %v3712 = vmul.f32 %v2982, 1.442695
      %v3713 = vpow.pop %v3712
      %v3714 = vmul.f32 %v2983, 1.442695
      %v3715 = vpow.pop %v3714
      %v3716 = vmul.f32 %v2984, 1.442695
      %v3717 = vpow.pop %v3716
      %v3718 = vmul.f32 %v2985, 1.442695
      %v3719 = vpow.pop %v3718
      %v3720 = vmul.f32 %v2986, 1.442695
      %v3721 = vpow.pop %v3720
      %v3722 = vmul.f32 %v2987, 1.442695
      %v3723 = vpow.pop %v3722
      %v3724 = vmul.f32 %v2988, 1.442695
      %v3725 = vpow.pop %v3724
      %v3726 = vmul.f32 %v2989, 1.442695
      %v3727 = vpow.pop %v3726
      %v3728 = vmul.f32 %v2990, 1.442695
      %v3729 = vpow.pop %v3728
      %v3730 = vmul.f32 %v2991, 1.442695
      %v3731 = vpow.pop %v3730
      %v3732 = vmul.f32 %v2992, 1.442695
      %v3733 = vpow.pop %v3732
      %v3734 = vmul.f32 %v2993, 1.442695
      %v3735 = vpow.pop %v3734
      %v3736 = vmul.f32 %v2994, 1.442695
      %v3737 = vpow.pop %v3736
      %v3738 = vmul.f32 %v2995, 1.442695
      %v3739 = vpow.pop %v3738
      %v3740 = vmul.f32 %v2996, 1.442695
      %v3741 = vpow.pop %v3740
      %v3742 = vmul.f32 %v2997, 1.442695
      %v3743 = vpow.pop %v3742
      %v3744 = vmul.f32 %v2998, 1.442695
      %v3745 = vpow.pop %v3744
      %v3746 = vmul.f32 %v2999, 1.442695
      %v3747 = vpow.pop %v3746
      %v3748 = vmul.f32 %v3000, 1.442695
      %v3749 = vpow.pop %v3748
      %v3750 = vmul.f32 %v3001, 1.442695
      %v3751 = vpow.pop %v3750
      %v3752 = vmul.f32 %v3002, 1.442695
      %v3753 = vpow.pop %v3752
      %v3754 = vmul.f32 %v3003, 1.442695
      %v3755 = vpow.pop %v3754
      %v3756 = vmul.f32 %v3004, 1.442695
      %v3757 = vpow.pop %v3756
      %v3758 = vmul.f32 %v3005, 1.442695
      %v3759 = vpow.pop %v3758
      %v3760 = vmul.f32 %v3006, 1.442695
      %v3761 = vpow.pop %v3760
      %v3762 = vmul.f32 %v3007, 1.442695
      %v3763 = vpow.pop %v3762
      %v3764 = vmul.f32 %v3008, 1.442695
      %v3765 = vpow.pop %v3764
      %v3766 = vmul.f32 %v3009, 1.442695
      %v3767 = vpow.pop %v3766
      %v3768 = vmul.f32 %v3010, 1.442695
      %v3769 = vpow.pop %v3768
      %v3770 = vmul.f32 %v3011, 1.442695
      %v3771 = vpow.pop %v3770
      %v3772 = vmul.f32 %v3012, 1.442695
      %v3773 = vpow.pop %v3772
      %v3774 = vmul.f32 %v3013, 1.442695
      %v3775 = vpow.pop %v3774
      %v3776 = vmul.f32 %v3014, 1.442695
      %v3777 = vpow.pop %v3776
      %v3778 = vmul.f32 %v3015, 1.442695
      %v3779 = vpow.pop %v3778
      %v3780 = vmul.f32 %v3016, 1.442695
      %v3781 = vpow.pop %v3780
      %v3782 = vmul.f32 %v3017, 1.442695
      %v3783 = vpow.pop %v3782
      %v3784 = vmul.f32 %v3018, 1.442695
      %v3785 = vpow.pop %v3784
      %v3786 = vmul.f32 %v3019, 1.442695
      %v3787 = vpow.pop %v3786
      %v3788 = vmul.f32 %v3020, 1.442695
      %v3789 = vpow.pop %v3788
      %v3790 = vmul.f32 %v3021, 1.442695
      %v3791 = vpow.pop %v3790
      %v3792 = vmul.f32 %v3022, 1.442695
      %v3793 = vpow.pop %v3792
      %v3794 = vmul.f32 %v3023, 1.442695
      %v3795 = vpow.pop %v3794
      %v3796 = vmul.f32 %v3024, 1.442695
      %v3797 = vpow.pop %v3796
      %v3798 = vmul.f32 %v3025, 1.442695
      %v3799 = vpow.pop %v3798
      %v3800 = vmul.f32 %v3026, 1.442695
      %v3801 = vpow.pop %v3800
      %v3802 = vmul.f32 %v3027, 1.442695
      %v3803 = vpow.pop %v3802
      %v3804 = vmul.f32 %v3028, 1.442695
      %v3805 = vpow.pop %v3804
      %v3806 = vmul.f32 %v3029, 1.442695
      %v3807 = vpow.pop %v3806
      %v3808 = vmul.f32 %v3030, 1.442695
      %v3809 = vpow.pop %v3808
      %v3810 = vmul.f32 %v3031, 1.442695
      %v3811 = vpow.pop %v3810
      %v3812 = vmul.f32 %v3032, 1.442695
      %v3813 = vpow.pop %v3812
      %v3814 = vmul.f32 %v3033, 1.442695
      %v3815 = vpow.pop %v3814
      %v3816 = vmul.f32 %v3034, 1.442695
      %v3817 = vpow.pop %v3816
      %v3818 = vmul.f32 %v3035, 1.442695
      %v3819 = vpow.pop %v3818
      %v3820 = vmul.f32 %v3036, 1.442695
      %v3821 = vpow.pop %v3820
      %v3822 = vmul.f32 %v3037, 1.442695
      %v3823 = vpow.pop %v3822
      %v3824 = vmul.f32 %v3038, 1.442695
      %v3825 = vpow.pop %v3824
      %v3826 = vmul.f32 %v3039, 1.442695
      %v3827 = vpow.pop %v3826
      %v3828 = vmul.f32 %v3040, 1.442695
      %v3829 = vpow.pop %v3828
      %v3830 = vmul.f32 %v3041, 1.442695
      %v3831 = vpow.pop %v3830
      %v3832 = vmul.f32 %v3042, 1.442695
      %v3833 = vpow.pop %v3832
      %v3834 = vmul.f32 %v3043, 1.442695
      %v3835 = vpow.pop %v3834
      %v3836 = vmul.f32 %v3044, 1.442695
      %v3837 = vpow.pop %v3836
      %v3838 = vmul.f32 %v3045, 1.442695
      %v3839 = vpow.pop %v3838
      %v3840 = vmul.f32 %v3046, 1.442695
      %v3841 = vpow.pop %v3840
      %v3842 = vmul.f32 %v3047, 1.442695
      %v3843 = vpow.pop %v3842
      %v3844 = vmul.f32 %v3048, 1.442695
      %v3845 = vpow.pop %v3844
      %v3846 = vmul.f32 %v3049, 1.442695
      %v3847 = vpow.pop %v3846
      %v3848 = vmul.f32 %v3050, 1.442695
      %v3849 = vpow.pop %v3848
      %v3850 = vmul.f32 %v3051, 1.442695
      %v3851 = vpow.pop %v3850
      %v3852 = vmul.f32 %v3052, 1.442695
      %v3853 = vpow.pop %v3852
      %v3854 = vmul.f32 %v3053, 1.442695
      %v3855 = vpow.pop %v3854
      %v3856 = vmul.f32 %v3054, 1.442695
      %v3857 = vpow.pop %v3856
      %v3858 = vmul.f32 %v3055, 1.442695
      %v3859 = vpow.pop %v3858
      %v3860 = vmul.f32 %v3056, 1.442695
      %v3861 = vpow.pop %v3860
      %v3862 = vmul.f32 %v3057, 1.442695
      %v3863 = vpow.pop %v3862
      %v3864 = vmul.f32 %v3058, 1.442695
      %v3865 = vpow.pop %v3864
      %v3866 = vmul.f32 %v3059, 1.442695
      %v3867 = vpow.pop %v3866
      %v3868 = vmul.f32 %v3060, 1.442695
      %v3869 = vpow.pop %v3868
      %v3870 = vmul.f32 %v3061, 1.442695
      %v3871 = vpow.pop %v3870
      %v3872 = vmul.f32 %v3062, 1.442695
      %v3873 = vpow.pop %v3872
      %v3874 = vmul.f32 %v3063, 1.442695
      %v3875 = vpow.pop %v3874
      %v3876 = vmul.f32 %v3064, 1.442695
      %v3877 = vpow.pop %v3876
      %v3878 = vmul.f32 %v3065, 1.442695
      %v3879 = vpow.pop %v3878
      %v3880 = vmul.f32 %v3066, 1.442695
      %v3881 = vpow.pop %v3880
      %v3882 = vmul.f32 %v3067, 1.442695
      %v3883 = vpow.pop %v3882
      %v3884 = vmul.f32 %v3068, 1.442695
      %v3885 = vpow.pop %v3884
      %v3886 = vmul.f32 %v3069, 1.442695
      %v3887 = vpow.pop %v3886
      %v3888 = vmul.f32 %v3070, 1.442695
      %v3889 = vpow.pop %v3888
      %v3890 = vmul.f32 %v3071, 1.442695
      %v3891 = vpow.pop %v3890
      %v3892 = vmul.f32 %v3072, 1.442695
      %v3893 = vpow.pop %v3892
      %v3894 = vmul.f32 %v3073, 1.442695
      %v3895 = vpow.pop %v3894
      %v3896 = vmul.f32 %v3074, 1.442695
      %v3897 = vpow.pop %v3896
      %v3898 = vmul.f32 %v3075, 1.442695
      %v3899 = vpow.pop %v3898
      %v3900 = vmul.f32 %v3076, 1.442695
      %v3901 = vpow.pop %v3900
      %v3902 = vmul.f32 %v3077, 1.442695
      %v3903 = vpow.pop %v3902
      %v3904 = vmul.f32 %v3078, 1.442695
      %v3905 = vpow.pop %v3904
      %v3906 = vmul.f32 %v3079, 1.442695
      %v3907 = vpow.pop %v3906
      %v3908 = vmul.f32 %v3080, 1.442695
      %v3909 = vpow.pop %v3908
      %v3910 = vmul.f32 %v3081, 1.442695
      %v3911 = vpow.pop %v3910
      %v3912 = vmul.f32 %v3082, 1.442695
      %v3913 = vpow.pop %v3912
      %v3914 = vmul.f32 %v3083, 1.442695
      %v3915 = vpow.pop %v3914
      %v3916 = vmul.f32 %v3084, 1.442695
      %v3917 = vpow.pop %v3916
      %v3918 = vmul.f32 %v3085, 1.442695
      %v3919 = vpow.pop %v3918
      %v3920 = vmul.f32 %v3086, 1.442695
      %v3921 = vpow.pop %v3920
      %v3922 = vmul.f32 %v3087, 1.442695
      %v3923 = vpow.pop %v3922
      %v3924 = vmul.f32 %v3088, 1.442695
      %v3925 = vpow.pop %v3924
      %v3926 = vmul.f32 %v3089, 1.442695
      %v3927 = vpow.pop %v3926
      %v3928 = vmul.f32 %v3090, 1.442695
      %v3929 = vpow.pop %v3928
      %v3930 = vmul.f32 %v3091, 1.442695
      %v3931 = vpow.pop %v3930
      %v3932 = vmul.f32 %v3092, 1.442695
      %v3933 = vpow.pop %v3932
      %v3934 = vmul.f32 %v3093, 1.442695
      %v3935 = vpow.pop %v3934
      %v3936 = vmul.f32 %v3094, 1.442695
      %v3937 = vpow.pop %v3936
      %v3938 = vmul.f32 %v3095, 1.442695
      %v3939 = vpow.pop %v3938
      %v3940 = vmul.f32 %v3096, 1.442695
      %v3941 = vpow.pop %v3940
      %v3942 = vmul.f32 %v3097, 1.442695
      %v3943 = vpow.pop %v3942
      %v3944 = vmul.f32 %v3098, 1.442695
      %v3945 = vpow.pop %v3944
      %v3946 = vmul.f32 %v3099, 1.442695
      %v3947 = vpow.pop %v3946
      %v3948 = vmul.f32 %v3100, 1.442695
      %v3949 = vpow.pop %v3948
      %v3950 = vmul.f32 %v3101, 1.442695
      %v3951 = vpow.pop %v3950
      %v3952 = vmul.f32 %v3102, 1.442695
      %v3953 = vpow.pop %v3952
      %v3954 = vmul.f32 %v3103, 1.442695
      %v3955 = vpow.pop %v3954
      %v3956 = vmul.f32 %v3104, 1.442695
      %v3957 = vpow.pop %v3956
      %v3958 = vmul.f32 %v3105, 1.442695
      %v3959 = vpow.pop %v3958
      %v3960 = vmul.f32 %v3106, 1.442695
      %v3961 = vpow.pop %v3960
      %v3962 = vmul.f32 %v3107, 1.442695
      %v3963 = vpow.pop %v3962
      %v3964 = vmul.f32 %v3108, 1.442695
      %v3965 = vpow.pop %v3964
      %v3966 = vmul.f32 %v3109, 1.442695
      %v3967 = vpow.pop %v3966
      %v3968 = vmul.f32 %v3110, 1.442695
      %v3969 = vpow.pop %v3968
      %v3970 = vmul.f32 %v3111, 1.442695
      %v3971 = vpow.pop %v3970
      %v3972 = vmul.f32 %v3112, 1.442695
      %v3973 = vpow.pop %v3972
      %v3974 = vmul.f32 %v3113, 1.442695
      %v3975 = vpow.pop %v3974
      %v3976 = vmul.f32 %v3114, 1.442695
      %v3977 = vpow.pop %v3976
      %v3978 = vmul.f32 %v3115, 1.442695
      %v3979 = vpow.pop %v3978
      %v3980 = vmul.f32 %v3116, 1.442695
      %v3981 = vpow.pop %v3980
      %v3982 = vmul.f32 %v3117, 1.442695
      %v3983 = vpow.pop %v3982
      %v3984 = vmul.f32 %v3118, 1.442695
      %v3985 = vpow.pop %v3984
      %v3986 = vmul.f32 %v3119, 1.442695
      %v3987 = vpow.pop %v3986
      %v3988 = vmul.f32 %v3120, 1.442695
      %v3989 = vpow.pop %v3988
      %v3990 = vmul.f32 %v3121, 1.442695
      %v3991 = vpow.pop %v3990
      %v3992 = vmul.f32 %v3122, 1.442695
      %v3993 = vpow.pop %v3992
      %v3994 = vmul.f32 %v3123, 1.442695
      %v3995 = vpow.pop %v3994
      %v3996 = vmul.f32 %v3124, 1.442695
      %v3997 = vpow.pop %v3996
      %v3998 = vmul.f32 %v3125, 1.442695
      %v3999 = vpow.pop %v3998
      %v4000 = vmul.f32 %v3126, 1.442695
      %v4001 = vpow.pop %v4000
      %v4002 = vmul.f32 %v3127, 1.442695
      %v4003 = vpow.pop %v4002
      %v4004 = vmul.f32 %v3128, 1.442695
      %v4005 = vpow.pop %v4004
      %v4006 = vmul.f32 %v3129, 1.442695
      %v4007 = vpow.pop %v4006
      %v4008 = vmul.f32 %v3130, 1.442695
      %v4009 = vpow.pop %v4008
      %v4010 = vmul.f32 %v3131, 1.442695
      %v4011 = vpow.pop %v4010
      %v4012 = vmul.f32 %v3132, 1.442695
      %v4013 = vpow.pop %v4012
      %v4014 = vmul.f32 %v3133, 1.442695
      %v4015 = vpow.pop %v4014
      %v4016 = vmul.f32 %v3134, 1.442695
      %v4017 = vpow.pop %v4016
      %v4018 = vmul.f32 %v3135, 1.442695
      %v4019 = vpow.pop %v4018
      %v4020 = vmul.f32 %v3136, 1.442695
      %v4021 = vpow.pop %v4020
      %v4022 = vmul.f32 %v3137, 1.442695
      %v4023 = vpow.pop %v4022
      %v4024 = vmul.f32 %v3138, 1.442695
      %v4025 = vpow.pop %v4024
      %v4026 = vmul.f32 %v3139, 1.442695
      %v4027 = vpow.pop %v4026
      %v4028 = vmul.f32 %v3140, 1.442695
      %v4029 = vpow.pop %v4028
      %v4030 = vmul.f32 %v3141, 1.442695
      %v4031 = vpow.pop %v4030
      %v4032 = vmul.f32 %v3142, 1.442695
      %v4033 = vpow.pop %v4032
      %v4034 = vmul.f32 %v3143, 1.442695
      %v4035 = vpow.pop %v4034
      %v4036 = vmul.f32 %v3144, 1.442695
      %v4037 = vpow.pop %v4036
      %v4038 = vmul.f32 %v3145, 1.442695
      %v4039 = vpow.pop %v4038
      %v4040 = vmul.f32 %v3146, 1.442695
      %v4041 = vpow.pop %v4040
      %v4042 = vmul.f32 %v3147, 1.442695
      %v4043 = vpow.pop %v4042
      %v4044 = vadd.f32 %v3149, 1.0
      %v4045 = vadd.f32 %v3151, 1.0
      %v4046 = vadd.f32 %v3153, 1.0
      %v4047 = vadd.f32 %v3155, 1.0
      %v4048 = vadd.f32 %v3157, 1.0
      %v4049 = vadd.f32 %v3159, 1.0
      %v4050 = vadd.f32 %v3161, 1.0
      %v4051 = vadd.f32 %v3163, 1.0
      %v4052 = vadd.f32 %v3165, 1.0
      %v4053 = vadd.f32 %v3167, 1.0
      %v4054 = vadd.f32 %v3169, 1.0
      %v4055 = vadd.f32 %v3171, 1.0
      %v4056 = vadd.f32 %v3173, 1.0
      %v4057 = vadd.f32 %v3175, 1.0
      %v4058 = vadd.f32 %v3177, 1.0
      %v4059 = vadd.f32 %v3179, 1.0
      %v4060 = vadd.f32 %v3181, 1.0
      %v4061 = vadd.f32 %v3183, 1.0
      %v4062 = vadd.f32 %v3185, 1.0
      %v4063 = vadd.f32 %v3187, 1.0
      %v4064 = vadd.f32 %v3189, 1.0
      %v4065 = vadd.f32 %v3191, 1.0
      %v4066 = vadd.f32 %v3193, 1.0
      %v4067 = vadd.f32 %v3195, 1.0
      %v4068 = vadd.f32 %v3197, 1.0
      %v4069 = vadd.f32 %v3199, 1.0
      %v4070 = vadd.f32 %v3201, 1.0
      %v4071 = vadd.f32 %v3203, 1.0
      %v4072 = vadd.f32 %v3205, 1.0
      %v4073 = vadd.f32 %v3207, 1.0
      %v4074 = vadd.f32 %v3209, 1.0
      %v4075 = vadd.f32 %v3211, 1.0
      %v4076 = vadd.f32 %v3213, 1.0
      %v4077 = vadd.f32 %v3215, 1.0
      %v4078 = vadd.f32 %v3217, 1.0
      %v4079 = vadd.f32 %v3219, 1.0
      %v4080 = vadd.f32 %v3221, 1.0
      %v4081 = vadd.f32 %v3223, 1.0
      %v4082 = vadd.f32 %v3225, 1.0
      %v4083 = vadd.f32 %v3227, 1.0
      %v4084 = vadd.f32 %v3229, 1.0
      %v4085 = vadd.f32 %v3231, 1.0
      %v4086 = vadd.f32 %v3233, 1.0
      %v4087 = vadd.f32 %v3235, 1.0
      %v4088 = vadd.f32 %v3237, 1.0
      %v4089 = vadd.f32 %v3239, 1.0
      %v4090 = vadd.f32 %v3241, 1.0
      %v4091 = vadd.f32 %v3243, 1.0
      %v4092 = vadd.f32 %v3245, 1.0
      %v4093 = vadd.f32 %v3247, 1.0
      %v4094 = vadd.f32 %v3249, 1.0
      %v4095 = vadd.f32 %v3251, 1.0
      %v4096 = vadd.f32 %v3253, 1.0
      %v4097 = vadd.f32 %v3255, 1.0
      %v4098 = vadd.f32 %v3257, 1.0
      %v4099 = vadd.f32 %v3259, 1.0
      %v4100 = vadd.f32 %v3261, 1.0
      %v4101 = vadd.f32 %v3263, 1.0
      %v4102 = vadd.f32 %v3265, 1.0
      %v4103 = vadd.f32 %v3267, 1.0
      %v4104 = vadd.f32 %v3269, 1.0
      %v4105 = vadd.f32 %v3271, 1.0
      %v4106 = vadd.f32 %v3273, 1.0
      %v4107 = vadd.f32 %v3275, 1.0
      %v4108 = vadd.f32 %v3277, 1.0
      %v4109 = vadd.f32 %v3279, 1.0
      %v4110 = vadd.f32 %v3281, 1.0
      %v4111 = vadd.f32 %v3283, 1.0
      %v4112 = vadd.f32 %v3285, 1.0
      %v4113 = vadd.f32 %v3287, 1.0
      %v4114 = vadd.f32 %v3289, 1.0
      %v4115 = vadd.f32 %v3291, 1.0
      %v4116 = vadd.f32 %v3293, 1.0
      %v4117 = vadd.f32 %v3295, 1.0
      %v4118 = vadd.f32 %v3297, 1.0
      %v4119 = vadd.f32 %v3299, 1.0
      %v4120 = vadd.f32 %v3301, 1.0
      %v4121 = vadd.f32 %v3303, 1.0
      %v4122 = vadd.f32 %v3305, 1.0
      %v4123 = vadd.f32 %v3307, 1.0
      %v4124 = vadd.f32 %v3309, 1.0
      %v4125 = vadd.f32 %v3311, 1.0
      %v4126 = vadd.f32 %v3313, 1.0
      %v4127 = vadd.f32 %v3315, 1.0
      %v4128 = vadd.f32 %v3317, 1.0
      %v4129 = vadd.f32 %v3319, 1.0
      %v4130 = vadd.f32 %v3321, 1.0
      %v4131 = vadd.f32 %v3323, 1.0
      %v4132 = vadd.f32 %v3325, 1.0
      %v4133 = vadd.f32 %v3327, 1.0
      %v4134 = vadd.f32 %v3329, 1.0
      %v4135 = vadd.f32 %v3331, 1.0
      %v4136 = vadd.f32 %v3333, 1.0
      %v4137 = vadd.f32 %v3335, 1.0
      %v4138 = vadd.f32 %v3337, 1.0
      %v4139 = vadd.f32 %v3339, 1.0
      %v4140 = vadd.f32 %v3341, 1.0
      %v4141 = vadd.f32 %v3343, 1.0
      %v4142 = vadd.f32 %v3345, 1.0
      %v4143 = vadd.f32 %v3347, 1.0
      %v4144 = vadd.f32 %v3349, 1.0
      %v4145 = vadd.f32 %v3351, 1.0
      %v4146 = vadd.f32 %v3353, 1.0
      %v4147 = vadd.f32 %v3355, 1.0
      %v4148 = vadd.f32 %v3357, 1.0
      %v4149 = vadd.f32 %v3359, 1.0
      %v4150 = vadd.f32 %v3361, 1.0
      %v4151 = vadd.f32 %v3363, 1.0
      %v4152 = vadd.f32 %v3365, 1.0
      %v4153 = vadd.f32 %v3367, 1.0
      %v4154 = vadd.f32 %v3369, 1.0
      %v4155 = vadd.f32 %v3371, 1.0
      %v4156 = vadd.f32 %v3373, 1.0
      %v4157 = vadd.f32 %v3375, 1.0
      %v4158 = vadd.f32 %v3377, 1.0
      %v4159 = vadd.f32 %v3379, 1.0
      %v4160 = vadd.f32 %v3381, 1.0
      %v4161 = vadd.f32 %v3383, 1.0
      %v4162 = vadd.f32 %v3385, 1.0
      %v4163 = vadd.f32 %v3387, 1.0
      %v4164 = vadd.f32 %v3389, 1.0
      %v4165 = vadd.f32 %v3391, 1.0
      %v4166 = vadd.f32 %v3393, 1.0
      %v4167 = vadd.f32 %v3395, 1.0
      %v4168 = vadd.f32 %v3397, 1.0
      %v4169 = vadd.f32 %v3399, 1.0
      %v4170 = vadd.f32 %v3401, 1.0
      %v4171 = vadd.f32 %v3403, 1.0
      %v4172 = vadd.f32 %v3405, 1.0
      %v4173 = vadd.f32 %v3407, 1.0
      %v4174 = vadd.f32 %v3409, 1.0
      %v4175 = vadd.f32 %v3411, 1.0
      %v4176 = vadd.f32 %v3413, 1.0
      %v4177 = vadd.f32 %v3415, 1.0
      %v4178 = vadd.f32 %v3417, 1.0
      %v4179 = vadd.f32 %v3419, 1.0
      %v4180 = vadd.f32 %v3421, 1.0
      %v4181 = vadd.f32 %v3423, 1.0
      %v4182 = vadd.f32 %v3425, 1.0
      %v4183 = vadd.f32 %v3427, 1.0
      %v4184 = vadd.f32 %v3429, 1.0
      %v4185 = vadd.f32 %v3431, 1.0
      %v4186 = vadd.f32 %v3433, 1.0
      %v4187 = vadd.f32 %v3435, 1.0
      %v4188 = vadd.f32 %v3437, 1.0
      %v4189 = vadd.f32 %v3439, 1.0
      %v4190 = vadd.f32 %v3441, 1.0
      %v4191 = vadd.f32 %v3443, 1.0
      %v4192 = vadd.f32 %v3445, 1.0
      %v4193 = vadd.f32 %v3447, 1.0
      %v4194 = vadd.f32 %v3449, 1.0
      %v4195 = vadd.f32 %v3451, 1.0
      %v4196 = vadd.f32 %v3453, 1.0
      %v4197 = vadd.f32 %v3455, 1.0
      %v4198 = vadd.f32 %v3457, 1.0
      %v4199 = vadd.f32 %v3459, 1.0
      %v4200 = vadd.f32 %v3461, 1.0
      %v4201 = vadd.f32 %v3463, 1.0
      %v4202 = vadd.f32 %v3465, 1.0
      %v4203 = vadd.f32 %v3467, 1.0
      %v4204 = vadd.f32 %v3469, 1.0
      %v4205 = vadd.f32 %v3471, 1.0
      %v4206 = vadd.f32 %v3473, 1.0
      %v4207 = vadd.f32 %v3475, 1.0
      %v4208 = vadd.f32 %v3477, 1.0
      %v4209 = vadd.f32 %v3479, 1.0
      %v4210 = vadd.f32 %v3481, 1.0
      %v4211 = vadd.f32 %v3483, 1.0
      %v4212 = vadd.f32 %v3485, 1.0
      %v4213 = vadd.f32 %v3487, 1.0
      %v4214 = vadd.f32 %v3489, 1.0
      %v4215 = vadd.f32 %v3491, 1.0
      %v4216 = vadd.f32 %v3493, 1.0
      %v4217 = vadd.f32 %v3495, 1.0
      %v4218 = vadd.f32 %v3497, 1.0
      %v4219 = vadd.f32 %v3499, 1.0
      %v4220 = vadd.f32 %v3501, 1.0
      %v4221 = vadd.f32 %v3503, 1.0
      %v4222 = vadd.f32 %v3505, 1.0
      %v4223 = vadd.f32 %v3507, 1.0
      %v4224 = vadd.f32 %v3509, 1.0
      %v4225 = vadd.f32 %v3511, 1.0
      %v4226 = vadd.f32 %v3513, 1.0
      %v4227 = vadd.f32 %v3515, 1.0
      %v4228 = vadd.f32 %v3517, 1.0
      %v4229 = vadd.f32 %v3519, 1.0
      %v4230 = vadd.f32 %v3521, 1.0
      %v4231 = vadd.f32 %v3523, 1.0
      %v4232 = vadd.f32 %v3525, 1.0
      %v4233 = vadd.f32 %v3527, 1.0
      %v4234 = vadd.f32 %v3529, 1.0
      %v4235 = vadd.f32 %v3531, 1.0
      %v4236 = vadd.f32 %v3533, 1.0
      %v4237 = vadd.f32 %v3535, 1.0
      %v4238 = vadd.f32 %v3537, 1.0
      %v4239 = vadd.f32 %v3539, 1.0
      %v4240 = vadd.f32 %v3541, 1.0
      %v4241 = vadd.f32 %v3543, 1.0
      %v4242 = vadd.f32 %v3545, 1.0
      %v4243 = vadd.f32 %v3547, 1.0
      %v4244 = vadd.f32 %v3549, 1.0
      %v4245 = vadd.f32 %v3551, 1.0
      %v4246 = vadd.f32 %v3553, 1.0
      %v4247 = vadd.f32 %v3555, 1.0
      %v4248 = vadd.f32 %v3557, 1.0
      %v4249 = vadd.f32 %v3559, 1.0
      %v4250 = vadd.f32 %v3561, 1.0
      %v4251 = vadd.f32 %v3563, 1.0
      %v4252 = vadd.f32 %v3565, 1.0
      %v4253 = vadd.f32 %v3567, 1.0
      %v4254 = vadd.f32 %v3569, 1.0
      %v4255 = vadd.f32 %v3571, 1.0
      %v4256 = vadd.f32 %v3573, 1.0
      %v4257 = vadd.f32 %v3575, 1.0
      %v4258 = vadd.f32 %v3577, 1.0
      %v4259 = vadd.f32 %v3579, 1.0
      %v4260 = vadd.f32 %v3581, 1.0
      %v4261 = vadd.f32 %v3583, 1.0
      %v4262 = vadd.f32 %v3585, 1.0
      %v4263 = vadd.f32 %v3587, 1.0
      %v4264 = vadd.f32 %v3589, 1.0
      %v4265 = vadd.f32 %v3591, 1.0
      %v4266 = vadd.f32 %v3593, 1.0
      %v4267 = vadd.f32 %v3595, 1.0
      %v4268 = vadd.f32 %v3597, 1.0
      %v4269 = vadd.f32 %v3599, 1.0
      %v4270 = vadd.f32 %v3601, 1.0
      %v4271 = vadd.f32 %v3603, 1.0
      %v4272 = vadd.f32 %v3605, 1.0
      %v4273 = vadd.f32 %v3607, 1.0
      %v4274 = vadd.f32 %v3609, 1.0
      %v4275 = vadd.f32 %v3611, 1.0
      %v4276 = vadd.f32 %v3613, 1.0
      %v4277 = vadd.f32 %v3615, 1.0
      %v4278 = vadd.f32 %v3617, 1.0
      %v4279 = vadd.f32 %v3619, 1.0
      %v4280 = vadd.f32 %v3621, 1.0
      %v4281 = vadd.f32 %v3623, 1.0
      %v4282 = vadd.f32 %v3625, 1.0
      %v4283 = vadd.f32 %v3627, 1.0
      %v4284 = vadd.f32 %v3629, 1.0
      %v4285 = vadd.f32 %v3631, 1.0
      %v4286 = vadd.f32 %v3633, 1.0
      %v4287 = vadd.f32 %v3635, 1.0
      %v4288 = vadd.f32 %v3637, 1.0
      %v4289 = vadd.f32 %v3639, 1.0
      %v4290 = vadd.f32 %v3641, 1.0
      %v4291 = vadd.f32 %v3643, 1.0
      %v4292 = vadd.f32 %v3645, 1.0
      %v4293 = vadd.f32 %v3647, 1.0
      %v4294 = vadd.f32 %v3649, 1.0
      %v4295 = vadd.f32 %v3651, 1.0
      %v4296 = vadd.f32 %v3653, 1.0
      %v4297 = vadd.f32 %v3655, 1.0
      %v4298 = vadd.f32 %v3657, 1.0
      %v4299 = vadd.f32 %v3659, 1.0
      %v4300 = vadd.f32 %v3661, 1.0
      %v4301 = vadd.f32 %v3663, 1.0
      %v4302 = vadd.f32 %v3665, 1.0
      %v4303 = vadd.f32 %v3667, 1.0
      %v4304 = vadd.f32 %v3669, 1.0
      %v4305 = vadd.f32 %v3671, 1.0
      %v4306 = vadd.f32 %v3673, 1.0
      %v4307 = vadd.f32 %v3675, 1.0
      %v4308 = vadd.f32 %v3677, 1.0
      %v4309 = vadd.f32 %v3679, 1.0
      %v4310 = vadd.f32 %v3681, 1.0
      %v4311 = vadd.f32 %v3683, 1.0
      %v4312 = vadd.f32 %v3685, 1.0
      %v4313 = vadd.f32 %v3687, 1.0
      %v4314 = vadd.f32 %v3689, 1.0
      %v4315 = vadd.f32 %v3691, 1.0
      %v4316 = vadd.f32 %v3693, 1.0
      %v4317 = vadd.f32 %v3695, 1.0
      %v4318 = vadd.f32 %v3697, 1.0
      %v4319 = vadd.f32 %v3699, 1.0
      %v4320 = vadd.f32 %v3701, 1.0
      %v4321 = vadd.f32 %v3703, 1.0
      %v4322 = vadd.f32 %v3705, 1.0
      %v4323 = vadd.f32 %v3707, 1.0
      %v4324 = vadd.f32 %v3709, 1.0
      %v4325 = vadd.f32 %v3711, 1.0
      %v4326 = vadd.f32 %v3713, 1.0
      %v4327 = vadd.f32 %v3715, 1.0
      %v4328 = vadd.f32 %v3717, 1.0
      %v4329 = vadd.f32 %v3719, 1.0
      %v4330 = vadd.f32 %v3721, 1.0
      %v4331 = vadd.f32 %v3723, 1.0
      %v4332 = vadd.f32 %v3725, 1.0
      %v4333 = vadd.f32 %v3727, 1.0
      %v4334 = vadd.f32 %v3729, 1.0
      %v4335 = vadd.f32 %v3731, 1.0
      %v4336 = vadd.f32 %v3733, 1.0
      %v4337 = vadd.f32 %v3735, 1.0
      %v4338 = vadd.f32 %v3737, 1.0
      %v4339 = vadd.f32 %v3739, 1.0
      %v4340 = vadd.f32 %v3741, 1.0
      %v4341 = vadd.f32 %v3743, 1.0
      %v4342 = vadd.f32 %v3745, 1.0
      %v4343 = vadd.f32 %v3747, 1.0
      %v4344 = vadd.f32 %v3749, 1.0
      %v4345 = vadd.f32 %v3751, 1.0
      %v4346 = vadd.f32 %v3753, 1.0
      %v4347 = vadd.f32 %v3755, 1.0
      %v4348 = vadd.f32 %v3757, 1.0
      %v4349 = vadd.f32 %v3759, 1.0
      %v4350 = vadd.f32 %v3761, 1.0
      %v4351 = vadd.f32 %v3763, 1.0
      %v4352 = vadd.f32 %v3765, 1.0
      %v4353 = vadd.f32 %v3767, 1.0
      %v4354 = vadd.f32 %v3769, 1.0
      %v4355 = vadd.f32 %v3771, 1.0
      %v4356 = vadd.f32 %v3773, 1.0
      %v4357 = vadd.f32 %v3775, 1.0
      %v4358 = vadd.f32 %v3777, 1.0
      %v4359 = vadd.f32 %v3779, 1.0
      %v4360 = vadd.f32 %v3781, 1.0
      %v4361 = vadd.f32 %v3783, 1.0
      %v4362 = vadd.f32 %v3785, 1.0
      %v4363 = vadd.f32 %v3787, 1.0
      %v4364 = vadd.f32 %v3789, 1.0
      %v4365 = vadd.f32 %v3791, 1.0
      %v4366 = vadd.f32 %v3793, 1.0
      %v4367 = vadd.f32 %v3795, 1.0
      %v4368 = vadd.f32 %v3797, 1.0
      %v4369 = vadd.f32 %v3799, 1.0
      %v4370 = vadd.f32 %v3801, 1.0
      %v4371 = vadd.f32 %v3803, 1.0
      %v4372 = vadd.f32 %v3805, 1.0
      %v4373 = vadd.f32 %v3807, 1.0
      %v4374 = vadd.f32 %v3809, 1.0
      %v4375 = vadd.f32 %v3811, 1.0
      %v4376 = vadd.f32 %v3813, 1.0
      %v4377 = vadd.f32 %v3815, 1.0
      %v4378 = vadd.f32 %v3817, 1.0
      %v4379 = vadd.f32 %v3819, 1.0
      %v4380 = vadd.f32 %v3821, 1.0
      %v4381 = vadd.f32 %v3823, 1.0
      %v4382 = vadd.f32 %v3825, 1.0
      %v4383 = vadd.f32 %v3827, 1.0
      %v4384 = vadd.f32 %v3829, 1.0
      %v4385 = vadd.f32 %v3831, 1.0
      %v4386 = vadd.f32 %v3833, 1.0
      %v4387 = vadd.f32 %v3835, 1.0
      %v4388 = vadd.f32 %v3837, 1.0
      %v4389 = vadd.f32 %v3839, 1.0
      %v4390 = vadd.f32 %v3841, 1.0
      %v4391 = vadd.f32 %v3843, 1.0
      %v4392 = vadd.f32 %v3845, 1.0
      %v4393 = vadd.f32 %v3847, 1.0
      %v4394 = vadd.f32 %v3849, 1.0
      %v4395 = vadd.f32 %v3851, 1.0
      %v4396 = vadd.f32 %v3853, 1.0
      %v4397 = vadd.f32 %v3855, 1.0
      %v4398 = vadd.f32 %v3857, 1.0
      %v4399 = vadd.f32 %v3859, 1.0
      %v4400 = vadd.f32 %v3861, 1.0
      %v4401 = vadd.f32 %v3863, 1.0
      %v4402 = vadd.f32 %v3865, 1.0
      %v4403 = vadd.f32 %v3867, 1.0
      %v4404 = vadd.f32 %v3869, 1.0
      %v4405 = vadd.f32 %v3871, 1.0
      %v4406 = vadd.f32 %v3873, 1.0
      %v4407 = vadd.f32 %v3875, 1.0
      %v4408 = vadd.f32 %v3877, 1.0
      %v4409 = vadd.f32 %v3879, 1.0
      %v4410 = vadd.f32 %v3881, 1.0
      %v4411 = vadd.f32 %v3883, 1.0
      %v4412 = vadd.f32 %v3885, 1.0
      %v4413 = vadd.f32 %v3887, 1.0
      %v4414 = vadd.f32 %v3889, 1.0
      %v4415 = vadd.f32 %v3891, 1.0
      %v4416 = vadd.f32 %v3893, 1.0
      %v4417 = vadd.f32 %v3895, 1.0
      %v4418 = vadd.f32 %v3897, 1.0
      %v4419 = vadd.f32 %v3899, 1.0
      %v4420 = vadd.f32 %v3901, 1.0
      %v4421 = vadd.f32 %v3903, 1.0
      %v4422 = vadd.f32 %v3905, 1.0
      %v4423 = vadd.f32 %v3907, 1.0
      %v4424 = vadd.f32 %v3909, 1.0
      %v4425 = vadd.f32 %v3911, 1.0
      %v4426 = vadd.f32 %v3913, 1.0
      %v4427 = vadd.f32 %v3915, 1.0
      %v4428 = vadd.f32 %v3917, 1.0
      %v4429 = vadd.f32 %v3919, 1.0
      %v4430 = vadd.f32 %v3921, 1.0
      %v4431 = vadd.f32 %v3923, 1.0
      %v4432 = vadd.f32 %v3925, 1.0
      %v4433 = vadd.f32 %v3927, 1.0
      %v4434 = vadd.f32 %v3929, 1.0
      %v4435 = vadd.f32 %v3931, 1.0
      %v4436 = vadd.f32 %v3933, 1.0
      %v4437 = vadd.f32 %v3935, 1.0
      %v4438 = vadd.f32 %v3937, 1.0
      %v4439 = vadd.f32 %v3939, 1.0
      %v4440 = vadd.f32 %v3941, 1.0
      %v4441 = vadd.f32 %v3943, 1.0
      %v4442 = vadd.f32 %v3945, 1.0
      %v4443 = vadd.f32 %v3947, 1.0
      %v4444 = vadd.f32 %v3949, 1.0
      %v4445 = vadd.f32 %v3951, 1.0
      %v4446 = vadd.f32 %v3953, 1.0
      %v4447 = vadd.f32 %v3955, 1.0
      %v4448 = vadd.f32 %v3957, 1.0
      %v4449 = vadd.f32 %v3959, 1.0
      %v4450 = vadd.f32 %v3961, 1.0
      %v4451 = vadd.f32 %v3963, 1.0
      %v4452 = vadd.f32 %v3965, 1.0
      %v4453 = vadd.f32 %v3967, 1.0
      %v4454 = vadd.f32 %v3969, 1.0
      %v4455 = vadd.f32 %v3971, 1.0
      %v4456 = vadd.f32 %v3973, 1.0
      %v4457 = vadd.f32 %v3975, 1.0
      %v4458 = vadd.f32 %v3977, 1.0
      %v4459 = vadd.f32 %v3979, 1.0
      %v4460 = vadd.f32 %v3981, 1.0
      %v4461 = vadd.f32 %v3983, 1.0
      %v4462 = vadd.f32 %v3985, 1.0
      %v4463 = vadd.f32 %v3987, 1.0
      %v4464 = vadd.f32 %v3989, 1.0
      %v4465 = vadd.f32 %v3991, 1.0
      %v4466 = vadd.f32 %v3993, 1.0
      %v4467 = vadd.f32 %v3995, 1.0
      %v4468 = vadd.f32 %v3997, 1.0
      %v4469 = vadd.f32 %v3999, 1.0
      %v4470 = vadd.f32 %v4001, 1.0
      %v4471 = vadd.f32 %v4003, 1.0
      %v4472 = vadd.f32 %v4005, 1.0
      %v4473 = vadd.f32 %v4007, 1.0
      %v4474 = vadd.f32 %v4009, 1.0
      %v4475 = vadd.f32 %v4011, 1.0
      %v4476 = vadd.f32 %v4013, 1.0
      %v4477 = vadd.f32 %v4015, 1.0
      %v4478 = vadd.f32 %v4017, 1.0
      %v4479 = vadd.f32 %v4019, 1.0
      %v4480 = vadd.f32 %v4021, 1.0
      %v4481 = vadd.f32 %v4023, 1.0
      %v4482 = vadd.f32 %v4025, 1.0
      %v4483 = vadd.f32 %v4027, 1.0
      %v4484 = vadd.f32 %v4029, 1.0
      %v4485 = vadd.f32 %v4031, 1.0
      %v4486 = vadd.f32 %v4033, 1.0
      %v4487 = vadd.f32 %v4035, 1.0
      %v4488 = vadd.f32 %v4037, 1.0
      %v4489 = vadd.f32 %v4039, 1.0
      %v4490 = vadd.f32 %v4041, 1.0
      %v4491 = vadd.f32 %v4043, 1.0
      %v4492 = vrcp.pop %v4044
      %v4493 = vmul.f32 1.0, %v4492
      %v4494 = vrcp.pop %v4045
      %v4495 = vmul.f32 1.0, %v4494
      %v4496 = vrcp.pop %v4046
      %v4497 = vmul.f32 1.0, %v4496
      %v4498 = vrcp.pop %v4047
      %v4499 = vmul.f32 1.0, %v4498
      %v4500 = vrcp.pop %v4048
      %v4501 = vmul.f32 1.0, %v4500
      %v4502 = vrcp.pop %v4049
      %v4503 = vmul.f32 1.0, %v4502
      %v4504 = vrcp.pop %v4050
      %v4505 = vmul.f32 1.0, %v4504
      %v4506 = vrcp.pop %v4051
      %v4507 = vmul.f32 1.0, %v4506
      %v4508 = vrcp.pop %v4052
      %v4509 = vmul.f32 1.0, %v4508
      %v4510 = vrcp.pop %v4053
      %v4511 = vmul.f32 1.0, %v4510
      %v4512 = vrcp.pop %v4054
      %v4513 = vmul.f32 1.0, %v4512
      %v4514 = vrcp.pop %v4055
      %v4515 = vmul.f32 1.0, %v4514
      %v4516 = vrcp.pop %v4056
      %v4517 = vmul.f32 1.0, %v4516
      %v4518 = vrcp.pop %v4057
      %v4519 = vmul.f32 1.0, %v4518
      %v4520 = vrcp.pop %v4058
      %v4521 = vmul.f32 1.0, %v4520
      %v4522 = vrcp.pop %v4059
      %v4523 = vmul.f32 1.0, %v4522
      %v4524 = vrcp.pop %v4060
      %v4525 = vmul.f32 1.0, %v4524
      %v4526 = vrcp.pop %v4061
      %v4527 = vmul.f32 1.0, %v4526
      %v4528 = vrcp.pop %v4062
      %v4529 = vmul.f32 1.0, %v4528
      %v4530 = vrcp.pop %v4063
      %v4531 = vmul.f32 1.0, %v4530
      %v4532 = vrcp.pop %v4064
      %v4533 = vmul.f32 1.0, %v4532
      %v4534 = vrcp.pop %v4065
      %v4535 = vmul.f32 1.0, %v4534
      %v4536 = vrcp.pop %v4066
      %v4537 = vmul.f32 1.0, %v4536
      %v4538 = vrcp.pop %v4067
      %v4539 = vmul.f32 1.0, %v4538
      %v4540 = vrcp.pop %v4068
      %v4541 = vmul.f32 1.0, %v4540
      %v4542 = vrcp.pop %v4069
      %v4543 = vmul.f32 1.0, %v4542
      %v4544 = vrcp.pop %v4070
      %v4545 = vmul.f32 1.0, %v4544
      %v4546 = vrcp.pop %v4071
      %v4547 = vmul.f32 1.0, %v4546
      %v4548 = vrcp.pop %v4072
      %v4549 = vmul.f32 1.0, %v4548
      %v4550 = vrcp.pop %v4073
      %v4551 = vmul.f32 1.0, %v4550
      %v4552 = vrcp.pop %v4074
      %v4553 = vmul.f32 1.0, %v4552
      %v4554 = vrcp.pop %v4075
      %v4555 = vmul.f32 1.0, %v4554
      %v4556 = vrcp.pop %v4076
      %v4557 = vmul.f32 1.0, %v4556
      %v4558 = vrcp.pop %v4077
      %v4559 = vmul.f32 1.0, %v4558
      %v4560 = vrcp.pop %v4078
      %v4561 = vmul.f32 1.0, %v4560
      %v4562 = vrcp.pop %v4079
      %v4563 = vmul.f32 1.0, %v4562
      %v4564 = vrcp.pop %v4080
      %v4565 = vmul.f32 1.0, %v4564
      %v4566 = vrcp.pop %v4081
      %v4567 = vmul.f32 1.0, %v4566
      %v4568 = vrcp.pop %v4082
      %v4569 = vmul.f32 1.0, %v4568
      %v4570 = vrcp.pop %v4083
      %v4571 = vmul.f32 1.0, %v4570
      %v4572 = vrcp.pop %v4084
      %v4573 = vmul.f32 1.0, %v4572
      %v4574 = vrcp.pop %v4085
      %v4575 = vmul.f32 1.0, %v4574
      %v4576 = vrcp.pop %v4086
      %v4577 = vmul.f32 1.0, %v4576
      %v4578 = vrcp.pop %v4087
      %v4579 = vmul.f32 1.0, %v4578
      %v4580 = vrcp.pop %v4088
      %v4581 = vmul.f32 1.0, %v4580
      %v4582 = vrcp.pop %v4089
      %v4583 = vmul.f32 1.0, %v4582
      %v4584 = vrcp.pop %v4090
      %v4585 = vmul.f32 1.0, %v4584
      %v4586 = vrcp.pop %v4091
      %v4587 = vmul.f32 1.0, %v4586
      %v4588 = vrcp.pop %v4092
      %v4589 = vmul.f32 1.0, %v4588
      %v4590 = vrcp.pop %v4093
      %v4591 = vmul.f32 1.0, %v4590
      %v4592 = vrcp.pop %v4094
      %v4593 = vmul.f32 1.0, %v4592
      %v4594 = vrcp.pop %v4095
      %v4595 = vmul.f32 1.0, %v4594
      %v4596 = vrcp.pop %v4096
      %v4597 = vmul.f32 1.0, %v4596
      %v4598 = vrcp.pop %v4097
      %v4599 = vmul.f32 1.0, %v4598
      %v4600 = vrcp.pop %v4098
      %v4601 = vmul.f32 1.0, %v4600
      %v4602 = vrcp.pop %v4099
      %v4603 = vmul.f32 1.0, %v4602
      %v4604 = vrcp.pop %v4100
      %v4605 = vmul.f32 1.0, %v4604
      %v4606 = vrcp.pop %v4101
      %v4607 = vmul.f32 1.0, %v4606
      %v4608 = vrcp.pop %v4102
      %v4609 = vmul.f32 1.0, %v4608
      %v4610 = vrcp.pop %v4103
      %v4611 = vmul.f32 1.0, %v4610
      %v4612 = vrcp.pop %v4104
      %v4613 = vmul.f32 1.0, %v4612
      %v4614 = vrcp.pop %v4105
      %v4615 = vmul.f32 1.0, %v4614
      %v4616 = vrcp.pop %v4106
      %v4617 = vmul.f32 1.0, %v4616
      %v4618 = vrcp.pop %v4107
      %v4619 = vmul.f32 1.0, %v4618
      %v4620 = vrcp.pop %v4108
      %v4621 = vmul.f32 1.0, %v4620
      %v4622 = vrcp.pop %v4109
      %v4623 = vmul.f32 1.0, %v4622
      %v4624 = vrcp.pop %v4110
      %v4625 = vmul.f32 1.0, %v4624
      %v4626 = vrcp.pop %v4111
      %v4627 = vmul.f32 1.0, %v4626
      %v4628 = vrcp.pop %v4112
      %v4629 = vmul.f32 1.0, %v4628
      %v4630 = vrcp.pop %v4113
      %v4631 = vmul.f32 1.0, %v4630
      %v4632 = vrcp.pop %v4114
      %v4633 = vmul.f32 1.0, %v4632
      %v4634 = vrcp.pop %v4115
      %v4635 = vmul.f32 1.0, %v4634
      %v4636 = vrcp.pop %v4116
      %v4637 = vmul.f32 1.0, %v4636
      %v4638 = vrcp.pop %v4117
      %v4639 = vmul.f32 1.0, %v4638
      %v4640 = vrcp.pop %v4118
      %v4641 = vmul.f32 1.0, %v4640
      %v4642 = vrcp.pop %v4119
      %v4643 = vmul.f32 1.0, %v4642
      %v4644 = vrcp.pop %v4120
      %v4645 = vmul.f32 1.0, %v4644
      %v4646 = vrcp.pop %v4121
      %v4647 = vmul.f32 1.0, %v4646
      %v4648 = vrcp.pop %v4122
      %v4649 = vmul.f32 1.0, %v4648
      %v4650 = vrcp.pop %v4123
      %v4651 = vmul.f32 1.0, %v4650
      %v4652 = vrcp.pop %v4124
      %v4653 = vmul.f32 1.0, %v4652
      %v4654 = vrcp.pop %v4125
      %v4655 = vmul.f32 1.0, %v4654
      %v4656 = vrcp.pop %v4126
      %v4657 = vmul.f32 1.0, %v4656
      %v4658 = vrcp.pop %v4127
      %v4659 = vmul.f32 1.0, %v4658
      %v4660 = vrcp.pop %v4128
      %v4661 = vmul.f32 1.0, %v4660
      %v4662 = vrcp.pop %v4129
      %v4663 = vmul.f32 1.0, %v4662
      %v4664 = vrcp.pop %v4130
      %v4665 = vmul.f32 1.0, %v4664
      %v4666 = vrcp.pop %v4131
      %v4667 = vmul.f32 1.0, %v4666
      %v4668 = vrcp.pop %v4132
      %v4669 = vmul.f32 1.0, %v4668
      %v4670 = vrcp.pop %v4133
      %v4671 = vmul.f32 1.0, %v4670
      %v4672 = vrcp.pop %v4134
      %v4673 = vmul.f32 1.0, %v4672
      %v4674 = vrcp.pop %v4135
      %v4675 = vmul.f32 1.0, %v4674
      %v4676 = vrcp.pop %v4136
      %v4677 = vmul.f32 1.0, %v4676
      %v4678 = vrcp.pop %v4137
      %v4679 = vmul.f32 1.0, %v4678
      %v4680 = vrcp.pop %v4138
      %v4681 = vmul.f32 1.0, %v4680
      %v4682 = vrcp.pop %v4139
      %v4683 = vmul.f32 1.0, %v4682
      %v4684 = vrcp.pop %v4140
      %v4685 = vmul.f32 1.0, %v4684
      %v4686 = vrcp.pop %v4141
      %v4687 = vmul.f32 1.0, %v4686
      %v4688 = vrcp.pop %v4142
      %v4689 = vmul.f32 1.0, %v4688
      %v4690 = vrcp.pop %v4143
      %v4691 = vmul.f32 1.0, %v4690
      %v4692 = vrcp.pop %v4144
      %v4693 = vmul.f32 1.0, %v4692
      %v4694 = vrcp.pop %v4145
      %v4695 = vmul.f32 1.0, %v4694
      %v4696 = vrcp.pop %v4146
      %v4697 = vmul.f32 1.0, %v4696
      %v4698 = vrcp.pop %v4147
      %v4699 = vmul.f32 1.0, %v4698
      %v4700 = vrcp.pop %v4148
      %v4701 = vmul.f32 1.0, %v4700
      %v4702 = vrcp.pop %v4149
      %v4703 = vmul.f32 1.0, %v4702
      %v4704 = vrcp.pop %v4150
      %v4705 = vmul.f32 1.0, %v4704
      %v4706 = vrcp.pop %v4151
      %v4707 = vmul.f32 1.0, %v4706
      %v4708 = vrcp.pop %v4152
      %v4709 = vmul.f32 1.0, %v4708
      %v4710 = vrcp.pop %v4153
      %v4711 = vmul.f32 1.0, %v4710
      %v4712 = vrcp.pop %v4154
      %v4713 = vmul.f32 1.0, %v4712
      %v4714 = vrcp.pop %v4155
      %v4715 = vmul.f32 1.0, %v4714
      %v4716 = vrcp.pop %v4156
      %v4717 = vmul.f32 1.0, %v4716
      %v4718 = vrcp.pop %v4157
      %v4719 = vmul.f32 1.0, %v4718
      %v4720 = vrcp.pop %v4158
      %v4721 = vmul.f32 1.0, %v4720
      %v4722 = vrcp.pop %v4159
      %v4723 = vmul.f32 1.0, %v4722
      %v4724 = vrcp.pop %v4160
      %v4725 = vmul.f32 1.0, %v4724
      %v4726 = vrcp.pop %v4161
      %v4727 = vmul.f32 1.0, %v4726
      %v4728 = vrcp.pop %v4162
      %v4729 = vmul.f32 1.0, %v4728
      %v4730 = vrcp.pop %v4163
      %v4731 = vmul.f32 1.0, %v4730
      %v4732 = vrcp.pop %v4164
      %v4733 = vmul.f32 1.0, %v4732
      %v4734 = vrcp.pop %v4165
      %v4735 = vmul.f32 1.0, %v4734
      %v4736 = vrcp.pop %v4166
      %v4737 = vmul.f32 1.0, %v4736
      %v4738 = vrcp.pop %v4167
      %v4739 = vmul.f32 1.0, %v4738
      %v4740 = vrcp.pop %v4168
      %v4741 = vmul.f32 1.0, %v4740
      %v4742 = vrcp.pop %v4169
      %v4743 = vmul.f32 1.0, %v4742
      %v4744 = vrcp.pop %v4170
      %v4745 = vmul.f32 1.0, %v4744
      %v4746 = vrcp.pop %v4171
      %v4747 = vmul.f32 1.0, %v4746
      %v4748 = vrcp.pop %v4172
      %v4749 = vmul.f32 1.0, %v4748
      %v4750 = vrcp.pop %v4173
      %v4751 = vmul.f32 1.0, %v4750
      %v4752 = vrcp.pop %v4174
      %v4753 = vmul.f32 1.0, %v4752
      %v4754 = vrcp.pop %v4175
      %v4755 = vmul.f32 1.0, %v4754
      %v4756 = vrcp.pop %v4176
      %v4757 = vmul.f32 1.0, %v4756
      %v4758 = vrcp.pop %v4177
      %v4759 = vmul.f32 1.0, %v4758
      %v4760 = vrcp.pop %v4178
      %v4761 = vmul.f32 1.0, %v4760
      %v4762 = vrcp.pop %v4179
      %v4763 = vmul.f32 1.0, %v4762
      %v4764 = vrcp.pop %v4180
      %v4765 = vmul.f32 1.0, %v4764
      %v4766 = vrcp.pop %v4181
      %v4767 = vmul.f32 1.0, %v4766
      %v4768 = vrcp.pop %v4182
      %v4769 = vmul.f32 1.0, %v4768
      %v4770 = vrcp.pop %v4183
      %v4771 = vmul.f32 1.0, %v4770
      %v4772 = vrcp.pop %v4184
      %v4773 = vmul.f32 1.0, %v4772
      %v4774 = vrcp.pop %v4185
      %v4775 = vmul.f32 1.0, %v4774
      %v4776 = vrcp.pop %v4186
      %v4777 = vmul.f32 1.0, %v4776
      %v4778 = vrcp.pop %v4187
      %v4779 = vmul.f32 1.0, %v4778
      %v4780 = vrcp.pop %v4188
      %v4781 = vmul.f32 1.0, %v4780
      %v4782 = vrcp.pop %v4189
      %v4783 = vmul.f32 1.0, %v4782
      %v4784 = vrcp.pop %v4190
      %v4785 = vmul.f32 1.0, %v4784
      %v4786 = vrcp.pop %v4191
      %v4787 = vmul.f32 1.0, %v4786
      %v4788 = vrcp.pop %v4192
      %v4789 = vmul.f32 1.0, %v4788
      %v4790 = vrcp.pop %v4193
      %v4791 = vmul.f32 1.0, %v4790
      %v4792 = vrcp.pop %v4194
      %v4793 = vmul.f32 1.0, %v4792
      %v4794 = vrcp.pop %v4195
      %v4795 = vmul.f32 1.0, %v4794
      %v4796 = vrcp.pop %v4196
      %v4797 = vmul.f32 1.0, %v4796
      %v4798 = vrcp.pop %v4197
      %v4799 = vmul.f32 1.0, %v4798
      %v4800 = vrcp.pop %v4198
      %v4801 = vmul.f32 1.0, %v4800
      %v4802 = vrcp.pop %v4199
      %v4803 = vmul.f32 1.0, %v4802
      %v4804 = vrcp.pop %v4200
      %v4805 = vmul.f32 1.0, %v4804
      %v4806 = vrcp.pop %v4201
      %v4807 = vmul.f32 1.0, %v4806
      %v4808 = vrcp.pop %v4202
      %v4809 = vmul.f32 1.0, %v4808
      %v4810 = vrcp.pop %v4203
      %v4811 = vmul.f32 1.0, %v4810
      %v4812 = vrcp.pop %v4204
      %v4813 = vmul.f32 1.0, %v4812
      %v4814 = vrcp.pop %v4205
      %v4815 = vmul.f32 1.0, %v4814
      %v4816 = vrcp.pop %v4206
      %v4817 = vmul.f32 1.0, %v4816
      %v4818 = vrcp.pop %v4207
      %v4819 = vmul.f32 1.0, %v4818
      %v4820 = vrcp.pop %v4208
      %v4821 = vmul.f32 1.0, %v4820
      %v4822 = vrcp.pop %v4209
      %v4823 = vmul.f32 1.0, %v4822
      %v4824 = vrcp.pop %v4210
      %v4825 = vmul.f32 1.0, %v4824
      %v4826 = vrcp.pop %v4211
      %v4827 = vmul.f32 1.0, %v4826
      %v4828 = vrcp.pop %v4212
      %v4829 = vmul.f32 1.0, %v4828
      %v4830 = vrcp.pop %v4213
      %v4831 = vmul.f32 1.0, %v4830
      %v4832 = vrcp.pop %v4214
      %v4833 = vmul.f32 1.0, %v4832
      %v4834 = vrcp.pop %v4215
      %v4835 = vmul.f32 1.0, %v4834
      %v4836 = vrcp.pop %v4216
      %v4837 = vmul.f32 1.0, %v4836
      %v4838 = vrcp.pop %v4217
      %v4839 = vmul.f32 1.0, %v4838
      %v4840 = vrcp.pop %v4218
      %v4841 = vmul.f32 1.0, %v4840
      %v4842 = vrcp.pop %v4219
      %v4843 = vmul.f32 1.0, %v4842
      %v4844 = vrcp.pop %v4220
      %v4845 = vmul.f32 1.0, %v4844
      %v4846 = vrcp.pop %v4221
      %v4847 = vmul.f32 1.0, %v4846
      %v4848 = vrcp.pop %v4222
      %v4849 = vmul.f32 1.0, %v4848
      %v4850 = vrcp.pop %v4223
      %v4851 = vmul.f32 1.0, %v4850
      %v4852 = vrcp.pop %v4224
      %v4853 = vmul.f32 1.0, %v4852
      %v4854 = vrcp.pop %v4225
      %v4855 = vmul.f32 1.0, %v4854
      %v4856 = vrcp.pop %v4226
      %v4857 = vmul.f32 1.0, %v4856
      %v4858 = vrcp.pop %v4227
      %v4859 = vmul.f32 1.0, %v4858
      %v4860 = vrcp.pop %v4228
      %v4861 = vmul.f32 1.0, %v4860
      %v4862 = vrcp.pop %v4229
      %v4863 = vmul.f32 1.0, %v4862
      %v4864 = vrcp.pop %v4230
      %v4865 = vmul.f32 1.0, %v4864
      %v4866 = vrcp.pop %v4231
      %v4867 = vmul.f32 1.0, %v4866
      %v4868 = vrcp.pop %v4232
      %v4869 = vmul.f32 1.0, %v4868
      %v4870 = vrcp.pop %v4233
      %v4871 = vmul.f32 1.0, %v4870
      %v4872 = vrcp.pop %v4234
      %v4873 = vmul.f32 1.0, %v4872
      %v4874 = vrcp.pop %v4235
      %v4875 = vmul.f32 1.0, %v4874
      %v4876 = vrcp.pop %v4236
      %v4877 = vmul.f32 1.0, %v4876
      %v4878 = vrcp.pop %v4237
      %v4879 = vmul.f32 1.0, %v4878
      %v4880 = vrcp.pop %v4238
      %v4881 = vmul.f32 1.0, %v4880
      %v4882 = vrcp.pop %v4239
      %v4883 = vmul.f32 1.0, %v4882
      %v4884 = vrcp.pop %v4240
      %v4885 = vmul.f32 1.0, %v4884
      %v4886 = vrcp.pop %v4241
      %v4887 = vmul.f32 1.0, %v4886
      %v4888 = vrcp.pop %v4242
      %v4889 = vmul.f32 1.0, %v4888
      %v4890 = vrcp.pop %v4243
      %v4891 = vmul.f32 1.0, %v4890
      %v4892 = vrcp.pop %v4244
      %v4893 = vmul.f32 1.0, %v4892
      %v4894 = vrcp.pop %v4245
      %v4895 = vmul.f32 1.0, %v4894
      %v4896 = vrcp.pop %v4246
      %v4897 = vmul.f32 1.0, %v4896
      %v4898 = vrcp.pop %v4247
      %v4899 = vmul.f32 1.0, %v4898
      %v4900 = vrcp.pop %v4248
      %v4901 = vmul.f32 1.0, %v4900
      %v4902 = vrcp.pop %v4249
      %v4903 = vmul.f32 1.0, %v4902
      %v4904 = vrcp.pop %v4250
      %v4905 = vmul.f32 1.0, %v4904
      %v4906 = vrcp.pop %v4251
      %v4907 = vmul.f32 1.0, %v4906
      %v4908 = vrcp.pop %v4252
      %v4909 = vmul.f32 1.0, %v4908
      %v4910 = vrcp.pop %v4253
      %v4911 = vmul.f32 1.0, %v4910
      %v4912 = vrcp.pop %v4254
      %v4913 = vmul.f32 1.0, %v4912
      %v4914 = vrcp.pop %v4255
      %v4915 = vmul.f32 1.0, %v4914
      %v4916 = vrcp.pop %v4256
      %v4917 = vmul.f32 1.0, %v4916
      %v4918 = vrcp.pop %v4257
      %v4919 = vmul.f32 1.0, %v4918
      %v4920 = vrcp.pop %v4258
      %v4921 = vmul.f32 1.0, %v4920
      %v4922 = vrcp.pop %v4259
      %v4923 = vmul.f32 1.0, %v4922
      %v4924 = vrcp.pop %v4260
      %v4925 = vmul.f32 1.0, %v4924
      %v4926 = vrcp.pop %v4261
      %v4927 = vmul.f32 1.0, %v4926
      %v4928 = vrcp.pop %v4262
      %v4929 = vmul.f32 1.0, %v4928
      %v4930 = vrcp.pop %v4263
      %v4931 = vmul.f32 1.0, %v4930
      %v4932 = vrcp.pop %v4264
      %v4933 = vmul.f32 1.0, %v4932
      %v4934 = vrcp.pop %v4265
      %v4935 = vmul.f32 1.0, %v4934
      %v4936 = vrcp.pop %v4266
      %v4937 = vmul.f32 1.0, %v4936
      %v4938 = vrcp.pop %v4267
      %v4939 = vmul.f32 1.0, %v4938
      %v4940 = vrcp.pop %v4268
      %v4941 = vmul.f32 1.0, %v4940
      %v4942 = vrcp.pop %v4269
      %v4943 = vmul.f32 1.0, %v4942
      %v4944 = vrcp.pop %v4270
      %v4945 = vmul.f32 1.0, %v4944
      %v4946 = vrcp.pop %v4271
      %v4947 = vmul.f32 1.0, %v4946
      %v4948 = vrcp.pop %v4272
      %v4949 = vmul.f32 1.0, %v4948
      %v4950 = vrcp.pop %v4273
      %v4951 = vmul.f32 1.0, %v4950
      %v4952 = vrcp.pop %v4274
      %v4953 = vmul.f32 1.0, %v4952
      %v4954 = vrcp.pop %v4275
      %v4955 = vmul.f32 1.0, %v4954
      %v4956 = vrcp.pop %v4276
      %v4957 = vmul.f32 1.0, %v4956
      %v4958 = vrcp.pop %v4277
      %v4959 = vmul.f32 1.0, %v4958
      %v4960 = vrcp.pop %v4278
      %v4961 = vmul.f32 1.0, %v4960
      %v4962 = vrcp.pop %v4279
      %v4963 = vmul.f32 1.0, %v4962
      %v4964 = vrcp.pop %v4280
      %v4965 = vmul.f32 1.0, %v4964
      %v4966 = vrcp.pop %v4281
      %v4967 = vmul.f32 1.0, %v4966
      %v4968 = vrcp.pop %v4282
      %v4969 = vmul.f32 1.0, %v4968
      %v4970 = vrcp.pop %v4283
      %v4971 = vmul.f32 1.0, %v4970
      %v4972 = vrcp.pop %v4284
      %v4973 = vmul.f32 1.0, %v4972
      %v4974 = vrcp.pop %v4285
      %v4975 = vmul.f32 1.0, %v4974
      %v4976 = vrcp.pop %v4286
      %v4977 = vmul.f32 1.0, %v4976
      %v4978 = vrcp.pop %v4287
      %v4979 = vmul.f32 1.0, %v4978
      %v4980 = vrcp.pop %v4288
      %v4981 = vmul.f32 1.0, %v4980
      %v4982 = vrcp.pop %v4289
      %v4983 = vmul.f32 1.0, %v4982
      %v4984 = vrcp.pop %v4290
      %v4985 = vmul.f32 1.0, %v4984
      %v4986 = vrcp.pop %v4291
      %v4987 = vmul.f32 1.0, %v4986
      %v4988 = vrcp.pop %v4292
      %v4989 = vmul.f32 1.0, %v4988
      %v4990 = vrcp.pop %v4293
      %v4991 = vmul.f32 1.0, %v4990
      %v4992 = vrcp.pop %v4294
      %v4993 = vmul.f32 1.0, %v4992
      %v4994 = vrcp.pop %v4295
      %v4995 = vmul.f32 1.0, %v4994
      %v4996 = vrcp.pop %v4296
      %v4997 = vmul.f32 1.0, %v4996
      %v4998 = vrcp.pop %v4297
      %v4999 = vmul.f32 1.0, %v4998
      %v5000 = vrcp.pop %v4298
      %v5001 = vmul.f32 1.0, %v5000
      %v5002 = vrcp.pop %v4299
      %v5003 = vmul.f32 1.0, %v5002
      %v5004 = vrcp.pop %v4300
      %v5005 = vmul.f32 1.0, %v5004
      %v5006 = vrcp.pop %v4301
      %v5007 = vmul.f32 1.0, %v5006
      %v5008 = vrcp.pop %v4302
      %v5009 = vmul.f32 1.0, %v5008
      %v5010 = vrcp.pop %v4303
      %v5011 = vmul.f32 1.0, %v5010
      %v5012 = vrcp.pop %v4304
      %v5013 = vmul.f32 1.0, %v5012
      %v5014 = vrcp.pop %v4305
      %v5015 = vmul.f32 1.0, %v5014
      %v5016 = vrcp.pop %v4306
      %v5017 = vmul.f32 1.0, %v5016
      %v5018 = vrcp.pop %v4307
      %v5019 = vmul.f32 1.0, %v5018
      %v5020 = vrcp.pop %v4308
      %v5021 = vmul.f32 1.0, %v5020
      %v5022 = vrcp.pop %v4309
      %v5023 = vmul.f32 1.0, %v5022
      %v5024 = vrcp.pop %v4310
      %v5025 = vmul.f32 1.0, %v5024
      %v5026 = vrcp.pop %v4311
      %v5027 = vmul.f32 1.0, %v5026
      %v5028 = vrcp.pop %v4312
      %v5029 = vmul.f32 1.0, %v5028
      %v5030 = vrcp.pop %v4313
      %v5031 = vmul.f32 1.0, %v5030
      %v5032 = vrcp.pop %v4314
      %v5033 = vmul.f32 1.0, %v5032
      %v5034 = vrcp.pop %v4315
      %v5035 = vmul.f32 1.0, %v5034
      %v5036 = vrcp.pop %v4316
      %v5037 = vmul.f32 1.0, %v5036
      %v5038 = vrcp.pop %v4317
      %v5039 = vmul.f32 1.0, %v5038
      %v5040 = vrcp.pop %v4318
      %v5041 = vmul.f32 1.0, %v5040
      %v5042 = vrcp.pop %v4319
      %v5043 = vmul.f32 1.0, %v5042
      %v5044 = vrcp.pop %v4320
      %v5045 = vmul.f32 1.0, %v5044
      %v5046 = vrcp.pop %v4321
      %v5047 = vmul.f32 1.0, %v5046
      %v5048 = vrcp.pop %v4322
      %v5049 = vmul.f32 1.0, %v5048
      %v5050 = vrcp.pop %v4323
      %v5051 = vmul.f32 1.0, %v5050
      %v5052 = vrcp.pop %v4324
      %v5053 = vmul.f32 1.0, %v5052
      %v5054 = vrcp.pop %v4325
      %v5055 = vmul.f32 1.0, %v5054
      %v5056 = vrcp.pop %v4326
      %v5057 = vmul.f32 1.0, %v5056
      %v5058 = vrcp.pop %v4327
      %v5059 = vmul.f32 1.0, %v5058
      %v5060 = vrcp.pop %v4328
      %v5061 = vmul.f32 1.0, %v5060
      %v5062 = vrcp.pop %v4329
      %v5063 = vmul.f32 1.0, %v5062
      %v5064 = vrcp.pop %v4330
      %v5065 = vmul.f32 1.0, %v5064
      %v5066 = vrcp.pop %v4331
      %v5067 = vmul.f32 1.0, %v5066
      %v5068 = vrcp.pop %v4332
      %v5069 = vmul.f32 1.0, %v5068
      %v5070 = vrcp.pop %v4333
      %v5071 = vmul.f32 1.0, %v5070
      %v5072 = vrcp.pop %v4334
      %v5073 = vmul.f32 1.0, %v5072
      %v5074 = vrcp.pop %v4335
      %v5075 = vmul.f32 1.0, %v5074
      %v5076 = vrcp.pop %v4336
      %v5077 = vmul.f32 1.0, %v5076
      %v5078 = vrcp.pop %v4337
      %v5079 = vmul.f32 1.0, %v5078
      %v5080 = vrcp.pop %v4338
      %v5081 = vmul.f32 1.0, %v5080
      %v5082 = vrcp.pop %v4339
      %v5083 = vmul.f32 1.0, %v5082
      %v5084 = vrcp.pop %v4340
      %v5085 = vmul.f32 1.0, %v5084
      %v5086 = vrcp.pop %v4341
      %v5087 = vmul.f32 1.0, %v5086
      %v5088 = vrcp.pop %v4342
      %v5089 = vmul.f32 1.0, %v5088
      %v5090 = vrcp.pop %v4343
      %v5091 = vmul.f32 1.0, %v5090
      %v5092 = vrcp.pop %v4344
      %v5093 = vmul.f32 1.0, %v5092
      %v5094 = vrcp.pop %v4345
      %v5095 = vmul.f32 1.0, %v5094
      %v5096 = vrcp.pop %v4346
      %v5097 = vmul.f32 1.0, %v5096
      %v5098 = vrcp.pop %v4347
      %v5099 = vmul.f32 1.0, %v5098
      %v5100 = vrcp.pop %v4348
      %v5101 = vmul.f32 1.0, %v5100
      %v5102 = vrcp.pop %v4349
      %v5103 = vmul.f32 1.0, %v5102
      %v5104 = vrcp.pop %v4350
      %v5105 = vmul.f32 1.0, %v5104
      %v5106 = vrcp.pop %v4351
      %v5107 = vmul.f32 1.0, %v5106
      %v5108 = vrcp.pop %v4352
      %v5109 = vmul.f32 1.0, %v5108
      %v5110 = vrcp.pop %v4353
      %v5111 = vmul.f32 1.0, %v5110
      %v5112 = vrcp.pop %v4354
      %v5113 = vmul.f32 1.0, %v5112
      %v5114 = vrcp.pop %v4355
      %v5115 = vmul.f32 1.0, %v5114
      %v5116 = vrcp.pop %v4356
      %v5117 = vmul.f32 1.0, %v5116
      %v5118 = vrcp.pop %v4357
      %v5119 = vmul.f32 1.0, %v5118
      %v5120 = vrcp.pop %v4358
      %v5121 = vmul.f32 1.0, %v5120
      %v5122 = vrcp.pop %v4359
      %v5123 = vmul.f32 1.0, %v5122
      %v5124 = vrcp.pop %v4360
      %v5125 = vmul.f32 1.0, %v5124
      %v5126 = vrcp.pop %v4361
      %v5127 = vmul.f32 1.0, %v5126
      %v5128 = vrcp.pop %v4362
      %v5129 = vmul.f32 1.0, %v5128
      %v5130 = vrcp.pop %v4363
      %v5131 = vmul.f32 1.0, %v5130
      %v5132 = vrcp.pop %v4364
      %v5133 = vmul.f32 1.0, %v5132
      %v5134 = vrcp.pop %v4365
      %v5135 = vmul.f32 1.0, %v5134
      %v5136 = vrcp.pop %v4366
      %v5137 = vmul.f32 1.0, %v5136
      %v5138 = vrcp.pop %v4367
      %v5139 = vmul.f32 1.0, %v5138
      %v5140 = vrcp.pop %v4368
      %v5141 = vmul.f32 1.0, %v5140
      %v5142 = vrcp.pop %v4369
      %v5143 = vmul.f32 1.0, %v5142
      %v5144 = vrcp.pop %v4370
      %v5145 = vmul.f32 1.0, %v5144
      %v5146 = vrcp.pop %v4371
      %v5147 = vmul.f32 1.0, %v5146
      %v5148 = vrcp.pop %v4372
      %v5149 = vmul.f32 1.0, %v5148
      %v5150 = vrcp.pop %v4373
      %v5151 = vmul.f32 1.0, %v5150
      %v5152 = vrcp.pop %v4374
      %v5153 = vmul.f32 1.0, %v5152
      %v5154 = vrcp.pop %v4375
      %v5155 = vmul.f32 1.0, %v5154
      %v5156 = vrcp.pop %v4376
      %v5157 = vmul.f32 1.0, %v5156
      %v5158 = vrcp.pop %v4377
      %v5159 = vmul.f32 1.0, %v5158
      %v5160 = vrcp.pop %v4378
      %v5161 = vmul.f32 1.0, %v5160
      %v5162 = vrcp.pop %v4379
      %v5163 = vmul.f32 1.0, %v5162
      %v5164 = vrcp.pop %v4380
      %v5165 = vmul.f32 1.0, %v5164
      %v5166 = vrcp.pop %v4381
      %v5167 = vmul.f32 1.0, %v5166
      %v5168 = vrcp.pop %v4382
      %v5169 = vmul.f32 1.0, %v5168
      %v5170 = vrcp.pop %v4383
      %v5171 = vmul.f32 1.0, %v5170
      %v5172 = vrcp.pop %v4384
      %v5173 = vmul.f32 1.0, %v5172
      %v5174 = vrcp.pop %v4385
      %v5175 = vmul.f32 1.0, %v5174
      %v5176 = vrcp.pop %v4386
      %v5177 = vmul.f32 1.0, %v5176
      %v5178 = vrcp.pop %v4387
      %v5179 = vmul.f32 1.0, %v5178
      %v5180 = vrcp.pop %v4388
      %v5181 = vmul.f32 1.0, %v5180
      %v5182 = vrcp.pop %v4389
      %v5183 = vmul.f32 1.0, %v5182
      %v5184 = vrcp.pop %v4390
      %v5185 = vmul.f32 1.0, %v5184
      %v5186 = vrcp.pop %v4391
      %v5187 = vmul.f32 1.0, %v5186
      %v5188 = vrcp.pop %v4392
      %v5189 = vmul.f32 1.0, %v5188
      %v5190 = vrcp.pop %v4393
      %v5191 = vmul.f32 1.0, %v5190
      %v5192 = vrcp.pop %v4394
      %v5193 = vmul.f32 1.0, %v5192
      %v5194 = vrcp.pop %v4395
      %v5195 = vmul.f32 1.0, %v5194
      %v5196 = vrcp.pop %v4396
      %v5197 = vmul.f32 1.0, %v5196
      %v5198 = vrcp.pop %v4397
      %v5199 = vmul.f32 1.0, %v5198
      %v5200 = vrcp.pop %v4398
      %v5201 = vmul.f32 1.0, %v5200
      %v5202 = vrcp.pop %v4399
      %v5203 = vmul.f32 1.0, %v5202
      %v5204 = vrcp.pop %v4400
      %v5205 = vmul.f32 1.0, %v5204
      %v5206 = vrcp.pop %v4401
      %v5207 = vmul.f32 1.0, %v5206
      %v5208 = vrcp.pop %v4402
      %v5209 = vmul.f32 1.0, %v5208
      %v5210 = vrcp.pop %v4403
      %v5211 = vmul.f32 1.0, %v5210
      %v5212 = vrcp.pop %v4404
      %v5213 = vmul.f32 1.0, %v5212
      %v5214 = vrcp.pop %v4405
      %v5215 = vmul.f32 1.0, %v5214
      %v5216 = vrcp.pop %v4406
      %v5217 = vmul.f32 1.0, %v5216
      %v5218 = vrcp.pop %v4407
      %v5219 = vmul.f32 1.0, %v5218
      %v5220 = vrcp.pop %v4408
      %v5221 = vmul.f32 1.0, %v5220
      %v5222 = vrcp.pop %v4409
      %v5223 = vmul.f32 1.0, %v5222
      %v5224 = vrcp.pop %v4410
      %v5225 = vmul.f32 1.0, %v5224
      %v5226 = vrcp.pop %v4411
      %v5227 = vmul.f32 1.0, %v5226
      %v5228 = vrcp.pop %v4412
      %v5229 = vmul.f32 1.0, %v5228
      %v5230 = vrcp.pop %v4413
      %v5231 = vmul.f32 1.0, %v5230
      %v5232 = vrcp.pop %v4414
      %v5233 = vmul.f32 1.0, %v5232
      %v5234 = vrcp.pop %v4415
      %v5235 = vmul.f32 1.0, %v5234
      %v5236 = vrcp.pop %v4416
      %v5237 = vmul.f32 1.0, %v5236
      %v5238 = vrcp.pop %v4417
      %v5239 = vmul.f32 1.0, %v5238
      %v5240 = vrcp.pop %v4418
      %v5241 = vmul.f32 1.0, %v5240
      %v5242 = vrcp.pop %v4419
      %v5243 = vmul.f32 1.0, %v5242
      %v5244 = vrcp.pop %v4420
      %v5245 = vmul.f32 1.0, %v5244
      %v5246 = vrcp.pop %v4421
      %v5247 = vmul.f32 1.0, %v5246
      %v5248 = vrcp.pop %v4422
      %v5249 = vmul.f32 1.0, %v5248
      %v5250 = vrcp.pop %v4423
      %v5251 = vmul.f32 1.0, %v5250
      %v5252 = vrcp.pop %v4424
      %v5253 = vmul.f32 1.0, %v5252
      %v5254 = vrcp.pop %v4425
      %v5255 = vmul.f32 1.0, %v5254
      %v5256 = vrcp.pop %v4426
      %v5257 = vmul.f32 1.0, %v5256
      %v5258 = vrcp.pop %v4427
      %v5259 = vmul.f32 1.0, %v5258
      %v5260 = vrcp.pop %v4428
      %v5261 = vmul.f32 1.0, %v5260
      %v5262 = vrcp.pop %v4429
      %v5263 = vmul.f32 1.0, %v5262
      %v5264 = vrcp.pop %v4430
      %v5265 = vmul.f32 1.0, %v5264
      %v5266 = vrcp.pop %v4431
      %v5267 = vmul.f32 1.0, %v5266
      %v5268 = vrcp.pop %v4432
      %v5269 = vmul.f32 1.0, %v5268
      %v5270 = vrcp.pop %v4433
      %v5271 = vmul.f32 1.0, %v5270
      %v5272 = vrcp.pop %v4434
      %v5273 = vmul.f32 1.0, %v5272
      %v5274 = vrcp.pop %v4435
      %v5275 = vmul.f32 1.0, %v5274
      %v5276 = vrcp.pop %v4436
      %v5277 = vmul.f32 1.0, %v5276
      %v5278 = vrcp.pop %v4437
      %v5279 = vmul.f32 1.0, %v5278
      %v5280 = vrcp.pop %v4438
      %v5281 = vmul.f32 1.0, %v5280
      %v5282 = vrcp.pop %v4439
      %v5283 = vmul.f32 1.0, %v5282
      %v5284 = vrcp.pop %v4440
      %v5285 = vmul.f32 1.0, %v5284
      %v5286 = vrcp.pop %v4441
      %v5287 = vmul.f32 1.0, %v5286
      %v5288 = vrcp.pop %v4442
      %v5289 = vmul.f32 1.0, %v5288
      %v5290 = vrcp.pop %v4443
      %v5291 = vmul.f32 1.0, %v5290
      %v5292 = vrcp.pop %v4444
      %v5293 = vmul.f32 1.0, %v5292
      %v5294 = vrcp.pop %v4445
      %v5295 = vmul.f32 1.0, %v5294
      %v5296 = vrcp.pop %v4446
      %v5297 = vmul.f32 1.0, %v5296
      %v5298 = vrcp.pop %v4447
      %v5299 = vmul.f32 1.0, %v5298
      %v5300 = vrcp.pop %v4448
      %v5301 = vmul.f32 1.0, %v5300
      %v5302 = vrcp.pop %v4449
      %v5303 = vmul.f32 1.0, %v5302
      %v5304 = vrcp.pop %v4450
      %v5305 = vmul.f32 1.0, %v5304
      %v5306 = vrcp.pop %v4451
      %v5307 = vmul.f32 1.0, %v5306
      %v5308 = vrcp.pop %v4452
      %v5309 = vmul.f32 1.0, %v5308
      %v5310 = vrcp.pop %v4453
      %v5311 = vmul.f32 1.0, %v5310
      %v5312 = vrcp.pop %v4454
      %v5313 = vmul.f32 1.0, %v5312
      %v5314 = vrcp.pop %v4455
      %v5315 = vmul.f32 1.0, %v5314
      %v5316 = vrcp.pop %v4456
      %v5317 = vmul.f32 1.0, %v5316
      %v5318 = vrcp.pop %v4457
      %v5319 = vmul.f32 1.0, %v5318
      %v5320 = vrcp.pop %v4458
      %v5321 = vmul.f32 1.0, %v5320
      %v5322 = vrcp.pop %v4459
      %v5323 = vmul.f32 1.0, %v5322
      %v5324 = vrcp.pop %v4460
      %v5325 = vmul.f32 1.0, %v5324
      %v5326 = vrcp.pop %v4461
      %v5327 = vmul.f32 1.0, %v5326
      %v5328 = vrcp.pop %v4462
      %v5329 = vmul.f32 1.0, %v5328
      %v5330 = vrcp.pop %v4463
      %v5331 = vmul.f32 1.0, %v5330
      %v5332 = vrcp.pop %v4464
      %v5333 = vmul.f32 1.0, %v5332
      %v5334 = vrcp.pop %v4465
      %v5335 = vmul.f32 1.0, %v5334
      %v5336 = vrcp.pop %v4466
      %v5337 = vmul.f32 1.0, %v5336
      %v5338 = vrcp.pop %v4467
      %v5339 = vmul.f32 1.0, %v5338
      %v5340 = vrcp.pop %v4468
      %v5341 = vmul.f32 1.0, %v5340
      %v5342 = vrcp.pop %v4469
      %v5343 = vmul.f32 1.0, %v5342
      %v5344 = vrcp.pop %v4470
      %v5345 = vmul.f32 1.0, %v5344
      %v5346 = vrcp.pop %v4471
      %v5347 = vmul.f32 1.0, %v5346
      %v5348 = vrcp.pop %v4472
      %v5349 = vmul.f32 1.0, %v5348
      %v5350 = vrcp.pop %v4473
      %v5351 = vmul.f32 1.0, %v5350
      %v5352 = vrcp.pop %v4474
      %v5353 = vmul.f32 1.0, %v5352
      %v5354 = vrcp.pop %v4475
      %v5355 = vmul.f32 1.0, %v5354
      %v5356 = vrcp.pop %v4476
      %v5357 = vmul.f32 1.0, %v5356
      %v5358 = vrcp.pop %v4477
      %v5359 = vmul.f32 1.0, %v5358
      %v5360 = vrcp.pop %v4478
      %v5361 = vmul.f32 1.0, %v5360
      %v5362 = vrcp.pop %v4479
      %v5363 = vmul.f32 1.0, %v5362
      %v5364 = vrcp.pop %v4480
      %v5365 = vmul.f32 1.0, %v5364
      %v5366 = vrcp.pop %v4481
      %v5367 = vmul.f32 1.0, %v5366
      %v5368 = vrcp.pop %v4482
      %v5369 = vmul.f32 1.0, %v5368
      %v5370 = vrcp.pop %v4483
      %v5371 = vmul.f32 1.0, %v5370
      %v5372 = vrcp.pop %v4484
      %v5373 = vmul.f32 1.0, %v5372
      %v5374 = vrcp.pop %v4485
      %v5375 = vmul.f32 1.0, %v5374
      %v5376 = vrcp.pop %v4486
      %v5377 = vmul.f32 1.0, %v5376
      %v5378 = vrcp.pop %v4487
      %v5379 = vmul.f32 1.0, %v5378
      %v5380 = vrcp.pop %v4488
      %v5381 = vmul.f32 1.0, %v5380
      %v5382 = vrcp.pop %v4489
      %v5383 = vmul.f32 1.0, %v5382
      %v5384 = vrcp.pop %v4490
      %v5385 = vmul.f32 1.0, %v5384
      %v5386 = vrcp.pop %v4491
      %v5387 = vmul.f32 1.0, %v5386
      %v5388 = vmul.f32 %v1384, %v4493
      %v5389 = vmul.f32 %v1386, %v4495
      %v5390 = vmul.f32 %v1577, %v4497
      %v5391 = vmul.f32 %v1579, %v4499
      %v5392 = vmul.f32 %v1770, %v4501
      %v5393 = vmul.f32 %v1772, %v4503
      %v5394 = vmul.f32 %v1963, %v4505
      %v5395 = vmul.f32 %v1965, %v4507
      %v5396 = vmul.f32 %v2156, %v4509
      %v5397 = vmul.f32 %v2158, %v4511
      %v5398 = vmul.f32 %v2349, %v4513
      %v5399 = vmul.f32 %v2351, %v4515
      %v5400 = vmul.f32 %v2542, %v4517
      %v5401 = vmul.f32 %v2544, %v4519
      %v5402 = vmul.f32 %v1388, %v4521
      %v5403 = vmul.f32 %v1390, %v4523
      %v5404 = vmul.f32 %v1581, %v4525
      %v5405 = vmul.f32 %v1583, %v4527
      %v5406 = vmul.f32 %v1774, %v4529
      %v5407 = vmul.f32 %v1776, %v4531
      %v5408 = vmul.f32 %v1967, %v4533
      %v5409 = vmul.f32 %v1969, %v4535
      %v5410 = vmul.f32 %v2160, %v4537
      %v5411 = vmul.f32 %v2162, %v4539
      %v5412 = vmul.f32 %v2353, %v4541
      %v5413 = vmul.f32 %v2355, %v4543
      %v5414 = vmul.f32 %v2546, %v4545
      %v5415 = vmul.f32 %v2548, %v4547
      %v5416 = vmul.f32 %v1394, %v4549
      %v5417 = vmul.f32 %v1396, %v4551
      %v5418 = vmul.f32 %v1587, %v4553
      %v5419 = vmul.f32 %v1589, %v4555
      %v5420 = vmul.f32 %v1780, %v4557
      %v5421 = vmul.f32 %v1782, %v4559
      %v5422 = vmul.f32 %v1973, %v4561
      %v5423 = vmul.f32 %v1975, %v4563
      %v5424 = vmul.f32 %v2166, %v4565
      %v5425 = vmul.f32 %v2168, %v4567
      %v5426 = vmul.f32 %v2359, %v4569
      %v5427 = vmul.f32 %v2361, %v4571
      %v5428 = vmul.f32 %v2552, %v4573
      %v5429 = vmul.f32 %v2554, %v4575
      %v5430 = vmul.f32 %v1398, %v4577
      %v5431 = vmul.f32 %v1400, %v4579
      %v5432 = vmul.f32 %v1591, %v4581
      %v5433 = vmul.f32 %v1593, %v4583
      %v5434 = vmul.f32 %v1784, %v4585
      %v5435 = vmul.f32 %v1786, %v4587
      %v5436 = vmul.f32 %v1977, %v4589
      %v5437 = vmul.f32 %v1979, %v4591
      %v5438 = vmul.f32 %v2170, %v4593
      %v5439 = vmul.f32 %v2172, %v4595
      %v5440 = vmul.f32 %v2363, %v4597
      %v5441 = vmul.f32 %v2365, %v4599
      %v5442 = vmul.f32 %v2556, %v4601
      %v5443 = vmul.f32 %v2558, %v4603
      %v5444 = vmul.f32 %v1404, %v4605
      %v5445 = vmul.f32 %v1406, %v4607
      %v5446 = vmul.f32 %v1597, %v4609
      %v5447 = vmul.f32 %v1599, %v4611
      %v5448 = vmul.f32 %v1790, %v4613
      %v5449 = vmul.f32 %v1792, %v4615
      %v5450 = vmul.f32 %v1983, %v4617
      %v5451 = vmul.f32 %v1985, %v4619
      %v5452 = vmul.f32 %v2176, %v4621
      %v5453 = vmul.f32 %v2178, %v4623
      %v5454 = vmul.f32 %v2369, %v4625
      %v5455 = vmul.f32 %v2371, %v4627
      %v5456 = vmul.f32 %v2562, %v4629
      %v5457 = vmul.f32 %v2564, %v4631
      %v5458 = vmul.f32 %v1408, %v4633
      %v5459 = vmul.f32 %v1410, %v4635
      %v5460 = vmul.f32 %v1601, %v4637
      %v5461 = vmul.f32 %v1603, %v4639
      %v5462 = vmul.f32 %v1794, %v4641
      %v5463 = vmul.f32 %v1796, %v4643
      %v5464 = vmul.f32 %v1987, %v4645
      %v5465 = vmul.f32 %v1989, %v4647
      %v5466 = vmul.f32 %v2180, %v4649
      %v5467 = vmul.f32 %v2182, %v4651
      %v5468 = vmul.f32 %v2373, %v4653
      %v5469 = vmul.f32 %v2375, %v4655
      %v5470 = vmul.f32 %v2566, %v4657
      %v5471 = vmul.f32 %v2568, %v4659
      %v5472 = vmul.f32 %v1414, %v4661
      %v5473 = vmul.f32 %v1416, %v4663
      %v5474 = vmul.f32 %v1607, %v4665
      %v5475 = vmul.f32 %v1609, %v4667
      %v5476 = vmul.f32 %v1800, %v4669
      %v5477 = vmul.f32 %v1802, %v4671
      %v5478 = vmul.f32 %v1993, %v4673
      %v5479 = vmul.f32 %v1995, %v4675
      %v5480 = vmul.f32 %v2186, %v4677
      %v5481 = vmul.f32 %v2188, %v4679
      %v5482 = vmul.f32 %v2379, %v4681
      %v5483 = vmul.f32 %v2381, %v4683
      %v5484 = vmul.f32 %v2572, %v4685
      %v5485 = vmul.f32 %v2574, %v4687
      %v5486 = vmul.f32 %v1418, %v4689
      %v5487 = vmul.f32 %v1420, %v4691
      %v5488 = vmul.f32 %v1611, %v4693
      %v5489 = vmul.f32 %v1613, %v4695
      %v5490 = vmul.f32 %v1804, %v4697
      %v5491 = vmul.f32 %v1806, %v4699
      %v5492 = vmul.f32 %v1997, %v4701
      %v5493 = vmul.f32 %v1999, %v4703
      %v5494 = vmul.f32 %v2190, %v4705
      %v5495 = vmul.f32 %v2192, %v4707
      %v5496 = vmul.f32 %v2383, %v4709
      %v5497 = vmul.f32 %v2385, %v4711
      %v5498 = vmul.f32 %v2576, %v4713
      %v5499 = vmul.f32 %v2578, %v4715
      %v5500 = vmul.f32 %v1424, %v4717
      %v5501 = vmul.f32 %v1426, %v4719
      %v5502 = vmul.f32 %v1617, %v4721
      %v5503 = vmul.f32 %v1619, %v4723
      %v5504 = vmul.f32 %v1810, %v4725
      %v5505 = vmul.f32 %v1812, %v4727
      %v5506 = vmul.f32 %v2003, %v4729
      %v5507 = vmul.f32 %v2005, %v4731
      %v5508 = vmul.f32 %v2196, %v4733
      %v5509 = vmul.f32 %v2198, %v4735
      %v5510 = vmul.f32 %v2389, %v4737
      %v5511 = vmul.f32 %v2391, %v4739
      %v5512 = vmul.f32 %v2582, %v4741
      %v5513 = vmul.f32 %v2584, %v4743
      %v5514 = vmul.f32 %v1428, %v4745
      %v5515 = vmul.f32 %v1430, %v4747
      %v5516 = vmul.f32 %v1621, %v4749
      %v5517 = vmul.f32 %v1623, %v4751
      %v5518 = vmul.f32 %v1814, %v4753
      %v5519 = vmul.f32 %v1816, %v4755
      %v5520 = vmul.f32 %v2007, %v4757
      %v5521 = vmul.f32 %v2009, %v4759
      %v5522 = vmul.f32 %v2200, %v4761
      %v5523 = vmul.f32 %v2202, %v4763
      %v5524 = vmul.f32 %v2393, %v4765
      %v5525 = vmul.f32 %v2395, %v4767
      %v5526 = vmul.f32 %v2586, %v4769
      %v5527 = vmul.f32 %v2588, %v4771
      %v5528 = vmul.f32 %v1434, %v4773
      %v5529 = vmul.f32 %v1436, %v4775
      %v5530 = vmul.f32 %v1627, %v4777
      %v5531 = vmul.f32 %v1629, %v4779
      %v5532 = vmul.f32 %v1820, %v4781
      %v5533 = vmul.f32 %v1822, %v4783
      %v5534 = vmul.f32 %v2013, %v4785
      %v5535 = vmul.f32 %v2015, %v4787
      %v5536 = vmul.f32 %v2206, %v4789
      %v5537 = vmul.f32 %v2208, %v4791
      %v5538 = vmul.f32 %v2399, %v4793
      %v5539 = vmul.f32 %v2401, %v4795
      %v5540 = vmul.f32 %v2592, %v4797
      %v5541 = vmul.f32 %v2594, %v4799
      %v5542 = vmul.f32 %v1438, %v4801
      %v5543 = vmul.f32 %v1440, %v4803
      %v5544 = vmul.f32 %v1631, %v4805
      %v5545 = vmul.f32 %v1633, %v4807
      %v5546 = vmul.f32 %v1824, %v4809
      %v5547 = vmul.f32 %v1826, %v4811
      %v5548 = vmul.f32 %v2017, %v4813
      %v5549 = vmul.f32 %v2019, %v4815
      %v5550 = vmul.f32 %v2210, %v4817
      %v5551 = vmul.f32 %v2212, %v4819
      %v5552 = vmul.f32 %v2403, %v4821
      %v5553 = vmul.f32 %v2405, %v4823
      %v5554 = vmul.f32 %v2596, %v4825
      %v5555 = vmul.f32 %v2598, %v4827
      %v5556 = vmul.f32 %v1444, %v4829
      %v5557 = vmul.f32 %v1446, %v4831
      %v5558 = vmul.f32 %v1637, %v4833
      %v5559 = vmul.f32 %v1639, %v4835
      %v5560 = vmul.f32 %v1830, %v4837
      %v5561 = vmul.f32 %v1832, %v4839
      %v5562 = vmul.f32 %v2023, %v4841
      %v5563 = vmul.f32 %v2025, %v4843
      %v5564 = vmul.f32 %v2216, %v4845
      %v5565 = vmul.f32 %v2218, %v4847
      %v5566 = vmul.f32 %v2409, %v4849
      %v5567 = vmul.f32 %v2411, %v4851
      %v5568 = vmul.f32 %v2602, %v4853
      %v5569 = vmul.f32 %v2604, %v4855
      %v5570 = vmul.f32 %v1448, %v4857
      %v5571 = vmul.f32 %v1450, %v4859
      %v5572 = vmul.f32 %v1641, %v4861
      %v5573 = vmul.f32 %v1643, %v4863
      %v5574 = vmul.f32 %v1834, %v4865
      %v5575 = vmul.f32 %v1836, %v4867
      %v5576 = vmul.f32 %v2027, %v4869
      %v5577 = vmul.f32 %v2029, %v4871
      %v5578 = vmul.f32 %v2220, %v4873
      %v5579 = vmul.f32 %v2222, %v4875
      %v5580 = vmul.f32 %v2413, %v4877
      %v5581 = vmul.f32 %v2415, %v4879
      %v5582 = vmul.f32 %v2606, %v4881
      %v5583 = vmul.f32 %v2608, %v4883
      %v5584 = vmul.f32 %v1454, %v4885
      %v5585 = vmul.f32 %v1456, %v4887
      %v5586 = vmul.f32 %v1647, %v4889
      %v5587 = vmul.f32 %v1649, %v4891
      %v5588 = vmul.f32 %v1840, %v4893
      %v5589 = vmul.f32 %v1842, %v4895
      %v5590 = vmul.f32 %v2033, %v4897
      %v5591 = vmul.f32 %v2035, %v4899
      %v5592 = vmul.f32 %v2226, %v4901
      %v5593 = vmul.f32 %v2228, %v4903
      %v5594 = vmul.f32 %v2419, %v4905
      %v5595 = vmul.f32 %v2421, %v4907
      %v5596 = vmul.f32 %v2612, %v4909
      %v5597 = vmul.f32 %v2614, %v4911
      %v5598 = vmul.f32 %v1458, %v4913
      %v5599 = vmul.f32 %v1460, %v4915
      %v5600 = vmul.f32 %v1651, %v4917
      %v5601 = vmul.f32 %v1653, %v4919
      %v5602 = vmul.f32 %v1844, %v4921
      %v5603 = vmul.f32 %v1846, %v4923
      %v5604 = vmul.f32 %v2037, %v4925
      %v5605 = vmul.f32 %v2039, %v4927
      %v5606 = vmul.f32 %v2230, %v4929
      %v5607 = vmul.f32 %v2232, %v4931
      %v5608 = vmul.f32 %v2423, %v4933
      %v5609 = vmul.f32 %v2425, %v4935
      %v5610 = vmul.f32 %v2616, %v4937
      %v5611 = vmul.f32 %v2618, %v4939
      %v5612 = vmul.f32 %v1464, %v4941
      %v5613 = vmul.f32 %v1466, %v4943
      %v5614 = vmul.f32 %v1657, %v4945
      %v5615 = vmul.f32 %v1659, %v4947
      %v5616 = vmul.f32 %v1850, %v4949
      %v5617 = vmul.f32 %v1852, %v4951
      %v5618 = vmul.f32 %v2043, %v4953
      %v5619 = vmul.f32 %v2045, %v4955
      %v5620 = vmul.f32 %v2236, %v4957
      %v5621 = vmul.f32 %v2238, %v4959
      %v5622 = vmul.f32 %v2429, %v4961
      %v5623 = vmul.f32 %v2431, %v4963
      %v5624 = vmul.f32 %v2622, %v4965
      %v5625 = vmul.f32 %v2624, %v4967
      %v5626 = vmul.f32 %v1468, %v4969
      %v5627 = vmul.f32 %v1470, %v4971
      %v5628 = vmul.f32 %v1661, %v4973
      %v5629 = vmul.f32 %v1663, %v4975
      %v5630 = vmul.f32 %v1854, %v4977
      %v5631 = vmul.f32 %v1856, %v4979
      %v5632 = vmul.f32 %v2047, %v4981
      %v5633 = vmul.f32 %v2049, %v4983
      %v5634 = vmul.f32 %v2240, %v4985
      %v5635 = vmul.f32 %v2242, %v4987
      %v5636 = vmul.f32 %v2433, %v4989
      %v5637 = vmul.f32 %v2435, %v4991
      %v5638 = vmul.f32 %v2626, %v4993
      %v5639 = vmul.f32 %v2628, %v4995
      %v5640 = vmul.f32 %v1474, %v4997
      %v5641 = vmul.f32 %v1476, %v4999
      %v5642 = vmul.f32 %v1667, %v5001
      %v5643 = vmul.f32 %v1669, %v5003
      %v5644 = vmul.f32 %v1860, %v5005
      %v5645 = vmul.f32 %v1862, %v5007
      %v5646 = vmul.f32 %v2053, %v5009
      %v5647 = vmul.f32 %v2055, %v5011
      %v5648 = vmul.f32 %v2246, %v5013
      %v5649 = vmul.f32 %v2248, %v5015
      %v5650 = vmul.f32 %v2439, %v5017
      %v5651 = vmul.f32 %v2441, %v5019
      %v5652 = vmul.f32 %v2632, %v5021
      %v5653 = vmul.f32 %v2634, %v5023
      %v5654 = vmul.f32 %v1478, %v5025
      %v5655 = vmul.f32 %v1480, %v5027
      %v5656 = vmul.f32 %v1671, %v5029
      %v5657 = vmul.f32 %v1673, %v5031
      %v5658 = vmul.f32 %v1864, %v5033
      %v5659 = vmul.f32 %v1866, %v5035
      %v5660 = vmul.f32 %v2057, %v5037
      %v5661 = vmul.f32 %v2059, %v5039
      %v5662 = vmul.f32 %v2250, %v5041
      %v5663 = vmul.f32 %v2252, %v5043
      %v5664 = vmul.f32 %v2443, %v5045
      %v5665 = vmul.f32 %v2445, %v5047
      %v5666 = vmul.f32 %v2636, %v5049
      %v5667 = vmul.f32 %v2638, %v5051
      %v5668 = vmul.f32 %v1484, %v5053
      %v5669 = vmul.f32 %v1486, %v5055
      %v5670 = vmul.f32 %v1677, %v5057
      %v5671 = vmul.f32 %v1679, %v5059
      %v5672 = vmul.f32 %v1870, %v5061
      %v5673 = vmul.f32 %v1872, %v5063
      %v5674 = vmul.f32 %v2063, %v5065
      %v5675 = vmul.f32 %v2065, %v5067
      %v5676 = vmul.f32 %v2256, %v5069
      %v5677 = vmul.f32 %v2258, %v5071
      %v5678 = vmul.f32 %v2449, %v5073
      %v5679 = vmul.f32 %v2451, %v5075
      %v5680 = vmul.f32 %v2642, %v5077
      %v5681 = vmul.f32 %v2644, %v5079
      %v5682 = vmul.f32 %v1488, %v5081
      %v5683 = vmul.f32 %v1490, %v5083
      %v5684 = vmul.f32 %v1681, %v5085
      %v5685 = vmul.f32 %v1683, %v5087
      %v5686 = vmul.f32 %v1874, %v5089
      %v5687 = vmul.f32 %v1876, %v5091
      %v5688 = vmul.f32 %v2067, %v5093
      %v5689 = vmul.f32 %v2069, %v5095
      %v5690 = vmul.f32 %v2260, %v5097
      %v5691 = vmul.f32 %v2262, %v5099
      %v5692 = vmul.f32 %v2453, %v5101
      %v5693 = vmul.f32 %v2455, %v5103
      %v5694 = vmul.f32 %v2646, %v5105
      %v5695 = vmul.f32 %v2648, %v5107
      %v5696 = vmul.f32 %v1494, %v5109
      %v5697 = vmul.f32 %v1496, %v5111
      %v5698 = vmul.f32 %v1687, %v5113
      %v5699 = vmul.f32 %v1689, %v5115
      %v5700 = vmul.f32 %v1880, %v5117
      %v5701 = vmul.f32 %v1882, %v5119
      %v5702 = vmul.f32 %v2073, %v5121
      %v5703 = vmul.f32 %v2075, %v5123
      %v5704 = vmul.f32 %v2266, %v5125
      %v5705 = vmul.f32 %v2268, %v5127
      %v5706 = vmul.f32 %v2459, %v5129
      %v5707 = vmul.f32 %v2461, %v5131
      %v5708 = vmul.f32 %v2652, %v5133
      %v5709 = vmul.f32 %v2654, %v5135
      %v5710 = vmul.f32 %v1498, %v5137
      %v5711 = vmul.f32 %v1500, %v5139
      %v5712 = vmul.f32 %v1691, %v5141
      %v5713 = vmul.f32 %v1693, %v5143
      %v5714 = vmul.f32 %v1884, %v5145
      %v5715 = vmul.f32 %v1886, %v5147
      %v5716 = vmul.f32 %v2077, %v5149
      %v5717 = vmul.f32 %v2079, %v5151
      %v5718 = vmul.f32 %v2270, %v5153
      %v5719 = vmul.f32 %v2272, %v5155
      %v5720 = vmul.f32 %v2463, %v5157
      %v5721 = vmul.f32 %v2465, %v5159
      %v5722 = vmul.f32 %v2656, %v5161
      %v5723 = vmul.f32 %v2658, %v5163
      %v5724 = vmul.f32 %v1504, %v5165
      %v5725 = vmul.f32 %v1506, %v5167
      %v5726 = vmul.f32 %v1697, %v5169
      %v5727 = vmul.f32 %v1699, %v5171
      %v5728 = vmul.f32 %v1890, %v5173
      %v5729 = vmul.f32 %v1892, %v5175
      %v5730 = vmul.f32 %v2083, %v5177
      %v5731 = vmul.f32 %v2085, %v5179
      %v5732 = vmul.f32 %v2276, %v5181
      %v5733 = vmul.f32 %v2278, %v5183
      %v5734 = vmul.f32 %v2469, %v5185
      %v5735 = vmul.f32 %v2471, %v5187
      %v5736 = vmul.f32 %v2662, %v5189
      %v5737 = vmul.f32 %v2664, %v5191
      %v5738 = vmul.f32 %v1508, %v5193
      %v5739 = vmul.f32 %v1510, %v5195
      %v5740 = vmul.f32 %v1701, %v5197
      %v5741 = vmul.f32 %v1703, %v5199
      %v5742 = vmul.f32 %v1894, %v5201
      %v5743 = vmul.f32 %v1896, %v5203
      %v5744 = vmul.f32 %v2087, %v5205
      %v5745 = vmul.f32 %v2089, %v5207
      %v5746 = vmul.f32 %v2280, %v5209
      %v5747 = vmul.f32 %v2282, %v5211
      %v5748 = vmul.f32 %v2473, %v5213
      %v5749 = vmul.f32 %v2475, %v5215
      %v5750 = vmul.f32 %v2666, %v5217
      %v5751 = vmul.f32 %v2668, %v5219
      %v5752 = vmul.f32 %v1514, %v5221
      %v5753 = vmul.f32 %v1516, %v5223
      %v5754 = vmul.f32 %v1707, %v5225
      %v5755 = vmul.f32 %v1709, %v5227
      %v5756 = vmul.f32 %v1900, %v5229
      %v5757 = vmul.f32 %v1902, %v5231
      %v5758 = vmul.f32 %v2093, %v5233
      %v5759 = vmul.f32 %v2095, %v5235
      %v5760 = vmul.f32 %v2286, %v5237
      %v5761 = vmul.f32 %v2288, %v5239
      %v5762 = vmul.f32 %v2479, %v5241
      %v5763 = vmul.f32 %v2481, %v5243
      %v5764 = vmul.f32 %v2672, %v5245
      %v5765 = vmul.f32 %v2674, %v5247
      %v5766 = vmul.f32 %v1518, %v5249
      %v5767 = vmul.f32 %v1520, %v5251
      %v5768 = vmul.f32 %v1711, %v5253
      %v5769 = vmul.f32 %v1713, %v5255
      %v5770 = vmul.f32 %v1904, %v5257
      %v5771 = vmul.f32 %v1906, %v5259
      %v5772 = vmul.f32 %v2097, %v5261
      %v5773 = vmul.f32 %v2099, %v5263
      %v5774 = vmul.f32 %v2290, %v5265
      %v5775 = vmul.f32 %v2292, %v5267
      %v5776 = vmul.f32 %v2483, %v5269
      %v5777 = vmul.f32 %v2485, %v5271
      %v5778 = vmul.f32 %v2676, %v5273
      %v5779 = vmul.f32 %v2678, %v5275
      %v5780 = vmul.f32 %v1524, %v5277
      %v5781 = vmul.f32 %v1526, %v5279
      %v5782 = vmul.f32 %v1717, %v5281
      %v5783 = vmul.f32 %v1719, %v5283
      %v5784 = vmul.f32 %v1910, %v5285
      %v5785 = vmul.f32 %v1912, %v5287
      %v5786 = vmul.f32 %v2103, %v5289
      %v5787 = vmul.f32 %v2105, %v5291
      %v5788 = vmul.f32 %v2296, %v5293
      %v5789 = vmul.f32 %v2298, %v5295
      %v5790 = vmul.f32 %v2489, %v5297
      %v5791 = vmul.f32 %v2491, %v5299
      %v5792 = vmul.f32 %v2682, %v5301
      %v5793 = vmul.f32 %v2684, %v5303
      %v5794 = vmul.f32 %v1528, %v5305
      %v5795 = vmul.f32 %v1530, %v5307
      %v5796 = vmul.f32 %v1721, %v5309
      %v5797 = vmul.f32 %v1723, %v5311
      %v5798 = vmul.f32 %v1914, %v5313
      %v5799 = vmul.f32 %v1916, %v5315
      %v5800 = vmul.f32 %v2107, %v5317
      %v5801 = vmul.f32 %v2109, %v5319
      %v5802 = vmul.f32 %v2300, %v5321
      %v5803 = vmul.f32 %v2302, %v5323
      %v5804 = vmul.f32 %v2493, %v5325
      %v5805 = vmul.f32 %v2495, %v5327
      %v5806 = vmul.f32 %v2686, %v5329
      %v5807 = vmul.f32 %v2688, %v5331
      %v5808 = vmul.f32 %v1534, %v5333
      %v5809 = vmul.f32 %v1536, %v5335
      %v5810 = vmul.f32 %v1727, %v5337
      %v5811 = vmul.f32 %v1729, %v5339
      %v5812 = vmul.f32 %v1920, %v5341
      %v5813 = vmul.f32 %v1922, %v5343
      %v5814 = vmul.f32 %v2113, %v5345
      %v5815 = vmul.f32 %v2115, %v5347
      %v5816 = vmul.f32 %v2306, %v5349
      %v5817 = vmul.f32 %v2308, %v5351
      %v5818 = vmul.f32 %v2499, %v5353
      %v5819 = vmul.f32 %v2501, %v5355
      %v5820 = vmul.f32 %v2692, %v5357
      %v5821 = vmul.f32 %v2694, %v5359
      %v5822 = vmul.f32 %v1538, %v5361
      %v5823 = vmul.f32 %v1540, %v5363
      %v5824 = vmul.f32 %v1731, %v5365
      %v5825 = vmul.f32 %v1733, %v5367
      %v5826 = vmul.f32 %v1924, %v5369
      %v5827 = vmul.f32 %v1926, %v5371
      %v5828 = vmul.f32 %v2117, %v5373
      %v5829 = vmul.f32 %v2119, %v5375
      %v5830 = vmul.f32 %v2310, %v5377
      %v5831 = vmul.f32 %v2312, %v5379
      %v5832 = vmul.f32 %v2503, %v5381
      %v5833 = vmul.f32 %v2505, %v5383
      %v5834 = vmul.f32 %v2696, %v5385
      %v5835 = vmul.f32 %v2698, %v5387
      %v5836 = vadd.f32 %v5388, %v5402
      %v5837 = vadd.f32 %v5836, %v5416
      %v5838 = vadd.f32 %v5837, %v5430
      %v5839 = vadd.f32 %v5838, %v5444
      %v5840 = vadd.f32 %v5839, %v5458
      %v5841 = vadd.f32 %v5840, %v5472
      %v5842 = vadd.f32 %v5841, %v5486
      %v5843 = vadd.f32 %v5842, %v5500
      %v5844 = vadd.f32 %v5843, %v5514
      %v5845 = vadd.f32 %v5844, %v5528
      %v5846 = vadd.f32 %v5845, %v5542
      %v5847 = vadd.f32 %v5846, %v5556
      %v5848 = vadd.f32 %v5847, %v5570
      %v5849 = vadd.f32 %v5848, %v5584
      %v5850 = vadd.f32 %v5849, %v5598
      %v5851 = vadd.f32 %v5850, %v5612
      %v5852 = vadd.f32 %v5851, %v5626
      %v5853 = vadd.f32 %v5852, %v5640
      %v5854 = vadd.f32 %v5853, %v5654
      %v5855 = vadd.f32 %v5854, %v5668
      %v5856 = vadd.f32 %v5855, %v5682
      %v5857 = vadd.f32 %v5856, %v5696
      %v5858 = vadd.f32 %v5857, %v5710
      %v5859 = vadd.f32 %v5858, %v5724
      %v5860 = vadd.f32 %v5859, %v5738
      %v5861 = vadd.f32 %v5860, %v5752
      %v5862 = vadd.f32 %v5861, %v5766
      %v5863 = vadd.f32 %v5862, %v5780
      %v5864 = vadd.f32 %v5863, %v5794
      %v5865 = vadd.f32 %v5864, %v5808
      %v5866 = vadd.f32 %v5865, %v5822
      %v5867 = vrot.slane %v5866, 4
      %v5868 = vadd.f32 %v5866, %v5867
      %v5869 = vrot.slane %v5868, 2
      %v5870 = vadd.f32 %v5868, %v5869
      %v5871 = vrot.slane %v5870, 1
      %v5872 = vadd.f32 %v5870, %v5871
      %v5873 = vadd.f32 %v5389, %v5403
      %v5874 = vadd.f32 %v5873, %v5417
      %v5875 = vadd.f32 %v5874, %v5431
      %v5876 = vadd.f32 %v5875, %v5445
      %v5877 = vadd.f32 %v5876, %v5459
      %v5878 = vadd.f32 %v5877, %v5473
      %v5879 = vadd.f32 %v5878, %v5487
      %v5880 = vadd.f32 %v5879, %v5501
      %v5881 = vadd.f32 %v5880, %v5515
      %v5882 = vadd.f32 %v5881, %v5529
      %v5883 = vadd.f32 %v5882, %v5543
      %v5884 = vadd.f32 %v5883, %v5557
      %v5885 = vadd.f32 %v5884, %v5571
      %v5886 = vadd.f32 %v5885, %v5585
      %v5887 = vadd.f32 %v5886, %v5599
      %v5888 = vadd.f32 %v5887, %v5613
      %v5889 = vadd.f32 %v5888, %v5627
      %v5890 = vadd.f32 %v5889, %v5641
      %v5891 = vadd.f32 %v5890, %v5655
      %v5892 = vadd.f32 %v5891, %v5669
      %v5893 = vadd.f32 %v5892, %v5683
      %v5894 = vadd.f32 %v5893, %v5697
      %v5895 = vadd.f32 %v5894, %v5711
      %v5896 = vadd.f32 %v5895, %v5725
      %v5897 = vadd.f32 %v5896, %v5739
      %v5898 = vadd.f32 %v5897, %v5753
      %v5899 = vadd.f32 %v5898, %v5767
      %v5900 = vadd.f32 %v5899, %v5781
      %v5901 = vadd.f32 %v5900, %v5795
      %v5902 = vadd.f32 %v5901, %v5809
      %v5903 = vadd.f32 %v5902, %v5823
      %v5904 = vrot.slane %v5903, 4
      %v5905 = vadd.f32 %v5903, %v5904
      %v5906 = vrot.slane %v5905, 2
      %v5907 = vadd.f32 %v5905, %v5906
      %v5908 = vrot.slane %v5907, 1
      %v5909 = vadd.f32 %v5907, %v5908
      %v5910 = vadd.f32 %v5390, %v5404
      %v5911 = vadd.f32 %v5910, %v5418
      %v5912 = vadd.f32 %v5911, %v5432
      %v5913 = vadd.f32 %v5912, %v5446
      %v5914 = vadd.f32 %v5913, %v5460
      %v5915 = vadd.f32 %v5914, %v5474
      %v5916 = vadd.f32 %v5915, %v5488
      %v5917 = vadd.f32 %v5916, %v5502
      %v5918 = vadd.f32 %v5917, %v5516
      %v5919 = vadd.f32 %v5918, %v5530
      %v5920 = vadd.f32 %v5919, %v5544
      %v5921 = vadd.f32 %v5920, %v5558
      %v5922 = vadd.f32 %v5921, %v5572
      %v5923 = vadd.f32 %v5922, %v5586
      %v5924 = vadd.f32 %v5923, %v5600
      %v5925 = vadd.f32 %v5924, %v5614
      %v5926 = vadd.f32 %v5925, %v5628
      %v5927 = vadd.f32 %v5926, %v5642
      %v5928 = vadd.f32 %v5927, %v5656
      %v5929 = vadd.f32 %v5928, %v5670
      %v5930 = vadd.f32 %v5929, %v5684
      %v5931 = vadd.f32 %v5930, %v5698
      %v5932 = vadd.f32 %v5931, %v5712
      %v5933 = vadd.f32 %v5932, %v5726
      %v5934 = vadd.f32 %v5933, %v5740
      %v5935 = vadd.f32 %v5934, %v5754
      %v5936 = vadd.f32 %v5935, %v5768
      %v5937 = vadd.f32 %v5936, %v5782
      %v5938 = vadd.f32 %v5937, %v5796
      %v5939 = vadd.f32 %v5938, %v5810
      %v5940 = vadd.f32 %v5939, %v5824
      %v5941 = vrot.slane %v5940, 4
      %v5942 = vadd.f32 %v5940, %v5941
      %v5943 = vrot.slane %v5942, 2
      %v5944 = vadd.f32 %v5942, %v5943
      %v5945 = vrot.slane %v5944, 1
      %v5946 = vadd.f32 %v5944, %v5945
      %v5947 = vadd.f32 %v5391, %v5405
      %v5948 = vadd.f32 %v5947, %v5419
      %v5949 = vadd.f32 %v5948, %v5433
      %v5950 = vadd.f32 %v5949, %v5447
      %v5951 = vadd.f32 %v5950, %v5461
      %v5952 = vadd.f32 %v5951, %v5475
      %v5953 = vadd.f32 %v5952, %v5489
      %v5954 = vadd.f32 %v5953, %v5503
      %v5955 = vadd.f32 %v5954, %v5517
      %v5956 = vadd.f32 %v5955, %v5531
      %v5957 = vadd.f32 %v5956, %v5545
      %v5958 = vadd.f32 %v5957, %v5559
      %v5959 = vadd.f32 %v5958, %v5573
      %v5960 = vadd.f32 %v5959, %v5587
      %v5961 = vadd.f32 %v5960, %v5601
      %v5962 = vadd.f32 %v5961, %v5615
      %v5963 = vadd.f32 %v5962, %v5629
      %v5964 = vadd.f32 %v5963, %v5643
      %v5965 = vadd.f32 %v5964, %v5657
      %v5966 = vadd.f32 %v5965, %v5671
      %v5967 = vadd.f32 %v5966, %v5685
      %v5968 = vadd.f32 %v5967, %v5699
      %v5969 = vadd.f32 %v5968, %v5713
      %v5970 = vadd.f32 %v5969, %v5727
      %v5971 = vadd.f32 %v5970, %v5741
      %v5972 = vadd.f32 %v5971, %v5755
      %v5973 = vadd.f32 %v5972, %v5769
      %v5974 = vadd.f32 %v5973, %v5783
      %v5975 = vadd.f32 %v5974, %v5797
      %v5976 = vadd.f32 %v5975, %v5811
      %v5977 = vadd.f32 %v5976, %v5825
      %v5978 = vrot.slane %v5977, 4
      %v5979 = vadd.f32 %v5977, %v5978
      %v5980 = vrot.slane %v5979, 2
      %v5981 = vadd.f32 %v5979, %v5980
      %v5982 = vrot.slane %v5981, 1
      %v5983 = vadd.f32 %v5981, %v5982
      %v5984 = vadd.f32 %v5392, %v5406
      %v5985 = vadd.f32 %v5984, %v5420
      %v5986 = vadd.f32 %v5985, %v5434
      %v5987 = vadd.f32 %v5986, %v5448
      %v5988 = vadd.f32 %v5987, %v5462
      %v5989 = vadd.f32 %v5988, %v5476
      %v5990 = vadd.f32 %v5989, %v5490
      %v5991 = vadd.f32 %v5990, %v5504
      %v5992 = vadd.f32 %v5991, %v5518
      %v5993 = vadd.f32 %v5992, %v5532
      %v5994 = vadd.f32 %v5993, %v5546
      %v5995 = vadd.f32 %v5994, %v5560
      %v5996 = vadd.f32 %v5995, %v5574
      %v5997 = vadd.f32 %v5996, %v5588
      %v5998 = vadd.f32 %v5997, %v5602
      %v5999 = vadd.f32 %v5998, %v5616
      %v6000 = vadd.f32 %v5999, %v5630
      %v6001 = vadd.f32 %v6000, %v5644
      %v6002 = vadd.f32 %v6001, %v5658
      %v6003 = vadd.f32 %v6002, %v5672
      %v6004 = vadd.f32 %v6003, %v5686
      %v6005 = vadd.f32 %v6004, %v5700
      %v6006 = vadd.f32 %v6005, %v5714
      %v6007 = vadd.f32 %v6006, %v5728
      %v6008 = vadd.f32 %v6007, %v5742
      %v6009 = vadd.f32 %v6008, %v5756
      %v6010 = vadd.f32 %v6009, %v5770
      %v6011 = vadd.f32 %v6010, %v5784
      %v6012 = vadd.f32 %v6011, %v5798
      %v6013 = vadd.f32 %v6012, %v5812
      %v6014 = vadd.f32 %v6013, %v5826
      %v6015 = vrot.slane %v6014, 4
      %v6016 = vadd.f32 %v6014, %v6015
      %v6017 = vrot.slane %v6016, 2
      %v6018 = vadd.f32 %v6016, %v6017
      %v6019 = vrot.slane %v6018, 1
      %v6020 = vadd.f32 %v6018, %v6019
      %v6021 = vadd.f32 %v5393, %v5407
      %v6022 = vadd.f32 %v6021, %v5421
      %v6023 = vadd.f32 %v6022, %v5435
      %v6024 = vadd.f32 %v6023, %v5449
      %v6025 = vadd.f32 %v6024, %v5463
      %v6026 = vadd.f32 %v6025, %v5477
      %v6027 = vadd.f32 %v6026, %v5491
      %v6028 = vadd.f32 %v6027, %v5505
      %v6029 = vadd.f32 %v6028, %v5519
      %v6030 = vadd.f32 %v6029, %v5533
      %v6031 = vadd.f32 %v6030, %v5547
      %v6032 = vadd.f32 %v6031, %v5561
      %v6033 = vadd.f32 %v6032, %v5575
      %v6034 = vadd.f32 %v6033, %v5589
      %v6035 = vadd.f32 %v6034, %v5603
      %v6036 = vadd.f32 %v6035, %v5617
      %v6037 = vadd.f32 %v6036, %v5631
      %v6038 = vadd.f32 %v6037, %v5645
      %v6039 = vadd.f32 %v6038, %v5659
      %v6040 = vadd.f32 %v6039, %v5673
      %v6041 = vadd.f32 %v6040, %v5687
      %v6042 = vadd.f32 %v6041, %v5701
      %v6043 = vadd.f32 %v6042, %v5715
      %v6044 = vadd.f32 %v6043, %v5729
      %v6045 = vadd.f32 %v6044, %v5743
      %v6046 = vadd.f32 %v6045, %v5757
      %v6047 = vadd.f32 %v6046, %v5771
      %v6048 = vadd.f32 %v6047, %v5785
      %v6049 = vadd.f32 %v6048, %v5799
      %v6050 = vadd.f32 %v6049, %v5813
      %v6051 = vadd.f32 %v6050, %v5827
      %v6052 = vrot.slane %v6051, 4
      %v6053 = vadd.f32 %v6051, %v6052
      %v6054 = vrot.slane %v6053, 2
      %v6055 = vadd.f32 %v6053, %v6054
      %v6056 = vrot.slane %v6055, 1
      %v6057 = vadd.f32 %v6055, %v6056
      %v6058 = vadd.f32 %v5394, %v5408
      %v6059 = vadd.f32 %v6058, %v5422
      %v6060 = vadd.f32 %v6059, %v5436
      %v6061 = vadd.f32 %v6060, %v5450
      %v6062 = vadd.f32 %v6061, %v5464
      %v6063 = vadd.f32 %v6062, %v5478
      %v6064 = vadd.f32 %v6063, %v5492
      %v6065 = vadd.f32 %v6064, %v5506
      %v6066 = vadd.f32 %v6065, %v5520
      %v6067 = vadd.f32 %v6066, %v5534
      %v6068 = vadd.f32 %v6067, %v5548
      %v6069 = vadd.f32 %v6068, %v5562
      %v6070 = vadd.f32 %v6069, %v5576
      %v6071 = vadd.f32 %v6070, %v5590
      %v6072 = vadd.f32 %v6071, %v5604
      %v6073 = vadd.f32 %v6072, %v5618
      %v6074 = vadd.f32 %v6073, %v5632
      %v6075 = vadd.f32 %v6074, %v5646
      %v6076 = vadd.f32 %v6075, %v5660
      %v6077 = vadd.f32 %v6076, %v5674
      %v6078 = vadd.f32 %v6077, %v5688
      %v6079 = vadd.f32 %v6078, %v5702
      %v6080 = vadd.f32 %v6079, %v5716
      %v6081 = vadd.f32 %v6080, %v5730
      %v6082 = vadd.f32 %v6081, %v5744
      %v6083 = vadd.f32 %v6082, %v5758
      %v6084 = vadd.f32 %v6083, %v5772
      %v6085 = vadd.f32 %v6084, %v5786
      %v6086 = vadd.f32 %v6085, %v5800
      %v6087 = vadd.f32 %v6086, %v5814
      %v6088 = vadd.f32 %v6087, %v5828
      %v6089 = vrot.slane %v6088, 4
      %v6090 = vadd.f32 %v6088, %v6089
      %v6091 = vrot.slane %v6090, 2
      %v6092 = vadd.f32 %v6090, %v6091
      %v6093 = vrot.slane %v6092, 1
      %v6094 = vadd.f32 %v6092, %v6093
      %v6095 = vadd.f32 %v5395, %v5409
      %v6096 = vadd.f32 %v6095, %v5423
      %v6097 = vadd.f32 %v6096, %v5437
      %v6098 = vadd.f32 %v6097, %v5451
      %v6099 = vadd.f32 %v6098, %v5465
      %v6100 = vadd.f32 %v6099, %v5479
      %v6101 = vadd.f32 %v6100, %v5493
      %v6102 = vadd.f32 %v6101, %v5507
      %v6103 = vadd.f32 %v6102, %v5521
      %v6104 = vadd.f32 %v6103, %v5535
      %v6105 = vadd.f32 %v6104, %v5549
      %v6106 = vadd.f32 %v6105, %v5563
      %v6107 = vadd.f32 %v6106, %v5577
      %v6108 = vadd.f32 %v6107, %v5591
      %v6109 = vadd.f32 %v6108, %v5605
      %v6110 = vadd.f32 %v6109, %v5619
      %v6111 = vadd.f32 %v6110, %v5633
      %v6112 = vadd.f32 %v6111, %v5647
      %v6113 = vadd.f32 %v6112, %v5661
      %v6114 = vadd.f32 %v6113, %v5675
      %v6115 = vadd.f32 %v6114, %v5689
      %v6116 = vadd.f32 %v6115, %v5703
      %v6117 = vadd.f32 %v6116, %v5717
      %v6118 = vadd.f32 %v6117, %v5731
      %v6119 = vadd.f32 %v6118, %v5745
      %v6120 = vadd.f32 %v6119, %v5759
      %v6121 = vadd.f32 %v6120, %v5773
      %v6122 = vadd.f32 %v6121, %v5787
      %v6123 = vadd.f32 %v6122, %v5801
      %v6124 = vadd.f32 %v6123, %v5815
      %v6125 = vadd.f32 %v6124, %v5829
      %v6126 = vrot.slane %v6125, 4
      %v6127 = vadd.f32 %v6125, %v6126
      %v6128 = vrot.slane %v6127, 2
      %v6129 = vadd.f32 %v6127, %v6128
      %v6130 = vrot.slane %v6129, 1
      %v6131 = vadd.f32 %v6129, %v6130
      %v6132 = vadd.f32 %v5396, %v5410
      %v6133 = vadd.f32 %v6132, %v5424
      %v6134 = vadd.f32 %v6133, %v5438
      %v6135 = vadd.f32 %v6134, %v5452
      %v6136 = vadd.f32 %v6135, %v5466
      %v6137 = vadd.f32 %v6136, %v5480
      %v6138 = vadd.f32 %v6137, %v5494
      %v6139 = vadd.f32 %v6138, %v5508
      %v6140 = vadd.f32 %v6139, %v5522
      %v6141 = vadd.f32 %v6140, %v5536
      %v6142 = vadd.f32 %v6141, %v5550
      %v6143 = vadd.f32 %v6142, %v5564
      %v6144 = vadd.f32 %v6143, %v5578
      %v6145 = vadd.f32 %v6144, %v5592
      %v6146 = vadd.f32 %v6145, %v5606
      %v6147 = vadd.f32 %v6146, %v5620
      %v6148 = vadd.f32 %v6147, %v5634
      %v6149 = vadd.f32 %v6148, %v5648
      %v6150 = vadd.f32 %v6149, %v5662
      %v6151 = vadd.f32 %v6150, %v5676
      %v6152 = vadd.f32 %v6151, %v5690
      %v6153 = vadd.f32 %v6152, %v5704
      %v6154 = vadd.f32 %v6153, %v5718
      %v6155 = vadd.f32 %v6154, %v5732
      %v6156 = vadd.f32 %v6155, %v5746
      %v6157 = vadd.f32 %v6156, %v5760
      %v6158 = vadd.f32 %v6157, %v5774
      %v6159 = vadd.f32 %v6158, %v5788
      %v6160 = vadd.f32 %v6159, %v5802
      %v6161 = vadd.f32 %v6160, %v5816
      %v6162 = vadd.f32 %v6161, %v5830
      %v6163 = vrot.slane %v6162, 4
      %v6164 = vadd.f32 %v6162, %v6163
      %v6165 = vrot.slane %v6164, 2
      %v6166 = vadd.f32 %v6164, %v6165
      %v6167 = vrot.slane %v6166, 1
      %v6168 = vadd.f32 %v6166, %v6167
      %v6169 = vadd.f32 %v5397, %v5411
      %v6170 = vadd.f32 %v6169, %v5425
      %v6171 = vadd.f32 %v6170, %v5439
      %v6172 = vadd.f32 %v6171, %v5453
      %v6173 = vadd.f32 %v6172, %v5467
      %v6174 = vadd.f32 %v6173, %v5481
      %v6175 = vadd.f32 %v6174, %v5495
      %v6176 = vadd.f32 %v6175, %v5509
      %v6177 = vadd.f32 %v6176, %v5523
      %v6178 = vadd.f32 %v6177, %v5537
      %v6179 = vadd.f32 %v6178, %v5551
      %v6180 = vadd.f32 %v6179, %v5565
      %v6181 = vadd.f32 %v6180, %v5579
      %v6182 = vadd.f32 %v6181, %v5593
      %v6183 = vadd.f32 %v6182, %v5607
      %v6184 = vadd.f32 %v6183, %v5621
      %v6185 = vadd.f32 %v6184, %v5635
      %v6186 = vadd.f32 %v6185, %v5649
      %v6187 = vadd.f32 %v6186, %v5663
      %v6188 = vadd.f32 %v6187, %v5677
      %v6189 = vadd.f32 %v6188, %v5691
      %v6190 = vadd.f32 %v6189, %v5705
      %v6191 = vadd.f32 %v6190, %v5719
      %v6192 = vadd.f32 %v6191, %v5733
      %v6193 = vadd.f32 %v6192, %v5747
      %v6194 = vadd.f32 %v6193, %v5761
      %v6195 = vadd.f32 %v6194, %v5775
      %v6196 = vadd.f32 %v6195, %v5789
      %v6197 = vadd.f32 %v6196, %v5803
      %v6198 = vadd.f32 %v6197, %v5817
      %v6199 = vadd.f32 %v6198, %v5831
      %v6200 = vrot.slane %v6199, 4
      %v6201 = vadd.f32 %v6199, %v6200
      %v6202 = vrot.slane %v6201, 2
      %v6203 = vadd.f32 %v6201, %v6202
      %v6204 = vrot.slane %v6203, 1
      %v6205 = vadd.f32 %v6203, %v6204
      %v6206 = vadd.f32 %v5398, %v5412
      %v6207 = vadd.f32 %v6206, %v5426
      %v6208 = vadd.f32 %v6207, %v5440
      %v6209 = vadd.f32 %v6208, %v5454
      %v6210 = vadd.f32 %v6209, %v5468
      %v6211 = vadd.f32 %v6210, %v5482
      %v6212 = vadd.f32 %v6211, %v5496
      %v6213 = vadd.f32 %v6212, %v5510
      %v6214 = vadd.f32 %v6213, %v5524
      %v6215 = vadd.f32 %v6214, %v5538
      %v6216 = vadd.f32 %v6215, %v5552
      %v6217 = vadd.f32 %v6216, %v5566
      %v6218 = vadd.f32 %v6217, %v5580
      %v6219 = vadd.f32 %v6218, %v5594
      %v6220 = vadd.f32 %v6219, %v5608
      %v6221 = vadd.f32 %v6220, %v5622
      %v6222 = vadd.f32 %v6221, %v5636
      %v6223 = vadd.f32 %v6222, %v5650
      %v6224 = vadd.f32 %v6223, %v5664
      %v6225 = vadd.f32 %v6224, %v5678
      %v6226 = vadd.f32 %v6225, %v5692
      %v6227 = vadd.f32 %v6226, %v5706
      %v6228 = vadd.f32 %v6227, %v5720
      %v6229 = vadd.f32 %v6228, %v5734
      %v6230 = vadd.f32 %v6229, %v5748
      %v6231 = vadd.f32 %v6230, %v5762
      %v6232 = vadd.f32 %v6231, %v5776
      %v6233 = vadd.f32 %v6232, %v5790
      %v6234 = vadd.f32 %v6233, %v5804
      %v6235 = vadd.f32 %v6234, %v5818
      %v6236 = vadd.f32 %v6235, %v5832
      %v6237 = vrot.slane %v6236, 4
      %v6238 = vadd.f32 %v6236, %v6237
      %v6239 = vrot.slane %v6238, 2
      %v6240 = vadd.f32 %v6238, %v6239
      %v6241 = vrot.slane %v6240, 1
      %v6242 = vadd.f32 %v6240, %v6241
      %v6243 = vadd.f32 %v5399, %v5413
      %v6244 = vadd.f32 %v6243, %v5427
      %v6245 = vadd.f32 %v6244, %v5441
      %v6246 = vadd.f32 %v6245, %v5455
      %v6247 = vadd.f32 %v6246, %v5469
      %v6248 = vadd.f32 %v6247, %v5483
      %v6249 = vadd.f32 %v6248, %v5497
      %v6250 = vadd.f32 %v6249, %v5511
      %v6251 = vadd.f32 %v6250, %v5525
      %v6252 = vadd.f32 %v6251, %v5539
      %v6253 = vadd.f32 %v6252, %v5553
      %v6254 = vadd.f32 %v6253, %v5567
      %v6255 = vadd.f32 %v6254, %v5581
      %v6256 = vadd.f32 %v6255, %v5595
      %v6257 = vadd.f32 %v6256, %v5609
      %v6258 = vadd.f32 %v6257, %v5623
      %v6259 = vadd.f32 %v6258, %v5637
      %v6260 = vadd.f32 %v6259, %v5651
      %v6261 = vadd.f32 %v6260, %v5665
      %v6262 = vadd.f32 %v6261, %v5679
      %v6263 = vadd.f32 %v6262, %v5693
      %v6264 = vadd.f32 %v6263, %v5707
      %v6265 = vadd.f32 %v6264, %v5721
      %v6266 = vadd.f32 %v6265, %v5735
      %v6267 = vadd.f32 %v6266, %v5749
      %v6268 = vadd.f32 %v6267, %v5763
      %v6269 = vadd.f32 %v6268, %v5777
      %v6270 = vadd.f32 %v6269, %v5791
      %v6271 = vadd.f32 %v6270, %v5805
      %v6272 = vadd.f32 %v6271, %v5819
      %v6273 = vadd.f32 %v6272, %v5833
      %v6274 = vrot.slane %v6273, 4
      %v6275 = vadd.f32 %v6273, %v6274
      %v6276 = vrot.slane %v6275, 2
      %v6277 = vadd.f32 %v6275, %v6276
      %v6278 = vrot.slane %v6277, 1
      %v6279 = vadd.f32 %v6277, %v6278
      %v6280 = vadd.f32 %v5400, %v5414
      %v6281 = vadd.f32 %v6280, %v5428
      %v6282 = vadd.f32 %v6281, %v5442
      %v6283 = vadd.f32 %v6282, %v5456
      %v6284 = vadd.f32 %v6283, %v5470
      %v6285 = vadd.f32 %v6284, %v5484
      %v6286 = vadd.f32 %v6285, %v5498
      %v6287 = vadd.f32 %v6286, %v5512
      %v6288 = vadd.f32 %v6287, %v5526
      %v6289 = vadd.f32 %v6288, %v5540
      %v6290 = vadd.f32 %v6289, %v5554
      %v6291 = vadd.f32 %v6290, %v5568
      %v6292 = vadd.f32 %v6291, %v5582
      %v6293 = vadd.f32 %v6292, %v5596
      %v6294 = vadd.f32 %v6293, %v5610
      %v6295 = vadd.f32 %v6294, %v5624
      %v6296 = vadd.f32 %v6295, %v5638
      %v6297 = vadd.f32 %v6296, %v5652
      %v6298 = vadd.f32 %v6297, %v5666
      %v6299 = vadd.f32 %v6298, %v5680
      %v6300 = vadd.f32 %v6299, %v5694
      %v6301 = vadd.f32 %v6300, %v5708
      %v6302 = vadd.f32 %v6301, %v5722
      %v6303 = vadd.f32 %v6302, %v5736
      %v6304 = vadd.f32 %v6303, %v5750
      %v6305 = vadd.f32 %v6304, %v5764
      %v6306 = vadd.f32 %v6305, %v5778
      %v6307 = vadd.f32 %v6306, %v5792
      %v6308 = vadd.f32 %v6307, %v5806
      %v6309 = vadd.f32 %v6308, %v5820
      %v6310 = vadd.f32 %v6309, %v5834
      %v6311 = vrot.slane %v6310, 4
      %v6312 = vadd.f32 %v6310, %v6311
      %v6313 = vrot.slane %v6312, 2
      %v6314 = vadd.f32 %v6312, %v6313
      %v6315 = vrot.slane %v6314, 1
      %v6316 = vadd.f32 %v6314, %v6315
      %v6317 = vadd.f32 %v5401, %v5415
      %v6318 = vadd.f32 %v6317, %v5429
      %v6319 = vadd.f32 %v6318, %v5443
      %v6320 = vadd.f32 %v6319, %v5457
      %v6321 = vadd.f32 %v6320, %v5471
      %v6322 = vadd.f32 %v6321, %v5485
      %v6323 = vadd.f32 %v6322, %v5499
      %v6324 = vadd.f32 %v6323, %v5513
      %v6325 = vadd.f32 %v6324, %v5527
      %v6326 = vadd.f32 %v6325, %v5541
      %v6327 = vadd.f32 %v6326, %v5555
      %v6328 = vadd.f32 %v6327, %v5569
      %v6329 = vadd.f32 %v6328, %v5583
      %v6330 = vadd.f32 %v6329, %v5597
      %v6331 = vadd.f32 %v6330, %v5611
      %v6332 = vadd.f32 %v6331, %v5625
      %v6333 = vadd.f32 %v6332, %v5639
      %v6334 = vadd.f32 %v6333, %v5653
      %v6335 = vadd.f32 %v6334, %v5667
      %v6336 = vadd.f32 %v6335, %v5681
      %v6337 = vadd.f32 %v6336, %v5695
      %v6338 = vadd.f32 %v6337, %v5709
      %v6339 = vadd.f32 %v6338, %v5723
      %v6340 = vadd.f32 %v6339, %v5737
      %v6341 = vadd.f32 %v6340, %v5751
      %v6342 = vadd.f32 %v6341, %v5765
      %v6343 = vadd.f32 %v6342, %v5779
      %v6344 = vadd.f32 %v6343, %v5793
      %v6345 = vadd.f32 %v6344, %v5807
      %v6346 = vadd.f32 %v6345, %v5821
      %v6347 = vadd.f32 %v6346, %v5835
      %v6348 = vrot.slane %v6347, 4
      %v6349 = vadd.f32 %v6347, %v6348
      %v6350 = vrot.slane %v6349, 2
      %v6351 = vadd.f32 %v6349, %v6350
      %v6352 = vrot.slane %v6351, 1
      %v6353 = vadd.f32 %v6351, %v6352
      %v6354 = vld [vmem:[%s369] sm:$0xff]
      %v6355 = vld [vmem:[%s369 + $0x8] sm:$0xff]
      %v6356 = vld [vmem:[%s369 + $0x10] sm:$0xff]
      %v6357 = vld [vmem:[%s369 + $0x18] sm:$0xff]
      %v6358 = vld [vmem:[%s369 + $0x20] sm:$0xff]
      %v6359 = vld [vmem:[%s369 + $0x28] sm:$0xff]
      %v6360 = vld [vmem:[%s369 + $0x30] sm:$0xff]
      %v6361 = vld [vmem:[%s369 + $0x38] sm:$0xff]
      %v6362 = vld [vmem:[%s369 + $0x40] sm:$0xff]
      %v6363 = vld [vmem:[%s369 + $0x48] sm:$0xff]
      %v6364 = vld [vmem:[%s369 + $0x50] sm:$0xff]
      %v6365 = vld [vmem:[%s369 + $0x58] sm:$0xff]
      %v6366 = vld [vmem:[%s369 + $0x60] sm:$0xff]
      %v6367 = vld [vmem:[%s369 + $0x68] sm:$0xff]
      %v6368 = vld [vmem:[%s369 + $0x70] sm:$0xff]
      %v6369 = vld [vmem:[%s369 + $0x78] sm:$0xff]
      %v6370 = vld [vmem:[%s369 + $0x80] sm:$0xff]
      %v6371 = vld [vmem:[%s369 + $0x88] sm:$0xff]
      %v6372 = vld [vmem:[%s369 + $0x90] sm:$0xff]
      %v6373 = vld [vmem:[%s369 + $0x98] sm:$0xff]
      %v6374 = vld [vmem:[%s369 + $0xa0] sm:$0xff]
      %v6375 = vld [vmem:[%s369 + $0xa8] sm:$0xff]
      %v6376 = vld [vmem:[%s369 + $0xb0] sm:$0xff]
      %v6377 = vld [vmem:[%s369 + $0xb8] sm:$0xff]
      %v6378 = vld [vmem:[%s369 + $0xc0] sm:$0xff]
      %v6379 = vld [vmem:[%s369 + $0xc8] sm:$0xff]
      %v6380 = vld [vmem:[%s369 + $0xd0] sm:$0xff]
      %v6381 = vld [vmem:[%s369 + $0xd8] sm:$0xff]
      %v6382 = vld [vmem:[%s369 + $0xe0] sm:$0xff]
      %v6383 = vld [vmem:[%s369 + $0xe8] sm:$0xff]
      %v6384 = vld [vmem:[%s369 + $0xf0] sm:$0xff]
      %v6385 = vld [vmem:[%s369 + $0xf8] sm:$0xff]
      %v6386 = vld [vmem:[%s369 + $0x100] sm:$0xff]
      %v6387 = vld [vmem:[%s369 + $0x108] sm:$0xff]
      %v6388 = vld [vmem:[%s369 + $0x110] sm:$0xff]
      %v6389 = vld [vmem:[%s369 + $0x118] sm:$0xff]
      %v6390 = vld [vmem:[%s369 + $0x120] sm:$0xff]
      %v6391 = vld [vmem:[%s369 + $0x128] sm:$0xff]
      %v6392 = vld [vmem:[%s369 + $0x130] sm:$0xff]
      %v6393 = vld [vmem:[%s369 + $0x138] sm:$0xff]
      %v6394 = vld [vmem:[%s369 + $0x140] sm:$0xff]
      %v6395 = vld [vmem:[%s369 + $0x148] sm:$0xff]
      %v6396 = vld [vmem:[%s369 + $0x150] sm:$0xff]
      %v6397 = vld [vmem:[%s369 + $0x158] sm:$0xff]
      %v6398 = vld [vmem:[%s369 + $0x160] sm:$0xff]
      %v6399 = vld [vmem:[%s369 + $0x168] sm:$0xff]
      %v6400 = vld [vmem:[%s369 + $0x170] sm:$0xff]
      %v6401 = vld [vmem:[%s369 + $0x178] sm:$0xff]
      %v6402 = vld [vmem:[%s369 + $0x180] sm:$0xff]
      %v6403 = vld [vmem:[%s369 + $0x188] sm:$0xff]
      %v6404 = vld [vmem:[%s369 + $0x190] sm:$0xff]
      %v6405 = vld [vmem:[%s369 + $0x198] sm:$0xff]
      %v6406 = vld [vmem:[%s369 + $0x1a0] sm:$0xff]
      %v6407 = vld [vmem:[%s369 + $0x1a8] sm:$0xff]
      %v6408 = vld [vmem:[%s369 + $0x1b0] sm:$0xff]
      %v6409 = vld [vmem:[%s369 + $0x1b8] sm:$0xff]
      %v6410 = vld [vmem:[%s369 + $0x1c0] sm:$0xff]
      %v6411 = vld [vmem:[%s369 + $0x1c8] sm:$0xff]
      %v6412 = vld [vmem:[%s369 + $0x1d0] sm:$0xff]
      %v6413 = vld [vmem:[%s369 + $0x1d8] sm:$0xff]
      %v6414 = vld [vmem:[%s369 + $0x1e0] sm:$0xff]
      %v6415 = vld [vmem:[%s369 + $0x1e8] sm:$0xff]
      %v6416 = vld [vmem:[%s369 + $0x1f0] sm:$0xff]
      %v6417 = vld [vmem:[%s369 + $0x1f8] sm:$0xff]
      %v6418 = vld [vmem:[%s369 + $0x200] sm:$0xff]
      %v6419 = vld [vmem:[%s369 + $0x208] sm:$0xff]
      %v6420 = vld [vmem:[%s369 + $0x210] sm:$0xff]
      %v6421 = vld [vmem:[%s369 + $0x218] sm:$0xff]
      %v6422 = vld [vmem:[%s369 + $0x220] sm:$0xff]
      %v6423 = vld [vmem:[%s369 + $0x228] sm:$0xff]
      %v6424 = vld [vmem:[%s369 + $0x230] sm:$0xff]
      %v6425 = vld [vmem:[%s369 + $0x238] sm:$0xff]
      %v6426 = vld [vmem:[%s369 + $0x240] sm:$0xff]
      %v6427 = vld [vmem:[%s369 + $0x248] sm:$0xff]
      %v6428 = vld [vmem:[%s369 + $0x250] sm:$0xff]
      %v6429 = vld [vmem:[%s369 + $0x258] sm:$0xff]
      %v6430 = vld [vmem:[%s369 + $0x260] sm:$0xff]
      %v6431 = vld [vmem:[%s369 + $0x268] sm:$0xff]
      %v6432 = vld [vmem:[%s369 + $0x270] sm:$0xff]
      %v6433 = vld [vmem:[%s369 + $0x278] sm:$0xff]
      %v6434 = vld [vmem:[%s369 + $0x280] sm:$0xff]
      %v6435 = vld [vmem:[%s369 + $0x288] sm:$0xff]
      %v6436 = vld [vmem:[%s369 + $0x290] sm:$0xff]
      %v6437 = vld [vmem:[%s369 + $0x298] sm:$0xff]
      %v6438 = vld [vmem:[%s369 + $0x2a0] sm:$0xff]
      %v6439 = vld [vmem:[%s369 + $0x2a8] sm:$0xff]
      %v6440 = vld [vmem:[%s369 + $0x2b0] sm:$0xff]
      %v6441 = vld [vmem:[%s369 + $0x2b8] sm:$0xff]
      %v6442 = vld [vmem:[%s369 + $0x2c0] sm:$0xff]
      %v6443 = vld [vmem:[%s369 + $0x2c8] sm:$0xff]
      %v6444 = vld [vmem:[%s369 + $0x2d0] sm:$0xff]
      %v6445 = vld [vmem:[%s369 + $0x2d8] sm:$0xff]
      %v6446 = vld [vmem:[%s369 + $0x2e0] sm:$0xff]
      %v6447 = vld [vmem:[%s369 + $0x2e8] sm:$0xff]
      %v6448 = vld [vmem:[%s369 + $0x2f0] sm:$0xff]
      %v6449 = vld [vmem:[%s369 + $0x2f8] sm:$0xff]
      %v6450 = vld [vmem:[%s369 + $0x300] sm:$0xff]
      %v6451 = vld [vmem:[%s369 + $0x308] sm:$0xff]
      %v6452 = vld [vmem:[%s369 + $0x310] sm:$0xff]
      %v6453 = vld [vmem:[%s369 + $0x318] sm:$0xff]
      %v6454 = vld [vmem:[%s369 + $0x320] sm:$0xff]
      %v6455 = vld [vmem:[%s369 + $0x328] sm:$0xff]
      %v6456 = vld [vmem:[%s369 + $0x330] sm:$0xff]
      %v6457 = vld [vmem:[%s369 + $0x338] sm:$0xff]
      %v6458 = vld [vmem:[%s369 + $0x340] sm:$0xff]
      %v6459 = vld [vmem:[%s369 + $0x348] sm:$0xff]
      %v6460 = vld [vmem:[%s369 + $0x350] sm:$0xff]
      %v6461 = vld [vmem:[%s369 + $0x358] sm:$0xff]
      %v6462 = vld [vmem:[%s369 + $0x360] sm:$0xff]
      %v6463 = vld [vmem:[%s369 + $0x368] sm:$0xff]
      %v6464 = vld [vmem:[%s369 + $0x370] sm:$0xff]
      %v6465 = vld [vmem:[%s369 + $0x378] sm:$0xff]
      %v6466 = vld [vmem:[%s369 + $0x380] sm:$0xff]
      %v6467 = vld [vmem:[%s369 + $0x388] sm:$0xff]
      %v6468 = vld [vmem:[%s369 + $0x390] sm:$0xff]
      %v6469 = vld [vmem:[%s369 + $0x398] sm:$0xff]
      %v6470 = vld [vmem:[%s369 + $0x3a0] sm:$0xff]
      %v6471 = vld [vmem:[%s369 + $0x3a8] sm:$0xff]
      %v6472 = vld [vmem:[%s369 + $0x3b0] sm:$0xff]
      %v6473 = vld [vmem:[%s369 + $0x3b8] sm:$0xff]
      %v6474 = vld [vmem:[%s369 + $0x3c0] sm:$0xff]
      %v6475 = vld [vmem:[%s369 + $0x3c8] sm:$0xff]
      %v6476 = vld [vmem:[%s369 + $0x3d0] sm:$0xff]
      %v6477 = vld [vmem:[%s369 + $0x3d8] sm:$0xff]
      %v6478 = vld [vmem:[%s369 + $0x3e0] sm:$0xff]
      %v6479 = vld [vmem:[%s369 + $0x3e8] sm:$0xff]
      %v6480 = vld [vmem:[%s369 + $0x3f0] sm:$0xff]
      %v6481 = vld [vmem:[%s369 + $0x3f8] sm:$0xff]
      %v6482 = vld [vmem:[%s369 + $0x400] sm:$0xff]
      %v6483 = vld [vmem:[%s369 + $0x408] sm:$0xff]
      %v6484 = vld [vmem:[%s369 + $0x410] sm:$0xff]
      %v6485 = vld [vmem:[%s369 + $0x418] sm:$0xff]
      %v6486 = vld [vmem:[%s369 + $0x420] sm:$0xff]
      %v6487 = vld [vmem:[%s369 + $0x428] sm:$0xff]
      %v6488 = vld [vmem:[%s369 + $0x430] sm:$0xff]
      %v6489 = vld [vmem:[%s369 + $0x438] sm:$0xff]
      %v6490 = vld [vmem:[%s369 + $0x440] sm:$0xff]
      %v6491 = vld [vmem:[%s369 + $0x448] sm:$0xff]
      %v6492 = vld [vmem:[%s369 + $0x450] sm:$0xff]
      %v6493 = vld [vmem:[%s369 + $0x458] sm:$0xff]
      %v6494 = vld [vmem:[%s369 + $0x460] sm:$0xff]
      %v6495 = vld [vmem:[%s369 + $0x468] sm:$0xff]
      %v6496 = vld [vmem:[%s369 + $0x470] sm:$0xff]
      %v6497 = vld [vmem:[%s369 + $0x478] sm:$0xff]
      %v6498 = vld [vmem:[%s369 + $0x480] sm:$0xff]
      %v6499 = vld [vmem:[%s369 + $0x488] sm:$0xff]
      %v6500 = vld [vmem:[%s369 + $0x490] sm:$0xff]
      %v6501 = vld [vmem:[%s369 + $0x498] sm:$0xff]
      %v6502 = vld [vmem:[%s369 + $0x4a0] sm:$0xff]
      %v6503 = vld [vmem:[%s369 + $0x4a8] sm:$0xff]
      %v6504 = vld [vmem:[%s369 + $0x4b0] sm:$0xff]
      %v6505 = vld [vmem:[%s369 + $0x4b8] sm:$0xff]
      %v6506 = vld [vmem:[%s369 + $0x4c0] sm:$0xff]
      %v6507 = vld [vmem:[%s369 + $0x4c8] sm:$0xff]
      %v6508 = vld [vmem:[%s369 + $0x4d0] sm:$0xff]
      %v6509 = vld [vmem:[%s369 + $0x4d8] sm:$0xff]
      %v6510 = vld [vmem:[%s369 + $0x4e0] sm:$0xff]
      %v6511 = vld [vmem:[%s369 + $0x4e8] sm:$0xff]
      %v6512 = vld [vmem:[%s369 + $0x4f0] sm:$0xff]
      %v6513 = vld [vmem:[%s369 + $0x4f8] sm:$0xff]
      %v6514 = vld [vmem:[%s369 + $0x500] sm:$0xff]
      %v6515 = vld [vmem:[%s369 + $0x508] sm:$0xff]
      %v6516 = vld [vmem:[%s369 + $0x510] sm:$0xff]
      %v6517 = vld [vmem:[%s369 + $0x518] sm:$0xff]
      %v6518 = vld [vmem:[%s369 + $0x520] sm:$0xff]
      %v6519 = vld [vmem:[%s369 + $0x528] sm:$0xff]
      %v6520 = vld [vmem:[%s369 + $0x530] sm:$0xff]
      %v6521 = vld [vmem:[%s369 + $0x538] sm:$0xff]
      %v6522 = vld [vmem:[%s369 + $0x540] sm:$0xff]
      %v6523 = vld [vmem:[%s369 + $0x548] sm:$0xff]
      %v6524 = vld [vmem:[%s369 + $0x550] sm:$0xff]
      %v6525 = vld [vmem:[%s369 + $0x558] sm:$0xff]
      %v6526 = vld [vmem:[%s369 + $0x560] sm:$0xff]
      %v6527 = vld [vmem:[%s369 + $0x568] sm:$0xff]
      %v6528 = vld [vmem:[%s369 + $0x570] sm:$0xff]
      %v6529 = vld [vmem:[%s369 + $0x578] sm:$0xff]
      %v6530 = vld [vmem:[%s369 + $0x580] sm:$0xff]
      %v6531 = vld [vmem:[%s369 + $0x588] sm:$0xff]
      %v6532 = vld [vmem:[%s369 + $0x590] sm:$0xff]
      %v6533 = vld [vmem:[%s369 + $0x598] sm:$0xff]
      %v6534 = vld [vmem:[%s369 + $0x5a0] sm:$0xff]
      %v6535 = vld [vmem:[%s369 + $0x5a8] sm:$0xff]
      %v6536 = vld [vmem:[%s369 + $0x5b0] sm:$0xff]
      %v6537 = vld [vmem:[%s369 + $0x5b8] sm:$0xff]
      %v6538 = vld [vmem:[%s369 + $0x5c0] sm:$0xff]
      %v6539 = vld [vmem:[%s369 + $0x5c8] sm:$0xff]
      %v6540 = vld [vmem:[%s369 + $0x5d0] sm:$0xff]
      %v6541 = vld [vmem:[%s369 + $0x5d8] sm:$0xff]
      %v6542 = vld [vmem:[%s369 + $0x5e0] sm:$0xff]
      %v6543 = vld [vmem:[%s369 + $0x5e8] sm:$0xff]
      %v6544 = vld [vmem:[%s369 + $0x5f0] sm:$0xff]
      %v6545 = vld [vmem:[%s369 + $0x5f8] sm:$0xff]
      %v6546 = vld [vmem:[%s369 + $0x600] sm:$0xff]
      %v6547 = vld [vmem:[%s369 + $0x608] sm:$0xff]
      %v6548 = vld [vmem:[%s369 + $0x610] sm:$0xff]
      %v6549 = vld [vmem:[%s369 + $0x618] sm:$0xff]
      %v6550 = vld [vmem:[%s369 + $0x620] sm:$0xff]
      %v6551 = vld [vmem:[%s369 + $0x628] sm:$0xff]
      %v6552 = vld [vmem:[%s369 + $0x630] sm:$0xff]
      %v6553 = vld [vmem:[%s369 + $0x638] sm:$0xff]
      %v6554 = vld [vmem:[%s369 + $0x640] sm:$0xff]
      %v6555 = vld [vmem:[%s369 + $0x648] sm:$0xff]
      %v6556 = vld [vmem:[%s369 + $0x650] sm:$0xff]
      %v6557 = vld [vmem:[%s369 + $0x658] sm:$0xff]
      %v6558 = vld [vmem:[%s369 + $0x660] sm:$0xff]
      %v6559 = vld [vmem:[%s369 + $0x668] sm:$0xff]
      %v6560 = vld [vmem:[%s369 + $0x670] sm:$0xff]
      %v6561 = vld [vmem:[%s369 + $0x678] sm:$0xff]
      %v6562 = vld [vmem:[%s369 + $0x680] sm:$0xff]
      %v6563 = vld [vmem:[%s369 + $0x688] sm:$0xff]
      %v6564 = vld [vmem:[%s369 + $0x690] sm:$0xff]
      %v6565 = vld [vmem:[%s369 + $0x698] sm:$0xff]
      %v6566 = vld [vmem:[%s369 + $0x6a0] sm:$0xff]
      %v6567 = vld [vmem:[%s369 + $0x6a8] sm:$0xff]
      %v6568 = vld [vmem:[%s369 + $0x6b0] sm:$0xff]
      %v6569 = vld [vmem:[%s369 + $0x6b8] sm:$0xff]
      %v6570 = vld [vmem:[%s369 + $0x6c0] sm:$0xff]
      %v6571 = vld [vmem:[%s369 + $0x6c8] sm:$0xff]
      %v6572 = vld [vmem:[%s369 + $0x6d0] sm:$0xff]
      %v6573 = vld [vmem:[%s369 + $0x6d8] sm:$0xff]
      %v6574 = vld [vmem:[%s369 + $0x6e0] sm:$0xff]
      %v6575 = vld [vmem:[%s369 + $0x6e8] sm:$0xff]
      %v6576 = vld [vmem:[%s369 + $0x6f0] sm:$0xff]
      %v6577 = vld [vmem:[%s369 + $0x6f8] sm:$0xff]
      %6578 = vmatprep.subr.mxu0 0.0
      %6579 = vmatpush1.msra.mxu0 %v6354
      %6580 = vmatprep.subr.mxu0 0.0
      %6581 = vmatpush1.msra.mxu0 %v6355
      %6582 = vmatprep.subr.mxu0 0.0
      %6583 = vmatpush1.msra.mxu0 %v6356
      %6584 = vmatprep.subr.mxu0 0.0
      %6585 = vmatpush1.msra.mxu0 %v6357
      %6586 = vmatprep.subr.mxu0 0.0
      %6587 = vmatpush1.msra.mxu0 %v6358
      %6588 = vmatprep.subr.mxu0 0.0
      %6589 = vmatpush1.msra.mxu0 %v6359
      %6590 = vmatprep.subr.mxu0 0.0
      %6591 = vmatpush1.msra.mxu0 %v6360
      %6592 = vmatprep.subr.mxu0 0.0
      %6593 = vmatpush1.msra.mxu0 %v6361
      %6594 = vmatprep.subr.mxu0 0.0
      %6595 = vmatpush1.msra.mxu0 %v6362
      %6596 = vmatprep.subr.mxu0 0.0
      %6597 = vmatpush1.msra.mxu0 %v6363
      %6598 = vmatprep.subr.mxu0 0.0
      %6599 = vmatpush1.msra.mxu0 %v6364
      %6600 = vmatprep.subr.mxu0 0.0
      %6601 = vmatpush1.msra.mxu0 %v6365
      %6602 = vmatprep.subr.mxu0 0.0
      %6603 = vmatpush1.msra.mxu0 %v6366
      %6604 = vmatprep.subr.mxu0 0.0
      %6605 = vmatpush1.msra.mxu0 %v6367
      %6606 = vmatprep.subr.mxu0 0.0
      %6607 = vmatpush1.msra.mxu0 %v6368
      %6608 = vmatprep.subr.mxu0 0.0
      %6609 = vmatpush1.msra.mxu0 %v6369
      %6610 = vmatprep.subr.mxu0 0.0
      %6611 = vmatpush1.msra.mxu0 %v6370
      %6612 = vmatprep.subr.mxu0 0.0
      %6613 = vmatpush1.msra.mxu0 %v6371
      %6614 = vmatprep.subr.mxu0 0.0
      %6615 = vmatpush1.msra.mxu0 %v6372
      %6616 = vmatprep.subr.mxu0 0.0
      %6617 = vmatpush1.msra.mxu0 %v6373
      %6618 = vmatprep.subr.mxu0 0.0
      %6619 = vmatpush1.msra.mxu0 %v6374
      %6620 = vmatprep.subr.mxu0 0.0
      %6621 = vmatpush1.msra.mxu0 %v6375
      %6622 = vmatprep.subr.mxu0 0.0
      %6623 = vmatpush1.msra.mxu0 %v6376
      %6624 = vmatprep.subr.mxu0 0.0
      %6625 = vmatpush1.msra.mxu0 %v6377
      %6626 = vmatprep.subr.mxu0 0.0
      %6627 = vmatpush1.msra.mxu0 %v6378
      %6628 = vmatprep.subr.mxu0 0.0
      %6629 = vmatpush1.msra.mxu0 %v6379
      %6630 = vmatprep.subr.mxu0 0.0
      %6631 = vmatpush1.msra.mxu0 %v6380
      %6632 = vmatprep.subr.mxu0 0.0
      %6633 = vmatpush1.msra.mxu0 %v6381
      %6634 = vmatprep.subr.mxu0 0.0
      %6635 = vmatpush1.msra.mxu0 %v6382
      %6636 = vmatprep.subr.mxu0 0.0
      %6637 = vmatpush1.msra.mxu0 %v6383
      %6638 = vmatprep.subr.mxu0 0.0
      %6639 = vmatpush1.msra.mxu0 %v6384
      %6640 = vmatprep.subr.mxu0 0.0
      %6641 = vmatpush1.msra.mxu0 %v6385
      %6642 = vmatprep.mubr.f32.mxu0 %v5909
      %6643 = vmatmul.mubr.f32.gmra.mrb[0].mxu0 %v5872
      %v6644 = vpop.f32.mrb[0].mxu0
      %v6645 = vadd.f32 0.0, %v6644
      %v6646 = vpop.f32.mrb[0].mxu0
      %6647 = vdwg.mxu0
      %6648 = vmatprep.subr.mxu0 0.0
      %6649 = vmatpush1.msra.mxu0 %v6386
      %6650 = vmatprep.subr.mxu0 0.0
      %6651 = vmatpush1.msra.mxu0 %v6387
      %6652 = vmatprep.subr.mxu0 0.0
      %6653 = vmatpush1.msra.mxu0 %v6388
      %6654 = vmatprep.subr.mxu0 0.0
      %6655 = vmatpush1.msra.mxu0 %v6389
      %6656 = vmatprep.subr.mxu0 0.0
      %6657 = vmatpush1.msra.mxu0 %v6390
      %6658 = vmatprep.subr.mxu0 0.0
      %6659 = vmatpush1.msra.mxu0 %v6391
      %6660 = vmatprep.subr.mxu0 0.0
      %6661 = vmatpush1.msra.mxu0 %v6392
      %6662 = vmatprep.subr.mxu0 0.0
      %6663 = vmatpush1.msra.mxu0 %v6393
      %6664 = vmatprep.subr.mxu0 0.0
      %6665 = vmatpush1.msra.mxu0 %v6394
      %6666 = vmatprep.subr.mxu0 0.0
      %6667 = vmatpush1.msra.mxu0 %v6395
      %6668 = vmatprep.subr.mxu0 0.0
      %6669 = vmatpush1.msra.mxu0 %v6396
      %6670 = vmatprep.subr.mxu0 0.0
      %6671 = vmatpush1.msra.mxu0 %v6397
      %6672 = vmatprep.subr.mxu0 0.0
      %6673 = vmatpush1.msra.mxu0 %v6398
      %6674 = vmatprep.subr.mxu0 0.0
      %6675 = vmatpush1.msra.mxu0 %v6399
      %6676 = vmatprep.subr.mxu0 0.0
      %6677 = vmatpush1.msra.mxu0 %v6400
      %6678 = vmatprep.subr.mxu0 0.0
      %6679 = vmatpush1.msra.mxu0 %v6401
      %6680 = vmatprep.subr.mxu0 0.0
      %6681 = vmatpush1.msra.mxu0 %v6402
      %6682 = vmatprep.subr.mxu0 0.0
      %6683 = vmatpush1.msra.mxu0 %v6403
      %6684 = vmatprep.subr.mxu0 0.0
      %6685 = vmatpush1.msra.mxu0 %v6404
      %6686 = vmatprep.subr.mxu0 0.0
      %6687 = vmatpush1.msra.mxu0 %v6405
      %6688 = vmatprep.subr.mxu0 0.0
      %6689 = vmatpush1.msra.mxu0 %v6406
      %6690 = vmatprep.subr.mxu0 0.0
      %6691 = vmatpush1.msra.mxu0 %v6407
      %6692 = vmatprep.subr.mxu0 0.0
      %6693 = vmatpush1.msra.mxu0 %v6408
      %6694 = vmatprep.subr.mxu0 0.0
      %6695 = vmatpush1.msra.mxu0 %v6409
      %6696 = vmatprep.subr.mxu0 0.0
      %6697 = vmatpush1.msra.mxu0 %v6410
      %6698 = vmatprep.subr.mxu0 0.0
      %6699 = vmatpush1.msra.mxu0 %v6411
      %6700 = vmatprep.subr.mxu0 0.0
      %6701 = vmatpush1.msra.mxu0 %v6412
      %6702 = vmatprep.subr.mxu0 0.0
      %6703 = vmatpush1.msra.mxu0 %v6413
      %6704 = vmatprep.subr.mxu0 0.0
      %6705 = vmatpush1.msra.mxu0 %v6414
      %6706 = vmatprep.subr.mxu0 0.0
      %6707 = vmatpush1.msra.mxu0 %v6415
      %6708 = vmatprep.subr.mxu0 0.0
      %6709 = vmatpush1.msra.mxu0 %v6416
      %6710 = vmatprep.subr.mxu0 0.0
      %6711 = vmatpush1.msra.mxu0 %v6417
      %6712 = vmatprep.mubr.f32.mxu0 %v5983
      %6713 = vmatmul.mubr.f32.gmra.mrb[0].mxu0 %v5946
      %v6714 = vpop.f32.mrb[0].mxu0
      %v6715 = vadd.f32 %v6645, %v6714
      %v6716 = vpop.f32.mrb[0].mxu0
      %6717 = vdwg.mxu0
      %6718 = vmatprep.subr.mxu0 0.0
      %6719 = vmatpush1.msra.mxu0 %v6418
      %6720 = vmatprep.subr.mxu0 0.0
      %6721 = vmatpush1.msra.mxu0 %v6419
      %6722 = vmatprep.subr.mxu0 0.0
      %6723 = vmatpush1.msra.mxu0 %v6420
      %6724 = vmatprep.subr.mxu0 0.0
      %6725 = vmatpush1.msra.mxu0 %v6421
      %6726 = vmatprep.subr.mxu0 0.0
      %6727 = vmatpush1.msra.mxu0 %v6422
      %6728 = vmatprep.subr.mxu0 0.0
      %6729 = vmatpush1.msra.mxu0 %v6423
      %6730 = vmatprep.subr.mxu0 0.0
      %6731 = vmatpush1.msra.mxu0 %v6424
      %6732 = vmatprep.subr.mxu0 0.0
      %6733 = vmatpush1.msra.mxu0 %v6425
      %6734 = vmatprep.subr.mxu0 0.0
      %6735 = vmatpush1.msra.mxu0 %v6426
      %6736 = vmatprep.subr.mxu0 0.0
      %6737 = vmatpush1.msra.mxu0 %v6427
      %6738 = vmatprep.subr.mxu0 0.0
      %6739 = vmatpush1.msra.mxu0 %v6428
      %6740 = vmatprep.subr.mxu0 0.0
      %6741 = vmatpush1.msra.mxu0 %v6429
      %6742 = vmatprep.subr.mxu0 0.0
      %6743 = vmatpush1.msra.mxu0 %v6430
      %6744 = vmatprep.subr.mxu0 0.0
      %6745 = vmatpush1.msra.mxu0 %v6431
      %6746 = vmatprep.subr.mxu0 0.0
      %6747 = vmatpush1.msra.mxu0 %v6432
      %6748 = vmatprep.subr.mxu0 0.0
      %6749 = vmatpush1.msra.mxu0 %v6433
      %6750 = vmatprep.subr.mxu0 0.0
      %6751 = vmatpush1.msra.mxu0 %v6434
      %6752 = vmatprep.subr.mxu0 0.0
      %6753 = vmatpush1.msra.mxu0 %v6435
      %6754 = vmatprep.subr.mxu0 0.0
      %6755 = vmatpush1.msra.mxu0 %v6436
      %6756 = vmatprep.subr.mxu0 0.0
      %6757 = vmatpush1.msra.mxu0 %v6437
      %6758 = vmatprep.subr.mxu0 0.0
      %6759 = vmatpush1.msra.mxu0 %v6438
      %6760 = vmatprep.subr.mxu0 0.0
      %6761 = vmatpush1.msra.mxu0 %v6439
      %6762 = vmatprep.subr.mxu0 0.0
      %6763 = vmatpush1.msra.mxu0 %v6440
      %6764 = vmatprep.subr.mxu0 0.0
      %6765 = vmatpush1.msra.mxu0 %v6441
      %6766 = vmatprep.subr.mxu0 0.0
      %6767 = vmatpush1.msra.mxu0 %v6442
      %6768 = vmatprep.subr.mxu0 0.0
      %6769 = vmatpush1.msra.mxu0 %v6443
      %6770 = vmatprep.subr.mxu0 0.0
      %6771 = vmatpush1.msra.mxu0 %v6444
      %6772 = vmatprep.subr.mxu0 0.0
      %6773 = vmatpush1.msra.mxu0 %v6445
      %6774 = vmatprep.subr.mxu0 0.0
      %6775 = vmatpush1.msra.mxu0 %v6446
      %6776 = vmatprep.subr.mxu0 0.0
      %6777 = vmatpush1.msra.mxu0 %v6447
      %6778 = vmatprep.subr.mxu0 0.0
      %6779 = vmatpush1.msra.mxu0 %v6448
      %6780 = vmatprep.subr.mxu0 0.0
      %6781 = vmatpush1.msra.mxu0 %v6449
      %6782 = vmatprep.mubr.f32.mxu0 %v6057
      %6783 = vmatmul.mubr.f32.gmra.mrb[0].mxu0 %v6020
      %v6784 = vpop.f32.mrb[0].mxu0
      %v6785 = vadd.f32 %v6715, %v6784
      %v6786 = vpop.f32.mrb[0].mxu0
      %6787 = vdwg.mxu0
      %6788 = vmatprep.subr.mxu0 0.0
      %6789 = vmatpush1.msra.mxu0 %v6450
      %6790 = vmatprep.subr.mxu0 0.0
      %6791 = vmatpush1.msra.mxu0 %v6451
      %6792 = vmatprep.subr.mxu0 0.0
      %6793 = vmatpush1.msra.mxu0 %v6452
      %6794 = vmatprep.subr.mxu0 0.0
      %6795 = vmatpush1.msra.mxu0 %v6453
      %6796 = vmatprep.subr.mxu0 0.0
      %6797 = vmatpush1.msra.mxu0 %v6454
      %6798 = vmatprep.subr.mxu0 0.0
      %6799 = vmatpush1.msra.mxu0 %v6455
      %6800 = vmatprep.subr.mxu0 0.0
      %6801 = vmatpush1.msra.mxu0 %v6456
      %6802 = vmatprep.subr.mxu0 0.0
      %6803 = vmatpush1.msra.mxu0 %v6457
      %6804 = vmatprep.subr.mxu0 0.0
      %6805 = vmatpush1.msra.mxu0 %v6458
      %6806 = vmatprep.subr.mxu0 0.0
      %6807 = vmatpush1.msra.mxu0 %v6459
      %6808 = vmatprep.subr.mxu0 0.0
      %6809 = vmatpush1.msra.mxu0 %v6460
      %6810 = vmatprep.subr.mxu0 0.0
      %6811 = vmatpush1.msra.mxu0 %v6461
      %6812 = vmatprep.subr.mxu0 0.0
      %6813 = vmatpush1.msra.mxu0 %v6462
      %6814 = vmatprep.subr.mxu0 0.0
      %6815 = vmatpush1.msra.mxu0 %v6463
      %6816 = vmatprep.subr.mxu0 0.0
      %6817 = vmatpush1.msra.mxu0 %v6464
      %6818 = vmatprep.subr.mxu0 0.0
      %6819 = vmatpush1.msra.mxu0 %v6465
      %6820 = vmatprep.subr.mxu0 0.0
      %6821 = vmatpush1.msra.mxu0 %v6466
      %6822 = vmatprep.subr.mxu0 0.0
      %6823 = vmatpush1.msra.mxu0 %v6467
      %6824 = vmatprep.subr.mxu0 0.0
      %6825 = vmatpush1.msra.mxu0 %v6468
      %6826 = vmatprep.subr.mxu0 0.0
      %6827 = vmatpush1.msra.mxu0 %v6469
      %6828 = vmatprep.subr.mxu0 0.0
      %6829 = vmatpush1.msra.mxu0 %v6470
      %6830 = vmatprep.subr.mxu0 0.0
      %6831 = vmatpush1.msra.mxu0 %v6471
      %6832 = vmatprep.subr.mxu0 0.0
      %6833 = vmatpush1.msra.mxu0 %v6472
      %6834 = vmatprep.subr.mxu0 0.0
      %6835 = vmatpush1.msra.mxu0 %v6473
      %6836 = vmatprep.subr.mxu0 0.0
      %6837 = vmatpush1.msra.mxu0 %v6474
      %6838 = vmatprep.subr.mxu0 0.0
      %6839 = vmatpush1.msra.mxu0 %v6475
      %6840 = vmatprep.subr.mxu0 0.0
      %6841 = vmatpush1.msra.mxu0 %v6476
      %6842 = vmatprep.subr.mxu0 0.0
      %6843 = vmatpush1.msra.mxu0 %v6477
      %6844 = vmatprep.subr.mxu0 0.0
      %6845 = vmatpush1.msra.mxu0 %v6478
      %6846 = vmatprep.subr.mxu0 0.0
      %6847 = vmatpush1.msra.mxu0 %v6479
      %6848 = vmatprep.subr.mxu0 0.0
      %6849 = vmatpush1.msra.mxu0 %v6480
      %6850 = vmatprep.subr.mxu0 0.0
      %6851 = vmatpush1.msra.mxu0 %v6481
      %6852 = vmatprep.mubr.f32.mxu0 %v6131
      %6853 = vmatmul.mubr.f32.gmra.mrb[0].mxu0 %v6094
      %v6854 = vpop.f32.mrb[0].mxu0
      %v6855 = vadd.f32 %v6785, %v6854
      %v6856 = vpop.f32.mrb[0].mxu0
      %6857 = vdwg.mxu0
      %6858 = vmatprep.subr.mxu0 0.0
      %6859 = vmatpush1.msra.mxu0 %v6482
      %6860 = vmatprep.subr.mxu0 0.0
      %6861 = vmatpush1.msra.mxu0 %v6483
      %6862 = vmatprep.subr.mxu0 0.0
      %6863 = vmatpush1.msra.mxu0 %v6484
      %6864 = vmatprep.subr.mxu0 0.0
      %6865 = vmatpush1.msra.mxu0 %v6485
      %6866 = vmatprep.subr.mxu0 0.0
      %6867 = vmatpush1.msra.mxu0 %v6486
      %6868 = vmatprep.subr.mxu0 0.0
      %6869 = vmatpush1.msra.mxu0 %v6487
      %6870 = vmatprep.subr.mxu0 0.0
      %6871 = vmatpush1.msra.mxu0 %v6488
      %6872 = vmatprep.subr.mxu0 0.0
      %6873 = vmatpush1.msra.mxu0 %v6489
      %6874 = vmatprep.subr.mxu0 0.0
      %6875 = vmatpush1.msra.mxu0 %v6490
      %6876 = vmatprep.subr.mxu0 0.0
      %6877 = vmatpush1.msra.mxu0 %v6491
      %6878 = vmatprep.subr.mxu0 0.0
      %6879 = vmatpush1.msra.mxu0 %v6492
      %6880 = vmatprep.subr.mxu0 0.0
      %6881 = vmatpush1.msra.mxu0 %v6493
      %6882 = vmatprep.subr.mxu0 0.0
      %6883 = vmatpush1.msra.mxu0 %v6494
      %6884 = vmatprep.subr.mxu0 0.0
      %6885 = vmatpush1.msra.mxu0 %v6495
      %6886 = vmatprep.subr.mxu0 0.0
      %6887 = vmatpush1.msra.mxu0 %v6496
      %6888 = vmatprep.subr.mxu0 0.0
      %6889 = vmatpush1.msra.mxu0 %v6497
      %6890 = vmatprep.subr.mxu0 0.0
      %6891 = vmatpush1.msra.mxu0 %v6498
      %6892 = vmatprep.subr.mxu0 0.0
      %6893 = vmatpush1.msra.mxu0 %v6499
      %6894 = vmatprep.subr.mxu0 0.0
      %6895 = vmatpush1.msra.mxu0 %v6500
      %6896 = vmatprep.subr.mxu0 0.0
      %6897 = vmatpush1.msra.mxu0 %v6501
      %6898 = vmatprep.subr.mxu0 0.0
      %6899 = vmatpush1.msra.mxu0 %v6502
      %6900 = vmatprep.subr.mxu0 0.0
      %6901 = vmatpush1.msra.mxu0 %v6503
      %6902 = vmatprep.subr.mxu0 0.0
      %6903 = vmatpush1.msra.mxu0 %v6504
      %6904 = vmatprep.subr.mxu0 0.0
      %6905 = vmatpush1.msra.mxu0 %v6505
      %6906 = vmatprep.subr.mxu0 0.0
      %6907 = vmatpush1.msra.mxu0 %v6506
      %6908 = vmatprep.subr.mxu0 0.0
      %6909 = vmatpush1.msra.mxu0 %v6507
      %6910 = vmatprep.subr.mxu0 0.0
      %6911 = vmatpush1.msra.mxu0 %v6508
      %6912 = vmatprep.subr.mxu0 0.0
      %6913 = vmatpush1.msra.mxu0 %v6509
      %6914 = vmatprep.subr.mxu0 0.0
      %6915 = vmatpush1.msra.mxu0 %v6510
      %6916 = vmatprep.subr.mxu0 0.0
      %6917 = vmatpush1.msra.mxu0 %v6511
      %6918 = vmatprep.subr.mxu0 0.0
      %6919 = vmatpush1.msra.mxu0 %v6512
      %6920 = vmatprep.subr.mxu0 0.0
      %6921 = vmatpush1.msra.mxu0 %v6513
      %6922 = vmatprep.mubr.f32.mxu0 %v6205
      %6923 = vmatmul.mubr.f32.gmra.mrb[0].mxu0 %v6168
      %v6924 = vpop.f32.mrb[0].mxu0
      %v6925 = vadd.f32 %v6855, %v6924
      %v6926 = vpop.f32.mrb[0].mxu0
      %6927 = vdwg.mxu0
      %6928 = vmatprep.subr.mxu0 0.0
      %6929 = vmatpush1.msra.mxu0 %v6514
      %6930 = vmatprep.subr.mxu0 0.0
      %6931 = vmatpush1.msra.mxu0 %v6515
      %6932 = vmatprep.subr.mxu0 0.0
      %6933 = vmatpush1.msra.mxu0 %v6516
      %6934 = vmatprep.subr.mxu0 0.0
      %6935 = vmatpush1.msra.mxu0 %v6517
      %6936 = vmatprep.subr.mxu0 0.0
      %6937 = vmatpush1.msra.mxu0 %v6518
      %6938 = vmatprep.subr.mxu0 0.0
      %6939 = vmatpush1.msra.mxu0 %v6519
      %6940 = vmatprep.subr.mxu0 0.0
      %6941 = vmatpush1.msra.mxu0 %v6520
      %6942 = vmatprep.subr.mxu0 0.0
      %6943 = vmatpush1.msra.mxu0 %v6521
      %6944 = vmatprep.subr.mxu0 0.0
      %6945 = vmatpush1.msra.mxu0 %v6522
      %6946 = vmatprep.subr.mxu0 0.0
      %6947 = vmatpush1.msra.mxu0 %v6523
      %6948 = vmatprep.subr.mxu0 0.0
      %6949 = vmatpush1.msra.mxu0 %v6524
      %6950 = vmatprep.subr.mxu0 0.0
      %6951 = vmatpush1.msra.mxu0 %v6525
      %6952 = vmatprep.subr.mxu0 0.0
      %6953 = vmatpush1.msra.mxu0 %v6526
      %6954 = vmatprep.subr.mxu0 0.0
      %6955 = vmatpush1.msra.mxu0 %v6527
      %6956 = vmatprep.subr.mxu0 0.0
      %6957 = vmatpush1.msra.mxu0 %v6528
      %6958 = vmatprep.subr.mxu0 0.0
      %6959 = vmatpush1.msra.mxu0 %v6529
      %6960 = vmatprep.subr.mxu0 0.0
      %6961 = vmatpush1.msra.mxu0 %v6530
      %6962 = vmatprep.subr.mxu0 0.0
      %6963 = vmatpush1.msra.mxu0 %v6531
      %6964 = vmatprep.subr.mxu0 0.0
      %6965 = vmatpush1.msra.mxu0 %v6532
      %6966 = vmatprep.subr.mxu0 0.0
      %6967 = vmatpush1.msra.mxu0 %v6533
      %6968 = vmatprep.subr.mxu0 0.0
      %6969 = vmatpush1.msra.mxu0 %v6534
      %6970 = vmatprep.subr.mxu0 0.0
      %6971 = vmatpush1.msra.mxu0 %v6535
      %6972 = vmatprep.subr.mxu0 0.0
      %6973 = vmatpush1.msra.mxu0 %v6536
      %6974 = vmatprep.subr.mxu0 0.0
      %6975 = vmatpush1.msra.mxu0 %v6537
      %6976 = vmatprep.subr.mxu0 0.0
      %6977 = vmatpush1.msra.mxu0 %v6538
      %6978 = vmatprep.subr.mxu0 0.0
      %6979 = vmatpush1.msra.mxu0 %v6539
      %6980 = vmatprep.subr.mxu0 0.0
      %6981 = vmatpush1.msra.mxu0 %v6540
      %6982 = vmatprep.subr.mxu0 0.0
      %6983 = vmatpush1.msra.mxu0 %v6541
      %6984 = vmatprep.subr.mxu0 0.0
      %6985 = vmatpush1.msra.mxu0 %v6542
      %6986 = vmatprep.subr.mxu0 0.0
      %6987 = vmatpush1.msra.mxu0 %v6543
      %6988 = vmatprep.subr.mxu0 0.0
      %6989 = vmatpush1.msra.mxu0 %v6544
      %6990 = vmatprep.subr.mxu0 0.0
      %6991 = vmatpush1.msra.mxu0 %v6545
      %6992 = vmatprep.mubr.f32.mxu0 %v6279
      %6993 = vmatmul.mubr.f32.gmra.mrb[0].mxu0 %v6242
      %v6994 = vpop.f32.mrb[0].mxu0
      %v6995 = vadd.f32 %v6925, %v6994
      %v6996 = vpop.f32.mrb[0].mxu0
      %6997 = vdwg.mxu0
      %6998 = vmatprep.subr.mxu0 0.0
      %6999 = vmatpush1.msra.mxu0 %v6546
      %7000 = vmatprep.subr.mxu0 0.0
      %7001 = vmatpush1.msra.mxu0 %v6547
      %7002 = vmatprep.subr.mxu0 0.0
      %7003 = vmatpush1.msra.mxu0 %v6548
      %7004 = vmatprep.subr.mxu0 0.0
      %7005 = vmatpush1.msra.mxu0 %v6549
      %7006 = vmatprep.subr.mxu0 0.0
      %7007 = vmatpush1.msra.mxu0 %v6550
      %7008 = vmatprep.subr.mxu0 0.0
      %7009 = vmatpush1.msra.mxu0 %v6551
      %7010 = vmatprep.subr.mxu0 0.0
      %7011 = vmatpush1.msra.mxu0 %v6552
      %7012 = vmatprep.subr.mxu0 0.0
      %7013 = vmatpush1.msra.mxu0 %v6553
      %7014 = vmatprep.subr.mxu0 0.0
      %7015 = vmatpush1.msra.mxu0 %v6554
      %7016 = vmatprep.subr.mxu0 0.0
      %7017 = vmatpush1.msra.mxu0 %v6555
      %7018 = vmatprep.subr.mxu0 0.0
      %7019 = vmatpush1.msra.mxu0 %v6556
      %7020 = vmatprep.subr.mxu0 0.0
      %7021 = vmatpush1.msra.mxu0 %v6557
      %7022 = vmatprep.subr.mxu0 0.0
      %7023 = vmatpush1.msra.mxu0 %v6558
      %7024 = vmatprep.subr.mxu0 0.0
      %7025 = vmatpush1.msra.mxu0 %v6559
      %7026 = vmatprep.subr.mxu0 0.0
      %7027 = vmatpush1.msra.mxu0 %v6560
      %7028 = vmatprep.subr.mxu0 0.0
      %7029 = vmatpush1.msra.mxu0 %v6561
      %7030 = vmatprep.subr.mxu0 0.0
      %7031 = vmatpush1.msra.mxu0 %v6562
      %7032 = vmatprep.subr.mxu0 0.0
      %7033 = vmatpush1.msra.mxu0 %v6563
      %7034 = vmatprep.subr.mxu0 0.0
      %7035 = vmatpush1.msra.mxu0 %v6564
      %7036 = vmatprep.subr.mxu0 0.0
      %7037 = vmatpush1.msra.mxu0 %v6565
      %7038 = vmatprep.subr.mxu0 0.0
      %7039 = vmatpush1.msra.mxu0 %v6566
      %7040 = vmatprep.subr.mxu0 0.0
      %7041 = vmatpush1.msra.mxu0 %v6567
      %7042 = vmatprep.subr.mxu0 0.0
      %7043 = vmatpush1.msra.mxu0 %v6568
      %7044 = vmatprep.subr.mxu0 0.0
      %7045 = vmatpush1.msra.mxu0 %v6569
      %7046 = vmatprep.subr.mxu0 0.0
      %7047 = vmatpush1.msra.mxu0 %v6570
      %7048 = vmatprep.subr.mxu0 0.0
      %7049 = vmatpush1.msra.mxu0 %v6571
      %7050 = vmatprep.subr.mxu0 0.0
      %7051 = vmatpush1.msra.mxu0 %v6572
      %7052 = vmatprep.subr.mxu0 0.0
      %7053 = vmatpush1.msra.mxu0 %v6573
      %7054 = vmatprep.subr.mxu0 0.0
      %7055 = vmatpush1.msra.mxu0 %v6574
      %7056 = vmatprep.subr.mxu0 0.0
      %7057 = vmatpush1.msra.mxu0 %v6575
      %7058 = vmatprep.subr.mxu0 0.0
      %7059 = vmatpush1.msra.mxu0 %v6576
      %7060 = vmatprep.subr.mxu0 0.0
      %7061 = vmatpush1.msra.mxu0 %v6577
      %7062 = vmatprep.mubr.f32.mxu0 %v6353
      %7063 = vmatmul.mubr.f32.gmra.mrb[0].mxu0 %v6316
      %v7064 = vpop.f32.mrb[0].mxu0
      %v7065 = vadd.f32 %v6995, %v7064
      %v7066 = vpop.f32.mrb[0].mxu0
      %7067 = vdwg.mxu0
      %v7068 = vld [vmem:[%s374] sm:$0xff]
      %v7069 = vlaneseq
      %v7070 = vshrl.u32 %v7069, 7
      %v7071 = vsub.s32 0, %v7070
      %v7072 = vrot.slane %v7065, %v7071
      %v7073 = vadd.f32 %v7068, %v7072
      %7074 = vst [vmem:[%s374] sm:$0xff] %v7073
      // Predicated region
      $region53: #{multihead_effb4_forward.1} parent=47 // pred_check
        _
      $region54: #{multihead_effb4_forward.1} parent=47 // pred_check_branch
        %7076 = sbr.rel (%p378) target = $region56
      $region55: #{multihead_effb4_forward.1} parent=47 // pred_region
        %v7077 = vld [vmem:[%s374] sm:$0xff]
        %v7078 = vmul.f32 %v7077, 0.00390625
        %v7079 = vld [vmem:[%s6] sm:$0x1]
        %v7081 = vlaneseq
        %v7082 = vshrl.u32 %v7081, 7
        %v7083 = vsub.s32 0, %v7082
        %v7084 = vrot.slane %v7079, %v7083
        %v7086 = vadd.f32 %v7078, %v7084
        %7087 = vst [vmem:[%s374] sm:$0xff] %v7086
      $region56: #{multihead_effb4_forward.1} parent=47 // pred_fallthru
        _
      %p7088 = scmp.lt.s32.totalorder %s23, 1
      %s7089 = scalar_select %p7088, %s23, 1
      %s7090 = smul.addr %s7089, 8
      %s7091 = scalar_lea.vmem %s7, %s7090
      // Predicated region
      $region57: #{multihead_effb4_forward.1} parent=47 // pred_check
        %p7092 = pneg %p224
      $region58: #{multihead_effb4_forward.1} parent=47 // pred_check_branch
        %7094 = sbr.rel (%p7092) target = $region60
      $region59: #{multihead_effb4_forward.1} parent=47 // pred_region
        _
      $region60: #{multihead_effb4_forward.1} parent=47 // pred_fallthru
        _
    $region48: #{multihead_effb4_forward.1} parent=5 // pred_fallthru
      _
    %p7095 = scmp.le.s32.totalorder 2, %s13
    // Predicated region
    $region61: #{multihead_effb4_forward.1} parent=5 // pred_check
      %p7096 = pneg %p7095
    $region62: #{multihead_effb4_forward.1} parent=5 // pred_check_branch
      %7098 = sbr.rel (%p7096) target = $region64
    $region63: #{multihead_effb4_forward.1} parent=5 // pred_region
      %s7099 = ssub.s32 %s13, 2
      // Predicated region
      $region65: #{multihead_effb4_forward.1} parent=63 // pred_check
        %p7100 = pneg %p230
      $region66: #{multihead_effb4_forward.1} parent=63 // pred_check_branch
        %7102 = sbr.rel (%p7100) target = $region68
      $region67: #{multihead_effb4_forward.1} parent=63 // pred_region
        %p7103 = scmp.lt.s32.totalorder %s26, 1
        %s7104 = scalar_select %p7103, %s26, 1
        %s7105 = smul.addr %s7104, 8
        %s7106 = scalar_lea.vmem %s7, %s7105
      $region68: #{multihead_effb4_forward.1} parent=63 // pred_fallthru
        _
    $region64: #{multihead_effb4_forward.1} parent=5 // pred_fallthru
      _
  $region6: #{multihead_effb4_forward.1} parent=0 // loop_footer
    %s17 = sadd.s32 1, %s13
  $region7: #{multihead_effb4_forward.1} parent=0 // loop_footer_branch
    %12 = sbr.rel target = $region3
  $region8: #{multihead_effb4_forward.1} parent=0 // loop_exit
    _

</llo_original>
